<compile_context>
chip_gen: v7x
topology: tpu7x:2x2x1
jax: 0.10.0
libtpu: 0.0.40
codegen_flags: <defaults>
</compile_context>

<pallas_src>
import math

import jax
import jax.numpy as jnp
from jax import lax
from jax.experimental import pallas as pl
from jax.experimental.pallas import tpu as pltpu

E = 256          # model dim (dim_q == dim_v == TransformerLayer input_dim)
H = 4            # attention heads
HD = E // H      # 64
HID = 128        # MLP hidden dim
EPS = 1e-5       # LayerNorm eps (PyTorch default)

# row indices inside the packed (13, E) vector bundle
_VE = dict(gq=0, bq=1, gk=2, bk=3, gv=4, bv=5, ga=6, ba=7,
           bpq=8, bpk=9, bpv=10, bo=11, b2=12)
# row indices inside the packed (3, HID) vector bundle
_VH = dict(gm=0, bm=1, b1=2)


def _layernorm(x, gamma, beta):
    """Single-pass LN: var = E[x^2] - mu^2 (one fewer elementwise pass + reduction dep)."""
    mu = jnp.mean(x, axis=-1, keepdims=True)
    var = jnp.maximum(jnp.mean(x * x, axis=-1, keepdims=True) - mu * mu, 0.0)
    return (x - mu) * lax.rsqrt(var + EPS) * gamma + beta


def mtcma_kernel(q_ref, k_ref, v_ref, vec_e_ref, vec_h_ref,
                 wqkv_ref, wo_ref, w1_ref, w2_ref, o_ref):
    Bt, Sq, _ = q_ref.shape
    Sk = k_ref.shape[1]
    Mq = Bt * Sq
    Mk = Bt * Sk

    # Cast bf16 -> f32 first (8-row sublane packing) so the (Bt, S, E) -> (M, E)
    # flatten is a free view; all LN/softmax math stays f32.
    q = q_ref[...].astype(jnp.float32).reshape(Mq, E)
    k = k_ref[...].astype(jnp.float32).reshape(Mk, E)
    v = v_ref[...].astype(jnp.float32).reshape(Mk, E)

    vec_e = vec_e_ref[...]                    # (13, E)  f32
    vec_h = vec_h_ref[...]                    # (3, HID) f32
    ve = lambda n: vec_e[_VE[n]:_VE[n] + 1]   # (1, E)   static slices
    vh = lambda n: vec_h[_VH[n]:_VH[n] + 1]   # (1, HID)

    # --- input LayerNorms (f32 math) ---
    qn = _layernorm(q, ve("gq"), ve("bq"))
    kn = _layernorm(k, ve("gk"), ve("bk"))
    vn = _layernorm(v, ve("gv"), ve("bv"))

    # --- QKV projections: bf16 MXU inputs, f32 accumulation (M = Bt*S, K = 256) ---
    wq, wk, wv = wqkv_ref[0], wqkv_ref[1], wqkv_ref[2]   # (E, E) bf16 each
    scale = 1.0 / math.sqrt(HD)
    # softmax scale folded once into qp (single pass) instead of per-head score scaling
    qp = (jnp.dot(qn.astype(jnp.bfloat16), wq,
                  preferred_element_type=jnp.float32) + ve("bpq")) * scale
    kp = jnp.dot(kn.astype(jnp.bfloat16), wk,
                 preferred_element_type=jnp.float32) + ve("bpk")
    vp = jnp.dot(vn.astype(jnp.bfloat16), wv,
                 preferred_element_type=jnp.float32) + ve("bpv")

    # token-major 3-D views (free reshapes on f32)
    qp3 = qp.reshape(Bt, Sq, E)
    kp3 = kp.reshape(Bt, Sk, E)
    vp3 = vp.reshape(Bt, Sk, E)

    # --- multi-head attention: 4 static head iterations, each BATCHED over Bt ---
    # Each head does one (Bt)-batched score matmul + softmax + one batched PV
    # matmul (single-leading-batch-dim dot_general: the validated Mosaic form).
    head_ctx = []
    for h in range(H):
        lo, hi = h * HD, (h + 1) * HD
        qh = qp3[:, :, lo:hi].astype(jnp.bfloat16)      # (Bt, Sq, HD)
        kh = kp3[:, :, lo:hi].astype(jnp.bfloat16)      # (Bt, Sk, HD)
        vh_ = vp3[:, :, lo:hi].astype(jnp.bfloat16)     # (Bt, Sk, HD)
        s = jnp.einsum("bqd,bkd->bqk", qh, kh,
                       preferred_element_type=jnp.float32)      # (Bt, Sq, Sk) f32
        s = s - jnp.max(s, axis=-1, keepdims=True)
        p = jnp.exp(s)
        p = p * pl.reciprocal(jnp.sum(p, axis=-1, keepdims=True), approx=True)
        ctx_h = jnp.einsum("bqk,bkd->bqd", p.astype(jnp.bfloat16), vh_,
                           preferred_element_type=jnp.float32)  # (Bt, Sq, HD) f32
        head_ctx.append(ctx_h)

    # concatenate heads once on the lane axis (f32, 8-row aligned) -> (Mq, E)
    ctx = jnp.concatenate(head_ctx, axis=-1).reshape(Mq, E)

    # single full-K out-projection for the whole tile
    attn = jnp.dot(ctx.astype(jnp.bfloat16), wo_ref[...],
                   preferred_element_type=jnp.float32) + ve("bo")

    # --- residual + post-attention LayerNorm ---
    x = _layernorm(qn + attn, ve("ga"), ve("ba"))

    # --- MLP: Linear -> GELU -> [Dropout=id] -> LN -> Linear -> GELU -> [Dropout=id] ---
    h1 = jnp.dot(x.astype(jnp.bfloat16), w1_ref[...],
                 preferred_element_type=jnp.float32) + vh("b1")
    h1 = jax.nn.gelu(h1, approximate=True)    # tanh GELU -> EUP slot
    h1 = _layernorm(h1, vh("gm"), vh("bm"))
    h2 = jnp.dot(h1.astype(jnp.bfloat16), w2_ref[...],
                 preferred_element_type=jnp.float32) + ve("b2")
    h2 = jax.nn.gelu(h2, approximate=True)

    o_ref[...] = (x + h2).reshape(Bt, Sq, E).astype(o_ref.dtype)


def init_params(key):
    """PyTorch-default init: LN gamma=1 beta=0, Linear U(-1/sqrt(fan_in), ...)."""
    def lin(k, fan_in, fan_out):
        bound = 1.0 / math.sqrt(fan_in)
        kw, kb = jax.random.split(k)
        w = jax.random.uniform(kw, (fan_in, fan_out), jnp.float32, -bound, bound)
        b = jax.random.uniform(kb, (1, fan_out), jnp.float32, -bound, bound)
        return w, b

    keys = jax.random.split(key, 6)
    p = {}
    for name, dim in [("gq", E), ("gk", E), ("gv", E), ("ga", E), ("gm", HID)]:
        p[name] = jnp.ones((1, dim), jnp.float32)
    for name, dim in [("bq", E), ("bk", E), ("bv", E), ("ba", E), ("bm", HID)]:
        p[name] = jnp.zeros((1, dim), jnp.float32)
    p["wq"], p["bpq"] = lin(keys[0], E, E)
    p["wk"], p["bpk"] = lin(keys[1], E, E)
    p["wv"], p["bpv"] = lin(keys[2], E, E)
    p["wo"], p["bo"] = lin(keys[3], E, E)
    p["w1"], p["b1"] = lin(keys[4], E, HID)
    p["w2"], p["b2"] = lin(keys[5], HID, E)
    return p


def _chip_config():
    """Per-generation tuning: (cap_rows, prefer_multi_step_grid, vmem_limit_bytes)."""
    kind = ""
    try:
        kind = jax.devices()[0].device_kind.lower()
    except Exception:
        pass
    if "v5p" in kind or "v4" in kind:
        # 2 TensorCores (megacore): keep >= 2 grid steps, defaults are fine.
        return 1024, True, None
    if "v5" in kind:
        # v5e: 16 MiB default scoped VMEM -> smaller tile + raised scoped limit.
        return 512, False, 48 << 20
    if "v6" in kind:
        # single TC, 128 MiB physical VMEM: biggest tile, raise scoped limit.
        return 1024, False, 64 << 20
    if "v7" in kind:
        # 2 TCs, only 64 MiB physical VMEM: keep 1024-row cap and the default
        # 32 MiB scoped limit; prefer an even grid so both TCs get work.
        return 1024, True, None
    return 1024, False, None


def _pick_batch_tile(B, S, cap_rows, prefer_multi):
    """Largest divisor batch tile whose flattened row count fits the cap.
    Only prefer >= 2 grid steps on chips with 2 TensorCores."""
    cands = [bt for bt in range(1, B + 1) if B % bt == 0 and bt * S <= cap_rows]
    if not cands:
        return 1
    if prefer_multi:
        multi = [bt for bt in cands if B // bt >= 2]
        if multi:
            return max(multi)
    return max(cands)


def _pack_params(params):
    """Host-side packing: 2 vector bundles (f32) + 4 bf16 weight tensors."""
    vec_e = jnp.concatenate(
        [params[n].reshape(1, E) for n in
         ["gq", "bq", "gk", "bk", "gv", "bv", "ga", "ba",
          "bpq", "bpk", "bpv", "bo", "b2"]], axis=0).astype(jnp.float32)
    vec_h = jnp.concatenate(
        [params[n].reshape(1, HID) for n in ["gm", "bm", "b1"]],
        axis=0).astype(jnp.float32)
    wqkv = jnp.stack([params["wq"], params["wk"], params["wv"]],
                     axis=0).astype(jnp.bfloat16)
    wo = params["wo"].astype(jnp.bfloat16)
    w1 = params["w1"].astype(jnp.bfloat16)
    w2 = params["w2"].astype(jnp.bfloat16)
    return [vec_e, vec_h, wqkv, wo, w1, w2]


def mtcma_forward(queries, keys, values, params, block_b=None,
                  out_dtype=jnp.float32):
    B, Sq, _ = queries.shape
    Sk = keys.shape[1]
    cap_rows, prefer_multi, vmem_limit = _chip_config()
    if block_b is None:
        block_b = _pick_batch_tile(B, max(Sq, Sk), cap_rows, prefer_multi)
    assert B % block_b == 0, "batch must be divisible by the batch tile"

    plist = _pack_params(params)

    # bf16 activations at the pallas_call boundary (halves HBM traffic; LN /
    # softmax / accumulation still run in f32 inside the kernel).
    q_in = queries.astype(jnp.bfloat16)
    k_in = keys.astype(jnp.bfloat16)
    v_in = values.astype(jnp.bfloat16)

    def full_spec(a):
        return pl.BlockSpec(a.shape, lambda b: (0,) * a.ndim)

    in_specs = (
        [pl.BlockSpec((block_b, Sq, E), lambda b: (b, 0, 0)),
         pl.BlockSpec((block_b, Sk, E), lambda b: (b, 0, 0)),
         pl.BlockSpec((block_b, Sk, E), lambda b: (b, 0, 0))]
        + [full_spec(a) for a in plist]
    )
    out_spec = pl.BlockSpec((block_b, Sq, E), lambda b: (b, 0, 0))

    cp_kwargs = dict(dimension_semantics=("parallel",))
    if vmem_limit is not None:
        cp_kwargs["vmem_limit_bytes"] = vmem_limit

    return pl.pallas_call(
        mtcma_kernel,
        out_shape=jax.ShapeDtypeStruct((B, Sq, E), out_dtype),
        grid_spec=pltpu.PrefetchScalarGridSpec(
            num_scalar_prefetch=0,
            grid=(B // block_b,),
            in_specs=in_specs,
            out_specs=out_spec,
        ),
        compiler_params=pltpu.CompilerParams(**cp_kwargs),
    )(q_in, k_in, v_in, *plist)


if __name__ == "__main__":
    B, Sq, Sk = 8, 8, 8
    root = jax.random.PRNGKey(0)
    kq, kk, kv, kp = jax.random.split(root, 4)

    queries = jax.random.normal(kq, (B, Sq, E), jnp.float32)
    keys_in = jax.random.normal(kk, (B, Sk, E), jnp.float32)
    values_in = jax.random.normal(kv, (B, Sk, E), jnp.float32)
    params = init_params(kp)

    out = mtcma_forward(queries, keys_in, values_in, params)
    jax.block_until_ready(out)
    assert out.shape == (B, Sq, E)
    assert bool(jnp.all(jnp.isfinite(out)))
    print("KERNEL_OK")
</pallas_src>

<mosaic_0001>
module attributes {stable_mosaic.version = 11 : i64} {
  func.func @mtcma_kernel(%arg0: i32, %arg1: memref<8x8x256xbf16, #tpu.memory_space<vmem>>, %arg2: memref<8x8x256xbf16, #tpu.memory_space<vmem>>, %arg3: memref<8x8x256xbf16, #tpu.memory_space<vmem>>, %arg4: memref<13x256xf32, #tpu.memory_space<vmem>>, %arg5: memref<3x128xf32, #tpu.memory_space<vmem>>, %arg6: memref<3x256x256xbf16, #tpu.memory_space<vmem>>, %arg7: memref<256x256xbf16, #tpu.memory_space<vmem>>, %arg8: memref<256x128xbf16, #tpu.memory_space<vmem>>, %arg9: memref<128x256xbf16, #tpu.memory_space<vmem>>, %arg10: memref<8x8x256xf32, #tpu.memory_space<vmem>>) attributes {dimension_semantics = [#tpu.dimension_semantics<parallel>], iteration_bounds = array<i64: 1>, scalar_prefetch = 0 : i64, scratch_operands = 0 : i64, tpu.core_type = #tpu.core_type<tc>, window_params = [{transform_indices = @transform_0, window_bounds = array<i64: 8, 8, 256>}, {transform_indices = @transform_1, window_bounds = array<i64: 8, 8, 256>}, {transform_indices = @transform_2, window_bounds = array<i64: 8, 8, 256>}, {pipeline_mode = #tpu.pipeline_mode<synchronous>, transform_indices = @transform_3, window_bounds = array<i64: 13, 256>}, {pipeline_mode = #tpu.pipeline_mode<synchronous>, transform_indices = @transform_4, window_bounds = array<i64: 3, 128>}, {pipeline_mode = #tpu.pipeline_mode<synchronous>, transform_indices = @transform_5, window_bounds = array<i64: 3, 256, 256>}, {pipeline_mode = #tpu.pipeline_mode<synchronous>, transform_indices = @transform_6, window_bounds = array<i64: 256, 256>}, {pipeline_mode = #tpu.pipeline_mode<synchronous>, transform_indices = @transform_7, window_bounds = array<i64: 256, 128>}, {pipeline_mode = #tpu.pipeline_mode<synchronous>, transform_indices = @transform_8, window_bounds = array<i64: 128, 256>}, {transform_indices = @transform_9, window_bounds = array<i64: 8, 8, 256>}]} {
    %c0 = arith.constant 0 : index
    %c0_0 = arith.constant 0 : index
    %c0_1 = arith.constant 0 : index
    %0 = vector.load %arg1[%c0, %c0_0, %c0_1] : memref<8x8x256xbf16, #tpu.memory_space<vmem>>, vector<8x8x256xbf16>
    %1 = arith.extf %0 : vector<8x8x256xbf16> to vector<8x8x256xf32>
    %2 = vector.shape_cast %1 : vector<8x8x256xf32> to vector<64x256xf32>
    %c0_2 = arith.constant 0 : index
    %c0_3 = arith.constant 0 : index
    %c0_4 = arith.constant 0 : index
    %3 = vector.load %arg2[%c0_2, %c0_3, %c0_4] : memref<8x8x256xbf16, #tpu.memory_space<vmem>>, vector<8x8x256xbf16>
    %4 = arith.extf %3 : vector<8x8x256xbf16> to vector<8x8x256xf32>
    %5 = vector.shape_cast %4 : vector<8x8x256xf32> to vector<64x256xf32>
    %c0_5 = arith.constant 0 : index
    %c0_6 = arith.constant 0 : index
    %c0_7 = arith.constant 0 : index
    %6 = vector.load %arg3[%c0_5, %c0_6, %c0_7] : memref<8x8x256xbf16, #tpu.memory_space<vmem>>, vector<8x8x256xbf16>
    %7 = arith.extf %6 : vector<8x8x256xbf16> to vector<8x8x256xf32>
    %8 = vector.shape_cast %7 : vector<8x8x256xf32> to vector<64x256xf32>
    %c0_8 = arith.constant 0 : index
    %c0_9 = arith.constant 0 : index
    %9 = vector.load %arg4[%c0_8, %c0_9] : memref<13x256xf32, #tpu.memory_space<vmem>>, vector<13x256xf32>
    %c0_10 = arith.constant 0 : index
    %c0_11 = arith.constant 0 : index
    %10 = vector.load %arg5[%c0_10, %c0_11] : memref<3x128xf32, #tpu.memory_space<vmem>>, vector<3x128xf32>
    %11 = vector.extract_strided_slice %9 {offsets = [0, 0], sizes = [1, 256], strides = [1, 1]} : vector<13x256xf32> to vector<1x256xf32>
    %12 = vector.extract_strided_slice %9 {offsets = [1, 0], sizes = [1, 256], strides = [1, 1]} : vector<13x256xf32> to vector<1x256xf32>
    %cst = arith.constant dense<0.000000e+00> : vector<64xf32>
    %13 = vector.multi_reduction <add>, %2, %cst [1] : vector<64x256xf32> to vector<64xf32>
    %14 = vector.shape_cast %13 : vector<64xf32> to vector<64x1xf32>
    %cst_12 = arith.constant 2.560000e+02 : f32
    %15 = vector.broadcast %cst_12 : f32 to vector<64x1xf32>
    %16 = arith.divf %14, %15 : vector<64x1xf32>
    %17 = arith.mulf %2, %2 : vector<64x256xf32>
    %cst_13 = arith.constant dense<0.000000e+00> : vector<64xf32>
    %18 = vector.multi_reduction <add>, %17, %cst_13 [1] : vector<64x256xf32> to vector<64xf32>
    %19 = vector.shape_cast %18 : vector<64xf32> to vector<64x1xf32>
    %cst_14 = arith.constant 2.560000e+02 : f32
    %20 = vector.broadcast %cst_14 : f32 to vector<64x1xf32>
    %21 = arith.divf %19, %20 : vector<64x1xf32>
    %22 = arith.mulf %16, %16 : vector<64x1xf32>
    %23 = arith.subf %21, %22 : vector<64x1xf32>
    %cst_15 = arith.constant 0.000000e+00 : f32
    %24 = vector.broadcast %cst_15 : f32 to vector<64x1xf32>
    %25 = arith.maximumf %23, %24 : vector<64x1xf32>
    %26 = vector.broadcast %16 : vector<64x1xf32> to vector<64x256xf32>
    %27 = arith.subf %2, %26 : vector<64x256xf32>
    %cst_16 = arith.constant 9.99999974E-6 : f32
    %28 = vector.broadcast %cst_16 : f32 to vector<64x1xf32>
    %29 = arith.addf %25, %28 : vector<64x1xf32>
    %30 = math.rsqrt %29 : vector<64x1xf32>
    %31 = vector.broadcast %30 : vector<64x1xf32> to vector<64x256xf32>
    %32 = arith.mulf %27, %31 : vector<64x256xf32>
    %33 = vector.broadcast %11 : vector<1x256xf32> to vector<64x256xf32>
    %34 = arith.mulf %32, %33 : vector<64x256xf32>
    %35 = vector.broadcast %12 : vector<1x256xf32> to vector<64x256xf32>
    %36 = arith.addf %34, %35 : vector<64x256xf32>
    %37 = vector.extract_strided_slice %9 {offsets = [2, 0], sizes = [1, 256], strides = [1, 1]} : vector<13x256xf32> to vector<1x256xf32>
    %38 = vector.extract_strided_slice %9 {offsets = [3, 0], sizes = [1, 256], strides = [1, 1]} : vector<13x256xf32> to vector<1x256xf32>
    %cst_17 = arith.constant dense<0.000000e+00> : vector<64xf32>
    %39 = vector.multi_reduction <add>, %5, %cst_17 [1] : vector<64x256xf32> to vector<64xf32>
    %40 = vector.shape_cast %39 : vector<64xf32> to vector<64x1xf32>
    %cst_18 = arith.constant 2.560000e+02 : f32
    %41 = vector.broadcast %cst_18 : f32 to vector<64x1xf32>
    %42 = arith.divf %40, %41 : vector<64x1xf32>
    %43 = arith.mulf %5, %5 : vector<64x256xf32>
    %cst_19 = arith.constant dense<0.000000e+00> : vector<64xf32>
    %44 = vector.multi_reduction <add>, %43, %cst_19 [1] : vector<64x256xf32> to vector<64xf32>
    %45 = vector.shape_cast %44 : vector<64xf32> to vector<64x1xf32>
    %cst_20 = arith.constant 2.560000e+02 : f32
    %46 = vector.broadcast %cst_20 : f32 to vector<64x1xf32>
    %47 = arith.divf %45, %46 : vector<64x1xf32>
    %48 = arith.mulf %42, %42 : vector<64x1xf32>
    %49 = arith.subf %47, %48 : vector<64x1xf32>
    %cst_21 = arith.constant 0.000000e+00 : f32
    %50 = vector.broadcast %cst_21 : f32 to vector<64x1xf32>
    %51 = arith.maximumf %49, %50 : vector<64x1xf32>
    %52 = vector.broadcast %42 : vector<64x1xf32> to vector<64x256xf32>
    %53 = arith.subf %5, %52 : vector<64x256xf32>
    %cst_22 = arith.constant 9.99999974E-6 : f32
    %54 = vector.broadcast %cst_22 : f32 to vector<64x1xf32>
    %55 = arith.addf %51, %54 : vector<64x1xf32>
    %56 = math.rsqrt %55 : vector<64x1xf32>
    %57 = vector.broadcast %56 : vector<64x1xf32> to vector<64x256xf32>
    %58 = arith.mulf %53, %57 : vector<64x256xf32>
    %59 = vector.broadcast %37 : vector<1x256xf32> to vector<64x256xf32>
    %60 = arith.mulf %58, %59 : vector<64x256xf32>
    %61 = vector.broadcast %38 : vector<1x256xf32> to vector<64x256xf32>
    %62 = arith.addf %60, %61 : vector<64x256xf32>
    %63 = vector.extract_strided_slice %9 {offsets = [4, 0], sizes = [1, 256], strides = [1, 1]} : vector<13x256xf32> to vector<1x256xf32>
    %64 = vector.extract_strided_slice %9 {offsets = [5, 0], sizes = [1, 256], strides = [1, 1]} : vector<13x256xf32> to vector<1x256xf32>
    %cst_23 = arith.constant dense<0.000000e+00> : vector<64xf32>
    %65 = vector.multi_reduction <add>, %8, %cst_23 [1] : vector<64x256xf32> to vector<64xf32>
    %66 = vector.shape_cast %65 : vector<64xf32> to vector<64x1xf32>
    %cst_24 = arith.constant 2.560000e+02 : f32
    %67 = vector.broadcast %cst_24 : f32 to vector<64x1xf32>
    %68 = arith.divf %66, %67 : vector<64x1xf32>
    %69 = arith.mulf %8, %8 : vector<64x256xf32>
    %cst_25 = arith.constant dense<0.000000e+00> : vector<64xf32>
    %70 = vector.multi_reduction <add>, %69, %cst_25 [1] : vector<64x256xf32> to vector<64xf32>
    %71 = vector.shape_cast %70 : vector<64xf32> to vector<64x1xf32>
    %cst_26 = arith.constant 2.560000e+02 : f32
    %72 = vector.broadcast %cst_26 : f32 to vector<64x1xf32>
    %73 = arith.divf %71, %72 : vector<64x1xf32>
    %74 = arith.mulf %68, %68 : vector<64x1xf32>
    %75 = arith.subf %73, %74 : vector<64x1xf32>
    %cst_27 = arith.constant 0.000000e+00 : f32
    %76 = vector.broadcast %cst_27 : f32 to vector<64x1xf32>
    %77 = arith.maximumf %75, %76 : vector<64x1xf32>
    %78 = vector.broadcast %68 : vector<64x1xf32> to vector<64x256xf32>
    %79 = arith.subf %8, %78 : vector<64x256xf32>
    %cst_28 = arith.constant 9.99999974E-6 : f32
    %80 = vector.broadcast %cst_28 : f32 to vector<64x1xf32>
    %81 = arith.addf %77, %80 : vector<64x1xf32>
    %82 = math.rsqrt %81 : vector<64x1xf32>
    %83 = vector.broadcast %82 : vector<64x1xf32> to vector<64x256xf32>
    %84 = arith.mulf %79, %83 : vector<64x256xf32>
    %85 = vector.broadcast %63 : vector<1x256xf32> to vector<64x256xf32>
    %86 = arith.mulf %84, %85 : vector<64x256xf32>
    %87 = vector.broadcast %64 : vector<1x256xf32> to vector<64x256xf32>
    %88 = arith.addf %86, %87 : vector<64x256xf32>
    %c0_29 = arith.constant 0 : index
    %c0_30 = arith.constant 0 : index
    %c0_31 = arith.constant 0 : index
    %89 = vector.load %arg6[%c0_29, %c0_30, %c0_31] : memref<3x256x256xbf16, #tpu.memory_space<vmem>>, vector<1x256x256xbf16>
    %90 = vector.shape_cast %89 : vector<1x256x256xbf16> to vector<256x256xbf16>
    %c1 = arith.constant 1 : index
    %c0_32 = arith.constant 0 : index
    %c0_33 = arith.constant 0 : index
    %91 = vector.load %arg6[%c1, %c0_32, %c0_33] : memref<3x256x256xbf16, #tpu.memory_space<vmem>>, vector<1x256x256xbf16>
    %92 = vector.shape_cast %91 : vector<1x256x256xbf16> to vector<256x256xbf16>
    %c2 = arith.constant 2 : index
    %c0_34 = arith.constant 0 : index
    %c0_35 = arith.constant 0 : index
    %93 = vector.load %arg6[%c2, %c0_34, %c0_35] : memref<3x256x256xbf16, #tpu.memory_space<vmem>>, vector<1x256x256xbf16>
    %94 = vector.shape_cast %93 : vector<1x256x256xbf16> to vector<256x256xbf16>
    %95 = arith.truncf %36 : vector<64x256xf32> to vector<64x256xbf16>
    %cst_36 = arith.constant dense<0.000000e+00> : vector<64x256xf32>
    %96 = tpu.matmul %95, %90, %cst_36 {dimension_numbers = #tpu.dot_dimension_numbers<[1], [0], [0], [1], [0, 0, 1, 1], [], []>} : vector<64x256xbf16>, vector<256x256xbf16>, vector<64x256xf32> -> vector<64x256xf32>
    %97 = vector.extract_strided_slice %9 {offsets = [8, 0], sizes = [1, 256], strides = [1, 1]} : vector<13x256xf32> to vector<1x256xf32>
    %98 = vector.broadcast %97 : vector<1x256xf32> to vector<64x256xf32>
    %99 = arith.addf %96, %98 : vector<64x256xf32>
    %cst_37 = arith.constant 1.250000e-01 : f32
    %100 = vector.broadcast %cst_37 : f32 to vector<64x256xf32>
    %101 = arith.mulf %99, %100 : vector<64x256xf32>
    %102 = arith.truncf %62 : vector<64x256xf32> to vector<64x256xbf16>
    %cst_38 = arith.constant dense<0.000000e+00> : vector<64x256xf32>
    %103 = tpu.matmul %102, %92, %cst_38 {dimension_numbers = #tpu.dot_dimension_numbers<[1], [0], [0], [1], [0, 0, 1, 1], [], []>} : vector<64x256xbf16>, vector<256x256xbf16>, vector<64x256xf32> -> vector<64x256xf32>
    %104 = vector.extract_strided_slice %9 {offsets = [9, 0], sizes = [1, 256], strides = [1, 1]} : vector<13x256xf32> to vector<1x256xf32>
    %105 = vector.broadcast %104 : vector<1x256xf32> to vector<64x256xf32>
    %106 = arith.addf %103, %105 : vector<64x256xf32>
    %107 = arith.truncf %88 : vector<64x256xf32> to vector<64x256xbf16>
    %cst_39 = arith.constant dense<0.000000e+00> : vector<64x256xf32>
    %108 = tpu.matmul %107, %94, %cst_39 {dimension_numbers = #tpu.dot_dimension_numbers<[1], [0], [0], [1], [0, 0, 1, 1], [], []>} : vector<64x256xbf16>, vector<256x256xbf16>, vector<64x256xf32> -> vector<64x256xf32>
    %109 = vector.extract_strided_slice %9 {offsets = [10, 0], sizes = [1, 256], strides = [1, 1]} : vector<13x256xf32> to vector<1x256xf32>
    %110 = vector.broadcast %109 : vector<1x256xf32> to vector<64x256xf32>
    %111 = arith.addf %108, %110 : vector<64x256xf32>
    %112 = vector.shape_cast %101 : vector<64x256xf32> to vector<8x8x256xf32>
    %113 = vector.shape_cast %106 : vector<64x256xf32> to vector<8x8x256xf32>
    %114 = vector.shape_cast %111 : vector<64x256xf32> to vector<8x8x256xf32>
    %115 = vector.extract_strided_slice %112 {offsets = [0, 0, 0], sizes = [8, 8, 64], strides = [1, 1, 1]} : vector<8x8x256xf32> to vector<8x8x64xf32>
    %116 = arith.truncf %115 : vector<8x8x64xf32> to vector<8x8x64xbf16>
    %117 = vector.extract_strided_slice %113 {offsets = [0, 0, 0], sizes = [8, 8, 64], strides = [1, 1, 1]} : vector<8x8x256xf32> to vector<8x8x64xf32>
    %118 = arith.truncf %117 : vector<8x8x64xf32> to vector<8x8x64xbf16>
    %119 = vector.extract_strided_slice %114 {offsets = [0, 0, 0], sizes = [8, 8, 64], strides = [1, 1, 1]} : vector<8x8x256xf32> to vector<8x8x64xf32>
    %120 = arith.truncf %119 : vector<8x8x64xf32> to vector<8x8x64xbf16>
    "tpu.trace_start"() <{level = 10 : i32, message = "bqd,bkd->bqk"}> : () -> ()
    %cst_40 = arith.constant dense<0.000000e+00> : vector<8x8x8xf32>
    %121 = tpu.matmul %116, %118, %cst_40 {dimension_numbers = #tpu.dot_dimension_numbers<[2], [2], [1], [1], [0, 0, 0, 1, 1, 1], [0], [0]>} : vector<8x8x64xbf16>, vector<8x8x64xbf16>, vector<8x8x8xf32> -> vector<8x8x8xf32>
    "tpu.trace_stop"() : () -> ()
    %cst_41 = arith.constant dense<0xFF800000> : vector<8x8xf32>
    %122 = vector.multi_reduction <maximumf>, %121, %cst_41 [2] : vector<8x8x8xf32> to vector<8x8xf32>
    %123 = vector.shape_cast %122 : vector<8x8xf32> to vector<8x8x1xf32>
    %124 = vector.broadcast %123 : vector<8x8x1xf32> to vector<8x8x8xf32>
    %125 = arith.subf %121, %124 : vector<8x8x8xf32>
    %126 = math.exp %125 : vector<8x8x8xf32>
    %cst_42 = arith.constant dense<0.000000e+00> : vector<8x8xf32>
    %127 = vector.multi_reduction <add>, %126, %cst_42 [2] : vector<8x8x8xf32> to vector<8x8xf32>
    %128 = vector.shape_cast %127 : vector<8x8xf32> to vector<8x8x1xf32>
    %129 = tpu.reciprocal %128 {approx = true} : vector<8x8x1xf32> -> vector<8x8x1xf32>
    %130 = vector.broadcast %129 : vector<8x8x1xf32> to vector<8x8x8xf32>
    %131 = arith.mulf %126, %130 : vector<8x8x8xf32>
    %132 = arith.truncf %131 : vector<8x8x8xf32> to vector<8x8x8xbf16>
    "tpu.trace_start"() <{level = 10 : i32, message = "bqk,bkd->bqd"}> : () -> ()
    %cst_43 = arith.constant dense<0.000000e+00> : vector<8x8x64xf32>
    %133 = tpu.matmul %132, %120, %cst_43 {dimension_numbers = #tpu.dot_dimension_numbers<[2], [1], [1], [2], [0, 0, 0, 1, 1, 2], [0], [0]>} : vector<8x8x8xbf16>, vector<8x8x64xbf16>, vector<8x8x64xf32> -> vector<8x8x64xf32>
    "tpu.trace_stop"() : () -> ()
    %134 = vector.extract_strided_slice %112 {offsets = [0, 0, 64], sizes = [8, 8, 64], strides = [1, 1, 1]} : vector<8x8x256xf32> to vector<8x8x64xf32>
    %135 = arith.truncf %134 : vector<8x8x64xf32> to vector<8x8x64xbf16>
    %136 = vector.extract_strided_slice %113 {offsets = [0, 0, 64], sizes = [8, 8, 64], strides = [1, 1, 1]} : vector<8x8x256xf32> to vector<8x8x64xf32>
    %137 = arith.truncf %136 : vector<8x8x64xf32> to vector<8x8x64xbf16>
    %138 = vector.extract_strided_slice %114 {offsets = [0, 0, 64], sizes = [8, 8, 64], strides = [1, 1, 1]} : vector<8x8x256xf32> to vector<8x8x64xf32>
    %139 = arith.truncf %138 : vector<8x8x64xf32> to vector<8x8x64xbf16>
    "tpu.trace_start"() <{level = 10 : i32, message = "bqd,bkd->bqk"}> : () -> ()
    %cst_44 = arith.constant dense<0.000000e+00> : vector<8x8x8xf32>
    %140 = tpu.matmul %135, %137, %cst_44 {dimension_numbers = #tpu.dot_dimension_numbers<[2], [2], [1], [1], [0, 0, 0, 1, 1, 1], [0], [0]>} : vector<8x8x64xbf16>, vector<8x8x64xbf16>, vector<8x8x8xf32> -> vector<8x8x8xf32>
    "tpu.trace_stop"() : () -> ()
    %cst_45 = arith.constant dense<0xFF800000> : vector<8x8xf32>
    %141 = vector.multi_reduction <maximumf>, %140, %cst_45 [2] : vector<8x8x8xf32> to vector<8x8xf32>
    %142 = vector.shape_cast %141 : vector<8x8xf32> to vector<8x8x1xf32>
    %143 = vector.broadcast %142 : vector<8x8x1xf32> to vector<8x8x8xf32>
    %144 = arith.subf %140, %143 : vector<8x8x8xf32>
    %145 = math.exp %144 : vector<8x8x8xf32>
    %cst_46 = arith.constant dense<0.000000e+00> : vector<8x8xf32>
    %146 = vector.multi_reduction <add>, %145, %cst_46 [2] : vector<8x8x8xf32> to vector<8x8xf32>
    %147 = vector.shape_cast %146 : vector<8x8xf32> to vector<8x8x1xf32>
    %148 = tpu.reciprocal %147 {approx = true} : vector<8x8x1xf32> -> vector<8x8x1xf32>
    %149 = vector.broadcast %148 : vector<8x8x1xf32> to vector<8x8x8xf32>
    %150 = arith.mulf %145, %149 : vector<8x8x8xf32>
    %151 = arith.truncf %150 : vector<8x8x8xf32> to vector<8x8x8xbf16>
    "tpu.trace_start"() <{level = 10 : i32, message = "bqk,bkd->bqd"}> : () -> ()
    %cst_47 = arith.constant dense<0.000000e+00> : vector<8x8x64xf32>
    %152 = tpu.matmul %151, %139, %cst_47 {dimension_numbers = #tpu.dot_dimension_numbers<[2], [1], [1], [2], [0, 0, 0, 1, 1, 2], [0], [0]>} : vector<8x8x8xbf16>, vector<8x8x64xbf16>, vector<8x8x64xf32> -> vector<8x8x64xf32>
    "tpu.trace_stop"() : () -> ()
    %153 = vector.extract_strided_slice %112 {offsets = [0, 0, 128], sizes = [8, 8, 64], strides = [1, 1, 1]} : vector<8x8x256xf32> to vector<8x8x64xf32>
    %154 = arith.truncf %153 : vector<8x8x64xf32> to vector<8x8x64xbf16>
    %155 = vector.extract_strided_slice %113 {offsets = [0, 0, 128], sizes = [8, 8, 64], strides = [1, 1, 1]} : vector<8x8x256xf32> to vector<8x8x64xf32>
    %156 = arith.truncf %155 : vector<8x8x64xf32> to vector<8x8x64xbf16>
    %157 = vector.extract_strided_slice %114 {offsets = [0, 0, 128], sizes = [8, 8, 64], strides = [1, 1, 1]} : vector<8x8x256xf32> to vector<8x8x64xf32>
    %158 = arith.truncf %157 : vector<8x8x64xf32> to vector<8x8x64xbf16>
    "tpu.trace_start"() <{level = 10 : i32, message = "bqd,bkd->bqk"}> : () -> ()
    %cst_48 = arith.constant dense<0.000000e+00> : vector<8x8x8xf32>
    %159 = tpu.matmul %154, %156, %cst_48 {dimension_numbers = #tpu.dot_dimension_numbers<[2], [2], [1], [1], [0, 0, 0, 1, 1, 1], [0], [0]>} : vector<8x8x64xbf16>, vector<8x8x64xbf16>, vector<8x8x8xf32> -> vector<8x8x8xf32>
    "tpu.trace_stop"() : () -> ()
    %cst_49 = arith.constant dense<0xFF800000> : vector<8x8xf32>
    %160 = vector.multi_reduction <maximumf>, %159, %cst_49 [2] : vector<8x8x8xf32> to vector<8x8xf32>
    %161 = vector.shape_cast %160 : vector<8x8xf32> to vector<8x8x1xf32>
    %162 = vector.broadcast %161 : vector<8x8x1xf32> to vector<8x8x8xf32>
    %163 = arith.subf %159, %162 : vector<8x8x8xf32>
    %164 = math.exp %163 : vector<8x8x8xf32>
    %cst_50 = arith.constant dense<0.000000e+00> : vector<8x8xf32>
    %165 = vector.multi_reduction <add>, %164, %cst_50 [2] : vector<8x8x8xf32> to vector<8x8xf32>
    %166 = vector.shape_cast %165 : vector<8x8xf32> to vector<8x8x1xf32>
    %167 = tpu.reciprocal %166 {approx = true} : vector<8x8x1xf32> -> vector<8x8x1xf32>
    %168 = vector.broadcast %167 : vector<8x8x1xf32> to vector<8x8x8xf32>
    %169 = arith.mulf %164, %168 : vector<8x8x8xf32>
    %170 = arith.truncf %169 : vector<8x8x8xf32> to vector<8x8x8xbf16>
    "tpu.trace_start"() <{level = 10 : i32, message = "bqk,bkd->bqd"}> : () -> ()
    %cst_51 = arith.constant dense<0.000000e+00> : vector<8x8x64xf32>
    %171 = tpu.matmul %170, %158, %cst_51 {dimension_numbers = #tpu.dot_dimension_numbers<[2], [1], [1], [2], [0, 0, 0, 1, 1, 2], [0], [0]>} : vector<8x8x8xbf16>, vector<8x8x64xbf16>, vector<8x8x64xf32> -> vector<8x8x64xf32>
    "tpu.trace_stop"() : () -> ()
    %172 = vector.extract_strided_slice %112 {offsets = [0, 0, 192], sizes = [8, 8, 64], strides = [1, 1, 1]} : vector<8x8x256xf32> to vector<8x8x64xf32>
    %173 = arith.truncf %172 : vector<8x8x64xf32> to vector<8x8x64xbf16>
    %174 = vector.extract_strided_slice %113 {offsets = [0, 0, 192], sizes = [8, 8, 64], strides = [1, 1, 1]} : vector<8x8x256xf32> to vector<8x8x64xf32>
    %175 = arith.truncf %174 : vector<8x8x64xf32> to vector<8x8x64xbf16>
    %176 = vector.extract_strided_slice %114 {offsets = [0, 0, 192], sizes = [8, 8, 64], strides = [1, 1, 1]} : vector<8x8x256xf32> to vector<8x8x64xf32>
    %177 = arith.truncf %176 : vector<8x8x64xf32> to vector<8x8x64xbf16>
    "tpu.trace_start"() <{level = 10 : i32, message = "bqd,bkd->bqk"}> : () -> ()
    %cst_52 = arith.constant dense<0.000000e+00> : vector<8x8x8xf32>
    %178 = tpu.matmul %173, %175, %cst_52 {dimension_numbers = #tpu.dot_dimension_numbers<[2], [2], [1], [1], [0, 0, 0, 1, 1, 1], [0], [0]>} : vector<8x8x64xbf16>, vector<8x8x64xbf16>, vector<8x8x8xf32> -> vector<8x8x8xf32>
    "tpu.trace_stop"() : () -> ()
    %cst_53 = arith.constant dense<0xFF800000> : vector<8x8xf32>
    %179 = vector.multi_reduction <maximumf>, %178, %cst_53 [2] : vector<8x8x8xf32> to vector<8x8xf32>
    %180 = vector.shape_cast %179 : vector<8x8xf32> to vector<8x8x1xf32>
    %181 = vector.broadcast %180 : vector<8x8x1xf32> to vector<8x8x8xf32>
    %182 = arith.subf %178, %181 : vector<8x8x8xf32>
    %183 = math.exp %182 : vector<8x8x8xf32>
    %cst_54 = arith.constant dense<0.000000e+00> : vector<8x8xf32>
    %184 = vector.multi_reduction <add>, %183, %cst_54 [2] : vector<8x8x8xf32> to vector<8x8xf32>
    %185 = vector.shape_cast %184 : vector<8x8xf32> to vector<8x8x1xf32>
    %186 = tpu.reciprocal %185 {approx = true} : vector<8x8x1xf32> -> vector<8x8x1xf32>
    %187 = vector.broadcast %186 : vector<8x8x1xf32> to vector<8x8x8xf32>
    %188 = arith.mulf %183, %187 : vector<8x8x8xf32>
    %189 = arith.truncf %188 : vector<8x8x8xf32> to vector<8x8x8xbf16>
    "tpu.trace_start"() <{level = 10 : i32, message = "bqk,bkd->bqd"}> : () -> ()
    %cst_55 = arith.constant dense<0.000000e+00> : vector<8x8x64xf32>
    %190 = tpu.matmul %189, %177, %cst_55 {dimension_numbers = #tpu.dot_dimension_numbers<[2], [1], [1], [2], [0, 0, 0, 1, 1, 2], [0], [0]>} : vector<8x8x8xbf16>, vector<8x8x64xbf16>, vector<8x8x64xf32> -> vector<8x8x64xf32>
    "tpu.trace_stop"() : () -> ()
    %191 = tpu.concatenate %133, %152, %171, %190 in 2 : vector<8x8x64xf32>, vector<8x8x64xf32>, vector<8x8x64xf32>, vector<8x8x64xf32> -> vector<8x8x256xf32>
    %192 = vector.shape_cast %191 : vector<8x8x256xf32> to vector<64x256xf32>
    %193 = arith.truncf %192 : vector<64x256xf32> to vector<64x256xbf16>
    %c0_56 = arith.constant 0 : index
    %c0_57 = arith.constant 0 : index
    %194 = vector.load %arg7[%c0_56, %c0_57] : memref<256x256xbf16, #tpu.memory_space<vmem>>, vector<256x256xbf16>
    %cst_58 = arith.constant dense<0.000000e+00> : vector<64x256xf32>
    %195 = tpu.matmul %193, %194, %cst_58 {dimension_numbers = #tpu.dot_dimension_numbers<[1], [0], [0], [1], [0, 0, 1, 1], [], []>} : vector<64x256xbf16>, vector<256x256xbf16>, vector<64x256xf32> -> vector<64x256xf32>
    %196 = vector.extract_strided_slice %9 {offsets = [11, 0], sizes = [1, 256], strides = [1, 1]} : vector<13x256xf32> to vector<1x256xf32>
    %197 = vector.broadcast %196 : vector<1x256xf32> to vector<64x256xf32>
    %198 = arith.addf %195, %197 : vector<64x256xf32>
    %199 = arith.addf %36, %198 : vector<64x256xf32>
    %200 = vector.extract_strided_slice %9 {offsets = [6, 0], sizes = [1, 256], strides = [1, 1]} : vector<13x256xf32> to vector<1x256xf32>
    %201 = vector.extract_strided_slice %9 {offsets = [7, 0], sizes = [1, 256], strides = [1, 1]} : vector<13x256xf32> to vector<1x256xf32>
    %cst_59 = arith.constant dense<0.000000e+00> : vector<64xf32>
    %202 = vector.multi_reduction <add>, %199, %cst_59 [1] : vector<64x256xf32> to vector<64xf32>
    %203 = vector.shape_cast %202 : vector<64xf32> to vector<64x1xf32>
    %cst_60 = arith.constant 2.560000e+02 : f32
    %204 = vector.broadcast %cst_60 : f32 to vector<64x1xf32>
    %205 = arith.divf %203, %204 : vector<64x1xf32>
    %206 = arith.mulf %199, %199 : vector<64x256xf32>
    %cst_61 = arith.constant dense<0.000000e+00> : vector<64xf32>
    %207 = vector.multi_reduction <add>, %206, %cst_61 [1] : vector<64x256xf32> to vector<64xf32>
    %208 = vector.shape_cast %207 : vector<64xf32> to vector<64x1xf32>
    %cst_62 = arith.constant 2.560000e+02 : f32
    %209 = vector.broadcast %cst_62 : f32 to vector<64x1xf32>
    %210 = arith.divf %208, %209 : vector<64x1xf32>
    %211 = arith.mulf %205, %205 : vector<64x1xf32>
    %212 = arith.subf %210, %211 : vector<64x1xf32>
    %cst_63 = arith.constant 0.000000e+00 : f32
    %213 = vector.broadcast %cst_63 : f32 to vector<64x1xf32>
    %214 = arith.maximumf %212, %213 : vector<64x1xf32>
    %215 = vector.broadcast %205 : vector<64x1xf32> to vector<64x256xf32>
    %216 = arith.subf %199, %215 : vector<64x256xf32>
    %cst_64 = arith.constant 9.99999974E-6 : f32
    %217 = vector.broadcast %cst_64 : f32 to vector<64x1xf32>
    %218 = arith.addf %214, %217 : vector<64x1xf32>
    %219 = math.rsqrt %218 : vector<64x1xf32>
    %220 = vector.broadcast %219 : vector<64x1xf32> to vector<64x256xf32>
    %221 = arith.mulf %216, %220 : vector<64x256xf32>
    %222 = vector.broadcast %200 : vector<1x256xf32> to vector<64x256xf32>
    %223 = arith.mulf %221, %222 : vector<64x256xf32>
    %224 = vector.broadcast %201 : vector<1x256xf32> to vector<64x256xf32>
    %225 = arith.addf %223, %224 : vector<64x256xf32>
    %226 = arith.truncf %225 : vector<64x256xf32> to vector<64x256xbf16>
    %c0_65 = arith.constant 0 : index
    %c0_66 = arith.constant 0 : index
    %227 = vector.load %arg8[%c0_65, %c0_66] : memref<256x128xbf16, #tpu.memory_space<vmem>>, vector<256x128xbf16>
    %cst_67 = arith.constant dense<0.000000e+00> : vector<64x128xf32>
    %228 = tpu.matmul %226, %227, %cst_67 {dimension_numbers = #tpu.dot_dimension_numbers<[1], [0], [0], [1], [0, 0, 1, 1], [], []>} : vector<64x256xbf16>, vector<256x128xbf16>, vector<64x128xf32> -> vector<64x128xf32>
    %229 = vector.extract_strided_slice %10 {offsets = [2, 0], sizes = [1, 128], strides = [1, 1]} : vector<3x128xf32> to vector<1x128xf32>
    %230 = vector.broadcast %229 : vector<1x128xf32> to vector<64x128xf32>
    %231 = arith.addf %228, %230 : vector<64x128xf32>
    %232 = arith.mulf %231, %231 : vector<64x128xf32>
    %233 = arith.mulf %231, %232 : vector<64x128xf32>
    %cst_68 = arith.constant 4.471500e-02 : f32
    %234 = vector.broadcast %cst_68 : f32 to vector<64x128xf32>
    %235 = arith.mulf %234, %233 : vector<64x128xf32>
    %236 = arith.addf %231, %235 : vector<64x128xf32>
    %cst_69 = arith.constant 0.797884583 : f32
    %237 = vector.broadcast %cst_69 : f32 to vector<64x128xf32>
    %238 = arith.mulf %237, %236 : vector<64x128xf32>
    %239 = math.tanh %238 : vector<64x128xf32>
    %cst_70 = arith.constant 1.000000e+00 : f32
    %240 = vector.broadcast %cst_70 : f32 to vector<64x128xf32>
    %241 = arith.addf %240, %239 : vector<64x128xf32>
    %cst_71 = arith.constant 5.000000e-01 : f32
    %242 = vector.broadcast %cst_71 : f32 to vector<64x128xf32>
    %243 = arith.mulf %242, %241 : vector<64x128xf32>
    %244 = arith.mulf %231, %243 : vector<64x128xf32>
    %245 = vector.extract_strided_slice %10 {offsets = [0, 0], sizes = [1, 128], strides = [1, 1]} : vector<3x128xf32> to vector<1x128xf32>
    %246 = vector.extract_strided_slice %10 {offsets = [1, 0], sizes = [1, 128], strides = [1, 1]} : vector<3x128xf32> to vector<1x128xf32>
    %cst_72 = arith.constant dense<0.000000e+00> : vector<64xf32>
    %247 = vector.multi_reduction <add>, %244, %cst_72 [1] : vector<64x128xf32> to vector<64xf32>
    %248 = vector.shape_cast %247 : vector<64xf32> to vector<64x1xf32>
    %cst_73 = arith.constant 1.280000e+02 : f32
    %249 = vector.broadcast %cst_73 : f32 to vector<64x1xf32>
    %250 = arith.divf %248, %249 : vector<64x1xf32>
    %251 = arith.mulf %244, %244 : vector<64x128xf32>
    %cst_74 = arith.constant dense<0.000000e+00> : vector<64xf32>
    %252 = vector.multi_reduction <add>, %251, %cst_74 [1] : vector<64x128xf32> to vector<64xf32>
    %253 = vector.shape_cast %252 : vector<64xf32> to vector<64x1xf32>
    %cst_75 = arith.constant 1.280000e+02 : f32
    %254 = vector.broadcast %cst_75 : f32 to vector<64x1xf32>
    %255 = arith.divf %253, %254 : vector<64x1xf32>
    %256 = arith.mulf %250, %250 : vector<64x1xf32>
    %257 = arith.subf %255, %256 : vector<64x1xf32>
    %cst_76 = arith.constant 0.000000e+00 : f32
    %258 = vector.broadcast %cst_76 : f32 to vector<64x1xf32>
    %259 = arith.maximumf %257, %258 : vector<64x1xf32>
    %260 = vector.broadcast %250 : vector<64x1xf32> to vector<64x128xf32>
    %261 = arith.subf %244, %260 : vector<64x128xf32>
    %cst_77 = arith.constant 9.99999974E-6 : f32
    %262 = vector.broadcast %cst_77 : f32 to vector<64x1xf32>
    %263 = arith.addf %259, %262 : vector<64x1xf32>
    %264 = math.rsqrt %263 : vector<64x1xf32>
    %265 = vector.broadcast %264 : vector<64x1xf32> to vector<64x128xf32>
    %266 = arith.mulf %261, %265 : vector<64x128xf32>
    %267 = vector.broadcast %245 : vector<1x128xf32> to vector<64x128xf32>
    %268 = arith.mulf %266, %267 : vector<64x128xf32>
    %269 = vector.broadcast %246 : vector<1x128xf32> to vector<64x128xf32>
    %270 = arith.addf %268, %269 : vector<64x128xf32>
    %271 = arith.truncf %270 : vector<64x128xf32> to vector<64x128xbf16>
    %c0_78 = arith.constant 0 : index
    %c0_79 = arith.constant 0 : index
    %272 = vector.load %arg9[%c0_78, %c0_79] : memref<128x256xbf16, #tpu.memory_space<vmem>>, vector<128x256xbf16>
    %cst_80 = arith.constant dense<0.000000e+00> : vector<64x256xf32>
    %273 = tpu.matmul %271, %272, %cst_80 {dimension_numbers = #tpu.dot_dimension_numbers<[1], [0], [0], [1], [0, 0, 1, 1], [], []>} : vector<64x128xbf16>, vector<128x256xbf16>, vector<64x256xf32> -> vector<64x256xf32>
    %274 = vector.extract_strided_slice %9 {offsets = [12, 0], sizes = [1, 256], strides = [1, 1]} : vector<13x256xf32> to vector<1x256xf32>
    %275 = vector.broadcast %274 : vector<1x256xf32> to vector<64x256xf32>
    %276 = arith.addf %273, %275 : vector<64x256xf32>
    %277 = arith.mulf %276, %276 : vector<64x256xf32>
    %278 = arith.mulf %276, %277 : vector<64x256xf32>
    %cst_81 = arith.constant 4.471500e-02 : f32
    %279 = vector.broadcast %cst_81 : f32 to vector<64x256xf32>
    %280 = arith.mulf %279, %278 : vector<64x256xf32>
    %281 = arith.addf %276, %280 : vector<64x256xf32>
    %cst_82 = arith.constant 0.797884583 : f32
    %282 = vector.broadcast %cst_82 : f32 to vector<64x256xf32>
    %283 = arith.mulf %282, %281 : vector<64x256xf32>
    %284 = math.tanh %283 : vector<64x256xf32>
    %cst_83 = arith.constant 1.000000e+00 : f32
    %285 = vector.broadcast %cst_83 : f32 to vector<64x256xf32>
    %286 = arith.addf %285, %284 : vector<64x256xf32>
    %cst_84 = arith.constant 5.000000e-01 : f32
    %287 = vector.broadcast %cst_84 : f32 to vector<64x256xf32>
    %288 = arith.mulf %287, %286 : vector<64x256xf32>
    %289 = arith.mulf %276, %288 : vector<64x256xf32>
    %290 = arith.addf %225, %289 : vector<64x256xf32>
    %291 = vector.shape_cast %290 : vector<64x256xf32> to vector<8x8x256xf32>
    %c0_85 = arith.constant 0 : index
    %c0_86 = arith.constant 0 : index
    %c0_87 = arith.constant 0 : index
    %292 = vector.load %arg10[%c0_85, %c0_86, %c0_87] : memref<8x8x256xf32, #tpu.memory_space<vmem>>, vector<8x8x256xf32>
    tpu.vector_store %arg10[%c0_85, %c0_86, %c0_87], %291 {strides = array<i32>} : memref<8x8x256xf32, #tpu.memory_space<vmem>>, vector<8x8x256xf32>,
    return
  }
  func.func @transform_0(%arg0: i32) -> (i32, i32, i32) {
    %c0_i32 = arith.constant 0 : i32
    %c0_i32_0 = arith.constant 0 : i32
    %c0_i32_1 = arith.constant 0 : i32
    return %arg0, %c0_i32, %c0_i32_0 : i32, i32, i32
  }
  func.func @transform_1(%arg0: i32) -> (i32, i32, i32) {
    %c0_i32 = arith.constant 0 : i32
    %c0_i32_0 = arith.constant 0 : i32
    %c0_i32_1 = arith.constant 0 : i32
    return %arg0, %c0_i32, %c0_i32_0 : i32, i32, i32
  }
  func.func @transform_2(%arg0: i32) -> (i32, i32, i32) {
    %c0_i32 = arith.constant 0 : i32
    %c0_i32_0 = arith.constant 0 : i32
    %c0_i32_1 = arith.constant 0 : i32
    return %arg0, %c0_i32, %c0_i32_0 : i32, i32, i32
  }
  func.func @transform_3(%arg0: i32) -> (i32, i32) {
    %c0_i32 = arith.constant 0 : i32
    %c0_i32_0 = arith.constant 0 : i32
    %c0_i32_1 = arith.constant 0 : i32
    return %c0_i32, %c0_i32_0 : i32, i32
  }
  func.func @transform_4(%arg0: i32) -> (i32, i32) {
    %c0_i32 = arith.constant 0 : i32
    %c0_i32_0 = arith.constant 0 : i32
    %c0_i32_1 = arith.constant 0 : i32
    return %c0_i32, %c0_i32_0 : i32, i32
  }
  func.func @transform_5(%arg0: i32) -> (i32, i32, i32) {
    %c0_i32 = arith.constant 0 : i32
    %c0_i32_0 = arith.constant 0 : i32
    %c0_i32_1 = arith.constant 0 : i32
    %c0_i32_2 = arith.constant 0 : i32
    return %c0_i32, %c0_i32_0, %c0_i32_1 : i32, i32, i32
  }
  func.func @transform_6(%arg0: i32) -> (i32, i32) {
    %c0_i32 = arith.constant 0 : i32
    %c0_i32_0 = arith.constant 0 : i32
    %c0_i32_1 = arith.constant 0 : i32
    return %c0_i32, %c0_i32_0 : i32, i32
  }
  func.func @transform_7(%arg0: i32) -> (i32, i32) {
    %c0_i32 = arith.constant 0 : i32
    %c0_i32_0 = arith.constant 0 : i32
    %c0_i32_1 = arith.constant 0 : i32
    return %c0_i32, %c0_i32_0 : i32, i32
  }
  func.func @transform_8(%arg0: i32) -> (i32, i32) {
    %c0_i32 = arith.constant 0 : i32
    %c0_i32_0 = arith.constant 0 : i32
    %c0_i32_1 = arith.constant 0 : i32
    return %c0_i32, %c0_i32_0 : i32, i32
  }
  func.func @transform_9(%arg0: i32) -> (i32, i32, i32) {
    %c0_i32 = arith.constant 0 : i32
    %c0_i32_0 = arith.constant 0 : i32
    %c0_i32_1 = arith.constant 0 : i32
    return %arg0, %c0_i32, %c0_i32_0 : i32, i32, i32
  }
}

</mosaic_0001>

<llo_original>
// kernel: tpu_custom_call.1
$region0: #{tpu_custom_call.1}
  #allocation0 [shape = 'u32[]', space=smem, size = 0x4, offset = 0x4, fixed_abs, tag = 'smem constant byte address 0x4 - core index']
  #allocation1 [shape = 'u32[144,128]{1,0:T(1,128)}', space=vmem, size = 0x12000, scoped, tag = 'internal scratch']
  %s0 = inlined_call_operand.hbm [shape: bf16[8,8,256], index: 0, kind: input, shape index: {}]
  %s1 = inlined_call_operand.hbm [shape: bf16[8,8,256], index: 1, kind: input, shape index: {}]
  %s2 = inlined_call_operand.hbm [shape: bf16[8,8,256], index: 2, kind: input, shape index: {}]
  %s3 = inlined_call_operand.hbm [shape: f32[13,256], index: 3, kind: input, shape index: {}]
  %s4 = inlined_call_operand.vmem [shape: f32[3,128], index: 4, kind: input, shape index: {}]
  %s5 = inlined_call_operand.hbm [shape: bf16[3,256,256], index: 5, kind: input, shape index: {}]
  %s6 = inlined_call_operand.hbm [shape: bf16[256,256], index: 6, kind: input, shape index: {}]
  %s7 = inlined_call_operand.hbm [shape: bf16[256,128], index: 7, kind: input, shape index: {}]
  %s8 = inlined_call_operand.hbm [shape: bf16[128,256], index: 8, kind: input, shape index: {}]
  %s9 = inlined_call_operand.hbm [shape: f32[8,8,256], index: 9, kind: output, shape index: {}]
  %s10 = sld [smem:[#allocation0]]
  $region78: #{tpu_custom_call.1} parent=0
    _
  %s12 = ssub.s32 1, %s10
  %s13 = scalar_select 0, %s12, %s10
  $region1: #{tpu_custom_call.1} parent=0
    #allocation2 [shape = 'u8[32768]{0}', space=vmem, size = 0x8000, scoped, tag = 'input window, operand 0, single buffered']
    #allocation3 [shape = 's32[1]{0}', space=sflag, size = 0x4, scoped, tag = 'scoped memory for tpu_custom_call.1']
    #allocation4 [shape = 's32[1]{0}', space=sflag, size = 0x4, scoped, tag = 'scoped memory for tpu_custom_call.1']
    #allocation5 [shape = 'u8[32768]{0}', space=vmem, size = 0x8000, scoped, tag = 'input window, operand 1, single buffered']
    #allocation6 [shape = 's32[1]{0}', space=sflag, size = 0x4, scoped, tag = 'scoped memory for tpu_custom_call.1']
    #allocation7 [shape = 'u8[32768]{0}', space=vmem, size = 0x8000, scoped, tag = 'input window, operand 2, single buffered']
    #allocation8 [shape = 'u8[16384]{0}', space=vmem, size = 0x4000, scoped, tag = 'input window, operand 3, single buffered']
    #allocation9 [shape = 's32[1]{0}', space=sflag, size = 0x4, scoped, tag = 'scoped memory for tpu_custom_call.1']
    #allocation10 [shape = 'u8[393216]{0}', space=vmem, size = 0x60000, scoped, tag = 'input window, operand 5, single buffered']
    #allocation11 [shape = 'u8[131072]{0}', space=vmem, size = 0x20000, scoped, tag = 'input window, operand 6, single buffered']
    #allocation12 [shape = 's32[1]{0}', space=sflag, size = 0x4, scoped, tag = 'scoped memory for tpu_custom_call.1']
    #allocation13 [shape = 'u8[65536]{0}', space=vmem, size = 0x10000, scoped, tag = 'input window, operand 7, single buffered']
    #allocation14 [shape = 'u8[65536]{0}', space=vmem, size = 0x10000, scoped, tag = 'input window, operand 8, single buffered']
    #allocation15 [shape = 's32[1]{0}', space=sflag, size = 0x4, scoped, tag = 'scoped memory for tpu_custom_call.1']
    #allocation16 [shape = 'u8[65536]{0}', space=vmem, size = 0x10000, scoped, tag = 'output window, operand 0, single buffered']
    %14 = vsyncpa [#allocation3], 0
    %15 = vsyncpa [#allocation6], 0
    %16 = vsyncpa [#allocation9], 0
    %17 = vsyncpa [#allocation12], 0
    %18 = vsyncpa [#allocation15], 0
    %19 = vsyncpa [#allocation4], 0
    // Predicated region
    $region2: #{tpu_custom_call.1} parent=1 // pred_check
      _
    $region3: #{tpu_custom_call.1} parent=1 // pred_check_branch
      %21 = sbr.rel (0) target = $region5
    $region4: #{tpu_custom_call.1} parent=1 // pred_region
      %s23 = ssub.s32 1024, 1024
      %24 = vsyncadd [#allocation3], %s23
      %s25 = sshll.u32 [#allocation2], 4
      %s26 = int_to_ptr.vmem [resolvable:$true] %s25
      %31 = dma.hbm_to_vmem [thread:$0]  %s0, 1024, %s26, [#allocation3], 128, 128, 8
    $region5: #{tpu_custom_call.1} parent=1 // pred_fallthru
      _
    // Predicated region
    $region6: #{tpu_custom_call.1} parent=1 // pred_check
      _
    $region7: #{tpu_custom_call.1} parent=1 // pred_check_branch
      %33 = sbr.rel (0) target = $region9
    $region8: #{tpu_custom_call.1} parent=1 // pred_region
      %s35 = ssub.s32 1024, 1024
      %36 = vsyncadd [#allocation6], %s35
      %s37 = sshll.u32 [#allocation5], 4
      %s38 = int_to_ptr.vmem [resolvable:$true] %s37
      %43 = dma.hbm_to_vmem [thread:$0]  %s1, 1024, %s38, [#allocation6], 128, 128, 8
    $region9: #{tpu_custom_call.1} parent=1 // pred_fallthru
      _
    // Predicated region
    $region10: #{tpu_custom_call.1} parent=1 // pred_check
      _
    $region11: #{tpu_custom_call.1} parent=1 // pred_check_branch
      %45 = sbr.rel (0) target = $region13
    $region12: #{tpu_custom_call.1} parent=1 // pred_region
      %s47 = ssub.s32 1024, 1024
      %48 = vsyncadd [#allocation6], %s47
      %s49 = sshll.u32 [#allocation7], 4
      %s50 = int_to_ptr.vmem [resolvable:$true] %s49
      %55 = dma.hbm_to_vmem [thread:$0]  %s2, 1024, %s50, [#allocation6], 128, 128, 8
    $region13: #{tpu_custom_call.1} parent=1 // pred_fallthru
      _
    // Predicated region
    $region14: #{tpu_custom_call.1} parent=1 // pred_check
      _
    $region15: #{tpu_custom_call.1} parent=1 // pred_check_branch
      %57 = sbr.rel (0) target = $region17
    $region16: #{tpu_custom_call.1} parent=1 // pred_region
      %s59 = ssub.s32 512, 512
      %60 = vsyncadd [#allocation9], %s59
      %s61 = sshll.u32 [#allocation8], 4
      %s62 = int_to_ptr.vmem [resolvable:$true] %s61
      %67 = dma.hbm_to_vmem [thread:$0]  %s3, 512, %s62, [#allocation9], 256, 256, 16
    $region17: #{tpu_custom_call.1} parent=1 // pred_fallthru
      _
    // Predicated region
    $region18: #{tpu_custom_call.1} parent=1 // pred_check
      _
    $region19: #{tpu_custom_call.1} parent=1 // pred_check_branch
      %69 = sbr.rel (0) target = $region21
    $region20: #{tpu_custom_call.1} parent=1 // pred_region
      _
    $region21: #{tpu_custom_call.1} parent=1 // pred_fallthru
      _
    // Predicated region
    $region22: #{tpu_custom_call.1} parent=1 // pred_check
      _
    $region23: #{tpu_custom_call.1} parent=1 // pred_check_branch
      %71 = sbr.rel (0) target = $region25
    $region24: #{tpu_custom_call.1} parent=1 // pred_region
      %s73 = ssub.s32 12288, 12288
      %74 = vsyncadd [#allocation9], %s73
      %s75 = sshll.u32 [#allocation10], 4
      %s76 = int_to_ptr.vmem [resolvable:$true] %s75
      %81 = dma.hbm_to_vmem [thread:$0]  %s5, 12288, %s76, [#allocation9], 128, 128, 8
    $region25: #{tpu_custom_call.1} parent=1 // pred_fallthru
      _
    // Predicated region
    $region26: #{tpu_custom_call.1} parent=1 // pred_check
      _
    $region27: #{tpu_custom_call.1} parent=1 // pred_check_branch
      %83 = sbr.rel (0) target = $region29
    $region28: #{tpu_custom_call.1} parent=1 // pred_region
      %s85 = ssub.s32 4096, 4096
      %86 = vsyncadd [#allocation12], %s85
      %s87 = sshll.u32 [#allocation11], 4
      %s88 = int_to_ptr.vmem [resolvable:$true] %s87
      %93 = dma.hbm_to_vmem [thread:$0]  %s6, 4096, %s88, [#allocation12], 128, 128, 8
    $region29: #{tpu_custom_call.1} parent=1 // pred_fallthru
      _
    // Predicated region
    $region30: #{tpu_custom_call.1} parent=1 // pred_check
      _
    $region31: #{tpu_custom_call.1} parent=1 // pred_check_branch
      %95 = sbr.rel (0) target = $region33
    $region32: #{tpu_custom_call.1} parent=1 // pred_region
      %s97 = ssub.s32 2048, 2048
      %98 = vsyncadd [#allocation12], %s97
      %s99 = sshll.u32 [#allocation13], 4
      %s100 = int_to_ptr.vmem [resolvable:$true] %s99
      %105 = dma.hbm_to_vmem [thread:$0]  %s7, 2048, %s100, [#allocation12], 64, 64, 4
    $region33: #{tpu_custom_call.1} parent=1 // pred_fallthru
      _
    // Predicated region
    $region34: #{tpu_custom_call.1} parent=1 // pred_check
      _
    $region35: #{tpu_custom_call.1} parent=1 // pred_check_branch
      %107 = sbr.rel (0) target = $region37
    $region36: #{tpu_custom_call.1} parent=1 // pred_region
      %s109 = ssub.s32 2048, 2048
      %110 = vsyncadd [#allocation15], %s109
      %s111 = sshll.u32 [#allocation14], 4
      %s112 = int_to_ptr.vmem [resolvable:$true] %s111
      %117 = dma.hbm_to_vmem [thread:$0]  %s8, 2048, %s112, [#allocation15], 128, 128, 8
    $region37: #{tpu_custom_call.1} parent=1 // pred_fallthru
      _
    // Predicated region
    $region38: #{tpu_custom_call.1} parent=1 // pred_check
      _
    $region39: #{tpu_custom_call.1} parent=1 // pred_check_branch
      %119 = sbr.rel (0) target = $region41
    $region40: #{tpu_custom_call.1} parent=1 // pred_region
      %120 = dma.done [#allocation3], 1024
    $region41: #{tpu_custom_call.1} parent=1 // pred_fallthru
      _
    // Predicated region
    $region42: #{tpu_custom_call.1} parent=1 // pred_check
      _
    $region43: #{tpu_custom_call.1} parent=1 // pred_check_branch
      %122 = sbr.rel (0) target = $region45
    $region44: #{tpu_custom_call.1} parent=1 // pred_region
      %123 = dma.done [#allocation6], 1024
    $region45: #{tpu_custom_call.1} parent=1 // pred_fallthru
      _
    // Predicated region
    $region46: #{tpu_custom_call.1} parent=1 // pred_check
      _
    $region47: #{tpu_custom_call.1} parent=1 // pred_check_branch
      %125 = sbr.rel (0) target = $region49
    $region48: #{tpu_custom_call.1} parent=1 // pred_region
      %126 = dma.done [#allocation6], 1024
    $region49: #{tpu_custom_call.1} parent=1 // pred_fallthru
      _
    // Predicated region
    $region50: #{tpu_custom_call.1} parent=1 // pred_check
      _
    $region51: #{tpu_custom_call.1} parent=1 // pred_check_branch
      %128 = sbr.rel (0) target = $region53
    $region52: #{tpu_custom_call.1} parent=1 // pred_region
      %129 = dma.done [#allocation9], 512
    $region53: #{tpu_custom_call.1} parent=1 // pred_fallthru
      _
    // Predicated region
    $region54: #{tpu_custom_call.1} parent=1 // pred_check
      _
    $region55: #{tpu_custom_call.1} parent=1 // pred_check_branch
      %131 = sbr.rel (0) target = $region57
    $region56: #{tpu_custom_call.1} parent=1 // pred_region
      %132 = dma.done [#allocation9], 12288
    $region57: #{tpu_custom_call.1} parent=1 // pred_fallthru
      _
    // Predicated region
    $region58: #{tpu_custom_call.1} parent=1 // pred_check
      _
    $region59: #{tpu_custom_call.1} parent=1 // pred_check_branch
      %134 = sbr.rel (0) target = $region61
    $region60: #{tpu_custom_call.1} parent=1 // pred_region
      %135 = dma.done [#allocation12], 4096
    $region61: #{tpu_custom_call.1} parent=1 // pred_fallthru
      _
    // Predicated region
    $region62: #{tpu_custom_call.1} parent=1 // pred_check
      _
    $region63: #{tpu_custom_call.1} parent=1 // pred_check_branch
      %137 = sbr.rel (0) target = $region65
    $region64: #{tpu_custom_call.1} parent=1 // pred_region
      %138 = dma.done [#allocation12], 2048
    $region65: #{tpu_custom_call.1} parent=1 // pred_fallthru
      _
    // Predicated region
    $region66: #{tpu_custom_call.1} parent=1 // pred_check
      _
    $region67: #{tpu_custom_call.1} parent=1 // pred_check_branch
      %140 = sbr.rel (0) target = $region69
    $region68: #{tpu_custom_call.1} parent=1 // pred_region
      %141 = dma.done [#allocation15], 2048
    $region69: #{tpu_custom_call.1} parent=1 // pred_fallthru
      _
    %v143 = vld [vmem:[#allocation2] sm:$0xff]
    %v144 = vld [vmem:[#allocation2 + $0x8] sm:$0xff]
    %v145 = vld [vmem:[#allocation2 + $0x10] sm:$0xff]
    %v146 = vld [vmem:[#allocation2 + $0x18] sm:$0xff]
    %v147 = vld [vmem:[#allocation2 + $0x20] sm:$0xff]
    %v148 = vld [vmem:[#allocation2 + $0x28] sm:$0xff]
    %v149 = vld [vmem:[#allocation2 + $0x30] sm:$0xff]
    %v150 = vld [vmem:[#allocation2 + $0x38] sm:$0xff]
    %v151 = vunpack.c.l.bf16 %v143
    %v152 = vunpack.c.h.bf16 %v143
    %v153 = vunpack.c.l.bf16 %v144
    %v154 = vunpack.c.h.bf16 %v144
    %v155 = vunpack.c.l.bf16 %v145
    %v156 = vunpack.c.h.bf16 %v145
    %v157 = vunpack.c.l.bf16 %v146
    %v158 = vunpack.c.h.bf16 %v146
    %v159 = vunpack.c.l.bf16 %v147
    %v160 = vunpack.c.h.bf16 %v147
    %v161 = vunpack.c.l.bf16 %v148
    %v162 = vunpack.c.h.bf16 %v148
    %v163 = vunpack.c.l.bf16 %v149
    %v164 = vunpack.c.h.bf16 %v149
    %v165 = vunpack.c.l.bf16 %v150
    %v166 = vunpack.c.h.bf16 %v150
    %v167 = vld [vmem:[#allocation5] sm:$0xff]
    %v168 = vld [vmem:[#allocation5 + $0x8] sm:$0xff]
    %v169 = vld [vmem:[#allocation5 + $0x10] sm:$0xff]
    %v170 = vld [vmem:[#allocation5 + $0x18] sm:$0xff]
    %v171 = vld [vmem:[#allocation5 + $0x20] sm:$0xff]
    %v172 = vld [vmem:[#allocation5 + $0x28] sm:$0xff]
    %v173 = vld [vmem:[#allocation5 + $0x30] sm:$0xff]
    %v174 = vld [vmem:[#allocation5 + $0x38] sm:$0xff]
    %v175 = vunpack.c.l.bf16 %v167
    %v176 = vunpack.c.h.bf16 %v167
    %v177 = vunpack.c.l.bf16 %v168
    %v178 = vunpack.c.h.bf16 %v168
    %v179 = vunpack.c.l.bf16 %v169
    %v180 = vunpack.c.h.bf16 %v169
    %v181 = vunpack.c.l.bf16 %v170
    %v182 = vunpack.c.h.bf16 %v170
    %v183 = vunpack.c.l.bf16 %v171
    %v184 = vunpack.c.h.bf16 %v171
    %v185 = vunpack.c.l.bf16 %v172
    %v186 = vunpack.c.h.bf16 %v172
    %v187 = vunpack.c.l.bf16 %v173
    %v188 = vunpack.c.h.bf16 %v173
    %v189 = vunpack.c.l.bf16 %v174
    %v190 = vunpack.c.h.bf16 %v174
    %v191 = vld [vmem:[#allocation7] sm:$0xff]
    %v192 = vld [vmem:[#allocation7 + $0x8] sm:$0xff]
    %v193 = vld [vmem:[#allocation7 + $0x10] sm:$0xff]
    %v194 = vld [vmem:[#allocation7 + $0x18] sm:$0xff]
    %v195 = vld [vmem:[#allocation7 + $0x20] sm:$0xff]
    %v196 = vld [vmem:[#allocation7 + $0x28] sm:$0xff]
    %v197 = vld [vmem:[#allocation7 + $0x30] sm:$0xff]
    %v198 = vld [vmem:[#allocation7 + $0x38] sm:$0xff]
    %v199 = vunpack.c.l.bf16 %v191
    %v200 = vunpack.c.h.bf16 %v191
    %v201 = vunpack.c.l.bf16 %v192
    %v202 = vunpack.c.h.bf16 %v192
    %v203 = vunpack.c.l.bf16 %v193
    %v204 = vunpack.c.h.bf16 %v193
    %v205 = vunpack.c.l.bf16 %v194
    %v206 = vunpack.c.h.bf16 %v194
    %v207 = vunpack.c.l.bf16 %v195
    %v208 = vunpack.c.h.bf16 %v195
    %v209 = vunpack.c.l.bf16 %v196
    %v210 = vunpack.c.h.bf16 %v196
    %v211 = vunpack.c.l.bf16 %v197
    %v212 = vunpack.c.h.bf16 %v197
    %v213 = vunpack.c.l.bf16 %v198
    %v214 = vunpack.c.h.bf16 %v198
    %v215 = vld [vmem:[#allocation8] sm:$0xff]
    %v216 = vld [vmem:[#allocation8 + $0x8] sm:$0xff]
    %v217 = vld [vmem:[#allocation8 + $0x10] sm:$0x1f]
    %v218 = vld [vmem:[#allocation8 + $0x18] sm:$0x1f]
    %v219 = vld [vmem:[%s4] sm:$0x7]
    %v220 = vadd.f32 %v151, %v152
    %221 = vadd.xlane.f32.xlu0 %v220
    %v222 = vpop.xlane.xlu0 %221
    %v223 = vadd.f32 %v153, %v154
    %224 = vadd.xlane.f32.xlu0 %v223
    %v225 = vpop.xlane.xlu0 %224
    %v226 = vadd.f32 %v155, %v156
    %227 = vadd.xlane.f32.xlu0 %v226
    %v228 = vpop.xlane.xlu0 %227
    %v229 = vadd.f32 %v157, %v158
    %230 = vadd.xlane.f32.xlu0 %v229
    %v231 = vpop.xlane.xlu0 %230
    %v232 = vadd.f32 %v159, %v160
    %233 = vadd.xlane.f32.xlu0 %v232
    %v234 = vpop.xlane.xlu0 %233
    %v235 = vadd.f32 %v161, %v162
    %236 = vadd.xlane.f32.xlu0 %v235
    %v237 = vpop.xlane.xlu0 %236
    %v238 = vadd.f32 %v163, %v164
    %239 = vadd.xlane.f32.xlu0 %v238
    %v240 = vpop.xlane.xlu0 %239
    %v241 = vadd.f32 %v165, %v166
    %242 = vadd.xlane.f32.xlu0 %v241
    %v243 = vpop.xlane.xlu0 %242
    %v244 = vrcp.pop 256.0
    %v245 = vmul.f32 %v222, %v244
    %v246 = vmul.f32 %v225, %v244
    %v247 = vmul.f32 %v228, %v244
    %v248 = vmul.f32 %v231, %v244
    %v249 = vmul.f32 %v234, %v244
    %v250 = vmul.f32 %v237, %v244
    %v251 = vmul.f32 %v240, %v244
    %v252 = vmul.f32 %v243, %v244
    %v253 = vmul.f32 %v151, %v151
    %v254 = vmul.f32 %v152, %v152
    %v255 = vmul.f32 %v153, %v153
    %v256 = vmul.f32 %v154, %v154
    %v257 = vmul.f32 %v155, %v155
    %v258 = vmul.f32 %v156, %v156
    %v259 = vmul.f32 %v157, %v157
    %v260 = vmul.f32 %v158, %v158
    %v261 = vmul.f32 %v159, %v159
    %v262 = vmul.f32 %v160, %v160
    %v263 = vmul.f32 %v161, %v161
    %v264 = vmul.f32 %v162, %v162
    %v265 = vmul.f32 %v163, %v163
    %v266 = vmul.f32 %v164, %v164
    %v267 = vmul.f32 %v165, %v165
    %v268 = vmul.f32 %v166, %v166
    %v269 = vadd.f32 %v253, %v254
    %270 = vadd.xlane.f32.xlu0 %v269
    %v271 = vpop.xlane.xlu0 %270
    %v272 = vadd.f32 %v255, %v256
    %273 = vadd.xlane.f32.xlu0 %v272
    %v274 = vpop.xlane.xlu0 %273
    %v275 = vadd.f32 %v257, %v258
    %276 = vadd.xlane.f32.xlu0 %v275
    %v277 = vpop.xlane.xlu0 %276
    %v278 = vadd.f32 %v259, %v260
    %279 = vadd.xlane.f32.xlu0 %v278
    %v280 = vpop.xlane.xlu0 %279
    %v281 = vadd.f32 %v261, %v262
    %282 = vadd.xlane.f32.xlu0 %v281
    %v283 = vpop.xlane.xlu0 %282
    %v284 = vadd.f32 %v263, %v264
    %285 = vadd.xlane.f32.xlu0 %v284
    %v286 = vpop.xlane.xlu0 %285
    %v287 = vadd.f32 %v265, %v266
    %288 = vadd.xlane.f32.xlu0 %v287
    %v289 = vpop.xlane.xlu0 %288
    %v290 = vadd.f32 %v267, %v268
    %291 = vadd.xlane.f32.xlu0 %v290
    %v292 = vpop.xlane.xlu0 %291
    %v293 = vmul.f32 %v271, %v244
    %v294 = vmul.f32 %v274, %v244
    %v295 = vmul.f32 %v277, %v244
    %v296 = vmul.f32 %v280, %v244
    %v297 = vmul.f32 %v283, %v244
    %v298 = vmul.f32 %v286, %v244
    %v299 = vmul.f32 %v289, %v244
    %v300 = vmul.f32 %v292, %v244
    %v301 = vmul.f32 %v245, %v245
    %v302 = vmul.f32 %v246, %v246
    %v303 = vmul.f32 %v247, %v247
    %v304 = vmul.f32 %v248, %v248
    %v305 = vmul.f32 %v249, %v249
    %v306 = vmul.f32 %v250, %v250
    %v307 = vmul.f32 %v251, %v251
    %v308 = vmul.f32 %v252, %v252
    %v309 = vsub.f32 %v293, %v301
    %v310 = vsub.f32 %v294, %v302
    %v311 = vsub.f32 %v295, %v303
    %v312 = vsub.f32 %v296, %v304
    %v313 = vsub.f32 %v297, %v305
    %v314 = vsub.f32 %v298, %v306
    %v315 = vsub.f32 %v299, %v307
    %v316 = vsub.f32 %v300, %v308
    %v317 = vmax.f32 %v309, 0.0
    %v318 = vmax.f32 %v310, 0.0
    %v319 = vmax.f32 %v311, 0.0
    %v320 = vmax.f32 %v312, 0.0
    %v321 = vmax.f32 %v313, 0.0
    %v322 = vmax.f32 %v314, 0.0
    %v323 = vmax.f32 %v315, 0.0
    %v324 = vmax.f32 %v316, 0.0
    %v325 = vsub.f32 %v151, %v245
    %v326 = vsub.f32 %v152, %v245
    %v327 = vsub.f32 %v153, %v246
    %v328 = vsub.f32 %v154, %v246
    %v329 = vsub.f32 %v155, %v247
    %v330 = vsub.f32 %v156, %v247
    %v331 = vsub.f32 %v157, %v248
    %v332 = vsub.f32 %v158, %v248
    %v333 = vsub.f32 %v159, %v249
    %v334 = vsub.f32 %v160, %v249
    %v335 = vsub.f32 %v161, %v250
    %v336 = vsub.f32 %v162, %v250
    %v337 = vsub.f32 %v163, %v251
    %v338 = vsub.f32 %v164, %v251
    %v339 = vsub.f32 %v165, %v252
    %v340 = vsub.f32 %v166, %v252
    %v341 = vadd.f32 %v317, 1e-05
    %v342 = vadd.f32 %v318, 1e-05
    %v343 = vadd.f32 %v319, 1e-05
    %v344 = vadd.f32 %v320, 1e-05
    %v345 = vadd.f32 %v321, 1e-05
    %v346 = vadd.f32 %v322, 1e-05
    %v347 = vadd.f32 %v323, 1e-05
    %v348 = vadd.f32 %v324, 1e-05
    %v349 = vrsqrt.pop %v341
    %v350 = vrsqrt.pop %v342
    %v351 = vrsqrt.pop %v343
    %v352 = vrsqrt.pop %v344
    %v353 = vrsqrt.pop %v345
    %v354 = vrsqrt.pop %v346
    %v355 = vrsqrt.pop %v347
    %v356 = vrsqrt.pop %v348
    %v357 = vmul.f32 %v325, %v349
    %v358 = vmul.f32 %v326, %v349
    %v359 = vmul.f32 %v327, %v350
    %v360 = vmul.f32 %v328, %v350
    %v361 = vmul.f32 %v329, %v351
    %v362 = vmul.f32 %v330, %v351
    %v363 = vmul.f32 %v331, %v352
    %v364 = vmul.f32 %v332, %v352
    %v365 = vmul.f32 %v333, %v353
    %v366 = vmul.f32 %v334, %v353
    %v367 = vmul.f32 %v335, %v354
    %v368 = vmul.f32 %v336, %v354
    %v369 = vmul.f32 %v337, %v355
    %v370 = vmul.f32 %v338, %v355
    %v371 = vmul.f32 %v339, %v356
    %v372 = vmul.f32 %v340, %v356
    %v373 = vlaneseq
    %v374 = vshrl.u32 %v373, 7
    %v375 = vsub.s32 0, %v374
    %v376 = vrot.slane %v215, %v375
    %v377 = vlaneseq
    %v378 = vshrl.u32 %v377, 7
    %v379 = vsub.s32 0, %v378
    %v380 = vrot.slane %v216, %v379
    %v381 = vmul.f32 %v357, %v376
    %v382 = vmul.f32 %v358, %v380
    %v383 = vmul.f32 %v359, %v376
    %v384 = vmul.f32 %v360, %v380
    %v385 = vmul.f32 %v361, %v376
    %v386 = vmul.f32 %v362, %v380
    %v387 = vmul.f32 %v363, %v376
    %v388 = vmul.f32 %v364, %v380
    %v389 = vmul.f32 %v365, %v376
    %v390 = vmul.f32 %v366, %v380
    %v391 = vmul.f32 %v367, %v376
    %v392 = vmul.f32 %v368, %v380
    %v393 = vmul.f32 %v369, %v376
    %v394 = vmul.f32 %v370, %v380
    %v395 = vmul.f32 %v371, %v376
    %v396 = vmul.f32 %v372, %v380
    %v397 = vlaneseq
    %v398 = vshrl.u32 %v397, 7
    %v399 = vsub.s32 1, %v398
    %v400 = vrot.slane %v215, %v399
    %v401 = vlaneseq
    %v402 = vshrl.u32 %v401, 7
    %v403 = vsub.s32 1, %v402
    %v404 = vrot.slane %v216, %v403
    %v405 = vadd.f32 %v381, %v400
    %v406 = vadd.f32 %v382, %v404
    %v407 = vadd.f32 %v383, %v400
    %v408 = vadd.f32 %v384, %v404
    %v409 = vadd.f32 %v385, %v400
    %v410 = vadd.f32 %v386, %v404
    %v411 = vadd.f32 %v387, %v400
    %v412 = vadd.f32 %v388, %v404
    %v413 = vadd.f32 %v389, %v400
    %v414 = vadd.f32 %v390, %v404
    %v415 = vadd.f32 %v391, %v400
    %v416 = vadd.f32 %v392, %v404
    %v417 = vadd.f32 %v393, %v400
    %v418 = vadd.f32 %v394, %v404
    %v419 = vadd.f32 %v395, %v400
    %v420 = vadd.f32 %v396, %v404
    %v421 = vadd.f32 %v175, %v176
    %422 = vadd.xlane.f32.xlu0 %v421
    %v423 = vpop.xlane.xlu0 %422
    %v424 = vadd.f32 %v177, %v178
    %425 = vadd.xlane.f32.xlu0 %v424
    %v426 = vpop.xlane.xlu0 %425
    %v427 = vadd.f32 %v179, %v180
    %428 = vadd.xlane.f32.xlu0 %v427
    %v429 = vpop.xlane.xlu0 %428
    %v430 = vadd.f32 %v181, %v182
    %431 = vadd.xlane.f32.xlu0 %v430
    %v432 = vpop.xlane.xlu0 %431
    %v433 = vadd.f32 %v183, %v184
    %434 = vadd.xlane.f32.xlu0 %v433
    %v435 = vpop.xlane.xlu0 %434
    %v436 = vadd.f32 %v185, %v186
    %437 = vadd.xlane.f32.xlu0 %v436
    %v438 = vpop.xlane.xlu0 %437
    %v439 = vadd.f32 %v187, %v188
    %440 = vadd.xlane.f32.xlu0 %v439
    %v441 = vpop.xlane.xlu0 %440
    %v442 = vadd.f32 %v189, %v190
    %443 = vadd.xlane.f32.xlu0 %v442
    %v444 = vpop.xlane.xlu0 %443
    %v445 = vmul.f32 %v423, %v244
    %v446 = vmul.f32 %v426, %v244
    %v447 = vmul.f32 %v429, %v244
    %v448 = vmul.f32 %v432, %v244
    %v449 = vmul.f32 %v435, %v244
    %v450 = vmul.f32 %v438, %v244
    %v451 = vmul.f32 %v441, %v244
    %v452 = vmul.f32 %v444, %v244
    %v453 = vmul.f32 %v175, %v175
    %v454 = vmul.f32 %v176, %v176
    %v455 = vmul.f32 %v177, %v177
    %v456 = vmul.f32 %v178, %v178
    %v457 = vmul.f32 %v179, %v179
    %v458 = vmul.f32 %v180, %v180
    %v459 = vmul.f32 %v181, %v181
    %v460 = vmul.f32 %v182, %v182
    %v461 = vmul.f32 %v183, %v183
    %v462 = vmul.f32 %v184, %v184
    %v463 = vmul.f32 %v185, %v185
    %v464 = vmul.f32 %v186, %v186
    %v465 = vmul.f32 %v187, %v187
    %v466 = vmul.f32 %v188, %v188
    %v467 = vmul.f32 %v189, %v189
    %v468 = vmul.f32 %v190, %v190
    %v469 = vadd.f32 %v453, %v454
    %470 = vadd.xlane.f32.xlu0 %v469
    %v471 = vpop.xlane.xlu0 %470
    %v472 = vadd.f32 %v455, %v456
    %473 = vadd.xlane.f32.xlu0 %v472
    %v474 = vpop.xlane.xlu0 %473
    %v475 = vadd.f32 %v457, %v458
    %476 = vadd.xlane.f32.xlu0 %v475
    %v477 = vpop.xlane.xlu0 %476
    %v478 = vadd.f32 %v459, %v460
    %479 = vadd.xlane.f32.xlu0 %v478
    %v480 = vpop.xlane.xlu0 %479
    %v481 = vadd.f32 %v461, %v462
    %482 = vadd.xlane.f32.xlu0 %v481
    %v483 = vpop.xlane.xlu0 %482
    %v484 = vadd.f32 %v463, %v464
    %485 = vadd.xlane.f32.xlu0 %v484
    %v486 = vpop.xlane.xlu0 %485
    %v487 = vadd.f32 %v465, %v466
    %488 = vadd.xlane.f32.xlu0 %v487
    %v489 = vpop.xlane.xlu0 %488
    %v490 = vadd.f32 %v467, %v468
    %491 = vadd.xlane.f32.xlu0 %v490
    %v492 = vpop.xlane.xlu0 %491
    %v493 = vmul.f32 %v471, %v244
    %v494 = vmul.f32 %v474, %v244
    %v495 = vmul.f32 %v477, %v244
    %v496 = vmul.f32 %v480, %v244
    %v497 = vmul.f32 %v483, %v244
    %v498 = vmul.f32 %v486, %v244
    %v499 = vmul.f32 %v489, %v244
    %v500 = vmul.f32 %v492, %v244
    %v501 = vmul.f32 %v445, %v445
    %v502 = vmul.f32 %v446, %v446
    %v503 = vmul.f32 %v447, %v447
    %v504 = vmul.f32 %v448, %v448
    %v505 = vmul.f32 %v449, %v449
    %v506 = vmul.f32 %v450, %v450
    %v507 = vmul.f32 %v451, %v451
    %v508 = vmul.f32 %v452, %v452
    %v509 = vsub.f32 %v493, %v501
    %v510 = vsub.f32 %v494, %v502
    %v511 = vsub.f32 %v495, %v503
    %v512 = vsub.f32 %v496, %v504
    %v513 = vsub.f32 %v497, %v505
    %v514 = vsub.f32 %v498, %v506
    %v515 = vsub.f32 %v499, %v507
    %v516 = vsub.f32 %v500, %v508
    %v517 = vmax.f32 %v509, 0.0
    %v518 = vmax.f32 %v510, 0.0
    %v519 = vmax.f32 %v511, 0.0
    %v520 = vmax.f32 %v512, 0.0
    %v521 = vmax.f32 %v513, 0.0
    %v522 = vmax.f32 %v514, 0.0
    %v523 = vmax.f32 %v515, 0.0
    %v524 = vmax.f32 %v516, 0.0
    %v525 = vsub.f32 %v175, %v445
    %v526 = vsub.f32 %v176, %v445
    %v527 = vsub.f32 %v177, %v446
    %v528 = vsub.f32 %v178, %v446
    %v529 = vsub.f32 %v179, %v447
    %v530 = vsub.f32 %v180, %v447
    %v531 = vsub.f32 %v181, %v448
    %v532 = vsub.f32 %v182, %v448
    %v533 = vsub.f32 %v183, %v449
    %v534 = vsub.f32 %v184, %v449
    %v535 = vsub.f32 %v185, %v450
    %v536 = vsub.f32 %v186, %v450
    %v537 = vsub.f32 %v187, %v451
    %v538 = vsub.f32 %v188, %v451
    %v539 = vsub.f32 %v189, %v452
    %v540 = vsub.f32 %v190, %v452
    %v541 = vadd.f32 %v517, 1e-05
    %v542 = vadd.f32 %v518, 1e-05
    %v543 = vadd.f32 %v519, 1e-05
    %v544 = vadd.f32 %v520, 1e-05
    %v545 = vadd.f32 %v521, 1e-05
    %v546 = vadd.f32 %v522, 1e-05
    %v547 = vadd.f32 %v523, 1e-05
    %v548 = vadd.f32 %v524, 1e-05
    %v549 = vrsqrt.pop %v541
    %v550 = vrsqrt.pop %v542
    %v551 = vrsqrt.pop %v543
    %v552 = vrsqrt.pop %v544
    %v553 = vrsqrt.pop %v545
    %v554 = vrsqrt.pop %v546
    %v555 = vrsqrt.pop %v547
    %v556 = vrsqrt.pop %v548
    %v557 = vmul.f32 %v525, %v549
    %v558 = vmul.f32 %v526, %v549
    %v559 = vmul.f32 %v527, %v550
    %v560 = vmul.f32 %v528, %v550
    %v561 = vmul.f32 %v529, %v551
    %v562 = vmul.f32 %v530, %v551
    %v563 = vmul.f32 %v531, %v552
    %v564 = vmul.f32 %v532, %v552
    %v565 = vmul.f32 %v533, %v553
    %v566 = vmul.f32 %v534, %v553
    %v567 = vmul.f32 %v535, %v554
    %v568 = vmul.f32 %v536, %v554
    %v569 = vmul.f32 %v537, %v555
    %v570 = vmul.f32 %v538, %v555
    %v571 = vmul.f32 %v539, %v556
    %v572 = vmul.f32 %v540, %v556
    %v573 = vlaneseq
    %v574 = vshrl.u32 %v573, 7
    %v575 = vsub.s32 2, %v574
    %v576 = vrot.slane %v215, %v575
    %v577 = vlaneseq
    %v578 = vshrl.u32 %v577, 7
    %v579 = vsub.s32 2, %v578
    %v580 = vrot.slane %v216, %v579
    %v581 = vmul.f32 %v557, %v576
    %v582 = vmul.f32 %v558, %v580
    %v583 = vmul.f32 %v559, %v576
    %v584 = vmul.f32 %v560, %v580
    %v585 = vmul.f32 %v561, %v576
    %v586 = vmul.f32 %v562, %v580
    %v587 = vmul.f32 %v563, %v576
    %v588 = vmul.f32 %v564, %v580
    %v589 = vmul.f32 %v565, %v576
    %v590 = vmul.f32 %v566, %v580
    %v591 = vmul.f32 %v567, %v576
    %v592 = vmul.f32 %v568, %v580
    %v593 = vmul.f32 %v569, %v576
    %v594 = vmul.f32 %v570, %v580
    %v595 = vmul.f32 %v571, %v576
    %v596 = vmul.f32 %v572, %v580
    %v597 = vlaneseq
    %v598 = vshrl.u32 %v597, 7
    %v599 = vsub.s32 3, %v598
    %v600 = vrot.slane %v215, %v599
    %v601 = vlaneseq
    %v602 = vshrl.u32 %v601, 7
    %v603 = vsub.s32 3, %v602
    %v604 = vrot.slane %v216, %v603
    %v605 = vadd.f32 %v581, %v600
    %v606 = vadd.f32 %v582, %v604
    %v607 = vadd.f32 %v583, %v600
    %v608 = vadd.f32 %v584, %v604
    %v609 = vadd.f32 %v585, %v600
    %v610 = vadd.f32 %v586, %v604
    %v611 = vadd.f32 %v587, %v600
    %v612 = vadd.f32 %v588, %v604
    %v613 = vadd.f32 %v589, %v600
    %v614 = vadd.f32 %v590, %v604
    %v615 = vadd.f32 %v591, %v600
    %v616 = vadd.f32 %v592, %v604
    %v617 = vadd.f32 %v593, %v600
    %v618 = vadd.f32 %v594, %v604
    %v619 = vadd.f32 %v595, %v600
    %v620 = vadd.f32 %v596, %v604
    %v621 = vadd.f32 %v199, %v200
    %622 = vadd.xlane.f32.xlu0 %v621
    %v623 = vpop.xlane.xlu0 %622
    %v624 = vadd.f32 %v201, %v202
    %625 = vadd.xlane.f32.xlu0 %v624
    %v626 = vpop.xlane.xlu0 %625
    %v627 = vadd.f32 %v203, %v204
    %628 = vadd.xlane.f32.xlu0 %v627
    %v629 = vpop.xlane.xlu0 %628
    %v630 = vadd.f32 %v205, %v206
    %631 = vadd.xlane.f32.xlu0 %v630
    %v632 = vpop.xlane.xlu0 %631
    %v633 = vadd.f32 %v207, %v208
    %634 = vadd.xlane.f32.xlu0 %v633
    %v635 = vpop.xlane.xlu0 %634
    %v636 = vadd.f32 %v209, %v210
    %637 = vadd.xlane.f32.xlu0 %v636
    %v638 = vpop.xlane.xlu0 %637
    %v639 = vadd.f32 %v211, %v212
    %640 = vadd.xlane.f32.xlu0 %v639
    %v641 = vpop.xlane.xlu0 %640
    %v642 = vadd.f32 %v213, %v214
    %643 = vadd.xlane.f32.xlu0 %v642
    %v644 = vpop.xlane.xlu0 %643
    %v645 = vmul.f32 %v623, %v244
    %v646 = vmul.f32 %v626, %v244
    %v647 = vmul.f32 %v629, %v244
    %v648 = vmul.f32 %v632, %v244
    %v649 = vmul.f32 %v635, %v244
    %v650 = vmul.f32 %v638, %v244
    %v651 = vmul.f32 %v641, %v244
    %v652 = vmul.f32 %v644, %v244
    %v653 = vmul.f32 %v199, %v199
    %v654 = vmul.f32 %v200, %v200
    %v655 = vmul.f32 %v201, %v201
    %v656 = vmul.f32 %v202, %v202
    %v657 = vmul.f32 %v203, %v203
    %v658 = vmul.f32 %v204, %v204
    %v659 = vmul.f32 %v205, %v205
    %v660 = vmul.f32 %v206, %v206
    %v661 = vmul.f32 %v207, %v207
    %v662 = vmul.f32 %v208, %v208
    %v663 = vmul.f32 %v209, %v209
    %v664 = vmul.f32 %v210, %v210
    %v665 = vmul.f32 %v211, %v211
    %v666 = vmul.f32 %v212, %v212
    %v667 = vmul.f32 %v213, %v213
    %v668 = vmul.f32 %v214, %v214
    %v669 = vadd.f32 %v653, %v654
    %670 = vadd.xlane.f32.xlu0 %v669
    %v671 = vpop.xlane.xlu0 %670
    %v672 = vadd.f32 %v655, %v656
    %673 = vadd.xlane.f32.xlu0 %v672
    %v674 = vpop.xlane.xlu0 %673
    %v675 = vadd.f32 %v657, %v658
    %676 = vadd.xlane.f32.xlu0 %v675
    %v677 = vpop.xlane.xlu0 %676
    %v678 = vadd.f32 %v659, %v660
    %679 = vadd.xlane.f32.xlu0 %v678
    %v680 = vpop.xlane.xlu0 %679
    %v681 = vadd.f32 %v661, %v662
    %682 = vadd.xlane.f32.xlu0 %v681
    %v683 = vpop.xlane.xlu0 %682
    %v684 = vadd.f32 %v663, %v664
    %685 = vadd.xlane.f32.xlu0 %v684
    %v686 = vpop.xlane.xlu0 %685
    %v687 = vadd.f32 %v665, %v666
    %688 = vadd.xlane.f32.xlu0 %v687
    %v689 = vpop.xlane.xlu0 %688
    %v690 = vadd.f32 %v667, %v668
    %691 = vadd.xlane.f32.xlu0 %v690
    %v692 = vpop.xlane.xlu0 %691
    %v693 = vmul.f32 %v671, %v244
    %v694 = vmul.f32 %v674, %v244
    %v695 = vmul.f32 %v677, %v244
    %v696 = vmul.f32 %v680, %v244
    %v697 = vmul.f32 %v683, %v244
    %v698 = vmul.f32 %v686, %v244
    %v699 = vmul.f32 %v689, %v244
    %v700 = vmul.f32 %v692, %v244
    %v701 = vmul.f32 %v645, %v645
    %v702 = vmul.f32 %v646, %v646
    %v703 = vmul.f32 %v647, %v647
    %v704 = vmul.f32 %v648, %v648
    %v705 = vmul.f32 %v649, %v649
    %v706 = vmul.f32 %v650, %v650
    %v707 = vmul.f32 %v651, %v651
    %v708 = vmul.f32 %v652, %v652
    %v709 = vsub.f32 %v693, %v701
    %v710 = vsub.f32 %v694, %v702
    %v711 = vsub.f32 %v695, %v703
    %v712 = vsub.f32 %v696, %v704
    %v713 = vsub.f32 %v697, %v705
    %v714 = vsub.f32 %v698, %v706
    %v715 = vsub.f32 %v699, %v707
    %v716 = vsub.f32 %v700, %v708
    %v717 = vmax.f32 %v709, 0.0
    %v718 = vmax.f32 %v710, 0.0
    %v719 = vmax.f32 %v711, 0.0
    %v720 = vmax.f32 %v712, 0.0
    %v721 = vmax.f32 %v713, 0.0
    %v722 = vmax.f32 %v714, 0.0
    %v723 = vmax.f32 %v715, 0.0
    %v724 = vmax.f32 %v716, 0.0
    %v725 = vsub.f32 %v199, %v645
    %v726 = vsub.f32 %v200, %v645
    %v727 = vsub.f32 %v201, %v646
    %v728 = vsub.f32 %v202, %v646
    %v729 = vsub.f32 %v203, %v647
    %v730 = vsub.f32 %v204, %v647
    %v731 = vsub.f32 %v205, %v648
    %v732 = vsub.f32 %v206, %v648
    %v733 = vsub.f32 %v207, %v649
    %v734 = vsub.f32 %v208, %v649
    %v735 = vsub.f32 %v209, %v650
    %v736 = vsub.f32 %v210, %v650
    %v737 = vsub.f32 %v211, %v651
    %v738 = vsub.f32 %v212, %v651
    %v739 = vsub.f32 %v213, %v652
    %v740 = vsub.f32 %v214, %v652
    %v741 = vadd.f32 %v717, 1e-05
    %v742 = vadd.f32 %v718, 1e-05
    %v743 = vadd.f32 %v719, 1e-05
    %v744 = vadd.f32 %v720, 1e-05
    %v745 = vadd.f32 %v721, 1e-05
    %v746 = vadd.f32 %v722, 1e-05
    %v747 = vadd.f32 %v723, 1e-05
    %v748 = vadd.f32 %v724, 1e-05
    %v749 = vrsqrt.pop %v741
    %v750 = vrsqrt.pop %v742
    %v751 = vrsqrt.pop %v743
    %v752 = vrsqrt.pop %v744
    %v753 = vrsqrt.pop %v745
    %v754 = vrsqrt.pop %v746
    %v755 = vrsqrt.pop %v747
    %v756 = vrsqrt.pop %v748
    %v757 = vmul.f32 %v725, %v749
    %v758 = vmul.f32 %v726, %v749
    %v759 = vmul.f32 %v727, %v750
    %v760 = vmul.f32 %v728, %v750
    %v761 = vmul.f32 %v729, %v751
    %v762 = vmul.f32 %v730, %v751
    %v763 = vmul.f32 %v731, %v752
    %v764 = vmul.f32 %v732, %v752
    %v765 = vmul.f32 %v733, %v753
    %v766 = vmul.f32 %v734, %v753
    %v767 = vmul.f32 %v735, %v754
    %v768 = vmul.f32 %v736, %v754
    %v769 = vmul.f32 %v737, %v755
    %v770 = vmul.f32 %v738, %v755
    %v771 = vmul.f32 %v739, %v756
    %v772 = vmul.f32 %v740, %v756
    %v773 = vlaneseq
    %v774 = vshrl.u32 %v773, 7
    %v775 = vsub.s32 4, %v774
    %v776 = vrot.slane %v215, %v775
    %v777 = vlaneseq
    %v778 = vshrl.u32 %v777, 7
    %v779 = vsub.s32 4, %v778
    %v780 = vrot.slane %v216, %v779
    %v781 = vmul.f32 %v757, %v776
    %v782 = vmul.f32 %v758, %v780
    %v783 = vmul.f32 %v759, %v776
    %v784 = vmul.f32 %v760, %v780
    %v785 = vmul.f32 %v761, %v776
    %v786 = vmul.f32 %v762, %v780
    %v787 = vmul.f32 %v763, %v776
    %v788 = vmul.f32 %v764, %v780
    %v789 = vmul.f32 %v765, %v776
    %v790 = vmul.f32 %v766, %v780
    %v791 = vmul.f32 %v767, %v776
    %v792 = vmul.f32 %v768, %v780
    %v793 = vmul.f32 %v769, %v776
    %v794 = vmul.f32 %v770, %v780
    %v795 = vmul.f32 %v771, %v776
    %v796 = vmul.f32 %v772, %v780
    %v797 = vlaneseq
    %v798 = vshrl.u32 %v797, 7
    %v799 = vsub.s32 5, %v798
    %v800 = vrot.slane %v215, %v799
    %v801 = vlaneseq
    %v802 = vshrl.u32 %v801, 7
    %v803 = vsub.s32 5, %v802
    %v804 = vrot.slane %v216, %v803
    %v805 = vadd.f32 %v781, %v800
    %v806 = vadd.f32 %v782, %v804
    %v807 = vadd.f32 %v783, %v800
    %v808 = vadd.f32 %v784, %v804
    %v809 = vadd.f32 %v785, %v800
    %v810 = vadd.f32 %v786, %v804
    %v811 = vadd.f32 %v787, %v800
    %v812 = vadd.f32 %v788, %v804
    %v813 = vadd.f32 %v789, %v800
    %v814 = vadd.f32 %v790, %v804
    %v815 = vadd.f32 %v791, %v800
    %v816 = vadd.f32 %v792, %v804
    %v817 = vadd.f32 %v793, %v800
    %v818 = vadd.f32 %v794, %v804
    %v819 = vadd.f32 %v795, %v800
    %v820 = vadd.f32 %v796, %v804
    %v821 = vld [vmem:[#allocation10] sm:$0xff]
    %v822 = vld [vmem:[#allocation10 + $0x8] sm:$0xff]
    %v823 = vld [vmem:[#allocation10 + $0x10] sm:$0xff]
    %v824 = vld [vmem:[#allocation10 + $0x18] sm:$0xff]
    %v825 = vld [vmem:[#allocation10 + $0x20] sm:$0xff]
    %v826 = vld [vmem:[#allocation10 + $0x28] sm:$0xff]
    %v827 = vld [vmem:[#allocation10 + $0x30] sm:$0xff]
    %v828 = vld [vmem:[#allocation10 + $0x38] sm:$0xff]
    %v829 = vld [vmem:[#allocation10 + $0x40] sm:$0xff]
    %v830 = vld [vmem:[#allocation10 + $0x48] sm:$0xff]
    %v831 = vld [vmem:[#allocation10 + $0x50] sm:$0xff]
    %v832 = vld [vmem:[#allocation10 + $0x58] sm:$0xff]
    %v833 = vld [vmem:[#allocation10 + $0x60] sm:$0xff]
    %v834 = vld [vmem:[#allocation10 + $0x68] sm:$0xff]
    %v835 = vld [vmem:[#allocation10 + $0x70] sm:$0xff]
    %v836 = vld [vmem:[#allocation10 + $0x78] sm:$0xff]
    %v837 = vld [vmem:[#allocation10 + $0x80] sm:$0xff]
    %v838 = vld [vmem:[#allocation10 + $0x88] sm:$0xff]
    %v839 = vld [vmem:[#allocation10 + $0x90] sm:$0xff]
    %v840 = vld [vmem:[#allocation10 + $0x98] sm:$0xff]
    %v841 = vld [vmem:[#allocation10 + $0xa0] sm:$0xff]
    %v842 = vld [vmem:[#allocation10 + $0xa8] sm:$0xff]
    %v843 = vld [vmem:[#allocation10 + $0xb0] sm:$0xff]
    %v844 = vld [vmem:[#allocation10 + $0xb8] sm:$0xff]
    %v845 = vld [vmem:[#allocation10 + $0xc0] sm:$0xff]
    %v846 = vld [vmem:[#allocation10 + $0xc8] sm:$0xff]
    %v847 = vld [vmem:[#allocation10 + $0xd0] sm:$0xff]
    %v848 = vld [vmem:[#allocation10 + $0xd8] sm:$0xff]
    %v849 = vld [vmem:[#allocation10 + $0xe0] sm:$0xff]
    %v850 = vld [vmem:[#allocation10 + $0xe8] sm:$0xff]
    %v851 = vld [vmem:[#allocation10 + $0xf0] sm:$0xff]
    %v852 = vld [vmem:[#allocation10 + $0xf8] sm:$0xff]
    %s853 = scalar_lea.vmem [#allocation10], 256
    %v854 = vld [vmem:[%s853] sm:$0xff]
    %v855 = vld [vmem:[%s853 + $0x8] sm:$0xff]
    %v856 = vld [vmem:[%s853 + $0x10] sm:$0xff]
    %v857 = vld [vmem:[%s853 + $0x18] sm:$0xff]
    %v858 = vld [vmem:[%s853 + $0x20] sm:$0xff]
    %v859 = vld [vmem:[%s853 + $0x28] sm:$0xff]
    %v860 = vld [vmem:[%s853 + $0x30] sm:$0xff]
    %v861 = vld [vmem:[%s853 + $0x38] sm:$0xff]
    %v862 = vld [vmem:[%s853 + $0x40] sm:$0xff]
    %v863 = vld [vmem:[%s853 + $0x48] sm:$0xff]
    %v864 = vld [vmem:[%s853 + $0x50] sm:$0xff]
    %v865 = vld [vmem:[%s853 + $0x58] sm:$0xff]
    %v866 = vld [vmem:[%s853 + $0x60] sm:$0xff]
    %v867 = vld [vmem:[%s853 + $0x68] sm:$0xff]
    %v868 = vld [vmem:[%s853 + $0x70] sm:$0xff]
    %v869 = vld [vmem:[%s853 + $0x78] sm:$0xff]
    %v870 = vld [vmem:[%s853 + $0x80] sm:$0xff]
    %v871 = vld [vmem:[%s853 + $0x88] sm:$0xff]
    %v872 = vld [vmem:[%s853 + $0x90] sm:$0xff]
    %v873 = vld [vmem:[%s853 + $0x98] sm:$0xff]
    %v874 = vld [vmem:[%s853 + $0xa0] sm:$0xff]
    %v875 = vld [vmem:[%s853 + $0xa8] sm:$0xff]
    %v876 = vld [vmem:[%s853 + $0xb0] sm:$0xff]
    %v877 = vld [vmem:[%s853 + $0xb8] sm:$0xff]
    %v878 = vld [vmem:[%s853 + $0xc0] sm:$0xff]
    %v879 = vld [vmem:[%s853 + $0xc8] sm:$0xff]
    %v880 = vld [vmem:[%s853 + $0xd0] sm:$0xff]
    %v881 = vld [vmem:[%s853 + $0xd8] sm:$0xff]
    %v882 = vld [vmem:[%s853 + $0xe0] sm:$0xff]
    %v883 = vld [vmem:[%s853 + $0xe8] sm:$0xff]
    %v884 = vld [vmem:[%s853 + $0xf0] sm:$0xff]
    %v885 = vld [vmem:[%s853 + $0xf8] sm:$0xff]
    %s886 = scalar_lea.vmem [#allocation10], 512
    %v887 = vld [vmem:[%s886] sm:$0xff]
    %v888 = vld [vmem:[%s886 + $0x8] sm:$0xff]
    %v889 = vld [vmem:[%s886 + $0x10] sm:$0xff]
    %v890 = vld [vmem:[%s886 + $0x18] sm:$0xff]
    %v891 = vld [vmem:[%s886 + $0x20] sm:$0xff]
    %v892 = vld [vmem:[%s886 + $0x28] sm:$0xff]
    %v893 = vld [vmem:[%s886 + $0x30] sm:$0xff]
    %v894 = vld [vmem:[%s886 + $0x38] sm:$0xff]
    %v895 = vld [vmem:[%s886 + $0x40] sm:$0xff]
    %v896 = vld [vmem:[%s886 + $0x48] sm:$0xff]
    %v897 = vld [vmem:[%s886 + $0x50] sm:$0xff]
    %v898 = vld [vmem:[%s886 + $0x58] sm:$0xff]
    %v899 = vld [vmem:[%s886 + $0x60] sm:$0xff]
    %v900 = vld [vmem:[%s886 + $0x68] sm:$0xff]
    %v901 = vld [vmem:[%s886 + $0x70] sm:$0xff]
    %v902 = vld [vmem:[%s886 + $0x78] sm:$0xff]
    %v903 = vld [vmem:[%s886 + $0x80] sm:$0xff]
    %v904 = vld [vmem:[%s886 + $0x88] sm:$0xff]
    %v905 = vld [vmem:[%s886 + $0x90] sm:$0xff]
    %v906 = vld [vmem:[%s886 + $0x98] sm:$0xff]
    %v907 = vld [vmem:[%s886 + $0xa0] sm:$0xff]
    %v908 = vld [vmem:[%s886 + $0xa8] sm:$0xff]
    %v909 = vld [vmem:[%s886 + $0xb0] sm:$0xff]
    %v910 = vld [vmem:[%s886 + $0xb8] sm:$0xff]
    %v911 = vld [vmem:[%s886 + $0xc0] sm:$0xff]
    %v912 = vld [vmem:[%s886 + $0xc8] sm:$0xff]
    %v913 = vld [vmem:[%s886 + $0xd0] sm:$0xff]
    %v914 = vld [vmem:[%s886 + $0xd8] sm:$0xff]
    %v915 = vld [vmem:[%s886 + $0xe0] sm:$0xff]
    %v916 = vld [vmem:[%s886 + $0xe8] sm:$0xff]
    %v917 = vld [vmem:[%s886 + $0xf0] sm:$0xff]
    %v918 = vld [vmem:[%s886 + $0xf8] sm:$0xff]
    %v919 = vpack.c.bf16 %v407, %v405
    %v920 = vpack.c.bf16 %v408, %v406
    %v921 = vpack.c.bf16 %v411, %v409
    %v922 = vpack.c.bf16 %v412, %v410
    %v923 = vpack.c.bf16 %v415, %v413
    %v924 = vpack.c.bf16 %v416, %v414
    %v925 = vpack.c.bf16 %v419, %v417
    %v926 = vpack.c.bf16 %v420, %v418
    %v927 = vlaneseq
    %v928 = vshrl.u32 %v927, 7
    %v929 = vsub.s32 0, %v928
    %v930 = vrot.slane %v217, %v929
    %v931 = vlaneseq
    %v932 = vshrl.u32 %v931, 7
    %v933 = vsub.s32 0, %v932
    %v934 = vrot.slane %v218, %v933
    %v967 = vunpack.c.l.b16 %v821
    %v968 = vunpack.c.h.b16 %v821
    %v969 = vunpack.c.l.b16 %v822
    %v970 = vunpack.c.h.b16 %v822
    %v971 = vunpack.c.l.b16 %v823
    %v972 = vunpack.c.h.b16 %v823
    %v973 = vunpack.c.l.b16 %v824
    %v974 = vunpack.c.h.b16 %v824
    %v975 = vunpack.c.l.b16 %v825
    %v976 = vunpack.c.h.b16 %v825
    %v977 = vunpack.c.l.b16 %v826
    %v978 = vunpack.c.h.b16 %v826
    %v979 = vunpack.c.l.b16 %v827
    %v980 = vunpack.c.h.b16 %v827
    %v981 = vunpack.c.l.b16 %v828
    %v982 = vunpack.c.h.b16 %v828
    %v983 = vunpack.c.l.b16 %v829
    %v984 = vunpack.c.h.b16 %v829
    %v985 = vunpack.c.l.b16 %v830
    %v986 = vunpack.c.h.b16 %v830
    %v987 = vunpack.c.l.b16 %v831
    %v988 = vunpack.c.h.b16 %v831
    %v989 = vunpack.c.l.b16 %v832
    %v990 = vunpack.c.h.b16 %v832
    %v991 = vunpack.c.l.b16 %v833
    %v992 = vunpack.c.h.b16 %v833
    %v993 = vunpack.c.l.b16 %v834
    %v994 = vunpack.c.h.b16 %v834
    %v995 = vunpack.c.l.b16 %v835
    %v996 = vunpack.c.h.b16 %v835
    %v997 = vunpack.c.l.b16 %v836
    %v998 = vunpack.c.h.b16 %v836
    %v999 = vunpack.c.l.b16 %v837
    %v1000 = vunpack.c.h.b16 %v837
    %v1001 = vunpack.c.l.b16 %v838
    %v1002 = vunpack.c.h.b16 %v838
    %v1003 = vunpack.c.l.b16 %v839
    %v1004 = vunpack.c.h.b16 %v839
    %v1005 = vunpack.c.l.b16 %v840
    %v1006 = vunpack.c.h.b16 %v840
    %v1007 = vunpack.c.l.b16 %v841
    %v1008 = vunpack.c.h.b16 %v841
    %v1009 = vunpack.c.l.b16 %v842
    %v1010 = vunpack.c.h.b16 %v842
    %v1011 = vunpack.c.l.b16 %v843
    %v1012 = vunpack.c.h.b16 %v843
    %v1013 = vunpack.c.l.b16 %v844
    %v1014 = vunpack.c.h.b16 %v844
    %v1015 = vunpack.c.l.b16 %v845
    %v1016 = vunpack.c.h.b16 %v845
    %v1017 = vunpack.c.l.b16 %v846
    %v1018 = vunpack.c.h.b16 %v846
    %v1019 = vunpack.c.l.b16 %v847
    %v1020 = vunpack.c.h.b16 %v847
    %v1021 = vunpack.c.l.b16 %v848
    %v1022 = vunpack.c.h.b16 %v848
    %v1023 = vunpack.c.l.b16 %v849
    %v1024 = vunpack.c.h.b16 %v849
    %v1025 = vunpack.c.l.b16 %v850
    %v1026 = vunpack.c.h.b16 %v850
    %v1027 = vunpack.c.l.b16 %v851
    %v1028 = vunpack.c.h.b16 %v851
    %v1029 = vunpack.c.l.b16 %v852
    %v1030 = vunpack.c.h.b16 %v852
    %v1031 = vpack.c.b16 %v969, %v967
    %v1032 = vpack.c.b16 %v970, %v968
    %v1033 = vpack.c.b16 %v973, %v971
    %v1034 = vpack.c.b16 %v974, %v972
    %v1035 = vpack.c.b16 %v977, %v975
    %v1036 = vpack.c.b16 %v978, %v976
    %v1037 = vpack.c.b16 %v981, %v979
    %v1038 = vpack.c.b16 %v982, %v980
    %v1039 = vpack.c.b16 %v985, %v983
    %v1040 = vpack.c.b16 %v986, %v984
    %v1041 = vpack.c.b16 %v989, %v987
    %v1042 = vpack.c.b16 %v990, %v988
    %v1043 = vpack.c.b16 %v993, %v991
    %v1044 = vpack.c.b16 %v994, %v992
    %v1045 = vpack.c.b16 %v997, %v995
    %v1046 = vpack.c.b16 %v998, %v996
    %v1047 = vpack.c.b16 %v1001, %v999
    %v1048 = vpack.c.b16 %v1002, %v1000
    %v1049 = vpack.c.b16 %v1005, %v1003
    %v1050 = vpack.c.b16 %v1006, %v1004
    %v1051 = vpack.c.b16 %v1009, %v1007
    %v1052 = vpack.c.b16 %v1010, %v1008
    %v1053 = vpack.c.b16 %v1013, %v1011
    %v1054 = vpack.c.b16 %v1014, %v1012
    %v1055 = vpack.c.b16 %v1017, %v1015
    %v1056 = vpack.c.b16 %v1018, %v1016
    %v1057 = vpack.c.b16 %v1021, %v1019
    %v1058 = vpack.c.b16 %v1022, %v1020
    %v1059 = vpack.c.b16 %v1025, %v1023
    %v1060 = vpack.c.b16 %v1026, %v1024
    %v1061 = vpack.c.b16 %v1029, %v1027
    %v1062 = vpack.c.b16 %v1030, %v1028
    %1095 = vmatprep.subr.bf16.mxu0 %v1032
    %1096 = vmatpush1.bf16.msra.mxu0 %v1031
    %1097 = vmatprep.subr.bf16.mxu0 %v1034
    %1098 = vmatpush1.bf16.msra.mxu0 %v1033
    %1099 = vmatprep.subr.bf16.mxu0 %v1036
    %1100 = vmatpush1.bf16.msra.mxu0 %v1035
    %1101 = vmatprep.subr.bf16.mxu0 %v1038
    %1102 = vmatpush1.bf16.msra.mxu0 %v1037
    %1103 = vmatprep.subr.bf16.mxu0 %v1040
    %1104 = vmatpush1.bf16.msra.mxu0 %v1039
    %1105 = vmatprep.subr.bf16.mxu0 %v1042
    %1106 = vmatpush1.bf16.msra.mxu0 %v1041
    %1107 = vmatprep.subr.bf16.mxu0 %v1044
    %1108 = vmatpush1.bf16.msra.mxu0 %v1043
    %1109 = vmatprep.subr.bf16.mxu0 %v1046
    %1110 = vmatpush1.bf16.msra.mxu0 %v1045
    %1111 = vmatprep.subr.bf16.mxu0 %v1048
    %1112 = vmatpush1.bf16.msra.mxu0 %v1047
    %1113 = vmatprep.subr.bf16.mxu0 %v1050
    %1114 = vmatpush1.bf16.msra.mxu0 %v1049
    %1115 = vmatprep.subr.bf16.mxu0 %v1052
    %1116 = vmatpush1.bf16.msra.mxu0 %v1051
    %1117 = vmatprep.subr.bf16.mxu0 %v1054
    %1118 = vmatpush1.bf16.msra.mxu0 %v1053
    %1119 = vmatprep.subr.bf16.mxu0 %v1056
    %1120 = vmatpush1.bf16.msra.mxu0 %v1055
    %1121 = vmatprep.subr.bf16.mxu0 %v1058
    %1122 = vmatpush1.bf16.msra.mxu0 %v1057
    %1123 = vmatprep.subr.bf16.mxu0 %v1060
    %1124 = vmatpush1.bf16.msra.mxu0 %v1059
    %1125 = vmatprep.subr.bf16.mxu0 %v1062
    %1126 = vmatpush1.bf16.msra.mxu0 %v1061
    %1127 = vmatprep.mubr.bf16.mxu0 %v920
    %1128 = vmatmul.mubr.bf16.gmra.mrb[0].mxu0 %v919
    %v1129 = vpop.f32.mrb[0].mxu0
    %v1130 = vadd.f32 %v930, %v1129
    %v1131 = vpop.f32.mrb[0].mxu0
    %v1132 = vadd.f32 %v934, %v1131
    %v1133 = vpop.f32.mrb[0].mxu0
    %v1134 = vadd.f32 %v930, %v1133
    %v1135 = vpop.f32.mrb[0].mxu0
    %v1136 = vadd.f32 %v934, %v1135
    %1137 = vmatprep.mubr.bf16.mxu0 %v922
    %1138 = vmatmul.mubr.bf16.gmra.mrb[0].mxu0 %v921
    %v1139 = vpop.f32.mrb[0].mxu0
    %v1140 = vadd.f32 %v930, %v1139
    %v1141 = vpop.f32.mrb[0].mxu0
    %v1142 = vadd.f32 %v934, %v1141
    %v1143 = vpop.f32.mrb[0].mxu0
    %v1144 = vadd.f32 %v930, %v1143
    %v1145 = vpop.f32.mrb[0].mxu0
    %v1146 = vadd.f32 %v934, %v1145
    %1147 = vmatprep.mubr.bf16.mxu0 %v924
    %1148 = vmatmul.mubr.bf16.gmra.mrb[0].mxu0 %v923
    %v1149 = vpop.f32.mrb[0].mxu0
    %v1150 = vadd.f32 %v930, %v1149
    %v1151 = vpop.f32.mrb[0].mxu0
    %v1152 = vadd.f32 %v934, %v1151
    %v1153 = vpop.f32.mrb[0].mxu0
    %v1154 = vadd.f32 %v930, %v1153
    %v1155 = vpop.f32.mrb[0].mxu0
    %v1156 = vadd.f32 %v934, %v1155
    %1157 = vmatprep.mubr.bf16.mxu0 %v926
    %1158 = vmatmul.mubr.bf16.gmra.mrb[0].mxu0 %v925
    %v1159 = vpop.f32.mrb[0].mxu0
    %v1160 = vadd.f32 %v930, %v1159
    %v1161 = vpop.f32.mrb[0].mxu0
    %v1162 = vadd.f32 %v934, %v1161
    %v1163 = vpop.f32.mrb[0].mxu0
    %v1164 = vadd.f32 %v930, %v1163
    %v1165 = vpop.f32.mrb[0].mxu0
    %v1166 = vadd.f32 %v934, %v1165
    %1167 = vdwg.mxu0
    %v1168 = vmul.f32 %v1130, 0.125
    %v1169 = vmul.f32 %v1132, 0.125
    %v1170 = vmul.f32 %v1134, 0.125
    %v1171 = vmul.f32 %v1136, 0.125
    %v1172 = vmul.f32 %v1140, 0.125
    %v1173 = vmul.f32 %v1142, 0.125
    %v1174 = vmul.f32 %v1144, 0.125
    %v1175 = vmul.f32 %v1146, 0.125
    %v1176 = vmul.f32 %v1150, 0.125
    %v1177 = vmul.f32 %v1152, 0.125
    %v1178 = vmul.f32 %v1154, 0.125
    %v1179 = vmul.f32 %v1156, 0.125
    %v1180 = vmul.f32 %v1160, 0.125
    %v1181 = vmul.f32 %v1162, 0.125
    %v1182 = vmul.f32 %v1164, 0.125
    %v1183 = vmul.f32 %v1166, 0.125
    %v1184 = vpack.c.bf16 %v607, %v605
    %v1185 = vpack.c.bf16 %v608, %v606
    %v1186 = vpack.c.bf16 %v611, %v609
    %v1187 = vpack.c.bf16 %v612, %v610
    %v1188 = vpack.c.bf16 %v615, %v613
    %v1189 = vpack.c.bf16 %v616, %v614
    %v1190 = vpack.c.bf16 %v619, %v617
    %v1191 = vpack.c.bf16 %v620, %v618
    %v1192 = vlaneseq
    %v1193 = vshrl.u32 %v1192, 7
    %v1194 = vsub.s32 1, %v1193
    %v1195 = vrot.slane %v217, %v1194
    %v1196 = vlaneseq
    %v1197 = vshrl.u32 %v1196, 7
    %v1198 = vsub.s32 1, %v1197
    %v1199 = vrot.slane %v218, %v1198
    %v1232 = vunpack.c.l.b16 %v854
    %v1233 = vunpack.c.h.b16 %v854
    %v1234 = vunpack.c.l.b16 %v855
    %v1235 = vunpack.c.h.b16 %v855
    %v1236 = vunpack.c.l.b16 %v856
    %v1237 = vunpack.c.h.b16 %v856
    %v1238 = vunpack.c.l.b16 %v857
    %v1239 = vunpack.c.h.b16 %v857
    %v1240 = vunpack.c.l.b16 %v858
    %v1241 = vunpack.c.h.b16 %v858
    %v1242 = vunpack.c.l.b16 %v859
    %v1243 = vunpack.c.h.b16 %v859
    %v1244 = vunpack.c.l.b16 %v860
    %v1245 = vunpack.c.h.b16 %v860
    %v1246 = vunpack.c.l.b16 %v861
    %v1247 = vunpack.c.h.b16 %v861
    %v1248 = vunpack.c.l.b16 %v862
    %v1249 = vunpack.c.h.b16 %v862
    %v1250 = vunpack.c.l.b16 %v863
    %v1251 = vunpack.c.h.b16 %v863
    %v1252 = vunpack.c.l.b16 %v864
    %v1253 = vunpack.c.h.b16 %v864
    %v1254 = vunpack.c.l.b16 %v865
    %v1255 = vunpack.c.h.b16 %v865
    %v1256 = vunpack.c.l.b16 %v866
    %v1257 = vunpack.c.h.b16 %v866
    %v1258 = vunpack.c.l.b16 %v867
    %v1259 = vunpack.c.h.b16 %v867
    %v1260 = vunpack.c.l.b16 %v868
    %v1261 = vunpack.c.h.b16 %v868
    %v1262 = vunpack.c.l.b16 %v869
    %v1263 = vunpack.c.h.b16 %v869
    %v1264 = vunpack.c.l.b16 %v870
    %v1265 = vunpack.c.h.b16 %v870
    %v1266 = vunpack.c.l.b16 %v871
    %v1267 = vunpack.c.h.b16 %v871
    %v1268 = vunpack.c.l.b16 %v872
    %v1269 = vunpack.c.h.b16 %v872
    %v1270 = vunpack.c.l.b16 %v873
    %v1271 = vunpack.c.h.b16 %v873
    %v1272 = vunpack.c.l.b16 %v874
    %v1273 = vunpack.c.h.b16 %v874
    %v1274 = vunpack.c.l.b16 %v875
    %v1275 = vunpack.c.h.b16 %v875
    %v1276 = vunpack.c.l.b16 %v876
    %v1277 = vunpack.c.h.b16 %v876
    %v1278 = vunpack.c.l.b16 %v877
    %v1279 = vunpack.c.h.b16 %v877
    %v1280 = vunpack.c.l.b16 %v878
    %v1281 = vunpack.c.h.b16 %v878
    %v1282 = vunpack.c.l.b16 %v879
    %v1283 = vunpack.c.h.b16 %v879
    %v1284 = vunpack.c.l.b16 %v880
    %v1285 = vunpack.c.h.b16 %v880
    %v1286 = vunpack.c.l.b16 %v881
    %v1287 = vunpack.c.h.b16 %v881
    %v1288 = vunpack.c.l.b16 %v882
    %v1289 = vunpack.c.h.b16 %v882
    %v1290 = vunpack.c.l.b16 %v883
    %v1291 = vunpack.c.h.b16 %v883
    %v1292 = vunpack.c.l.b16 %v884
    %v1293 = vunpack.c.h.b16 %v884
    %v1294 = vunpack.c.l.b16 %v885
    %v1295 = vunpack.c.h.b16 %v885
    %v1296 = vpack.c.b16 %v1234, %v1232
    %v1297 = vpack.c.b16 %v1235, %v1233
    %v1298 = vpack.c.b16 %v1238, %v1236
    %v1299 = vpack.c.b16 %v1239, %v1237
    %v1300 = vpack.c.b16 %v1242, %v1240
    %v1301 = vpack.c.b16 %v1243, %v1241
    %v1302 = vpack.c.b16 %v1246, %v1244
    %v1303 = vpack.c.b16 %v1247, %v1245
    %v1304 = vpack.c.b16 %v1250, %v1248
    %v1305 = vpack.c.b16 %v1251, %v1249
    %v1306 = vpack.c.b16 %v1254, %v1252
    %v1307 = vpack.c.b16 %v1255, %v1253
    %v1308 = vpack.c.b16 %v1258, %v1256
    %v1309 = vpack.c.b16 %v1259, %v1257
    %v1310 = vpack.c.b16 %v1262, %v1260
    %v1311 = vpack.c.b16 %v1263, %v1261
    %v1312 = vpack.c.b16 %v1266, %v1264
    %v1313 = vpack.c.b16 %v1267, %v1265
    %v1314 = vpack.c.b16 %v1270, %v1268
    %v1315 = vpack.c.b16 %v1271, %v1269
    %v1316 = vpack.c.b16 %v1274, %v1272
    %v1317 = vpack.c.b16 %v1275, %v1273
    %v1318 = vpack.c.b16 %v1278, %v1276
    %v1319 = vpack.c.b16 %v1279, %v1277
    %v1320 = vpack.c.b16 %v1282, %v1280
    %v1321 = vpack.c.b16 %v1283, %v1281
    %v1322 = vpack.c.b16 %v1286, %v1284
    %v1323 = vpack.c.b16 %v1287, %v1285
    %v1324 = vpack.c.b16 %v1290, %v1288
    %v1325 = vpack.c.b16 %v1291, %v1289
    %v1326 = vpack.c.b16 %v1294, %v1292
    %v1327 = vpack.c.b16 %v1295, %v1293
    %1360 = vmatprep.subr.bf16.mxu0 %v1297
    %1361 = vmatpush1.bf16.msra.mxu0 %v1296
    %1362 = vmatprep.subr.bf16.mxu0 %v1299
    %1363 = vmatpush1.bf16.msra.mxu0 %v1298
    %1364 = vmatprep.subr.bf16.mxu0 %v1301
    %1365 = vmatpush1.bf16.msra.mxu0 %v1300
    %1366 = vmatprep.subr.bf16.mxu0 %v1303
    %1367 = vmatpush1.bf16.msra.mxu0 %v1302
    %1368 = vmatprep.subr.bf16.mxu0 %v1305
    %1369 = vmatpush1.bf16.msra.mxu0 %v1304
    %1370 = vmatprep.subr.bf16.mxu0 %v1307
    %1371 = vmatpush1.bf16.msra.mxu0 %v1306
    %1372 = vmatprep.subr.bf16.mxu0 %v1309
    %1373 = vmatpush1.bf16.msra.mxu0 %v1308
    %1374 = vmatprep.subr.bf16.mxu0 %v1311
    %1375 = vmatpush1.bf16.msra.mxu0 %v1310
    %1376 = vmatprep.subr.bf16.mxu0 %v1313
    %1377 = vmatpush1.bf16.msra.mxu0 %v1312
    %1378 = vmatprep.subr.bf16.mxu0 %v1315
    %1379 = vmatpush1.bf16.msra.mxu0 %v1314
    %1380 = vmatprep.subr.bf16.mxu0 %v1317
    %1381 = vmatpush1.bf16.msra.mxu0 %v1316
    %1382 = vmatprep.subr.bf16.mxu0 %v1319
    %1383 = vmatpush1.bf16.msra.mxu0 %v1318
    %1384 = vmatprep.subr.bf16.mxu0 %v1321
    %1385 = vmatpush1.bf16.msra.mxu0 %v1320
    %1386 = vmatprep.subr.bf16.mxu0 %v1323
    %1387 = vmatpush1.bf16.msra.mxu0 %v1322
    %1388 = vmatprep.subr.bf16.mxu0 %v1325
    %1389 = vmatpush1.bf16.msra.mxu0 %v1324
    %1390 = vmatprep.subr.bf16.mxu0 %v1327
    %1391 = vmatpush1.bf16.msra.mxu0 %v1326
    %1392 = vmatprep.mubr.bf16.mxu0 %v1185
    %1393 = vmatmul.mubr.bf16.gmra.mrb[0].mxu0 %v1184
    %v1394 = vpop.f32.mrb[0].mxu0
    %v1395 = vadd.f32 %v1195, %v1394
    %v1396 = vpop.f32.mrb[0].mxu0
    %v1397 = vadd.f32 %v1199, %v1396
    %v1398 = vpop.f32.mrb[0].mxu0
    %v1399 = vadd.f32 %v1195, %v1398
    %v1400 = vpop.f32.mrb[0].mxu0
    %v1401 = vadd.f32 %v1199, %v1400
    %1402 = vmatprep.mubr.bf16.mxu0 %v1187
    %1403 = vmatmul.mubr.bf16.gmra.mrb[0].mxu0 %v1186
    %v1404 = vpop.f32.mrb[0].mxu0
    %v1405 = vadd.f32 %v1195, %v1404
    %v1406 = vpop.f32.mrb[0].mxu0
    %v1407 = vadd.f32 %v1199, %v1406
    %v1408 = vpop.f32.mrb[0].mxu0
    %v1409 = vadd.f32 %v1195, %v1408
    %v1410 = vpop.f32.mrb[0].mxu0
    %v1411 = vadd.f32 %v1199, %v1410
    %1412 = vmatprep.mubr.bf16.mxu0 %v1189
    %1413 = vmatmul.mubr.bf16.gmra.mrb[0].mxu0 %v1188
    %v1414 = vpop.f32.mrb[0].mxu0
    %v1415 = vadd.f32 %v1195, %v1414
    %v1416 = vpop.f32.mrb[0].mxu0
    %v1417 = vadd.f32 %v1199, %v1416
    %v1418 = vpop.f32.mrb[0].mxu0
    %v1419 = vadd.f32 %v1195, %v1418
    %v1420 = vpop.f32.mrb[0].mxu0
    %v1421 = vadd.f32 %v1199, %v1420
    %1422 = vmatprep.mubr.bf16.mxu0 %v1191
    %1423 = vmatmul.mubr.bf16.gmra.mrb[0].mxu0 %v1190
    %v1424 = vpop.f32.mrb[0].mxu0
    %v1425 = vadd.f32 %v1195, %v1424
    %v1426 = vpop.f32.mrb[0].mxu0
    %v1427 = vadd.f32 %v1199, %v1426
    %v1428 = vpop.f32.mrb[0].mxu0
    %v1429 = vadd.f32 %v1195, %v1428
    %v1430 = vpop.f32.mrb[0].mxu0
    %v1431 = vadd.f32 %v1199, %v1430
    %1432 = vdwg.mxu0
    %v1433 = vpack.c.bf16 %v807, %v805
    %v1434 = vpack.c.bf16 %v808, %v806
    %v1435 = vpack.c.bf16 %v811, %v809
    %v1436 = vpack.c.bf16 %v812, %v810
    %v1437 = vpack.c.bf16 %v815, %v813
    %v1438 = vpack.c.bf16 %v816, %v814
    %v1439 = vpack.c.bf16 %v819, %v817
    %v1440 = vpack.c.bf16 %v820, %v818
    %v1441 = vlaneseq
    %v1442 = vshrl.u32 %v1441, 7
    %v1443 = vsub.s32 2, %v1442
    %v1444 = vrot.slane %v217, %v1443
    %v1445 = vlaneseq
    %v1446 = vshrl.u32 %v1445, 7
    %v1447 = vsub.s32 2, %v1446
    %v1448 = vrot.slane %v218, %v1447
    %v1481 = vunpack.c.l.b16 %v887
    %v1482 = vunpack.c.h.b16 %v887
    %v1483 = vunpack.c.l.b16 %v888
    %v1484 = vunpack.c.h.b16 %v888
    %v1485 = vunpack.c.l.b16 %v889
    %v1486 = vunpack.c.h.b16 %v889
    %v1487 = vunpack.c.l.b16 %v890
    %v1488 = vunpack.c.h.b16 %v890
    %v1489 = vunpack.c.l.b16 %v891
    %v1490 = vunpack.c.h.b16 %v891
    %v1491 = vunpack.c.l.b16 %v892
    %v1492 = vunpack.c.h.b16 %v892
    %v1493 = vunpack.c.l.b16 %v893
    %v1494 = vunpack.c.h.b16 %v893
    %v1495 = vunpack.c.l.b16 %v894
    %v1496 = vunpack.c.h.b16 %v894
    %v1497 = vunpack.c.l.b16 %v895
    %v1498 = vunpack.c.h.b16 %v895
    %v1499 = vunpack.c.l.b16 %v896
    %v1500 = vunpack.c.h.b16 %v896
    %v1501 = vunpack.c.l.b16 %v897
    %v1502 = vunpack.c.h.b16 %v897
    %v1503 = vunpack.c.l.b16 %v898
    %v1504 = vunpack.c.h.b16 %v898
    %v1505 = vunpack.c.l.b16 %v899
    %v1506 = vunpack.c.h.b16 %v899
    %v1507 = vunpack.c.l.b16 %v900
    %v1508 = vunpack.c.h.b16 %v900
    %v1509 = vunpack.c.l.b16 %v901
    %v1510 = vunpack.c.h.b16 %v901
    %v1511 = vunpack.c.l.b16 %v902
    %v1512 = vunpack.c.h.b16 %v902
    %v1513 = vunpack.c.l.b16 %v903
    %v1514 = vunpack.c.h.b16 %v903
    %v1515 = vunpack.c.l.b16 %v904
    %v1516 = vunpack.c.h.b16 %v904
    %v1517 = vunpack.c.l.b16 %v905
    %v1518 = vunpack.c.h.b16 %v905
    %v1519 = vunpack.c.l.b16 %v906
    %v1520 = vunpack.c.h.b16 %v906
    %v1521 = vunpack.c.l.b16 %v907
    %v1522 = vunpack.c.h.b16 %v907
    %v1523 = vunpack.c.l.b16 %v908
    %v1524 = vunpack.c.h.b16 %v908
    %v1525 = vunpack.c.l.b16 %v909
    %v1526 = vunpack.c.h.b16 %v909
    %v1527 = vunpack.c.l.b16 %v910
    %v1528 = vunpack.c.h.b16 %v910
    %v1529 = vunpack.c.l.b16 %v911
    %v1530 = vunpack.c.h.b16 %v911
    %v1531 = vunpack.c.l.b16 %v912
    %v1532 = vunpack.c.h.b16 %v912
    %v1533 = vunpack.c.l.b16 %v913
    %v1534 = vunpack.c.h.b16 %v913
    %v1535 = vunpack.c.l.b16 %v914
    %v1536 = vunpack.c.h.b16 %v914
    %v1537 = vunpack.c.l.b16 %v915
    %v1538 = vunpack.c.h.b16 %v915
    %v1539 = vunpack.c.l.b16 %v916
    %v1540 = vunpack.c.h.b16 %v916
    %v1541 = vunpack.c.l.b16 %v917
    %v1542 = vunpack.c.h.b16 %v917
    %v1543 = vunpack.c.l.b16 %v918
    %v1544 = vunpack.c.h.b16 %v918
    %v1545 = vpack.c.b16 %v1483, %v1481
    %v1546 = vpack.c.b16 %v1484, %v1482
    %v1547 = vpack.c.b16 %v1487, %v1485
    %v1548 = vpack.c.b16 %v1488, %v1486
    %v1549 = vpack.c.b16 %v1491, %v1489
    %v1550 = vpack.c.b16 %v1492, %v1490
    %v1551 = vpack.c.b16 %v1495, %v1493
    %v1552 = vpack.c.b16 %v1496, %v1494
    %v1553 = vpack.c.b16 %v1499, %v1497
    %v1554 = vpack.c.b16 %v1500, %v1498
    %v1555 = vpack.c.b16 %v1503, %v1501
    %v1556 = vpack.c.b16 %v1504, %v1502
    %v1557 = vpack.c.b16 %v1507, %v1505
    %v1558 = vpack.c.b16 %v1508, %v1506
    %v1559 = vpack.c.b16 %v1511, %v1509
    %v1560 = vpack.c.b16 %v1512, %v1510
    %v1561 = vpack.c.b16 %v1515, %v1513
    %v1562 = vpack.c.b16 %v1516, %v1514
    %v1563 = vpack.c.b16 %v1519, %v1517
    %v1564 = vpack.c.b16 %v1520, %v1518
    %v1565 = vpack.c.b16 %v1523, %v1521
    %v1566 = vpack.c.b16 %v1524, %v1522
    %v1567 = vpack.c.b16 %v1527, %v1525
    %v1568 = vpack.c.b16 %v1528, %v1526
    %v1569 = vpack.c.b16 %v1531, %v1529
    %v1570 = vpack.c.b16 %v1532, %v1530
    %v1571 = vpack.c.b16 %v1535, %v1533
    %v1572 = vpack.c.b16 %v1536, %v1534
    %v1573 = vpack.c.b16 %v1539, %v1537
    %v1574 = vpack.c.b16 %v1540, %v1538
    %v1575 = vpack.c.b16 %v1543, %v1541
    %v1576 = vpack.c.b16 %v1544, %v1542
    %1609 = vmatprep.subr.bf16.mxu0 %v1546
    %1610 = vmatpush1.bf16.msra.mxu0 %v1545
    %1611 = vmatprep.subr.bf16.mxu0 %v1548
    %1612 = vmatpush1.bf16.msra.mxu0 %v1547
    %1613 = vmatprep.subr.bf16.mxu0 %v1550
    %1614 = vmatpush1.bf16.msra.mxu0 %v1549
    %1615 = vmatprep.subr.bf16.mxu0 %v1552
    %1616 = vmatpush1.bf16.msra.mxu0 %v1551
    %1617 = vmatprep.subr.bf16.mxu0 %v1554
    %1618 = vmatpush1.bf16.msra.mxu0 %v1553
    %1619 = vmatprep.subr.bf16.mxu0 %v1556
    %1620 = vmatpush1.bf16.msra.mxu0 %v1555
    %1621 = vmatprep.subr.bf16.mxu0 %v1558
    %1622 = vmatpush1.bf16.msra.mxu0 %v1557
    %1623 = vmatprep.subr.bf16.mxu0 %v1560
    %1624 = vmatpush1.bf16.msra.mxu0 %v1559
    %1625 = vmatprep.subr.bf16.mxu0 %v1562
    %1626 = vmatpush1.bf16.msra.mxu0 %v1561
    %1627 = vmatprep.subr.bf16.mxu0 %v1564
    %1628 = vmatpush1.bf16.msra.mxu0 %v1563
    %1629 = vmatprep.subr.bf16.mxu0 %v1566
    %1630 = vmatpush1.bf16.msra.mxu0 %v1565
    %1631 = vmatprep.subr.bf16.mxu0 %v1568
    %1632 = vmatpush1.bf16.msra.mxu0 %v1567
    %1633 = vmatprep.subr.bf16.mxu0 %v1570
    %1634 = vmatpush1.bf16.msra.mxu0 %v1569
    %1635 = vmatprep.subr.bf16.mxu0 %v1572
    %1636 = vmatpush1.bf16.msra.mxu0 %v1571
    %1637 = vmatprep.subr.bf16.mxu0 %v1574
    %1638 = vmatpush1.bf16.msra.mxu0 %v1573
    %1639 = vmatprep.subr.bf16.mxu0 %v1576
    %1640 = vmatpush1.bf16.msra.mxu0 %v1575
    %1641 = vmatprep.mubr.bf16.mxu0 %v1434
    %1642 = vmatmul.mubr.bf16.gmra.mrb[0].mxu0 %v1433
    %v1643 = vpop.f32.mrb[0].mxu0
    %v1644 = vadd.f32 %v1444, %v1643
    %v1645 = vpop.f32.mrb[0].mxu0
    %v1646 = vadd.f32 %v1448, %v1645
    %v1647 = vpop.f32.mrb[0].mxu0
    %v1648 = vadd.f32 %v1444, %v1647
    %v1649 = vpop.f32.mrb[0].mxu0
    %v1650 = vadd.f32 %v1448, %v1649
    %1651 = vmatprep.mubr.bf16.mxu0 %v1436
    %1652 = vmatmul.mubr.bf16.gmra.mrb[0].mxu0 %v1435
    %v1653 = vpop.f32.mrb[0].mxu0
    %v1654 = vadd.f32 %v1444, %v1653
    %v1655 = vpop.f32.mrb[0].mxu0
    %v1656 = vadd.f32 %v1448, %v1655
    %v1657 = vpop.f32.mrb[0].mxu0
    %v1658 = vadd.f32 %v1444, %v1657
    %v1659 = vpop.f32.mrb[0].mxu0
    %v1660 = vadd.f32 %v1448, %v1659
    %1661 = vmatprep.mubr.bf16.mxu0 %v1438
    %1662 = vmatmul.mubr.bf16.gmra.mrb[0].mxu0 %v1437
    %v1663 = vpop.f32.mrb[0].mxu0
    %v1664 = vadd.f32 %v1444, %v1663
    %v1665 = vpop.f32.mrb[0].mxu0
    %v1666 = vadd.f32 %v1448, %v1665
    %v1667 = vpop.f32.mrb[0].mxu0
    %v1668 = vadd.f32 %v1444, %v1667
    %v1669 = vpop.f32.mrb[0].mxu0
    %v1670 = vadd.f32 %v1448, %v1669
    %1671 = vmatprep.mubr.bf16.mxu0 %v1440
    %1672 = vmatmul.mubr.bf16.gmra.mrb[0].mxu0 %v1439
    %v1673 = vpop.f32.mrb[0].mxu0
    %v1674 = vadd.f32 %v1444, %v1673
    %v1675 = vpop.f32.mrb[0].mxu0
    %v1676 = vadd.f32 %v1448, %v1675
    %v1677 = vpop.f32.mrb[0].mxu0
    %v1678 = vadd.f32 %v1444, %v1677
    %v1679 = vpop.f32.mrb[0].mxu0
    %v1680 = vadd.f32 %v1448, %v1679
    %1681 = vdwg.mxu0
    %v1682 = vpack.c.bf16 %v1168, %v1168
    %v1683 = vpack.c.bf16 %v1170, %v1170
    %v1684 = vpack.c.bf16 %v1172, %v1172
    %v1685 = vpack.c.bf16 %v1174, %v1174
    %v1686 = vpack.c.bf16 %v1176, %v1176
    %v1687 = vpack.c.bf16 %v1178, %v1178
    %v1688 = vpack.c.bf16 %v1180, %v1180
    %v1689 = vpack.c.bf16 %v1182, %v1182
    %v1690 = vpack.c.bf16 %v1395, %v1395
    %v1691 = vpack.c.bf16 %v1399, %v1399
    %v1692 = vpack.c.bf16 %v1405, %v1405
    %v1693 = vpack.c.bf16 %v1409, %v1409
    %v1694 = vpack.c.bf16 %v1415, %v1415
    %v1695 = vpack.c.bf16 %v1419, %v1419
    %v1696 = vpack.c.bf16 %v1425, %v1425
    %v1697 = vpack.c.bf16 %v1429, %v1429
    %v1698 = vpack.c.bf16 %v1644, %v1644
    %v1699 = vpack.c.bf16 %v1648, %v1648
    %v1700 = vpack.c.bf16 %v1654, %v1654
    %v1701 = vpack.c.bf16 %v1658, %v1658
    %v1702 = vpack.c.bf16 %v1664, %v1664
    %v1703 = vpack.c.bf16 %v1668, %v1668
    %v1704 = vpack.c.bf16 %v1674, %v1674
    %v1705 = vpack.c.bf16 %v1678, %v1678
    %vm1706 = vcmask 523264
    %v1708 = vsel %vm1706, %v1682, 0
    %v1711 = vsel %vm1706, %v1690, 0
    %1713 = vmatprep.subr.bf16.mxu0 0
    %1714 = vmatpush1.bf16.xpose.msra.mxu0 %v1711
    %1715 = vmatprep.subr.bf16.mxu0 0
    %1716 = vmatpush1.bf16.xpose.msra.mxu0 0
    %1717 = vmatprep.subr.bf16.mxu0 0
    %1718 = vmatpush1.bf16.xpose.msra.mxu0 0
    %1719 = vmatprep.subr.bf16.mxu0 0
    %1720 = vmatpush1.bf16.xpose.msra.mxu0 0
    %1721 = vmatprep.subr.bf16.mxu0 0
    %1722 = vmatpush1.bf16.xpose.msra.mxu0 0
    %1723 = vmatprep.subr.bf16.mxu0 0
    %1724 = vmatpush1.bf16.xpose.msra.mxu0 0
    %1725 = vmatprep.subr.bf16.mxu0 0
    %1726 = vmatpush1.bf16.xpose.msra.mxu0 0
    %1727 = vmatprep.subr.bf16.mxu0 0
    %1728 = vmatpush1.bf16.xpose.msra.mxu0 0
    %1729 = vmatprep.subr.bf16.mxu0 0
    %1730 = vmatpush1.bf16.xpose.msra.mxu0 0
    %1731 = vmatprep.subr.bf16.mxu0 0
    %1732 = vmatpush1.bf16.xpose.msra.mxu0 0
    %1733 = vmatprep.subr.bf16.mxu0 0
    %1734 = vmatpush1.bf16.xpose.msra.mxu0 0
    %1735 = vmatprep.subr.bf16.mxu0 0
    %1736 = vmatpush1.bf16.xpose.msra.mxu0 0
    %1737 = vmatprep.subr.bf16.mxu0 0
    %1738 = vmatpush1.bf16.xpose.msra.mxu0 0
    %1739 = vmatprep.subr.bf16.mxu0 0
    %1740 = vmatpush1.bf16.xpose.msra.mxu0 0
    %1741 = vmatprep.subr.bf16.mxu0 0
    %1742 = vmatpush1.bf16.xpose.msra.mxu0 0
    %1743 = vmatprep.subr.bf16.mxu0 0
    %1744 = vmatpush1.bf16.xpose.msra.mxu0 0
    %1745 = vmatprep.mubr.bf16.mxu0 0
    %1746 = vmatmul.mubr.bf16.gmra.mrb[0].mxu0 %v1708
    %v1747 = vpop.f32.mrb[0].mxu0
    %v1748 = vadd.f32 0.0, %v1747
    %v1749 = vpop.f32.mrb[0].mxu0
    %v1750 = vpop.f32.mrb[0].mxu0
    %v1751 = vpop.f32.mrb[0].mxu0
    %1752 = vdwg.mxu0
    %v1754 = vsel %vm1706, %v1683, 0
    %v1757 = vsel %vm1706, %v1691, 0
    %1759 = vmatprep.subr.bf16.mxu0 0
    %1760 = vmatpush1.bf16.xpose.msra.mxu0 %v1757
    %1761 = vmatprep.subr.bf16.mxu0 0
    %1762 = vmatpush1.bf16.xpose.msra.mxu0 0
    %1763 = vmatprep.subr.bf16.mxu0 0
    %1764 = vmatpush1.bf16.xpose.msra.mxu0 0
    %1765 = vmatprep.subr.bf16.mxu0 0
    %1766 = vmatpush1.bf16.xpose.msra.mxu0 0
    %1767 = vmatprep.subr.bf16.mxu0 0
    %1768 = vmatpush1.bf16.xpose.msra.mxu0 0
    %1769 = vmatprep.subr.bf16.mxu0 0
    %1770 = vmatpush1.bf16.xpose.msra.mxu0 0
    %1771 = vmatprep.subr.bf16.mxu0 0
    %1772 = vmatpush1.bf16.xpose.msra.mxu0 0
    %1773 = vmatprep.subr.bf16.mxu0 0
    %1774 = vmatpush1.bf16.xpose.msra.mxu0 0
    %1775 = vmatprep.subr.bf16.mxu0 0
    %1776 = vmatpush1.bf16.xpose.msra.mxu0 0
    %1777 = vmatprep.subr.bf16.mxu0 0
    %1778 = vmatpush1.bf16.xpose.msra.mxu0 0
    %1779 = vmatprep.subr.bf16.mxu0 0
    %1780 = vmatpush1.bf16.xpose.msra.mxu0 0
    %1781 = vmatprep.subr.bf16.mxu0 0
    %1782 = vmatpush1.bf16.xpose.msra.mxu0 0
    %1783 = vmatprep.subr.bf16.mxu0 0
    %1784 = vmatpush1.bf16.xpose.msra.mxu0 0
    %1785 = vmatprep.subr.bf16.mxu0 0
    %1786 = vmatpush1.bf16.xpose.msra.mxu0 0
    %1787 = vmatprep.subr.bf16.mxu0 0
    %1788 = vmatpush1.bf16.xpose.msra.mxu0 0
    %1789 = vmatprep.subr.bf16.mxu0 0
    %1790 = vmatpush1.bf16.xpose.msra.mxu0 0
    %1791 = vmatprep.mubr.bf16.mxu0 0
    %1792 = vmatmul.mubr.bf16.gmra.mrb[0].mxu0 %v1754
    %v1793 = vpop.f32.mrb[0].mxu0
    %v1794 = vadd.f32 0.0, %v1793
    %v1795 = vpop.f32.mrb[0].mxu0
    %v1796 = vpop.f32.mrb[0].mxu0
    %v1797 = vpop.f32.mrb[0].mxu0
    %1798 = vdwg.mxu0
    %v1800 = vsel %vm1706, %v1684, 0
    %v1803 = vsel %vm1706, %v1692, 0
    %1805 = vmatprep.subr.bf16.mxu0 0
    %1806 = vmatpush1.bf16.xpose.msra.mxu0 %v1803
    %1807 = vmatprep.subr.bf16.mxu0 0
    %1808 = vmatpush1.bf16.xpose.msra.mxu0 0
    %1809 = vmatprep.subr.bf16.mxu0 0
    %1810 = vmatpush1.bf16.xpose.msra.mxu0 0
    %1811 = vmatprep.subr.bf16.mxu0 0
    %1812 = vmatpush1.bf16.xpose.msra.mxu0 0
    %1813 = vmatprep.subr.bf16.mxu0 0
    %1814 = vmatpush1.bf16.xpose.msra.mxu0 0
    %1815 = vmatprep.subr.bf16.mxu0 0
    %1816 = vmatpush1.bf16.xpose.msra.mxu0 0
    %1817 = vmatprep.subr.bf16.mxu0 0
    %1818 = vmatpush1.bf16.xpose.msra.mxu0 0
    %1819 = vmatprep.subr.bf16.mxu0 0
    %1820 = vmatpush1.bf16.xpose.msra.mxu0 0
    %1821 = vmatprep.subr.bf16.mxu0 0
    %1822 = vmatpush1.bf16.xpose.msra.mxu0 0
    %1823 = vmatprep.subr.bf16.mxu0 0
    %1824 = vmatpush1.bf16.xpose.msra.mxu0 0
    %1825 = vmatprep.subr.bf16.mxu0 0
    %1826 = vmatpush1.bf16.xpose.msra.mxu0 0
    %1827 = vmatprep.subr.bf16.mxu0 0
    %1828 = vmatpush1.bf16.xpose.msra.mxu0 0
    %1829 = vmatprep.subr.bf16.mxu0 0
    %1830 = vmatpush1.bf16.xpose.msra.mxu0 0
    %1831 = vmatprep.subr.bf16.mxu0 0
    %1832 = vmatpush1.bf16.xpose.msra.mxu0 0
    %1833 = vmatprep.subr.bf16.mxu0 0
    %1834 = vmatpush1.bf16.xpose.msra.mxu0 0
    %1835 = vmatprep.subr.bf16.mxu0 0
    %1836 = vmatpush1.bf16.xpose.msra.mxu0 0
    %1837 = vmatprep.mubr.bf16.mxu0 0
    %1838 = vmatmul.mubr.bf16.gmra.mrb[0].mxu0 %v1800
    %v1839 = vpop.f32.mrb[0].mxu0
    %v1840 = vadd.f32 0.0, %v1839
    %v1841 = vpop.f32.mrb[0].mxu0
    %v1842 = vpop.f32.mrb[0].mxu0
    %v1843 = vpop.f32.mrb[0].mxu0
    %1844 = vdwg.mxu0
    %v1846 = vsel %vm1706, %v1685, 0
    %v1849 = vsel %vm1706, %v1693, 0
    %1851 = vmatprep.subr.bf16.mxu0 0
    %1852 = vmatpush1.bf16.xpose.msra.mxu0 %v1849
    %1853 = vmatprep.subr.bf16.mxu0 0
    %1854 = vmatpush1.bf16.xpose.msra.mxu0 0
    %1855 = vmatprep.subr.bf16.mxu0 0
    %1856 = vmatpush1.bf16.xpose.msra.mxu0 0
    %1857 = vmatprep.subr.bf16.mxu0 0
    %1858 = vmatpush1.bf16.xpose.msra.mxu0 0
    %1859 = vmatprep.subr.bf16.mxu0 0
    %1860 = vmatpush1.bf16.xpose.msra.mxu0 0
    %1861 = vmatprep.subr.bf16.mxu0 0
    %1862 = vmatpush1.bf16.xpose.msra.mxu0 0
    %1863 = vmatprep.subr.bf16.mxu0 0
    %1864 = vmatpush1.bf16.xpose.msra.mxu0 0
    %1865 = vmatprep.subr.bf16.mxu0 0
    %1866 = vmatpush1.bf16.xpose.msra.mxu0 0
    %1867 = vmatprep.subr.bf16.mxu0 0
    %1868 = vmatpush1.bf16.xpose.msra.mxu0 0
    %1869 = vmatprep.subr.bf16.mxu0 0
    %1870 = vmatpush1.bf16.xpose.msra.mxu0 0
    %1871 = vmatprep.subr.bf16.mxu0 0
    %1872 = vmatpush1.bf16.xpose.msra.mxu0 0
    %1873 = vmatprep.subr.bf16.mxu0 0
    %1874 = vmatpush1.bf16.xpose.msra.mxu0 0
    %1875 = vmatprep.subr.bf16.mxu0 0
    %1876 = vmatpush1.bf16.xpose.msra.mxu0 0
    %1877 = vmatprep.subr.bf16.mxu0 0
    %1878 = vmatpush1.bf16.xpose.msra.mxu0 0
    %1879 = vmatprep.subr.bf16.mxu0 0
    %1880 = vmatpush1.bf16.xpose.msra.mxu0 0
    %1881 = vmatprep.subr.bf16.mxu0 0
    %1882 = vmatpush1.bf16.xpose.msra.mxu0 0
    %1883 = vmatprep.mubr.bf16.mxu0 0
    %1884 = vmatmul.mubr.bf16.gmra.mrb[0].mxu0 %v1846
    %v1885 = vpop.f32.mrb[0].mxu0
    %v1886 = vadd.f32 0.0, %v1885
    %v1887 = vpop.f32.mrb[0].mxu0
    %v1888 = vpop.f32.mrb[0].mxu0
    %v1889 = vpop.f32.mrb[0].mxu0
    %1890 = vdwg.mxu0
    %v1892 = vsel %vm1706, %v1686, 0
    %v1895 = vsel %vm1706, %v1694, 0
    %1897 = vmatprep.subr.bf16.mxu0 0
    %1898 = vmatpush1.bf16.xpose.msra.mxu0 %v1895
    %1899 = vmatprep.subr.bf16.mxu0 0
    %1900 = vmatpush1.bf16.xpose.msra.mxu0 0
    %1901 = vmatprep.subr.bf16.mxu0 0
    %1902 = vmatpush1.bf16.xpose.msra.mxu0 0
    %1903 = vmatprep.subr.bf16.mxu0 0
    %1904 = vmatpush1.bf16.xpose.msra.mxu0 0
    %1905 = vmatprep.subr.bf16.mxu0 0
    %1906 = vmatpush1.bf16.xpose.msra.mxu0 0
    %1907 = vmatprep.subr.bf16.mxu0 0
    %1908 = vmatpush1.bf16.xpose.msra.mxu0 0
    %1909 = vmatprep.subr.bf16.mxu0 0
    %1910 = vmatpush1.bf16.xpose.msra.mxu0 0
    %1911 = vmatprep.subr.bf16.mxu0 0
    %1912 = vmatpush1.bf16.xpose.msra.mxu0 0
    %1913 = vmatprep.subr.bf16.mxu0 0
    %1914 = vmatpush1.bf16.xpose.msra.mxu0 0
    %1915 = vmatprep.subr.bf16.mxu0 0
    %1916 = vmatpush1.bf16.xpose.msra.mxu0 0
    %1917 = vmatprep.subr.bf16.mxu0 0
    %1918 = vmatpush1.bf16.xpose.msra.mxu0 0
    %1919 = vmatprep.subr.bf16.mxu0 0
    %1920 = vmatpush1.bf16.xpose.msra.mxu0 0
    %1921 = vmatprep.subr.bf16.mxu0 0
    %1922 = vmatpush1.bf16.xpose.msra.mxu0 0
    %1923 = vmatprep.subr.bf16.mxu0 0
    %1924 = vmatpush1.bf16.xpose.msra.mxu0 0
    %1925 = vmatprep.subr.bf16.mxu0 0
    %1926 = vmatpush1.bf16.xpose.msra.mxu0 0
    %1927 = vmatprep.subr.bf16.mxu0 0
    %1928 = vmatpush1.bf16.xpose.msra.mxu0 0
    %1929 = vmatprep.mubr.bf16.mxu0 0
    %1930 = vmatmul.mubr.bf16.gmra.mrb[0].mxu0 %v1892
    %v1931 = vpop.f32.mrb[0].mxu0
    %v1932 = vadd.f32 0.0, %v1931
    %v1933 = vpop.f32.mrb[0].mxu0
    %v1934 = vpop.f32.mrb[0].mxu0
    %v1935 = vpop.f32.mrb[0].mxu0
    %1936 = vdwg.mxu0
    %v1938 = vsel %vm1706, %v1687, 0
    %v1941 = vsel %vm1706, %v1695, 0
    %1943 = vmatprep.subr.bf16.mxu0 0
    %1944 = vmatpush1.bf16.xpose.msra.mxu0 %v1941
    %1945 = vmatprep.subr.bf16.mxu0 0
    %1946 = vmatpush1.bf16.xpose.msra.mxu0 0
    %1947 = vmatprep.subr.bf16.mxu0 0
    %1948 = vmatpush1.bf16.xpose.msra.mxu0 0
    %1949 = vmatprep.subr.bf16.mxu0 0
    %1950 = vmatpush1.bf16.xpose.msra.mxu0 0
    %1951 = vmatprep.subr.bf16.mxu0 0
    %1952 = vmatpush1.bf16.xpose.msra.mxu0 0
    %1953 = vmatprep.subr.bf16.mxu0 0
    %1954 = vmatpush1.bf16.xpose.msra.mxu0 0
    %1955 = vmatprep.subr.bf16.mxu0 0
    %1956 = vmatpush1.bf16.xpose.msra.mxu0 0
    %1957 = vmatprep.subr.bf16.mxu0 0
    %1958 = vmatpush1.bf16.xpose.msra.mxu0 0
    %1959 = vmatprep.subr.bf16.mxu0 0
    %1960 = vmatpush1.bf16.xpose.msra.mxu0 0
    %1961 = vmatprep.subr.bf16.mxu0 0
    %1962 = vmatpush1.bf16.xpose.msra.mxu0 0
    %1963 = vmatprep.subr.bf16.mxu0 0
    %1964 = vmatpush1.bf16.xpose.msra.mxu0 0
    %1965 = vmatprep.subr.bf16.mxu0 0
    %1966 = vmatpush1.bf16.xpose.msra.mxu0 0
    %1967 = vmatprep.subr.bf16.mxu0 0
    %1968 = vmatpush1.bf16.xpose.msra.mxu0 0
    %1969 = vmatprep.subr.bf16.mxu0 0
    %1970 = vmatpush1.bf16.xpose.msra.mxu0 0
    %1971 = vmatprep.subr.bf16.mxu0 0
    %1972 = vmatpush1.bf16.xpose.msra.mxu0 0
    %1973 = vmatprep.subr.bf16.mxu0 0
    %1974 = vmatpush1.bf16.xpose.msra.mxu0 0
    %1975 = vmatprep.mubr.bf16.mxu0 0
    %1976 = vmatmul.mubr.bf16.gmra.mrb[0].mxu0 %v1938
    %v1977 = vpop.f32.mrb[0].mxu0
    %v1978 = vadd.f32 0.0, %v1977
    %v1979 = vpop.f32.mrb[0].mxu0
    %v1980 = vpop.f32.mrb[0].mxu0
    %v1981 = vpop.f32.mrb[0].mxu0
    %1982 = vdwg.mxu0
    %v1984 = vsel %vm1706, %v1688, 0
    %v1987 = vsel %vm1706, %v1696, 0
    %1989 = vmatprep.subr.bf16.mxu0 0
    %1990 = vmatpush1.bf16.xpose.msra.mxu0 %v1987
    %1991 = vmatprep.subr.bf16.mxu0 0
    %1992 = vmatpush1.bf16.xpose.msra.mxu0 0
    %1993 = vmatprep.subr.bf16.mxu0 0
    %1994 = vmatpush1.bf16.xpose.msra.mxu0 0
    %1995 = vmatprep.subr.bf16.mxu0 0
    %1996 = vmatpush1.bf16.xpose.msra.mxu0 0
    %1997 = vmatprep.subr.bf16.mxu0 0
    %1998 = vmatpush1.bf16.xpose.msra.mxu0 0
    %1999 = vmatprep.subr.bf16.mxu0 0
    %2000 = vmatpush1.bf16.xpose.msra.mxu0 0
    %2001 = vmatprep.subr.bf16.mxu0 0
    %2002 = vmatpush1.bf16.xpose.msra.mxu0 0
    %2003 = vmatprep.subr.bf16.mxu0 0
    %2004 = vmatpush1.bf16.xpose.msra.mxu0 0
    %2005 = vmatprep.subr.bf16.mxu0 0
    %2006 = vmatpush1.bf16.xpose.msra.mxu0 0
    %2007 = vmatprep.subr.bf16.mxu0 0
    %2008 = vmatpush1.bf16.xpose.msra.mxu0 0
    %2009 = vmatprep.subr.bf16.mxu0 0
    %2010 = vmatpush1.bf16.xpose.msra.mxu0 0
    %2011 = vmatprep.subr.bf16.mxu0 0
    %2012 = vmatpush1.bf16.xpose.msra.mxu0 0
    %2013 = vmatprep.subr.bf16.mxu0 0
    %2014 = vmatpush1.bf16.xpose.msra.mxu0 0
    %2015 = vmatprep.subr.bf16.mxu0 0
    %2016 = vmatpush1.bf16.xpose.msra.mxu0 0
    %2017 = vmatprep.subr.bf16.mxu0 0
    %2018 = vmatpush1.bf16.xpose.msra.mxu0 0
    %2019 = vmatprep.subr.bf16.mxu0 0
    %2020 = vmatpush1.bf16.xpose.msra.mxu0 0
    %2021 = vmatprep.mubr.bf16.mxu0 0
    %2022 = vmatmul.mubr.bf16.gmra.mrb[0].mxu0 %v1984
    %v2023 = vpop.f32.mrb[0].mxu0
    %v2024 = vadd.f32 0.0, %v2023
    %v2025 = vpop.f32.mrb[0].mxu0
    %v2026 = vpop.f32.mrb[0].mxu0
    %v2027 = vpop.f32.mrb[0].mxu0
    %2028 = vdwg.mxu0
    %v2030 = vsel %vm1706, %v1689, 0
    %v2033 = vsel %vm1706, %v1697, 0
    %2035 = vmatprep.subr.bf16.mxu0 0
    %2036 = vmatpush1.bf16.xpose.msra.mxu0 %v2033
    %2037 = vmatprep.subr.bf16.mxu0 0
    %2038 = vmatpush1.bf16.xpose.msra.mxu0 0
    %2039 = vmatprep.subr.bf16.mxu0 0
    %2040 = vmatpush1.bf16.xpose.msra.mxu0 0
    %2041 = vmatprep.subr.bf16.mxu0 0
    %2042 = vmatpush1.bf16.xpose.msra.mxu0 0
    %2043 = vmatprep.subr.bf16.mxu0 0
    %2044 = vmatpush1.bf16.xpose.msra.mxu0 0
    %2045 = vmatprep.subr.bf16.mxu0 0
    %2046 = vmatpush1.bf16.xpose.msra.mxu0 0
    %2047 = vmatprep.subr.bf16.mxu0 0
    %2048 = vmatpush1.bf16.xpose.msra.mxu0 0
    %2049 = vmatprep.subr.bf16.mxu0 0
    %2050 = vmatpush1.bf16.xpose.msra.mxu0 0
    %2051 = vmatprep.subr.bf16.mxu0 0
    %2052 = vmatpush1.bf16.xpose.msra.mxu0 0
    %2053 = vmatprep.subr.bf16.mxu0 0
    %2054 = vmatpush1.bf16.xpose.msra.mxu0 0
    %2055 = vmatprep.subr.bf16.mxu0 0
    %2056 = vmatpush1.bf16.xpose.msra.mxu0 0
    %2057 = vmatprep.subr.bf16.mxu0 0
    %2058 = vmatpush1.bf16.xpose.msra.mxu0 0
    %2059 = vmatprep.subr.bf16.mxu0 0
    %2060 = vmatpush1.bf16.xpose.msra.mxu0 0
    %2061 = vmatprep.subr.bf16.mxu0 0
    %2062 = vmatpush1.bf16.xpose.msra.mxu0 0
    %2063 = vmatprep.subr.bf16.mxu0 0
    %2064 = vmatpush1.bf16.xpose.msra.mxu0 0
    %2065 = vmatprep.subr.bf16.mxu0 0
    %2066 = vmatpush1.bf16.xpose.msra.mxu0 0
    %2067 = vmatprep.mubr.bf16.mxu0 0
    %2068 = vmatmul.mubr.bf16.gmra.mrb[0].mxu0 %v2030
    %v2069 = vpop.f32.mrb[0].mxu0
    %v2070 = vadd.f32 0.0, %v2069
    %v2071 = vpop.f32.mrb[0].mxu0
    %v2072 = vpop.f32.mrb[0].mxu0
    %v2073 = vpop.f32.mrb[0].mxu0
    %2074 = vdwg.mxu0
    %vm2075 = vcmask 64512
    %v2076 = vsel %vm2075, %v1748, -inf
    %2077 = vmax.xlane.f32.xlu0 %v2076
    %v2078 = vpop.xlane.xlu0 %2077
    %v2079 = vsel %vm2075, %v1794, -inf
    %2080 = vmax.xlane.f32.xlu0 %v2079
    %v2081 = vpop.xlane.xlu0 %2080
    %v2082 = vsel %vm2075, %v1840, -inf
    %2083 = vmax.xlane.f32.xlu0 %v2082
    %v2084 = vpop.xlane.xlu0 %2083
    %v2085 = vsel %vm2075, %v1886, -inf
    %2086 = vmax.xlane.f32.xlu0 %v2085
    %v2087 = vpop.xlane.xlu0 %2086
    %v2088 = vsel %vm2075, %v1932, -inf
    %2089 = vmax.xlane.f32.xlu0 %v2088
    %v2090 = vpop.xlane.xlu0 %2089
    %v2091 = vsel %vm2075, %v1978, -inf
    %2092 = vmax.xlane.f32.xlu0 %v2091
    %v2093 = vpop.xlane.xlu0 %2092
    %v2094 = vsel %vm2075, %v2024, -inf
    %2095 = vmax.xlane.f32.xlu0 %v2094
    %v2096 = vpop.xlane.xlu0 %2095
    %v2097 = vsel %vm2075, %v2070, -inf
    %2098 = vmax.xlane.f32.xlu0 %v2097
    %v2099 = vpop.xlane.xlu0 %2098
    %v2100 = vsub.f32 %v1748, %v2078
    %v2101 = vsub.f32 %v1794, %v2081
    %v2102 = vsub.f32 %v1840, %v2084
    %v2103 = vsub.f32 %v1886, %v2087
    %v2104 = vsub.f32 %v1932, %v2090
    %v2105 = vsub.f32 %v1978, %v2093
    %v2106 = vsub.f32 %v2024, %v2096
    %v2107 = vsub.f32 %v2070, %v2099
    %v2108 = vmul.f32 %v2100, 1.442695
    %v2109 = vpow.pop %v2108
    %v2110 = vmul.f32 %v2101, 1.442695
    %v2111 = vpow.pop %v2110
    %v2112 = vmul.f32 %v2102, 1.442695
    %v2113 = vpow.pop %v2112
    %v2114 = vmul.f32 %v2103, 1.442695
    %v2115 = vpow.pop %v2114
    %v2116 = vmul.f32 %v2104, 1.442695
    %v2117 = vpow.pop %v2116
    %v2118 = vmul.f32 %v2105, 1.442695
    %v2119 = vpow.pop %v2118
    %v2120 = vmul.f32 %v2106, 1.442695
    %v2121 = vpow.pop %v2120
    %v2122 = vmul.f32 %v2107, 1.442695
    %v2123 = vpow.pop %v2122
    %v2124 = vsel %vm2075, %v2109, 0.0
    %2125 = vadd.xlane.f32.xlu0 %v2124
    %v2126 = vpop.xlane.xlu0 %2125
    %v2127 = vsel %vm2075, %v2111, 0.0
    %2128 = vadd.xlane.f32.xlu0 %v2127
    %v2129 = vpop.xlane.xlu0 %2128
    %v2130 = vsel %vm2075, %v2113, 0.0
    %2131 = vadd.xlane.f32.xlu0 %v2130
    %v2132 = vpop.xlane.xlu0 %2131
    %v2133 = vsel %vm2075, %v2115, 0.0
    %2134 = vadd.xlane.f32.xlu0 %v2133
    %v2135 = vpop.xlane.xlu0 %2134
    %v2136 = vsel %vm2075, %v2117, 0.0
    %2137 = vadd.xlane.f32.xlu0 %v2136
    %v2138 = vpop.xlane.xlu0 %2137
    %v2139 = vsel %vm2075, %v2119, 0.0
    %2140 = vadd.xlane.f32.xlu0 %v2139
    %v2141 = vpop.xlane.xlu0 %2140
    %v2142 = vsel %vm2075, %v2121, 0.0
    %2143 = vadd.xlane.f32.xlu0 %v2142
    %v2144 = vpop.xlane.xlu0 %2143
    %v2145 = vsel %vm2075, %v2123, 0.0
    %2146 = vadd.xlane.f32.xlu0 %v2145
    %v2147 = vpop.xlane.xlu0 %2146
    %v2148 = vrcp.pop %v2126
    %v2149 = vrcp.pop %v2129
    %v2150 = vrcp.pop %v2132
    %v2151 = vrcp.pop %v2135
    %v2152 = vrcp.pop %v2138
    %v2153 = vrcp.pop %v2141
    %v2154 = vrcp.pop %v2144
    %v2155 = vrcp.pop %v2147
    %v2156 = vmul.f32 %v2109, %v2148
    %v2157 = vmul.f32 %v2111, %v2149
    %v2158 = vmul.f32 %v2113, %v2150
    %v2159 = vmul.f32 %v2115, %v2151
    %v2160 = vmul.f32 %v2117, %v2152
    %v2161 = vmul.f32 %v2119, %v2153
    %v2162 = vmul.f32 %v2121, %v2154
    %v2163 = vmul.f32 %v2123, %v2155
    %v2164 = vpack.c.bf16 %v2156, %v2156
    %v2165 = vpack.c.bf16 %v2157, %v2157
    %v2166 = vpack.c.bf16 %v2158, %v2158
    %v2167 = vpack.c.bf16 %v2159, %v2159
    %v2168 = vpack.c.bf16 %v2160, %v2160
    %v2169 = vpack.c.bf16 %v2161, %v2161
    %v2170 = vpack.c.bf16 %v2162, %v2162
    %v2171 = vpack.c.bf16 %v2163, %v2163
    %v2173 = vsel %vm2075, %v2164, 0
    %vm2175 = vcmask 1043456
    %v2177 = vsel %vm2175, %v1698, 0
    %2179 = vmatprep.subr.bf16.mxu0 0
    %2180 = vmatpush1.bf16.msra.mxu0 %v2177
    %2181 = vmatprep.subr.bf16.mxu0 0
    %2182 = vmatpush1.bf16.msra.mxu0 0
    %2183 = vmatprep.subr.bf16.mxu0 0
    %2184 = vmatpush1.bf16.msra.mxu0 0
    %2185 = vmatprep.subr.bf16.mxu0 0
    %2186 = vmatpush1.bf16.msra.mxu0 0
    %2187 = vmatprep.subr.bf16.mxu0 0
    %2188 = vmatpush1.bf16.msra.mxu0 0
    %2189 = vmatprep.subr.bf16.mxu0 0
    %2190 = vmatpush1.bf16.msra.mxu0 0
    %2191 = vmatprep.subr.bf16.mxu0 0
    %2192 = vmatpush1.bf16.msra.mxu0 0
    %2193 = vmatprep.subr.bf16.mxu0 0
    %2194 = vmatpush1.bf16.msra.mxu0 0
    %2195 = vmatprep.subr.bf16.mxu0 0
    %2196 = vmatpush1.bf16.msra.mxu0 0
    %2197 = vmatprep.subr.bf16.mxu0 0
    %2198 = vmatpush1.bf16.msra.mxu0 0
    %2199 = vmatprep.subr.bf16.mxu0 0
    %2200 = vmatpush1.bf16.msra.mxu0 0
    %2201 = vmatprep.subr.bf16.mxu0 0
    %2202 = vmatpush1.bf16.msra.mxu0 0
    %2203 = vmatprep.subr.bf16.mxu0 0
    %2204 = vmatpush1.bf16.msra.mxu0 0
    %2205 = vmatprep.subr.bf16.mxu0 0
    %2206 = vmatpush1.bf16.msra.mxu0 0
    %2207 = vmatprep.subr.bf16.mxu0 0
    %2208 = vmatpush1.bf16.msra.mxu0 0
    %2209 = vmatprep.subr.bf16.mxu0 0
    %2210 = vmatpush1.bf16.msra.mxu0 0
    %2211 = vmatprep.mubr.bf16.mxu0 0
    %2212 = vmatmul.mubr.bf16.gmra.mrb[0].mxu0 %v2173
    %v2213 = vpop.f32.mrb[0].mxu0
    %v2214 = vadd.f32 0.0, %v2213
    %v2215 = vpop.f32.mrb[0].mxu0
    %v2216 = vpop.f32.mrb[0].mxu0
    %v2217 = vpop.f32.mrb[0].mxu0
    %2218 = vdwg.mxu0
    %v2220 = vsel %vm2075, %v2165, 0
    %v2223 = vsel %vm2175, %v1699, 0
    %2225 = vmatprep.subr.bf16.mxu0 0
    %2226 = vmatpush1.bf16.msra.mxu0 %v2223
    %2227 = vmatprep.subr.bf16.mxu0 0
    %2228 = vmatpush1.bf16.msra.mxu0 0
    %2229 = vmatprep.subr.bf16.mxu0 0
    %2230 = vmatpush1.bf16.msra.mxu0 0
    %2231 = vmatprep.subr.bf16.mxu0 0
    %2232 = vmatpush1.bf16.msra.mxu0 0
    %2233 = vmatprep.subr.bf16.mxu0 0
    %2234 = vmatpush1.bf16.msra.mxu0 0
    %2235 = vmatprep.subr.bf16.mxu0 0
    %2236 = vmatpush1.bf16.msra.mxu0 0
    %2237 = vmatprep.subr.bf16.mxu0 0
    %2238 = vmatpush1.bf16.msra.mxu0 0
    %2239 = vmatprep.subr.bf16.mxu0 0
    %2240 = vmatpush1.bf16.msra.mxu0 0
    %2241 = vmatprep.subr.bf16.mxu0 0
    %2242 = vmatpush1.bf16.msra.mxu0 0
    %2243 = vmatprep.subr.bf16.mxu0 0
    %2244 = vmatpush1.bf16.msra.mxu0 0
    %2245 = vmatprep.subr.bf16.mxu0 0
    %2246 = vmatpush1.bf16.msra.mxu0 0
    %2247 = vmatprep.subr.bf16.mxu0 0
    %2248 = vmatpush1.bf16.msra.mxu0 0
    %2249 = vmatprep.subr.bf16.mxu0 0
    %2250 = vmatpush1.bf16.msra.mxu0 0
    %2251 = vmatprep.subr.bf16.mxu0 0
    %2252 = vmatpush1.bf16.msra.mxu0 0
    %2253 = vmatprep.subr.bf16.mxu0 0
    %2254 = vmatpush1.bf16.msra.mxu0 0
    %2255 = vmatprep.subr.bf16.mxu0 0
    %2256 = vmatpush1.bf16.msra.mxu0 0
    %2257 = vmatprep.mubr.bf16.mxu0 0
    %2258 = vmatmul.mubr.bf16.gmra.mrb[0].mxu0 %v2220
    %v2259 = vpop.f32.mrb[0].mxu0
    %v2260 = vadd.f32 0.0, %v2259
    %v2261 = vpop.f32.mrb[0].mxu0
    %v2262 = vpop.f32.mrb[0].mxu0
    %v2263 = vpop.f32.mrb[0].mxu0
    %2264 = vdwg.mxu0
    %v2266 = vsel %vm2075, %v2166, 0
    %v2269 = vsel %vm2175, %v1700, 0
    %2271 = vmatprep.subr.bf16.mxu0 0
    %2272 = vmatpush1.bf16.msra.mxu0 %v2269
    %2273 = vmatprep.subr.bf16.mxu0 0
    %2274 = vmatpush1.bf16.msra.mxu0 0
    %2275 = vmatprep.subr.bf16.mxu0 0
    %2276 = vmatpush1.bf16.msra.mxu0 0
    %2277 = vmatprep.subr.bf16.mxu0 0
    %2278 = vmatpush1.bf16.msra.mxu0 0
    %2279 = vmatprep.subr.bf16.mxu0 0
    %2280 = vmatpush1.bf16.msra.mxu0 0
    %2281 = vmatprep.subr.bf16.mxu0 0
    %2282 = vmatpush1.bf16.msra.mxu0 0
    %2283 = vmatprep.subr.bf16.mxu0 0
    %2284 = vmatpush1.bf16.msra.mxu0 0
    %2285 = vmatprep.subr.bf16.mxu0 0
    %2286 = vmatpush1.bf16.msra.mxu0 0
    %2287 = vmatprep.subr.bf16.mxu0 0
    %2288 = vmatpush1.bf16.msra.mxu0 0
    %2289 = vmatprep.subr.bf16.mxu0 0
    %2290 = vmatpush1.bf16.msra.mxu0 0
    %2291 = vmatprep.subr.bf16.mxu0 0
    %2292 = vmatpush1.bf16.msra.mxu0 0
    %2293 = vmatprep.subr.bf16.mxu0 0
    %2294 = vmatpush1.bf16.msra.mxu0 0
    %2295 = vmatprep.subr.bf16.mxu0 0
    %2296 = vmatpush1.bf16.msra.mxu0 0
    %2297 = vmatprep.subr.bf16.mxu0 0
    %2298 = vmatpush1.bf16.msra.mxu0 0
    %2299 = vmatprep.subr.bf16.mxu0 0
    %2300 = vmatpush1.bf16.msra.mxu0 0
    %2301 = vmatprep.subr.bf16.mxu0 0
    %2302 = vmatpush1.bf16.msra.mxu0 0
    %2303 = vmatprep.mubr.bf16.mxu0 0
    %2304 = vmatmul.mubr.bf16.gmra.mrb[0].mxu0 %v2266
    %v2305 = vpop.f32.mrb[0].mxu0
    %v2306 = vadd.f32 0.0, %v2305
    %v2307 = vpop.f32.mrb[0].mxu0
    %v2308 = vpop.f32.mrb[0].mxu0
    %v2309 = vpop.f32.mrb[0].mxu0
    %2310 = vdwg.mxu0
    %v2312 = vsel %vm2075, %v2167, 0
    %v2315 = vsel %vm2175, %v1701, 0
    %2317 = vmatprep.subr.bf16.mxu0 0
    %2318 = vmatpush1.bf16.msra.mxu0 %v2315
    %2319 = vmatprep.subr.bf16.mxu0 0
    %2320 = vmatpush1.bf16.msra.mxu0 0
    %2321 = vmatprep.subr.bf16.mxu0 0
    %2322 = vmatpush1.bf16.msra.mxu0 0
    %2323 = vmatprep.subr.bf16.mxu0 0
    %2324 = vmatpush1.bf16.msra.mxu0 0
    %2325 = vmatprep.subr.bf16.mxu0 0
    %2326 = vmatpush1.bf16.msra.mxu0 0
    %2327 = vmatprep.subr.bf16.mxu0 0
    %2328 = vmatpush1.bf16.msra.mxu0 0
    %2329 = vmatprep.subr.bf16.mxu0 0
    %2330 = vmatpush1.bf16.msra.mxu0 0
    %2331 = vmatprep.subr.bf16.mxu0 0
    %2332 = vmatpush1.bf16.msra.mxu0 0
    %2333 = vmatprep.subr.bf16.mxu0 0
    %2334 = vmatpush1.bf16.msra.mxu0 0
    %2335 = vmatprep.subr.bf16.mxu0 0
    %2336 = vmatpush1.bf16.msra.mxu0 0
    %2337 = vmatprep.subr.bf16.mxu0 0
    %2338 = vmatpush1.bf16.msra.mxu0 0
    %2339 = vmatprep.subr.bf16.mxu0 0
    %2340 = vmatpush1.bf16.msra.mxu0 0
    %2341 = vmatprep.subr.bf16.mxu0 0
    %2342 = vmatpush1.bf16.msra.mxu0 0
    %2343 = vmatprep.subr.bf16.mxu0 0
    %2344 = vmatpush1.bf16.msra.mxu0 0
    %2345 = vmatprep.subr.bf16.mxu0 0
    %2346 = vmatpush1.bf16.msra.mxu0 0
    %2347 = vmatprep.subr.bf16.mxu0 0
    %2348 = vmatpush1.bf16.msra.mxu0 0
    %2349 = vmatprep.mubr.bf16.mxu0 0
    %2350 = vmatmul.mubr.bf16.gmra.mrb[0].mxu0 %v2312
    %v2351 = vpop.f32.mrb[0].mxu0
    %v2352 = vadd.f32 0.0, %v2351
    %v2353 = vpop.f32.mrb[0].mxu0
    %v2354 = vpop.f32.mrb[0].mxu0
    %v2355 = vpop.f32.mrb[0].mxu0
    %2356 = vdwg.mxu0
    %v2358 = vsel %vm2075, %v2168, 0
    %v2361 = vsel %vm2175, %v1702, 0
    %2363 = vmatprep.subr.bf16.mxu0 0
    %2364 = vmatpush1.bf16.msra.mxu0 %v2361
    %2365 = vmatprep.subr.bf16.mxu0 0
    %2366 = vmatpush1.bf16.msra.mxu0 0
    %2367 = vmatprep.subr.bf16.mxu0 0
    %2368 = vmatpush1.bf16.msra.mxu0 0
    %2369 = vmatprep.subr.bf16.mxu0 0
    %2370 = vmatpush1.bf16.msra.mxu0 0
    %2371 = vmatprep.subr.bf16.mxu0 0
    %2372 = vmatpush1.bf16.msra.mxu0 0
    %2373 = vmatprep.subr.bf16.mxu0 0
    %2374 = vmatpush1.bf16.msra.mxu0 0
    %2375 = vmatprep.subr.bf16.mxu0 0
    %2376 = vmatpush1.bf16.msra.mxu0 0
    %2377 = vmatprep.subr.bf16.mxu0 0
    %2378 = vmatpush1.bf16.msra.mxu0 0
    %2379 = vmatprep.subr.bf16.mxu0 0
    %2380 = vmatpush1.bf16.msra.mxu0 0
    %2381 = vmatprep.subr.bf16.mxu0 0
    %2382 = vmatpush1.bf16.msra.mxu0 0
    %2383 = vmatprep.subr.bf16.mxu0 0
    %2384 = vmatpush1.bf16.msra.mxu0 0
    %2385 = vmatprep.subr.bf16.mxu0 0
    %2386 = vmatpush1.bf16.msra.mxu0 0
    %2387 = vmatprep.subr.bf16.mxu0 0
    %2388 = vmatpush1.bf16.msra.mxu0 0
    %2389 = vmatprep.subr.bf16.mxu0 0
    %2390 = vmatpush1.bf16.msra.mxu0 0
    %2391 = vmatprep.subr.bf16.mxu0 0
    %2392 = vmatpush1.bf16.msra.mxu0 0
    %2393 = vmatprep.subr.bf16.mxu0 0
    %2394 = vmatpush1.bf16.msra.mxu0 0
    %2395 = vmatprep.mubr.bf16.mxu0 0
    %2396 = vmatmul.mubr.bf16.gmra.mrb[0].mxu0 %v2358
    %v2397 = vpop.f32.mrb[0].mxu0
    %v2398 = vadd.f32 0.0, %v2397
    %v2399 = vpop.f32.mrb[0].mxu0
    %v2400 = vpop.f32.mrb[0].mxu0
    %v2401 = vpop.f32.mrb[0].mxu0
    %2402 = vdwg.mxu0
    %v2404 = vsel %vm2075, %v2169, 0
    %v2407 = vsel %vm2175, %v1703, 0
    %2409 = vmatprep.subr.bf16.mxu0 0
    %2410 = vmatpush1.bf16.msra.mxu0 %v2407
    %2411 = vmatprep.subr.bf16.mxu0 0
    %2412 = vmatpush1.bf16.msra.mxu0 0
    %2413 = vmatprep.subr.bf16.mxu0 0
    %2414 = vmatpush1.bf16.msra.mxu0 0
    %2415 = vmatprep.subr.bf16.mxu0 0
    %2416 = vmatpush1.bf16.msra.mxu0 0
    %2417 = vmatprep.subr.bf16.mxu0 0
    %2418 = vmatpush1.bf16.msra.mxu0 0
    %2419 = vmatprep.subr.bf16.mxu0 0
    %2420 = vmatpush1.bf16.msra.mxu0 0
    %2421 = vmatprep.subr.bf16.mxu0 0
    %2422 = vmatpush1.bf16.msra.mxu0 0
    %2423 = vmatprep.subr.bf16.mxu0 0
    %2424 = vmatpush1.bf16.msra.mxu0 0
    %2425 = vmatprep.subr.bf16.mxu0 0
    %2426 = vmatpush1.bf16.msra.mxu0 0
    %2427 = vmatprep.subr.bf16.mxu0 0
    %2428 = vmatpush1.bf16.msra.mxu0 0
    %2429 = vmatprep.subr.bf16.mxu0 0
    %2430 = vmatpush1.bf16.msra.mxu0 0
    %2431 = vmatprep.subr.bf16.mxu0 0
    %2432 = vmatpush1.bf16.msra.mxu0 0
    %2433 = vmatprep.subr.bf16.mxu0 0
    %2434 = vmatpush1.bf16.msra.mxu0 0
    %2435 = vmatprep.subr.bf16.mxu0 0
    %2436 = vmatpush1.bf16.msra.mxu0 0
    %2437 = vmatprep.subr.bf16.mxu0 0
    %2438 = vmatpush1.bf16.msra.mxu0 0
    %2439 = vmatprep.subr.bf16.mxu0 0
    %2440 = vmatpush1.bf16.msra.mxu0 0
    %2441 = vmatprep.mubr.bf16.mxu0 0
    %2442 = vmatmul.mubr.bf16.gmra.mrb[0].mxu0 %v2404
    %v2443 = vpop.f32.mrb[0].mxu0
    %v2444 = vadd.f32 0.0, %v2443
    %v2445 = vpop.f32.mrb[0].mxu0
    %v2446 = vpop.f32.mrb[0].mxu0
    %v2447 = vpop.f32.mrb[0].mxu0
    %2448 = vdwg.mxu0
    %v2450 = vsel %vm2075, %v2170, 0
    %v2453 = vsel %vm2175, %v1704, 0
    %2455 = vmatprep.subr.bf16.mxu0 0
    %2456 = vmatpush1.bf16.msra.mxu0 %v2453
    %2457 = vmatprep.subr.bf16.mxu0 0
    %2458 = vmatpush1.bf16.msra.mxu0 0
    %2459 = vmatprep.subr.bf16.mxu0 0
    %2460 = vmatpush1.bf16.msra.mxu0 0
    %2461 = vmatprep.subr.bf16.mxu0 0
    %2462 = vmatpush1.bf16.msra.mxu0 0
    %2463 = vmatprep.subr.bf16.mxu0 0
    %2464 = vmatpush1.bf16.msra.mxu0 0
    %2465 = vmatprep.subr.bf16.mxu0 0
    %2466 = vmatpush1.bf16.msra.mxu0 0
    %2467 = vmatprep.subr.bf16.mxu0 0
    %2468 = vmatpush1.bf16.msra.mxu0 0
    %2469 = vmatprep.subr.bf16.mxu0 0
    %2470 = vmatpush1.bf16.msra.mxu0 0
    %2471 = vmatprep.subr.bf16.mxu0 0
    %2472 = vmatpush1.bf16.msra.mxu0 0
    %2473 = vmatprep.subr.bf16.mxu0 0
    %2474 = vmatpush1.bf16.msra.mxu0 0
    %2475 = vmatprep.subr.bf16.mxu0 0
    %2476 = vmatpush1.bf16.msra.mxu0 0
    %2477 = vmatprep.subr.bf16.mxu0 0
    %2478 = vmatpush1.bf16.msra.mxu0 0
    %2479 = vmatprep.subr.bf16.mxu0 0
    %2480 = vmatpush1.bf16.msra.mxu0 0
    %2481 = vmatprep.subr.bf16.mxu0 0
    %2482 = vmatpush1.bf16.msra.mxu0 0
    %2483 = vmatprep.subr.bf16.mxu0 0
    %2484 = vmatpush1.bf16.msra.mxu0 0
    %2485 = vmatprep.subr.bf16.mxu0 0
    %2486 = vmatpush1.bf16.msra.mxu0 0
    %2487 = vmatprep.mubr.bf16.mxu0 0
    %2488 = vmatmul.mubr.bf16.gmra.mrb[0].mxu0 %v2450
    %v2489 = vpop.f32.mrb[0].mxu0
    %v2490 = vadd.f32 0.0, %v2489
    %v2491 = vpop.f32.mrb[0].mxu0
    %v2492 = vpop.f32.mrb[0].mxu0
    %v2493 = vpop.f32.mrb[0].mxu0
    %2494 = vdwg.mxu0
    %v2496 = vsel %vm2075, %v2171, 0
    %v2499 = vsel %vm2175, %v1705, 0
    %2501 = vmatprep.subr.bf16.mxu0 0
    %2502 = vmatpush1.bf16.msra.mxu0 %v2499
    %2503 = vmatprep.subr.bf16.mxu0 0
    %2504 = vmatpush1.bf16.msra.mxu0 0
    %2505 = vmatprep.subr.bf16.mxu0 0
    %2506 = vmatpush1.bf16.msra.mxu0 0
    %2507 = vmatprep.subr.bf16.mxu0 0
    %2508 = vmatpush1.bf16.msra.mxu0 0
    %2509 = vmatprep.subr.bf16.mxu0 0
    %2510 = vmatpush1.bf16.msra.mxu0 0
    %2511 = vmatprep.subr.bf16.mxu0 0
    %2512 = vmatpush1.bf16.msra.mxu0 0
    %2513 = vmatprep.subr.bf16.mxu0 0
    %2514 = vmatpush1.bf16.msra.mxu0 0
    %2515 = vmatprep.subr.bf16.mxu0 0
    %2516 = vmatpush1.bf16.msra.mxu0 0
    %2517 = vmatprep.subr.bf16.mxu0 0
    %2518 = vmatpush1.bf16.msra.mxu0 0
    %2519 = vmatprep.subr.bf16.mxu0 0
    %2520 = vmatpush1.bf16.msra.mxu0 0
    %2521 = vmatprep.subr.bf16.mxu0 0
    %2522 = vmatpush1.bf16.msra.mxu0 0
    %2523 = vmatprep.subr.bf16.mxu0 0
    %2524 = vmatpush1.bf16.msra.mxu0 0
    %2525 = vmatprep.subr.bf16.mxu0 0
    %2526 = vmatpush1.bf16.msra.mxu0 0
    %2527 = vmatprep.subr.bf16.mxu0 0
    %2528 = vmatpush1.bf16.msra.mxu0 0
    %2529 = vmatprep.subr.bf16.mxu0 0
    %2530 = vmatpush1.bf16.msra.mxu0 0
    %2531 = vmatprep.subr.bf16.mxu0 0
    %2532 = vmatpush1.bf16.msra.mxu0 0
    %2533 = vmatprep.mubr.bf16.mxu0 0
    %2534 = vmatmul.mubr.bf16.gmra.mrb[0].mxu0 %v2496
    %v2535 = vpop.f32.mrb[0].mxu0
    %v2536 = vadd.f32 0.0, %v2535
    %v2537 = vpop.f32.mrb[0].mxu0
    %v2538 = vpop.f32.mrb[0].mxu0
    %v2539 = vpop.f32.mrb[0].mxu0
    %2540 = vdwg.mxu0
    %2542 = vrot.lane.b32.xlu0 %v1682, 64
    %v2543 = vpop.permute.xlu0 %2542
    %2545 = vrot.lane.b32.xlu0 %v1690, 64
    %v2546 = vpop.permute.xlu0 %2545
    %v2548 = vsel %vm1706, %v2543, 0
    %v2551 = vsel %vm1706, %v2546, 0
    %2553 = vmatprep.subr.bf16.mxu0 0
    %2554 = vmatpush1.bf16.xpose.msra.mxu0 %v2551
    %2555 = vmatprep.subr.bf16.mxu0 0
    %2556 = vmatpush1.bf16.xpose.msra.mxu0 0
    %2557 = vmatprep.subr.bf16.mxu0 0
    %2558 = vmatpush1.bf16.xpose.msra.mxu0 0
    %2559 = vmatprep.subr.bf16.mxu0 0
    %2560 = vmatpush1.bf16.xpose.msra.mxu0 0
    %2561 = vmatprep.subr.bf16.mxu0 0
    %2562 = vmatpush1.bf16.xpose.msra.mxu0 0
    %2563 = vmatprep.subr.bf16.mxu0 0
    %2564 = vmatpush1.bf16.xpose.msra.mxu0 0
    %2565 = vmatprep.subr.bf16.mxu0 0
    %2566 = vmatpush1.bf16.xpose.msra.mxu0 0
    %2567 = vmatprep.subr.bf16.mxu0 0
    %2568 = vmatpush1.bf16.xpose.msra.mxu0 0
    %2569 = vmatprep.subr.bf16.mxu0 0
    %2570 = vmatpush1.bf16.xpose.msra.mxu0 0
    %2571 = vmatprep.subr.bf16.mxu0 0
    %2572 = vmatpush1.bf16.xpose.msra.mxu0 0
    %2573 = vmatprep.subr.bf16.mxu0 0
    %2574 = vmatpush1.bf16.xpose.msra.mxu0 0
    %2575 = vmatprep.subr.bf16.mxu0 0
    %2576 = vmatpush1.bf16.xpose.msra.mxu0 0
    %2577 = vmatprep.subr.bf16.mxu0 0
    %2578 = vmatpush1.bf16.xpose.msra.mxu0 0
    %2579 = vmatprep.subr.bf16.mxu0 0
    %2580 = vmatpush1.bf16.xpose.msra.mxu0 0
    %2581 = vmatprep.subr.bf16.mxu0 0
    %2582 = vmatpush1.bf16.xpose.msra.mxu0 0
    %2583 = vmatprep.subr.bf16.mxu0 0
    %2584 = vmatpush1.bf16.xpose.msra.mxu0 0
    %2585 = vmatprep.mubr.bf16.mxu0 0
    %2586 = vmatmul.mubr.bf16.gmra.mrb[0].mxu0 %v2548
    %v2587 = vpop.f32.mrb[0].mxu0
    %v2588 = vadd.f32 0.0, %v2587
    %v2589 = vpop.f32.mrb[0].mxu0
    %v2590 = vpop.f32.mrb[0].mxu0
    %v2591 = vpop.f32.mrb[0].mxu0
    %2592 = vdwg.mxu0
    %2594 = vrot.lane.b32.xlu0 %v1683, 64
    %v2595 = vpop.permute.xlu0 %2594
    %2597 = vrot.lane.b32.xlu0 %v1691, 64
    %v2598 = vpop.permute.xlu0 %2597
    %v2600 = vsel %vm1706, %v2595, 0
    %v2603 = vsel %vm1706, %v2598, 0
    %2605 = vmatprep.subr.bf16.mxu0 0
    %2606 = vmatpush1.bf16.xpose.msra.mxu0 %v2603
    %2607 = vmatprep.subr.bf16.mxu0 0
    %2608 = vmatpush1.bf16.xpose.msra.mxu0 0
    %2609 = vmatprep.subr.bf16.mxu0 0
    %2610 = vmatpush1.bf16.xpose.msra.mxu0 0
    %2611 = vmatprep.subr.bf16.mxu0 0
    %2612 = vmatpush1.bf16.xpose.msra.mxu0 0
    %2613 = vmatprep.subr.bf16.mxu0 0
    %2614 = vmatpush1.bf16.xpose.msra.mxu0 0
    %2615 = vmatprep.subr.bf16.mxu0 0
    %2616 = vmatpush1.bf16.xpose.msra.mxu0 0
    %2617 = vmatprep.subr.bf16.mxu0 0
    %2618 = vmatpush1.bf16.xpose.msra.mxu0 0
    %2619 = vmatprep.subr.bf16.mxu0 0
    %2620 = vmatpush1.bf16.xpose.msra.mxu0 0
    %2621 = vmatprep.subr.bf16.mxu0 0
    %2622 = vmatpush1.bf16.xpose.msra.mxu0 0
    %2623 = vmatprep.subr.bf16.mxu0 0
    %2624 = vmatpush1.bf16.xpose.msra.mxu0 0
    %2625 = vmatprep.subr.bf16.mxu0 0
    %2626 = vmatpush1.bf16.xpose.msra.mxu0 0
    %2627 = vmatprep.subr.bf16.mxu0 0
    %2628 = vmatpush1.bf16.xpose.msra.mxu0 0
    %2629 = vmatprep.subr.bf16.mxu0 0
    %2630 = vmatpush1.bf16.xpose.msra.mxu0 0
    %2631 = vmatprep.subr.bf16.mxu0 0
    %2632 = vmatpush1.bf16.xpose.msra.mxu0 0
    %2633 = vmatprep.subr.bf16.mxu0 0
    %2634 = vmatpush1.bf16.xpose.msra.mxu0 0
    %2635 = vmatprep.subr.bf16.mxu0 0
    %2636 = vmatpush1.bf16.xpose.msra.mxu0 0
    %2637 = vmatprep.mubr.bf16.mxu0 0
    %2638 = vmatmul.mubr.bf16.gmra.mrb[0].mxu0 %v2600
    %v2639 = vpop.f32.mrb[0].mxu0
    %v2640 = vadd.f32 0.0, %v2639
    %v2641 = vpop.f32.mrb[0].mxu0
    %v2642 = vpop.f32.mrb[0].mxu0
    %v2643 = vpop.f32.mrb[0].mxu0
    %2644 = vdwg.mxu0
    %2646 = vrot.lane.b32.xlu0 %v1684, 64
    %v2647 = vpop.permute.xlu0 %2646
    %2649 = vrot.lane.b32.xlu0 %v1692, 64
    %v2650 = vpop.permute.xlu0 %2649
    %v2652 = vsel %vm1706, %v2647, 0
    %v2655 = vsel %vm1706, %v2650, 0
    %2657 = vmatprep.subr.bf16.mxu0 0
    %2658 = vmatpush1.bf16.xpose.msra.mxu0 %v2655
    %2659 = vmatprep.subr.bf16.mxu0 0
    %2660 = vmatpush1.bf16.xpose.msra.mxu0 0
    %2661 = vmatprep.subr.bf16.mxu0 0
    %2662 = vmatpush1.bf16.xpose.msra.mxu0 0
    %2663 = vmatprep.subr.bf16.mxu0 0
    %2664 = vmatpush1.bf16.xpose.msra.mxu0 0
    %2665 = vmatprep.subr.bf16.mxu0 0
    %2666 = vmatpush1.bf16.xpose.msra.mxu0 0
    %2667 = vmatprep.subr.bf16.mxu0 0
    %2668 = vmatpush1.bf16.xpose.msra.mxu0 0
    %2669 = vmatprep.subr.bf16.mxu0 0
    %2670 = vmatpush1.bf16.xpose.msra.mxu0 0
    %2671 = vmatprep.subr.bf16.mxu0 0
    %2672 = vmatpush1.bf16.xpose.msra.mxu0 0
    %2673 = vmatprep.subr.bf16.mxu0 0
    %2674 = vmatpush1.bf16.xpose.msra.mxu0 0
    %2675 = vmatprep.subr.bf16.mxu0 0
    %2676 = vmatpush1.bf16.xpose.msra.mxu0 0
    %2677 = vmatprep.subr.bf16.mxu0 0
    %2678 = vmatpush1.bf16.xpose.msra.mxu0 0
    %2679 = vmatprep.subr.bf16.mxu0 0
    %2680 = vmatpush1.bf16.xpose.msra.mxu0 0
    %2681 = vmatprep.subr.bf16.mxu0 0
    %2682 = vmatpush1.bf16.xpose.msra.mxu0 0
    %2683 = vmatprep.subr.bf16.mxu0 0
    %2684 = vmatpush1.bf16.xpose.msra.mxu0 0
    %2685 = vmatprep.subr.bf16.mxu0 0
    %2686 = vmatpush1.bf16.xpose.msra.mxu0 0
    %2687 = vmatprep.subr.bf16.mxu0 0
    %2688 = vmatpush1.bf16.xpose.msra.mxu0 0
    %2689 = vmatprep.mubr.bf16.mxu0 0
    %2690 = vmatmul.mubr.bf16.gmra.mrb[0].mxu0 %v2652
    %v2691 = vpop.f32.mrb[0].mxu0
    %v2692 = vadd.f32 0.0, %v2691
    %v2693 = vpop.f32.mrb[0].mxu0
    %v2694 = vpop.f32.mrb[0].mxu0
    %v2695 = vpop.f32.mrb[0].mxu0
    %2696 = vdwg.mxu0
    %2698 = vrot.lane.b32.xlu0 %v1685, 64
    %v2699 = vpop.permute.xlu0 %2698
    %2701 = vrot.lane.b32.xlu0 %v1693, 64
    %v2702 = vpop.permute.xlu0 %2701
    %v2704 = vsel %vm1706, %v2699, 0
    %v2707 = vsel %vm1706, %v2702, 0
    %2709 = vmatprep.subr.bf16.mxu0 0
    %2710 = vmatpush1.bf16.xpose.msra.mxu0 %v2707
    %2711 = vmatprep.subr.bf16.mxu0 0
    %2712 = vmatpush1.bf16.xpose.msra.mxu0 0
    %2713 = vmatprep.subr.bf16.mxu0 0
    %2714 = vmatpush1.bf16.xpose.msra.mxu0 0
    %2715 = vmatprep.subr.bf16.mxu0 0
    %2716 = vmatpush1.bf16.xpose.msra.mxu0 0
    %2717 = vmatprep.subr.bf16.mxu0 0
    %2718 = vmatpush1.bf16.xpose.msra.mxu0 0
    %2719 = vmatprep.subr.bf16.mxu0 0
    %2720 = vmatpush1.bf16.xpose.msra.mxu0 0
    %2721 = vmatprep.subr.bf16.mxu0 0
    %2722 = vmatpush1.bf16.xpose.msra.mxu0 0
    %2723 = vmatprep.subr.bf16.mxu0 0
    %2724 = vmatpush1.bf16.xpose.msra.mxu0 0
    %2725 = vmatprep.subr.bf16.mxu0 0
    %2726 = vmatpush1.bf16.xpose.msra.mxu0 0
    %2727 = vmatprep.subr.bf16.mxu0 0
    %2728 = vmatpush1.bf16.xpose.msra.mxu0 0
    %2729 = vmatprep.subr.bf16.mxu0 0
    %2730 = vmatpush1.bf16.xpose.msra.mxu0 0
    %2731 = vmatprep.subr.bf16.mxu0 0
    %2732 = vmatpush1.bf16.xpose.msra.mxu0 0
    %2733 = vmatprep.subr.bf16.mxu0 0
    %2734 = vmatpush1.bf16.xpose.msra.mxu0 0
    %2735 = vmatprep.subr.bf16.mxu0 0
    %2736 = vmatpush1.bf16.xpose.msra.mxu0 0
    %2737 = vmatprep.subr.bf16.mxu0 0
    %2738 = vmatpush1.bf16.xpose.msra.mxu0 0
    %2739 = vmatprep.subr.bf16.mxu0 0
    %2740 = vmatpush1.bf16.xpose.msra.mxu0 0
    %2741 = vmatprep.mubr.bf16.mxu0 0
    %2742 = vmatmul.mubr.bf16.gmra.mrb[0].mxu0 %v2704
    %v2743 = vpop.f32.mrb[0].mxu0
    %v2744 = vadd.f32 0.0, %v2743
    %v2745 = vpop.f32.mrb[0].mxu0
    %v2746 = vpop.f32.mrb[0].mxu0
    %v2747 = vpop.f32.mrb[0].mxu0
    %2748 = vdwg.mxu0
    %2750 = vrot.lane.b32.xlu0 %v1686, 64
    %v2751 = vpop.permute.xlu0 %2750
    %2753 = vrot.lane.b32.xlu0 %v1694, 64
    %v2754 = vpop.permute.xlu0 %2753
    %v2756 = vsel %vm1706, %v2751, 0
    %v2759 = vsel %vm1706, %v2754, 0
    %2761 = vmatprep.subr.bf16.mxu0 0
    %2762 = vmatpush1.bf16.xpose.msra.mxu0 %v2759
    %2763 = vmatprep.subr.bf16.mxu0 0
    %2764 = vmatpush1.bf16.xpose.msra.mxu0 0
    %2765 = vmatprep.subr.bf16.mxu0 0
    %2766 = vmatpush1.bf16.xpose.msra.mxu0 0
    %2767 = vmatprep.subr.bf16.mxu0 0
    %2768 = vmatpush1.bf16.xpose.msra.mxu0 0
    %2769 = vmatprep.subr.bf16.mxu0 0
    %2770 = vmatpush1.bf16.xpose.msra.mxu0 0
    %2771 = vmatprep.subr.bf16.mxu0 0
    %2772 = vmatpush1.bf16.xpose.msra.mxu0 0
    %2773 = vmatprep.subr.bf16.mxu0 0
    %2774 = vmatpush1.bf16.xpose.msra.mxu0 0
    %2775 = vmatprep.subr.bf16.mxu0 0
    %2776 = vmatpush1.bf16.xpose.msra.mxu0 0
    %2777 = vmatprep.subr.bf16.mxu0 0
    %2778 = vmatpush1.bf16.xpose.msra.mxu0 0
    %2779 = vmatprep.subr.bf16.mxu0 0
    %2780 = vmatpush1.bf16.xpose.msra.mxu0 0
    %2781 = vmatprep.subr.bf16.mxu0 0
    %2782 = vmatpush1.bf16.xpose.msra.mxu0 0
    %2783 = vmatprep.subr.bf16.mxu0 0
    %2784 = vmatpush1.bf16.xpose.msra.mxu0 0
    %2785 = vmatprep.subr.bf16.mxu0 0
    %2786 = vmatpush1.bf16.xpose.msra.mxu0 0
    %2787 = vmatprep.subr.bf16.mxu0 0
    %2788 = vmatpush1.bf16.xpose.msra.mxu0 0
    %2789 = vmatprep.subr.bf16.mxu0 0
    %2790 = vmatpush1.bf16.xpose.msra.mxu0 0
    %2791 = vmatprep.subr.bf16.mxu0 0
    %2792 = vmatpush1.bf16.xpose.msra.mxu0 0
    %2793 = vmatprep.mubr.bf16.mxu0 0
    %2794 = vmatmul.mubr.bf16.gmra.mrb[0].mxu0 %v2756
    %v2795 = vpop.f32.mrb[0].mxu0
    %v2796 = vadd.f32 0.0, %v2795
    %v2797 = vpop.f32.mrb[0].mxu0
    %v2798 = vpop.f32.mrb[0].mxu0
    %v2799 = vpop.f32.mrb[0].mxu0
    %2800 = vdwg.mxu0
    %2802 = vrot.lane.b32.xlu0 %v1687, 64
    %v2803 = vpop.permute.xlu0 %2802
    %2805 = vrot.lane.b32.xlu0 %v1695, 64
    %v2806 = vpop.permute.xlu0 %2805
    %v2808 = vsel %vm1706, %v2803, 0
    %v2811 = vsel %vm1706, %v2806, 0
    %2813 = vmatprep.subr.bf16.mxu0 0
    %2814 = vmatpush1.bf16.xpose.msra.mxu0 %v2811
    %2815 = vmatprep.subr.bf16.mxu0 0
    %2816 = vmatpush1.bf16.xpose.msra.mxu0 0
    %2817 = vmatprep.subr.bf16.mxu0 0
    %2818 = vmatpush1.bf16.xpose.msra.mxu0 0
    %2819 = vmatprep.subr.bf16.mxu0 0
    %2820 = vmatpush1.bf16.xpose.msra.mxu0 0
    %2821 = vmatprep.subr.bf16.mxu0 0
    %2822 = vmatpush1.bf16.xpose.msra.mxu0 0
    %2823 = vmatprep.subr.bf16.mxu0 0
    %2824 = vmatpush1.bf16.xpose.msra.mxu0 0
    %2825 = vmatprep.subr.bf16.mxu0 0
    %2826 = vmatpush1.bf16.xpose.msra.mxu0 0
    %2827 = vmatprep.subr.bf16.mxu0 0
    %2828 = vmatpush1.bf16.xpose.msra.mxu0 0
    %2829 = vmatprep.subr.bf16.mxu0 0
    %2830 = vmatpush1.bf16.xpose.msra.mxu0 0
    %2831 = vmatprep.subr.bf16.mxu0 0
    %2832 = vmatpush1.bf16.xpose.msra.mxu0 0
    %2833 = vmatprep.subr.bf16.mxu0 0
    %2834 = vmatpush1.bf16.xpose.msra.mxu0 0
    %2835 = vmatprep.subr.bf16.mxu0 0
    %2836 = vmatpush1.bf16.xpose.msra.mxu0 0
    %2837 = vmatprep.subr.bf16.mxu0 0
    %2838 = vmatpush1.bf16.xpose.msra.mxu0 0
    %2839 = vmatprep.subr.bf16.mxu0 0
    %2840 = vmatpush1.bf16.xpose.msra.mxu0 0
    %2841 = vmatprep.subr.bf16.mxu0 0
    %2842 = vmatpush1.bf16.xpose.msra.mxu0 0
    %2843 = vmatprep.subr.bf16.mxu0 0
    %2844 = vmatpush1.bf16.xpose.msra.mxu0 0
    %2845 = vmatprep.mubr.bf16.mxu0 0
    %2846 = vmatmul.mubr.bf16.gmra.mrb[0].mxu0 %v2808
    %v2847 = vpop.f32.mrb[0].mxu0
    %v2848 = vadd.f32 0.0, %v2847
    %v2849 = vpop.f32.mrb[0].mxu0
    %v2850 = vpop.f32.mrb[0].mxu0
    %v2851 = vpop.f32.mrb[0].mxu0
    %2852 = vdwg.mxu0
    %2854 = vrot.lane.b32.xlu0 %v1688, 64
    %v2855 = vpop.permute.xlu0 %2854
    %2857 = vrot.lane.b32.xlu0 %v1696, 64
    %v2858 = vpop.permute.xlu0 %2857
    %v2860 = vsel %vm1706, %v2855, 0
    %v2863 = vsel %vm1706, %v2858, 0
    %2865 = vmatprep.subr.bf16.mxu0 0
    %2866 = vmatpush1.bf16.xpose.msra.mxu0 %v2863
    %2867 = vmatprep.subr.bf16.mxu0 0
    %2868 = vmatpush1.bf16.xpose.msra.mxu0 0
    %2869 = vmatprep.subr.bf16.mxu0 0
    %2870 = vmatpush1.bf16.xpose.msra.mxu0 0
    %2871 = vmatprep.subr.bf16.mxu0 0
    %2872 = vmatpush1.bf16.xpose.msra.mxu0 0
    %2873 = vmatprep.subr.bf16.mxu0 0
    %2874 = vmatpush1.bf16.xpose.msra.mxu0 0
    %2875 = vmatprep.subr.bf16.mxu0 0
    %2876 = vmatpush1.bf16.xpose.msra.mxu0 0
    %2877 = vmatprep.subr.bf16.mxu0 0
    %2878 = vmatpush1.bf16.xpose.msra.mxu0 0
    %2879 = vmatprep.subr.bf16.mxu0 0
    %2880 = vmatpush1.bf16.xpose.msra.mxu0 0
    %2881 = vmatprep.subr.bf16.mxu0 0
    %2882 = vmatpush1.bf16.xpose.msra.mxu0 0
    %2883 = vmatprep.subr.bf16.mxu0 0
    %2884 = vmatpush1.bf16.xpose.msra.mxu0 0
    %2885 = vmatprep.subr.bf16.mxu0 0
    %2886 = vmatpush1.bf16.xpose.msra.mxu0 0
    %2887 = vmatprep.subr.bf16.mxu0 0
    %2888 = vmatpush1.bf16.xpose.msra.mxu0 0
    %2889 = vmatprep.subr.bf16.mxu0 0
    %2890 = vmatpush1.bf16.xpose.msra.mxu0 0
    %2891 = vmatprep.subr.bf16.mxu0 0
    %2892 = vmatpush1.bf16.xpose.msra.mxu0 0
    %2893 = vmatprep.subr.bf16.mxu0 0
    %2894 = vmatpush1.bf16.xpose.msra.mxu0 0
    %2895 = vmatprep.subr.bf16.mxu0 0
    %2896 = vmatpush1.bf16.xpose.msra.mxu0 0
    %2897 = vmatprep.mubr.bf16.mxu0 0
    %2898 = vmatmul.mubr.bf16.gmra.mrb[0].mxu0 %v2860
    %v2899 = vpop.f32.mrb[0].mxu0
    %v2900 = vadd.f32 0.0, %v2899
    %v2901 = vpop.f32.mrb[0].mxu0
    %v2902 = vpop.f32.mrb[0].mxu0
    %v2903 = vpop.f32.mrb[0].mxu0
    %2904 = vdwg.mxu0
    %2906 = vrot.lane.b32.xlu0 %v1689, 64
    %v2907 = vpop.permute.xlu0 %2906
    %2909 = vrot.lane.b32.xlu0 %v1697, 64
    %v2910 = vpop.permute.xlu0 %2909
    %v2912 = vsel %vm1706, %v2907, 0
    %v2915 = vsel %vm1706, %v2910, 0
    %2917 = vmatprep.subr.bf16.mxu0 0
    %2918 = vmatpush1.bf16.xpose.msra.mxu0 %v2915
    %2919 = vmatprep.subr.bf16.mxu0 0
    %2920 = vmatpush1.bf16.xpose.msra.mxu0 0
    %2921 = vmatprep.subr.bf16.mxu0 0
    %2922 = vmatpush1.bf16.xpose.msra.mxu0 0
    %2923 = vmatprep.subr.bf16.mxu0 0
    %2924 = vmatpush1.bf16.xpose.msra.mxu0 0
    %2925 = vmatprep.subr.bf16.mxu0 0
    %2926 = vmatpush1.bf16.xpose.msra.mxu0 0
    %2927 = vmatprep.subr.bf16.mxu0 0
    %2928 = vmatpush1.bf16.xpose.msra.mxu0 0
    %2929 = vmatprep.subr.bf16.mxu0 0
    %2930 = vmatpush1.bf16.xpose.msra.mxu0 0
    %2931 = vmatprep.subr.bf16.mxu0 0
    %2932 = vmatpush1.bf16.xpose.msra.mxu0 0
    %2933 = vmatprep.subr.bf16.mxu0 0
    %2934 = vmatpush1.bf16.xpose.msra.mxu0 0
    %2935 = vmatprep.subr.bf16.mxu0 0
    %2936 = vmatpush1.bf16.xpose.msra.mxu0 0
    %2937 = vmatprep.subr.bf16.mxu0 0
    %2938 = vmatpush1.bf16.xpose.msra.mxu0 0
    %2939 = vmatprep.subr.bf16.mxu0 0
    %2940 = vmatpush1.bf16.xpose.msra.mxu0 0
    %2941 = vmatprep.subr.bf16.mxu0 0
    %2942 = vmatpush1.bf16.xpose.msra.mxu0 0
    %2943 = vmatprep.subr.bf16.mxu0 0
    %2944 = vmatpush1.bf16.xpose.msra.mxu0 0
    %2945 = vmatprep.subr.bf16.mxu0 0
    %2946 = vmatpush1.bf16.xpose.msra.mxu0 0
    %2947 = vmatprep.subr.bf16.mxu0 0
    %2948 = vmatpush1.bf16.xpose.msra.mxu0 0
    %2949 = vmatprep.mubr.bf16.mxu0 0
    %2950 = vmatmul.mubr.bf16.gmra.mrb[0].mxu0 %v2912
    %v2951 = vpop.f32.mrb[0].mxu0
    %v2952 = vadd.f32 0.0, %v2951
    %v2953 = vpop.f32.mrb[0].mxu0
    %v2954 = vpop.f32.mrb[0].mxu0
    %v2955 = vpop.f32.mrb[0].mxu0
    %2956 = vdwg.mxu0
    %v2957 = vsel %vm2075, %v2588, -inf
    %2958 = vmax.xlane.f32.xlu0 %v2957
    %v2959 = vpop.xlane.xlu0 %2958
    %v2960 = vsel %vm2075, %v2640, -inf
    %2961 = vmax.xlane.f32.xlu0 %v2960
    %v2962 = vpop.xlane.xlu0 %2961
    %v2963 = vsel %vm2075, %v2692, -inf
    %2964 = vmax.xlane.f32.xlu0 %v2963
    %v2965 = vpop.xlane.xlu0 %2964
    %v2966 = vsel %vm2075, %v2744, -inf
    %2967 = vmax.xlane.f32.xlu0 %v2966
    %v2968 = vpop.xlane.xlu0 %2967
    %v2969 = vsel %vm2075, %v2796, -inf
    %2970 = vmax.xlane.f32.xlu0 %v2969
    %v2971 = vpop.xlane.xlu0 %2970
    %v2972 = vsel %vm2075, %v2848, -inf
    %2973 = vmax.xlane.f32.xlu0 %v2972
    %v2974 = vpop.xlane.xlu0 %2973
    %v2975 = vsel %vm2075, %v2900, -inf
    %2976 = vmax.xlane.f32.xlu0 %v2975
    %v2977 = vpop.xlane.xlu0 %2976
    %v2978 = vsel %vm2075, %v2952, -inf
    %2979 = vmax.xlane.f32.xlu0 %v2978
    %v2980 = vpop.xlane.xlu0 %2979
    %v2981 = vsub.f32 %v2588, %v2959
    %v2982 = vsub.f32 %v2640, %v2962
    %v2983 = vsub.f32 %v2692, %v2965
    %v2984 = vsub.f32 %v2744, %v2968
    %v2985 = vsub.f32 %v2796, %v2971
    %v2986 = vsub.f32 %v2848, %v2974
    %v2987 = vsub.f32 %v2900, %v2977
    %v2988 = vsub.f32 %v2952, %v2980
    %v2989 = vmul.f32 %v2981, 1.442695
    %v2990 = vpow.pop %v2989
    %v2991 = vmul.f32 %v2982, 1.442695
    %v2992 = vpow.pop %v2991
    %v2993 = vmul.f32 %v2983, 1.442695
    %v2994 = vpow.pop %v2993
    %v2995 = vmul.f32 %v2984, 1.442695
    %v2996 = vpow.pop %v2995
    %v2997 = vmul.f32 %v2985, 1.442695
    %v2998 = vpow.pop %v2997
    %v2999 = vmul.f32 %v2986, 1.442695
    %v3000 = vpow.pop %v2999
    %v3001 = vmul.f32 %v2987, 1.442695
    %v3002 = vpow.pop %v3001
    %v3003 = vmul.f32 %v2988, 1.442695
    %v3004 = vpow.pop %v3003
    %v3005 = vsel %vm2075, %v2990, 0.0
    %3006 = vadd.xlane.f32.xlu0 %v3005
    %v3007 = vpop.xlane.xlu0 %3006
    %v3008 = vsel %vm2075, %v2992, 0.0
    %3009 = vadd.xlane.f32.xlu0 %v3008
    %v3010 = vpop.xlane.xlu0 %3009
    %v3011 = vsel %vm2075, %v2994, 0.0
    %3012 = vadd.xlane.f32.xlu0 %v3011
    %v3013 = vpop.xlane.xlu0 %3012
    %v3014 = vsel %vm2075, %v2996, 0.0
    %3015 = vadd.xlane.f32.xlu0 %v3014
    %v3016 = vpop.xlane.xlu0 %3015
    %v3017 = vsel %vm2075, %v2998, 0.0
    %3018 = vadd.xlane.f32.xlu0 %v3017
    %v3019 = vpop.xlane.xlu0 %3018
    %v3020 = vsel %vm2075, %v3000, 0.0
    %3021 = vadd.xlane.f32.xlu0 %v3020
    %v3022 = vpop.xlane.xlu0 %3021
    %v3023 = vsel %vm2075, %v3002, 0.0
    %3024 = vadd.xlane.f32.xlu0 %v3023
    %v3025 = vpop.xlane.xlu0 %3024
    %v3026 = vsel %vm2075, %v3004, 0.0
    %3027 = vadd.xlane.f32.xlu0 %v3026
    %v3028 = vpop.xlane.xlu0 %3027
    %v3029 = vrcp.pop %v3007
    %v3030 = vrcp.pop %v3010
    %v3031 = vrcp.pop %v3013
    %v3032 = vrcp.pop %v3016
    %v3033 = vrcp.pop %v3019
    %v3034 = vrcp.pop %v3022
    %v3035 = vrcp.pop %v3025
    %v3036 = vrcp.pop %v3028
    %v3037 = vmul.f32 %v2990, %v3029
    %v3038 = vmul.f32 %v2992, %v3030
    %v3039 = vmul.f32 %v2994, %v3031
    %v3040 = vmul.f32 %v2996, %v3032
    %v3041 = vmul.f32 %v2998, %v3033
    %v3042 = vmul.f32 %v3000, %v3034
    %v3043 = vmul.f32 %v3002, %v3035
    %v3044 = vmul.f32 %v3004, %v3036
    %v3045 = vpack.c.bf16 %v3037, %v3037
    %v3046 = vpack.c.bf16 %v3038, %v3038
    %v3047 = vpack.c.bf16 %v3039, %v3039
    %v3048 = vpack.c.bf16 %v3040, %v3040
    %v3049 = vpack.c.bf16 %v3041, %v3041
    %v3050 = vpack.c.bf16 %v3042, %v3042
    %v3051 = vpack.c.bf16 %v3043, %v3043
    %v3052 = vpack.c.bf16 %v3044, %v3044
    %3054 = vrot.lane.b32.xlu0 %v1698, 64
    %v3055 = vpop.permute.xlu0 %3054
    %v3057 = vsel %vm2075, %v3045, 0
    %v3060 = vsel %vm2175, %v3055, 0
    %3062 = vmatprep.subr.bf16.mxu0 0
    %3063 = vmatpush1.bf16.msra.mxu0 %v3060
    %3064 = vmatprep.subr.bf16.mxu0 0
    %3065 = vmatpush1.bf16.msra.mxu0 0
    %3066 = vmatprep.subr.bf16.mxu0 0
    %3067 = vmatpush1.bf16.msra.mxu0 0
    %3068 = vmatprep.subr.bf16.mxu0 0
    %3069 = vmatpush1.bf16.msra.mxu0 0
    %3070 = vmatprep.subr.bf16.mxu0 0
    %3071 = vmatpush1.bf16.msra.mxu0 0
    %3072 = vmatprep.subr.bf16.mxu0 0
    %3073 = vmatpush1.bf16.msra.mxu0 0
    %3074 = vmatprep.subr.bf16.mxu0 0
    %3075 = vmatpush1.bf16.msra.mxu0 0
    %3076 = vmatprep.subr.bf16.mxu0 0
    %3077 = vmatpush1.bf16.msra.mxu0 0
    %3078 = vmatprep.subr.bf16.mxu0 0
    %3079 = vmatpush1.bf16.msra.mxu0 0
    %3080 = vmatprep.subr.bf16.mxu0 0
    %3081 = vmatpush1.bf16.msra.mxu0 0
    %3082 = vmatprep.subr.bf16.mxu0 0
    %3083 = vmatpush1.bf16.msra.mxu0 0
    %3084 = vmatprep.subr.bf16.mxu0 0
    %3085 = vmatpush1.bf16.msra.mxu0 0
    %3086 = vmatprep.subr.bf16.mxu0 0
    %3087 = vmatpush1.bf16.msra.mxu0 0
    %3088 = vmatprep.subr.bf16.mxu0 0
    %3089 = vmatpush1.bf16.msra.mxu0 0
    %3090 = vmatprep.subr.bf16.mxu0 0
    %3091 = vmatpush1.bf16.msra.mxu0 0
    %3092 = vmatprep.subr.bf16.mxu0 0
    %3093 = vmatpush1.bf16.msra.mxu0 0
    %3094 = vmatprep.mubr.bf16.mxu0 0
    %3095 = vmatmul.mubr.bf16.gmra.mrb[0].mxu0 %v3057
    %v3096 = vpop.f32.mrb[0].mxu0
    %v3097 = vadd.f32 0.0, %v3096
    %v3098 = vpop.f32.mrb[0].mxu0
    %v3099 = vpop.f32.mrb[0].mxu0
    %v3100 = vpop.f32.mrb[0].mxu0
    %3101 = vdwg.mxu0
    %3103 = vrot.lane.b32.xlu0 %v1699, 64
    %v3104 = vpop.permute.xlu0 %3103
    %v3106 = vsel %vm2075, %v3046, 0
    %v3109 = vsel %vm2175, %v3104, 0
    %3111 = vmatprep.subr.bf16.mxu0 0
    %3112 = vmatpush1.bf16.msra.mxu0 %v3109
    %3113 = vmatprep.subr.bf16.mxu0 0
    %3114 = vmatpush1.bf16.msra.mxu0 0
    %3115 = vmatprep.subr.bf16.mxu0 0
    %3116 = vmatpush1.bf16.msra.mxu0 0
    %3117 = vmatprep.subr.bf16.mxu0 0
    %3118 = vmatpush1.bf16.msra.mxu0 0
    %3119 = vmatprep.subr.bf16.mxu0 0
    %3120 = vmatpush1.bf16.msra.mxu0 0
    %3121 = vmatprep.subr.bf16.mxu0 0
    %3122 = vmatpush1.bf16.msra.mxu0 0
    %3123 = vmatprep.subr.bf16.mxu0 0
    %3124 = vmatpush1.bf16.msra.mxu0 0
    %3125 = vmatprep.subr.bf16.mxu0 0
    %3126 = vmatpush1.bf16.msra.mxu0 0
    %3127 = vmatprep.subr.bf16.mxu0 0
    %3128 = vmatpush1.bf16.msra.mxu0 0
    %3129 = vmatprep.subr.bf16.mxu0 0
    %3130 = vmatpush1.bf16.msra.mxu0 0
    %3131 = vmatprep.subr.bf16.mxu0 0
    %3132 = vmatpush1.bf16.msra.mxu0 0
    %3133 = vmatprep.subr.bf16.mxu0 0
    %3134 = vmatpush1.bf16.msra.mxu0 0
    %3135 = vmatprep.subr.bf16.mxu0 0
    %3136 = vmatpush1.bf16.msra.mxu0 0
    %3137 = vmatprep.subr.bf16.mxu0 0
    %3138 = vmatpush1.bf16.msra.mxu0 0
    %3139 = vmatprep.subr.bf16.mxu0 0
    %3140 = vmatpush1.bf16.msra.mxu0 0
    %3141 = vmatprep.subr.bf16.mxu0 0
    %3142 = vmatpush1.bf16.msra.mxu0 0
    %3143 = vmatprep.mubr.bf16.mxu0 0
    %3144 = vmatmul.mubr.bf16.gmra.mrb[0].mxu0 %v3106
    %v3145 = vpop.f32.mrb[0].mxu0
    %v3146 = vadd.f32 0.0, %v3145
    %v3147 = vpop.f32.mrb[0].mxu0
    %v3148 = vpop.f32.mrb[0].mxu0
    %v3149 = vpop.f32.mrb[0].mxu0
    %3150 = vdwg.mxu0
    %3152 = vrot.lane.b32.xlu0 %v1700, 64
    %v3153 = vpop.permute.xlu0 %3152
    %v3155 = vsel %vm2075, %v3047, 0
    %v3158 = vsel %vm2175, %v3153, 0
    %3160 = vmatprep.subr.bf16.mxu0 0
    %3161 = vmatpush1.bf16.msra.mxu0 %v3158
    %3162 = vmatprep.subr.bf16.mxu0 0
    %3163 = vmatpush1.bf16.msra.mxu0 0
    %3164 = vmatprep.subr.bf16.mxu0 0
    %3165 = vmatpush1.bf16.msra.mxu0 0
    %3166 = vmatprep.subr.bf16.mxu0 0
    %3167 = vmatpush1.bf16.msra.mxu0 0
    %3168 = vmatprep.subr.bf16.mxu0 0
    %3169 = vmatpush1.bf16.msra.mxu0 0
    %3170 = vmatprep.subr.bf16.mxu0 0
    %3171 = vmatpush1.bf16.msra.mxu0 0
    %3172 = vmatprep.subr.bf16.mxu0 0
    %3173 = vmatpush1.bf16.msra.mxu0 0
    %3174 = vmatprep.subr.bf16.mxu0 0
    %3175 = vmatpush1.bf16.msra.mxu0 0
    %3176 = vmatprep.subr.bf16.mxu0 0
    %3177 = vmatpush1.bf16.msra.mxu0 0
    %3178 = vmatprep.subr.bf16.mxu0 0
    %3179 = vmatpush1.bf16.msra.mxu0 0
    %3180 = vmatprep.subr.bf16.mxu0 0
    %3181 = vmatpush1.bf16.msra.mxu0 0
    %3182 = vmatprep.subr.bf16.mxu0 0
    %3183 = vmatpush1.bf16.msra.mxu0 0
    %3184 = vmatprep.subr.bf16.mxu0 0
    %3185 = vmatpush1.bf16.msra.mxu0 0
    %3186 = vmatprep.subr.bf16.mxu0 0
    %3187 = vmatpush1.bf16.msra.mxu0 0
    %3188 = vmatprep.subr.bf16.mxu0 0
    %3189 = vmatpush1.bf16.msra.mxu0 0
    %3190 = vmatprep.subr.bf16.mxu0 0
    %3191 = vmatpush1.bf16.msra.mxu0 0
    %3192 = vmatprep.mubr.bf16.mxu0 0
    %3193 = vmatmul.mubr.bf16.gmra.mrb[0].mxu0 %v3155
    %v3194 = vpop.f32.mrb[0].mxu0
    %v3195 = vadd.f32 0.0, %v3194
    %v3196 = vpop.f32.mrb[0].mxu0
    %v3197 = vpop.f32.mrb[0].mxu0
    %v3198 = vpop.f32.mrb[0].mxu0
    %3199 = vdwg.mxu0
    %3201 = vrot.lane.b32.xlu0 %v1701, 64
    %v3202 = vpop.permute.xlu0 %3201
    %v3204 = vsel %vm2075, %v3048, 0
    %v3207 = vsel %vm2175, %v3202, 0
    %3209 = vmatprep.subr.bf16.mxu0 0
    %3210 = vmatpush1.bf16.msra.mxu0 %v3207
    %3211 = vmatprep.subr.bf16.mxu0 0
    %3212 = vmatpush1.bf16.msra.mxu0 0
    %3213 = vmatprep.subr.bf16.mxu0 0
    %3214 = vmatpush1.bf16.msra.mxu0 0
    %3215 = vmatprep.subr.bf16.mxu0 0
    %3216 = vmatpush1.bf16.msra.mxu0 0
    %3217 = vmatprep.subr.bf16.mxu0 0
    %3218 = vmatpush1.bf16.msra.mxu0 0
    %3219 = vmatprep.subr.bf16.mxu0 0
    %3220 = vmatpush1.bf16.msra.mxu0 0
    %3221 = vmatprep.subr.bf16.mxu0 0
    %3222 = vmatpush1.bf16.msra.mxu0 0
    %3223 = vmatprep.subr.bf16.mxu0 0
    %3224 = vmatpush1.bf16.msra.mxu0 0
    %3225 = vmatprep.subr.bf16.mxu0 0
    %3226 = vmatpush1.bf16.msra.mxu0 0
    %3227 = vmatprep.subr.bf16.mxu0 0
    %3228 = vmatpush1.bf16.msra.mxu0 0
    %3229 = vmatprep.subr.bf16.mxu0 0
    %3230 = vmatpush1.bf16.msra.mxu0 0
    %3231 = vmatprep.subr.bf16.mxu0 0
    %3232 = vmatpush1.bf16.msra.mxu0 0
    %3233 = vmatprep.subr.bf16.mxu0 0
    %3234 = vmatpush1.bf16.msra.mxu0 0
    %3235 = vmatprep.subr.bf16.mxu0 0
    %3236 = vmatpush1.bf16.msra.mxu0 0
    %3237 = vmatprep.subr.bf16.mxu0 0
    %3238 = vmatpush1.bf16.msra.mxu0 0
    %3239 = vmatprep.subr.bf16.mxu0 0
    %3240 = vmatpush1.bf16.msra.mxu0 0
    %3241 = vmatprep.mubr.bf16.mxu0 0
    %3242 = vmatmul.mubr.bf16.gmra.mrb[0].mxu0 %v3204
    %v3243 = vpop.f32.mrb[0].mxu0
    %v3244 = vadd.f32 0.0, %v3243
    %v3245 = vpop.f32.mrb[0].mxu0
    %v3246 = vpop.f32.mrb[0].mxu0
    %v3247 = vpop.f32.mrb[0].mxu0
    %3248 = vdwg.mxu0
    %3250 = vrot.lane.b32.xlu0 %v1702, 64
    %v3251 = vpop.permute.xlu0 %3250
    %v3253 = vsel %vm2075, %v3049, 0
    %v3256 = vsel %vm2175, %v3251, 0
    %3258 = vmatprep.subr.bf16.mxu0 0
    %3259 = vmatpush1.bf16.msra.mxu0 %v3256
    %3260 = vmatprep.subr.bf16.mxu0 0
    %3261 = vmatpush1.bf16.msra.mxu0 0
    %3262 = vmatprep.subr.bf16.mxu0 0
    %3263 = vmatpush1.bf16.msra.mxu0 0
    %3264 = vmatprep.subr.bf16.mxu0 0
    %3265 = vmatpush1.bf16.msra.mxu0 0
    %3266 = vmatprep.subr.bf16.mxu0 0
    %3267 = vmatpush1.bf16.msra.mxu0 0
    %3268 = vmatprep.subr.bf16.mxu0 0
    %3269 = vmatpush1.bf16.msra.mxu0 0
    %3270 = vmatprep.subr.bf16.mxu0 0
    %3271 = vmatpush1.bf16.msra.mxu0 0
    %3272 = vmatprep.subr.bf16.mxu0 0
    %3273 = vmatpush1.bf16.msra.mxu0 0
    %3274 = vmatprep.subr.bf16.mxu0 0
    %3275 = vmatpush1.bf16.msra.mxu0 0
    %3276 = vmatprep.subr.bf16.mxu0 0
    %3277 = vmatpush1.bf16.msra.mxu0 0
    %3278 = vmatprep.subr.bf16.mxu0 0
    %3279 = vmatpush1.bf16.msra.mxu0 0
    %3280 = vmatprep.subr.bf16.mxu0 0
    %3281 = vmatpush1.bf16.msra.mxu0 0
    %3282 = vmatprep.subr.bf16.mxu0 0
    %3283 = vmatpush1.bf16.msra.mxu0 0
    %3284 = vmatprep.subr.bf16.mxu0 0
    %3285 = vmatpush1.bf16.msra.mxu0 0
    %3286 = vmatprep.subr.bf16.mxu0 0
    %3287 = vmatpush1.bf16.msra.mxu0 0
    %3288 = vmatprep.subr.bf16.mxu0 0
    %3289 = vmatpush1.bf16.msra.mxu0 0
    %3290 = vmatprep.mubr.bf16.mxu0 0
    %3291 = vmatmul.mubr.bf16.gmra.mrb[0].mxu0 %v3253
    %v3292 = vpop.f32.mrb[0].mxu0
    %v3293 = vadd.f32 0.0, %v3292
    %v3294 = vpop.f32.mrb[0].mxu0
    %v3295 = vpop.f32.mrb[0].mxu0
    %v3296 = vpop.f32.mrb[0].mxu0
    %3297 = vdwg.mxu0
    %3299 = vrot.lane.b32.xlu0 %v1703, 64
    %v3300 = vpop.permute.xlu0 %3299
    %v3302 = vsel %vm2075, %v3050, 0
    %v3305 = vsel %vm2175, %v3300, 0
    %3307 = vmatprep.subr.bf16.mxu0 0
    %3308 = vmatpush1.bf16.msra.mxu0 %v3305
    %3309 = vmatprep.subr.bf16.mxu0 0
    %3310 = vmatpush1.bf16.msra.mxu0 0
    %3311 = vmatprep.subr.bf16.mxu0 0
    %3312 = vmatpush1.bf16.msra.mxu0 0
    %3313 = vmatprep.subr.bf16.mxu0 0
    %3314 = vmatpush1.bf16.msra.mxu0 0
    %3315 = vmatprep.subr.bf16.mxu0 0
    %3316 = vmatpush1.bf16.msra.mxu0 0
    %3317 = vmatprep.subr.bf16.mxu0 0
    %3318 = vmatpush1.bf16.msra.mxu0 0
    %3319 = vmatprep.subr.bf16.mxu0 0
    %3320 = vmatpush1.bf16.msra.mxu0 0
    %3321 = vmatprep.subr.bf16.mxu0 0
    %3322 = vmatpush1.bf16.msra.mxu0 0
    %3323 = vmatprep.subr.bf16.mxu0 0
    %3324 = vmatpush1.bf16.msra.mxu0 0
    %3325 = vmatprep.subr.bf16.mxu0 0
    %3326 = vmatpush1.bf16.msra.mxu0 0
    %3327 = vmatprep.subr.bf16.mxu0 0
    %3328 = vmatpush1.bf16.msra.mxu0 0
    %3329 = vmatprep.subr.bf16.mxu0 0
    %3330 = vmatpush1.bf16.msra.mxu0 0
    %3331 = vmatprep.subr.bf16.mxu0 0
    %3332 = vmatpush1.bf16.msra.mxu0 0
    %3333 = vmatprep.subr.bf16.mxu0 0
    %3334 = vmatpush1.bf16.msra.mxu0 0
    %3335 = vmatprep.subr.bf16.mxu0 0
    %3336 = vmatpush1.bf16.msra.mxu0 0
    %3337 = vmatprep.subr.bf16.mxu0 0
    %3338 = vmatpush1.bf16.msra.mxu0 0
    %3339 = vmatprep.mubr.bf16.mxu0 0
    %3340 = vmatmul.mubr.bf16.gmra.mrb[0].mxu0 %v3302
    %v3341 = vpop.f32.mrb[0].mxu0
    %v3342 = vadd.f32 0.0, %v3341
    %v3343 = vpop.f32.mrb[0].mxu0
    %v3344 = vpop.f32.mrb[0].mxu0
    %v3345 = vpop.f32.mrb[0].mxu0
    %3346 = vdwg.mxu0
    %3348 = vrot.lane.b32.xlu0 %v1704, 64
    %v3349 = vpop.permute.xlu0 %3348
    %v3351 = vsel %vm2075, %v3051, 0
    %v3354 = vsel %vm2175, %v3349, 0
    %3356 = vmatprep.subr.bf16.mxu0 0
    %3357 = vmatpush1.bf16.msra.mxu0 %v3354
    %3358 = vmatprep.subr.bf16.mxu0 0
    %3359 = vmatpush1.bf16.msra.mxu0 0
    %3360 = vmatprep.subr.bf16.mxu0 0
    %3361 = vmatpush1.bf16.msra.mxu0 0
    %3362 = vmatprep.subr.bf16.mxu0 0
    %3363 = vmatpush1.bf16.msra.mxu0 0
    %3364 = vmatprep.subr.bf16.mxu0 0
    %3365 = vmatpush1.bf16.msra.mxu0 0
    %3366 = vmatprep.subr.bf16.mxu0 0
    %3367 = vmatpush1.bf16.msra.mxu0 0
    %3368 = vmatprep.subr.bf16.mxu0 0
    %3369 = vmatpush1.bf16.msra.mxu0 0
    %3370 = vmatprep.subr.bf16.mxu0 0
    %3371 = vmatpush1.bf16.msra.mxu0 0
    %3372 = vmatprep.subr.bf16.mxu0 0
    %3373 = vmatpush1.bf16.msra.mxu0 0
    %3374 = vmatprep.subr.bf16.mxu0 0
    %3375 = vmatpush1.bf16.msra.mxu0 0
    %3376 = vmatprep.subr.bf16.mxu0 0
    %3377 = vmatpush1.bf16.msra.mxu0 0
    %3378 = vmatprep.subr.bf16.mxu0 0
    %3379 = vmatpush1.bf16.msra.mxu0 0
    %3380 = vmatprep.subr.bf16.mxu0 0
    %3381 = vmatpush1.bf16.msra.mxu0 0
    %3382 = vmatprep.subr.bf16.mxu0 0
    %3383 = vmatpush1.bf16.msra.mxu0 0
    %3384 = vmatprep.subr.bf16.mxu0 0
    %3385 = vmatpush1.bf16.msra.mxu0 0
    %3386 = vmatprep.subr.bf16.mxu0 0
    %3387 = vmatpush1.bf16.msra.mxu0 0
    %3388 = vmatprep.mubr.bf16.mxu0 0
    %3389 = vmatmul.mubr.bf16.gmra.mrb[0].mxu0 %v3351
    %v3390 = vpop.f32.mrb[0].mxu0
    %v3391 = vadd.f32 0.0, %v3390
    %v3392 = vpop.f32.mrb[0].mxu0
    %v3393 = vpop.f32.mrb[0].mxu0
    %v3394 = vpop.f32.mrb[0].mxu0
    %3395 = vdwg.mxu0
    %3397 = vrot.lane.b32.xlu0 %v1705, 64
    %v3398 = vpop.permute.xlu0 %3397
    %v3400 = vsel %vm2075, %v3052, 0
    %v3403 = vsel %vm2175, %v3398, 0
    %3405 = vmatprep.subr.bf16.mxu0 0
    %3406 = vmatpush1.bf16.msra.mxu0 %v3403
    %3407 = vmatprep.subr.bf16.mxu0 0
    %3408 = vmatpush1.bf16.msra.mxu0 0
    %3409 = vmatprep.subr.bf16.mxu0 0
    %3410 = vmatpush1.bf16.msra.mxu0 0
    %3411 = vmatprep.subr.bf16.mxu0 0
    %3412 = vmatpush1.bf16.msra.mxu0 0
    %3413 = vmatprep.subr.bf16.mxu0 0
    %3414 = vmatpush1.bf16.msra.mxu0 0
    %3415 = vmatprep.subr.bf16.mxu0 0
    %3416 = vmatpush1.bf16.msra.mxu0 0
    %3417 = vmatprep.subr.bf16.mxu0 0
    %3418 = vmatpush1.bf16.msra.mxu0 0
    %3419 = vmatprep.subr.bf16.mxu0 0
    %3420 = vmatpush1.bf16.msra.mxu0 0
    %3421 = vmatprep.subr.bf16.mxu0 0
    %3422 = vmatpush1.bf16.msra.mxu0 0
    %3423 = vmatprep.subr.bf16.mxu0 0
    %3424 = vmatpush1.bf16.msra.mxu0 0
    %3425 = vmatprep.subr.bf16.mxu0 0
    %3426 = vmatpush1.bf16.msra.mxu0 0
    %3427 = vmatprep.subr.bf16.mxu0 0
    %3428 = vmatpush1.bf16.msra.mxu0 0
    %3429 = vmatprep.subr.bf16.mxu0 0
    %3430 = vmatpush1.bf16.msra.mxu0 0
    %3431 = vmatprep.subr.bf16.mxu0 0
    %3432 = vmatpush1.bf16.msra.mxu0 0
    %3433 = vmatprep.subr.bf16.mxu0 0
    %3434 = vmatpush1.bf16.msra.mxu0 0
    %3435 = vmatprep.subr.bf16.mxu0 0
    %3436 = vmatpush1.bf16.msra.mxu0 0
    %3437 = vmatprep.mubr.bf16.mxu0 0
    %3438 = vmatmul.mubr.bf16.gmra.mrb[0].mxu0 %v3400
    %v3439 = vpop.f32.mrb[0].mxu0
    %v3440 = vadd.f32 0.0, %v3439
    %v3441 = vpop.f32.mrb[0].mxu0
    %v3442 = vpop.f32.mrb[0].mxu0
    %v3443 = vpop.f32.mrb[0].mxu0
    %3444 = vdwg.mxu0
    %v3445 = vpack.c.bf16 %v1169, %v1169
    %v3446 = vpack.c.bf16 %v1171, %v1171
    %v3447 = vpack.c.bf16 %v1173, %v1173
    %v3448 = vpack.c.bf16 %v1175, %v1175
    %v3449 = vpack.c.bf16 %v1177, %v1177
    %v3450 = vpack.c.bf16 %v1179, %v1179
    %v3451 = vpack.c.bf16 %v1181, %v1181
    %v3452 = vpack.c.bf16 %v1183, %v1183
    %v3453 = vpack.c.bf16 %v1397, %v1397
    %v3454 = vpack.c.bf16 %v1401, %v1401
    %v3455 = vpack.c.bf16 %v1407, %v1407
    %v3456 = vpack.c.bf16 %v1411, %v1411
    %v3457 = vpack.c.bf16 %v1417, %v1417
    %v3458 = vpack.c.bf16 %v1421, %v1421
    %v3459 = vpack.c.bf16 %v1427, %v1427
    %v3460 = vpack.c.bf16 %v1431, %v1431
    %v3461 = vpack.c.bf16 %v1646, %v1646
    %v3462 = vpack.c.bf16 %v1650, %v1650
    %v3463 = vpack.c.bf16 %v1656, %v1656
    %v3464 = vpack.c.bf16 %v1660, %v1660
    %v3465 = vpack.c.bf16 %v1666, %v1666
    %v3466 = vpack.c.bf16 %v1670, %v1670
    %v3467 = vpack.c.bf16 %v1676, %v1676
    %v3468 = vpack.c.bf16 %v1680, %v1680
    %v3470 = vsel %vm1706, %v3445, 0
    %v3473 = vsel %vm1706, %v3453, 0
    %3475 = vmatprep.subr.bf16.mxu0 0
    %3476 = vmatpush1.bf16.xpose.msra.mxu0 %v3473
    %3477 = vmatprep.subr.bf16.mxu0 0
    %3478 = vmatpush1.bf16.xpose.msra.mxu0 0
    %3479 = vmatprep.subr.bf16.mxu0 0
    %3480 = vmatpush1.bf16.xpose.msra.mxu0 0
    %3481 = vmatprep.subr.bf16.mxu0 0
    %3482 = vmatpush1.bf16.xpose.msra.mxu0 0
    %3483 = vmatprep.subr.bf16.mxu0 0
    %3484 = vmatpush1.bf16.xpose.msra.mxu0 0
    %3485 = vmatprep.subr.bf16.mxu0 0
    %3486 = vmatpush1.bf16.xpose.msra.mxu0 0
    %3487 = vmatprep.subr.bf16.mxu0 0
    %3488 = vmatpush1.bf16.xpose.msra.mxu0 0
    %3489 = vmatprep.subr.bf16.mxu0 0
    %3490 = vmatpush1.bf16.xpose.msra.mxu0 0
    %3491 = vmatprep.subr.bf16.mxu0 0
    %3492 = vmatpush1.bf16.xpose.msra.mxu0 0
    %3493 = vmatprep.subr.bf16.mxu0 0
    %3494 = vmatpush1.bf16.xpose.msra.mxu0 0
    %3495 = vmatprep.subr.bf16.mxu0 0
    %3496 = vmatpush1.bf16.xpose.msra.mxu0 0
    %3497 = vmatprep.subr.bf16.mxu0 0
    %3498 = vmatpush1.bf16.xpose.msra.mxu0 0
    %3499 = vmatprep.subr.bf16.mxu0 0
    %3500 = vmatpush1.bf16.xpose.msra.mxu0 0
    %3501 = vmatprep.subr.bf16.mxu0 0
    %3502 = vmatpush1.bf16.xpose.msra.mxu0 0
    %3503 = vmatprep.subr.bf16.mxu0 0
    %3504 = vmatpush1.bf16.xpose.msra.mxu0 0
    %3505 = vmatprep.subr.bf16.mxu0 0
    %3506 = vmatpush1.bf16.xpose.msra.mxu0 0
    %3507 = vmatprep.mubr.bf16.mxu0 0
    %3508 = vmatmul.mubr.bf16.gmra.mrb[0].mxu0 %v3470
    %v3509 = vpop.f32.mrb[0].mxu0
    %v3510 = vadd.f32 0.0, %v3509
    %v3511 = vpop.f32.mrb[0].mxu0
    %v3512 = vpop.f32.mrb[0].mxu0
    %v3513 = vpop.f32.mrb[0].mxu0
    %3514 = vdwg.mxu0
    %v3516 = vsel %vm1706, %v3446, 0
    %v3519 = vsel %vm1706, %v3454, 0
    %3521 = vmatprep.subr.bf16.mxu0 0
    %3522 = vmatpush1.bf16.xpose.msra.mxu0 %v3519
    %3523 = vmatprep.subr.bf16.mxu0 0
    %3524 = vmatpush1.bf16.xpose.msra.mxu0 0
    %3525 = vmatprep.subr.bf16.mxu0 0
    %3526 = vmatpush1.bf16.xpose.msra.mxu0 0
    %3527 = vmatprep.subr.bf16.mxu0 0
    %3528 = vmatpush1.bf16.xpose.msra.mxu0 0
    %3529 = vmatprep.subr.bf16.mxu0 0
    %3530 = vmatpush1.bf16.xpose.msra.mxu0 0
    %3531 = vmatprep.subr.bf16.mxu0 0
    %3532 = vmatpush1.bf16.xpose.msra.mxu0 0
    %3533 = vmatprep.subr.bf16.mxu0 0
    %3534 = vmatpush1.bf16.xpose.msra.mxu0 0
    %3535 = vmatprep.subr.bf16.mxu0 0
    %3536 = vmatpush1.bf16.xpose.msra.mxu0 0
    %3537 = vmatprep.subr.bf16.mxu0 0
    %3538 = vmatpush1.bf16.xpose.msra.mxu0 0
    %3539 = vmatprep.subr.bf16.mxu0 0
    %3540 = vmatpush1.bf16.xpose.msra.mxu0 0
    %3541 = vmatprep.subr.bf16.mxu0 0
    %3542 = vmatpush1.bf16.xpose.msra.mxu0 0
    %3543 = vmatprep.subr.bf16.mxu0 0
    %3544 = vmatpush1.bf16.xpose.msra.mxu0 0
    %3545 = vmatprep.subr.bf16.mxu0 0
    %3546 = vmatpush1.bf16.xpose.msra.mxu0 0
    %3547 = vmatprep.subr.bf16.mxu0 0
    %3548 = vmatpush1.bf16.xpose.msra.mxu0 0
    %3549 = vmatprep.subr.bf16.mxu0 0
    %3550 = vmatpush1.bf16.xpose.msra.mxu0 0
    %3551 = vmatprep.subr.bf16.mxu0 0
    %3552 = vmatpush1.bf16.xpose.msra.mxu0 0
    %3553 = vmatprep.mubr.bf16.mxu0 0
    %3554 = vmatmul.mubr.bf16.gmra.mrb[0].mxu0 %v3516
    %v3555 = vpop.f32.mrb[0].mxu0
    %v3556 = vadd.f32 0.0, %v3555
    %v3557 = vpop.f32.mrb[0].mxu0
    %v3558 = vpop.f32.mrb[0].mxu0
    %v3559 = vpop.f32.mrb[0].mxu0
    %3560 = vdwg.mxu0
    %v3562 = vsel %vm1706, %v3447, 0
    %v3565 = vsel %vm1706, %v3455, 0
    %3567 = vmatprep.subr.bf16.mxu0 0
    %3568 = vmatpush1.bf16.xpose.msra.mxu0 %v3565
    %3569 = vmatprep.subr.bf16.mxu0 0
    %3570 = vmatpush1.bf16.xpose.msra.mxu0 0
    %3571 = vmatprep.subr.bf16.mxu0 0
    %3572 = vmatpush1.bf16.xpose.msra.mxu0 0
    %3573 = vmatprep.subr.bf16.mxu0 0
    %3574 = vmatpush1.bf16.xpose.msra.mxu0 0
    %3575 = vmatprep.subr.bf16.mxu0 0
    %3576 = vmatpush1.bf16.xpose.msra.mxu0 0
    %3577 = vmatprep.subr.bf16.mxu0 0
    %3578 = vmatpush1.bf16.xpose.msra.mxu0 0
    %3579 = vmatprep.subr.bf16.mxu0 0
    %3580 = vmatpush1.bf16.xpose.msra.mxu0 0
    %3581 = vmatprep.subr.bf16.mxu0 0
    %3582 = vmatpush1.bf16.xpose.msra.mxu0 0
    %3583 = vmatprep.subr.bf16.mxu0 0
    %3584 = vmatpush1.bf16.xpose.msra.mxu0 0
    %3585 = vmatprep.subr.bf16.mxu0 0
    %3586 = vmatpush1.bf16.xpose.msra.mxu0 0
    %3587 = vmatprep.subr.bf16.mxu0 0
    %3588 = vmatpush1.bf16.xpose.msra.mxu0 0
    %3589 = vmatprep.subr.bf16.mxu0 0
    %3590 = vmatpush1.bf16.xpose.msra.mxu0 0
    %3591 = vmatprep.subr.bf16.mxu0 0
    %3592 = vmatpush1.bf16.xpose.msra.mxu0 0
    %3593 = vmatprep.subr.bf16.mxu0 0
    %3594 = vmatpush1.bf16.xpose.msra.mxu0 0
    %3595 = vmatprep.subr.bf16.mxu0 0
    %3596 = vmatpush1.bf16.xpose.msra.mxu0 0
    %3597 = vmatprep.subr.bf16.mxu0 0
    %3598 = vmatpush1.bf16.xpose.msra.mxu0 0
    %3599 = vmatprep.mubr.bf16.mxu0 0
    %3600 = vmatmul.mubr.bf16.gmra.mrb[0].mxu0 %v3562
    %v3601 = vpop.f32.mrb[0].mxu0
    %v3602 = vadd.f32 0.0, %v3601
    %v3603 = vpop.f32.mrb[0].mxu0
    %v3604 = vpop.f32.mrb[0].mxu0
    %v3605 = vpop.f32.mrb[0].mxu0
    %3606 = vdwg.mxu0
    %v3608 = vsel %vm1706, %v3448, 0
    %v3611 = vsel %vm1706, %v3456, 0
    %3613 = vmatprep.subr.bf16.mxu0 0
    %3614 = vmatpush1.bf16.xpose.msra.mxu0 %v3611
    %3615 = vmatprep.subr.bf16.mxu0 0
    %3616 = vmatpush1.bf16.xpose.msra.mxu0 0
    %3617 = vmatprep.subr.bf16.mxu0 0
    %3618 = vmatpush1.bf16.xpose.msra.mxu0 0
    %3619 = vmatprep.subr.bf16.mxu0 0
    %3620 = vmatpush1.bf16.xpose.msra.mxu0 0
    %3621 = vmatprep.subr.bf16.mxu0 0
    %3622 = vmatpush1.bf16.xpose.msra.mxu0 0
    %3623 = vmatprep.subr.bf16.mxu0 0
    %3624 = vmatpush1.bf16.xpose.msra.mxu0 0
    %3625 = vmatprep.subr.bf16.mxu0 0
    %3626 = vmatpush1.bf16.xpose.msra.mxu0 0
    %3627 = vmatprep.subr.bf16.mxu0 0
    %3628 = vmatpush1.bf16.xpose.msra.mxu0 0
    %3629 = vmatprep.subr.bf16.mxu0 0
    %3630 = vmatpush1.bf16.xpose.msra.mxu0 0
    %3631 = vmatprep.subr.bf16.mxu0 0
    %3632 = vmatpush1.bf16.xpose.msra.mxu0 0
    %3633 = vmatprep.subr.bf16.mxu0 0
    %3634 = vmatpush1.bf16.xpose.msra.mxu0 0
    %3635 = vmatprep.subr.bf16.mxu0 0
    %3636 = vmatpush1.bf16.xpose.msra.mxu0 0
    %3637 = vmatprep.subr.bf16.mxu0 0
    %3638 = vmatpush1.bf16.xpose.msra.mxu0 0
    %3639 = vmatprep.subr.bf16.mxu0 0
    %3640 = vmatpush1.bf16.xpose.msra.mxu0 0
    %3641 = vmatprep.subr.bf16.mxu0 0
    %3642 = vmatpush1.bf16.xpose.msra.mxu0 0
    %3643 = vmatprep.subr.bf16.mxu0 0
    %3644 = vmatpush1.bf16.xpose.msra.mxu0 0
    %3645 = vmatprep.mubr.bf16.mxu0 0
    %3646 = vmatmul.mubr.bf16.gmra.mrb[0].mxu0 %v3608
    %v3647 = vpop.f32.mrb[0].mxu0
    %v3648 = vadd.f32 0.0, %v3647
    %v3649 = vpop.f32.mrb[0].mxu0
    %v3650 = vpop.f32.mrb[0].mxu0
    %v3651 = vpop.f32.mrb[0].mxu0
    %3652 = vdwg.mxu0
    %v3654 = vsel %vm1706, %v3449, 0
    %v3657 = vsel %vm1706, %v3457, 0
    %3659 = vmatprep.subr.bf16.mxu0 0
    %3660 = vmatpush1.bf16.xpose.msra.mxu0 %v3657
    %3661 = vmatprep.subr.bf16.mxu0 0
    %3662 = vmatpush1.bf16.xpose.msra.mxu0 0
    %3663 = vmatprep.subr.bf16.mxu0 0
    %3664 = vmatpush1.bf16.xpose.msra.mxu0 0
    %3665 = vmatprep.subr.bf16.mxu0 0
    %3666 = vmatpush1.bf16.xpose.msra.mxu0 0
    %3667 = vmatprep.subr.bf16.mxu0 0
    %3668 = vmatpush1.bf16.xpose.msra.mxu0 0
    %3669 = vmatprep.subr.bf16.mxu0 0
    %3670 = vmatpush1.bf16.xpose.msra.mxu0 0
    %3671 = vmatprep.subr.bf16.mxu0 0
    %3672 = vmatpush1.bf16.xpose.msra.mxu0 0
    %3673 = vmatprep.subr.bf16.mxu0 0
    %3674 = vmatpush1.bf16.xpose.msra.mxu0 0
    %3675 = vmatprep.subr.bf16.mxu0 0
    %3676 = vmatpush1.bf16.xpose.msra.mxu0 0
    %3677 = vmatprep.subr.bf16.mxu0 0
    %3678 = vmatpush1.bf16.xpose.msra.mxu0 0
    %3679 = vmatprep.subr.bf16.mxu0 0
    %3680 = vmatpush1.bf16.xpose.msra.mxu0 0
    %3681 = vmatprep.subr.bf16.mxu0 0
    %3682 = vmatpush1.bf16.xpose.msra.mxu0 0
    %3683 = vmatprep.subr.bf16.mxu0 0
    %3684 = vmatpush1.bf16.xpose.msra.mxu0 0
    %3685 = vmatprep.subr.bf16.mxu0 0
    %3686 = vmatpush1.bf16.xpose.msra.mxu0 0
    %3687 = vmatprep.subr.bf16.mxu0 0
    %3688 = vmatpush1.bf16.xpose.msra.mxu0 0
    %3689 = vmatprep.subr.bf16.mxu0 0
    %3690 = vmatpush1.bf16.xpose.msra.mxu0 0
    %3691 = vmatprep.mubr.bf16.mxu0 0
    %3692 = vmatmul.mubr.bf16.gmra.mrb[0].mxu0 %v3654
    %v3693 = vpop.f32.mrb[0].mxu0
    %v3694 = vadd.f32 0.0, %v3693
    %v3695 = vpop.f32.mrb[0].mxu0
    %v3696 = vpop.f32.mrb[0].mxu0
    %v3697 = vpop.f32.mrb[0].mxu0
    %3698 = vdwg.mxu0
    %v3700 = vsel %vm1706, %v3450, 0
    %v3703 = vsel %vm1706, %v3458, 0
    %3705 = vmatprep.subr.bf16.mxu0 0
    %3706 = vmatpush1.bf16.xpose.msra.mxu0 %v3703
    %3707 = vmatprep.subr.bf16.mxu0 0
    %3708 = vmatpush1.bf16.xpose.msra.mxu0 0
    %3709 = vmatprep.subr.bf16.mxu0 0
    %3710 = vmatpush1.bf16.xpose.msra.mxu0 0
    %3711 = vmatprep.subr.bf16.mxu0 0
    %3712 = vmatpush1.bf16.xpose.msra.mxu0 0
    %3713 = vmatprep.subr.bf16.mxu0 0
    %3714 = vmatpush1.bf16.xpose.msra.mxu0 0
    %3715 = vmatprep.subr.bf16.mxu0 0
    %3716 = vmatpush1.bf16.xpose.msra.mxu0 0
    %3717 = vmatprep.subr.bf16.mxu0 0
    %3718 = vmatpush1.bf16.xpose.msra.mxu0 0
    %3719 = vmatprep.subr.bf16.mxu0 0
    %3720 = vmatpush1.bf16.xpose.msra.mxu0 0
    %3721 = vmatprep.subr.bf16.mxu0 0
    %3722 = vmatpush1.bf16.xpose.msra.mxu0 0
    %3723 = vmatprep.subr.bf16.mxu0 0
    %3724 = vmatpush1.bf16.xpose.msra.mxu0 0
    %3725 = vmatprep.subr.bf16.mxu0 0
    %3726 = vmatpush1.bf16.xpose.msra.mxu0 0
    %3727 = vmatprep.subr.bf16.mxu0 0
    %3728 = vmatpush1.bf16.xpose.msra.mxu0 0
    %3729 = vmatprep.subr.bf16.mxu0 0
    %3730 = vmatpush1.bf16.xpose.msra.mxu0 0
    %3731 = vmatprep.subr.bf16.mxu0 0
    %3732 = vmatpush1.bf16.xpose.msra.mxu0 0
    %3733 = vmatprep.subr.bf16.mxu0 0
    %3734 = vmatpush1.bf16.xpose.msra.mxu0 0
    %3735 = vmatprep.subr.bf16.mxu0 0
    %3736 = vmatpush1.bf16.xpose.msra.mxu0 0
    %3737 = vmatprep.mubr.bf16.mxu0 0
    %3738 = vmatmul.mubr.bf16.gmra.mrb[0].mxu0 %v3700
    %v3739 = vpop.f32.mrb[0].mxu0
    %v3740 = vadd.f32 0.0, %v3739
    %v3741 = vpop.f32.mrb[0].mxu0
    %v3742 = vpop.f32.mrb[0].mxu0
    %v3743 = vpop.f32.mrb[0].mxu0
    %3744 = vdwg.mxu0
    %v3746 = vsel %vm1706, %v3451, 0
    %v3749 = vsel %vm1706, %v3459, 0
    %3751 = vmatprep.subr.bf16.mxu0 0
    %3752 = vmatpush1.bf16.xpose.msra.mxu0 %v3749
    %3753 = vmatprep.subr.bf16.mxu0 0
    %3754 = vmatpush1.bf16.xpose.msra.mxu0 0
    %3755 = vmatprep.subr.bf16.mxu0 0
    %3756 = vmatpush1.bf16.xpose.msra.mxu0 0
    %3757 = vmatprep.subr.bf16.mxu0 0
    %3758 = vmatpush1.bf16.xpose.msra.mxu0 0
    %3759 = vmatprep.subr.bf16.mxu0 0
    %3760 = vmatpush1.bf16.xpose.msra.mxu0 0
    %3761 = vmatprep.subr.bf16.mxu0 0
    %3762 = vmatpush1.bf16.xpose.msra.mxu0 0
    %3763 = vmatprep.subr.bf16.mxu0 0
    %3764 = vmatpush1.bf16.xpose.msra.mxu0 0
    %3765 = vmatprep.subr.bf16.mxu0 0
    %3766 = vmatpush1.bf16.xpose.msra.mxu0 0
    %3767 = vmatprep.subr.bf16.mxu0 0
    %3768 = vmatpush1.bf16.xpose.msra.mxu0 0
    %3769 = vmatprep.subr.bf16.mxu0 0
    %3770 = vmatpush1.bf16.xpose.msra.mxu0 0
    %3771 = vmatprep.subr.bf16.mxu0 0
    %3772 = vmatpush1.bf16.xpose.msra.mxu0 0
    %3773 = vmatprep.subr.bf16.mxu0 0
    %3774 = vmatpush1.bf16.xpose.msra.mxu0 0
    %3775 = vmatprep.subr.bf16.mxu0 0
    %3776 = vmatpush1.bf16.xpose.msra.mxu0 0
    %3777 = vmatprep.subr.bf16.mxu0 0
    %3778 = vmatpush1.bf16.xpose.msra.mxu0 0
    %3779 = vmatprep.subr.bf16.mxu0 0
    %3780 = vmatpush1.bf16.xpose.msra.mxu0 0
    %3781 = vmatprep.subr.bf16.mxu0 0
    %3782 = vmatpush1.bf16.xpose.msra.mxu0 0
    %3783 = vmatprep.mubr.bf16.mxu0 0
    %3784 = vmatmul.mubr.bf16.gmra.mrb[0].mxu0 %v3746
    %v3785 = vpop.f32.mrb[0].mxu0
    %v3786 = vadd.f32 0.0, %v3785
    %v3787 = vpop.f32.mrb[0].mxu0
    %v3788 = vpop.f32.mrb[0].mxu0
    %v3789 = vpop.f32.mrb[0].mxu0
    %3790 = vdwg.mxu0
    %v3792 = vsel %vm1706, %v3452, 0
    %v3795 = vsel %vm1706, %v3460, 0
    %3797 = vmatprep.subr.bf16.mxu0 0
    %3798 = vmatpush1.bf16.xpose.msra.mxu0 %v3795
    %3799 = vmatprep.subr.bf16.mxu0 0
    %3800 = vmatpush1.bf16.xpose.msra.mxu0 0
    %3801 = vmatprep.subr.bf16.mxu0 0
    %3802 = vmatpush1.bf16.xpose.msra.mxu0 0
    %3803 = vmatprep.subr.bf16.mxu0 0
    %3804 = vmatpush1.bf16.xpose.msra.mxu0 0
    %3805 = vmatprep.subr.bf16.mxu0 0
    %3806 = vmatpush1.bf16.xpose.msra.mxu0 0
    %3807 = vmatprep.subr.bf16.mxu0 0
    %3808 = vmatpush1.bf16.xpose.msra.mxu0 0
    %3809 = vmatprep.subr.bf16.mxu0 0
    %3810 = vmatpush1.bf16.xpose.msra.mxu0 0
    %3811 = vmatprep.subr.bf16.mxu0 0
    %3812 = vmatpush1.bf16.xpose.msra.mxu0 0
    %3813 = vmatprep.subr.bf16.mxu0 0
    %3814 = vmatpush1.bf16.xpose.msra.mxu0 0
    %3815 = vmatprep.subr.bf16.mxu0 0
    %3816 = vmatpush1.bf16.xpose.msra.mxu0 0
    %3817 = vmatprep.subr.bf16.mxu0 0
    %3818 = vmatpush1.bf16.xpose.msra.mxu0 0
    %3819 = vmatprep.subr.bf16.mxu0 0
    %3820 = vmatpush1.bf16.xpose.msra.mxu0 0
    %3821 = vmatprep.subr.bf16.mxu0 0
    %3822 = vmatpush1.bf16.xpose.msra.mxu0 0
    %3823 = vmatprep.subr.bf16.mxu0 0
    %3824 = vmatpush1.bf16.xpose.msra.mxu0 0
    %3825 = vmatprep.subr.bf16.mxu0 0
    %3826 = vmatpush1.bf16.xpose.msra.mxu0 0
    %3827 = vmatprep.subr.bf16.mxu0 0
    %3828 = vmatpush1.bf16.xpose.msra.mxu0 0
    %3829 = vmatprep.mubr.bf16.mxu0 0
    %3830 = vmatmul.mubr.bf16.gmra.mrb[0].mxu0 %v3792
    %v3831 = vpop.f32.mrb[0].mxu0
    %v3832 = vadd.f32 0.0, %v3831
    %v3833 = vpop.f32.mrb[0].mxu0
    %v3834 = vpop.f32.mrb[0].mxu0
    %v3835 = vpop.f32.mrb[0].mxu0
    %3836 = vdwg.mxu0
    %v3837 = vsel %vm2075, %v3510, -inf
    %3838 = vmax.xlane.f32.xlu0 %v3837
    %v3839 = vpop.xlane.xlu0 %3838
    %v3840 = vsel %vm2075, %v3556, -inf
    %3841 = vmax.xlane.f32.xlu0 %v3840
    %v3842 = vpop.xlane.xlu0 %3841
    %v3843 = vsel %vm2075, %v3602, -inf
    %3844 = vmax.xlane.f32.xlu0 %v3843
    %v3845 = vpop.xlane.xlu0 %3844
    %v3846 = vsel %vm2075, %v3648, -inf
    %3847 = vmax.xlane.f32.xlu0 %v3846
    %v3848 = vpop.xlane.xlu0 %3847
    %v3849 = vsel %vm2075, %v3694, -inf
    %3850 = vmax.xlane.f32.xlu0 %v3849
    %v3851 = vpop.xlane.xlu0 %3850
    %v3852 = vsel %vm2075, %v3740, -inf
    %3853 = vmax.xlane.f32.xlu0 %v3852
    %v3854 = vpop.xlane.xlu0 %3853
    %v3855 = vsel %vm2075, %v3786, -inf
    %3856 = vmax.xlane.f32.xlu0 %v3855
    %v3857 = vpop.xlane.xlu0 %3856
    %v3858 = vsel %vm2075, %v3832, -inf
    %3859 = vmax.xlane.f32.xlu0 %v3858
    %v3860 = vpop.xlane.xlu0 %3859
    %v3861 = vsub.f32 %v3510, %v3839
    %v3862 = vsub.f32 %v3556, %v3842
    %v3863 = vsub.f32 %v3602, %v3845
    %v3864 = vsub.f32 %v3648, %v3848
    %v3865 = vsub.f32 %v3694, %v3851
    %v3866 = vsub.f32 %v3740, %v3854
    %v3867 = vsub.f32 %v3786, %v3857
    %v3868 = vsub.f32 %v3832, %v3860
    %v3869 = vmul.f32 %v3861, 1.442695
    %v3870 = vpow.pop %v3869
    %v3871 = vmul.f32 %v3862, 1.442695
    %v3872 = vpow.pop %v3871
    %v3873 = vmul.f32 %v3863, 1.442695
    %v3874 = vpow.pop %v3873
    %v3875 = vmul.f32 %v3864, 1.442695
    %v3876 = vpow.pop %v3875
    %v3877 = vmul.f32 %v3865, 1.442695
    %v3878 = vpow.pop %v3877
    %v3879 = vmul.f32 %v3866, 1.442695
    %v3880 = vpow.pop %v3879
    %v3881 = vmul.f32 %v3867, 1.442695
    %v3882 = vpow.pop %v3881
    %v3883 = vmul.f32 %v3868, 1.442695
    %v3884 = vpow.pop %v3883
    %v3885 = vsel %vm2075, %v3870, 0.0
    %3886 = vadd.xlane.f32.xlu0 %v3885
    %v3887 = vpop.xlane.xlu0 %3886
    %v3888 = vsel %vm2075, %v3872, 0.0
    %3889 = vadd.xlane.f32.xlu0 %v3888
    %v3890 = vpop.xlane.xlu0 %3889
    %v3891 = vsel %vm2075, %v3874, 0.0
    %3892 = vadd.xlane.f32.xlu0 %v3891
    %v3893 = vpop.xlane.xlu0 %3892
    %v3894 = vsel %vm2075, %v3876, 0.0
    %3895 = vadd.xlane.f32.xlu0 %v3894
    %v3896 = vpop.xlane.xlu0 %3895
    %v3897 = vsel %vm2075, %v3878, 0.0
    %3898 = vadd.xlane.f32.xlu0 %v3897
    %v3899 = vpop.xlane.xlu0 %3898
    %v3900 = vsel %vm2075, %v3880, 0.0
    %3901 = vadd.xlane.f32.xlu0 %v3900
    %v3902 = vpop.xlane.xlu0 %3901
    %v3903 = vsel %vm2075, %v3882, 0.0
    %3904 = vadd.xlane.f32.xlu0 %v3903
    %v3905 = vpop.xlane.xlu0 %3904
    %v3906 = vsel %vm2075, %v3884, 0.0
    %3907 = vadd.xlane.f32.xlu0 %v3906
    %v3908 = vpop.xlane.xlu0 %3907
    %v3909 = vrcp.pop %v3887
    %v3910 = vrcp.pop %v3890
    %v3911 = vrcp.pop %v3893
    %v3912 = vrcp.pop %v3896
    %v3913 = vrcp.pop %v3899
    %v3914 = vrcp.pop %v3902
    %v3915 = vrcp.pop %v3905
    %v3916 = vrcp.pop %v3908
    %v3917 = vmul.f32 %v3870, %v3909
    %v3918 = vmul.f32 %v3872, %v3910
    %v3919 = vmul.f32 %v3874, %v3911
    %v3920 = vmul.f32 %v3876, %v3912
    %v3921 = vmul.f32 %v3878, %v3913
    %v3922 = vmul.f32 %v3880, %v3914
    %v3923 = vmul.f32 %v3882, %v3915
    %v3924 = vmul.f32 %v3884, %v3916
    %v3925 = vpack.c.bf16 %v3917, %v3917
    %v3926 = vpack.c.bf16 %v3918, %v3918
    %v3927 = vpack.c.bf16 %v3919, %v3919
    %v3928 = vpack.c.bf16 %v3920, %v3920
    %v3929 = vpack.c.bf16 %v3921, %v3921
    %v3930 = vpack.c.bf16 %v3922, %v3922
    %v3931 = vpack.c.bf16 %v3923, %v3923
    %v3932 = vpack.c.bf16 %v3924, %v3924
    %v3934 = vsel %vm2075, %v3925, 0
    %v3937 = vsel %vm2175, %v3461, 0
    %3939 = vmatprep.subr.bf16.mxu0 0
    %3940 = vmatpush1.bf16.msra.mxu0 %v3937
    %3941 = vmatprep.subr.bf16.mxu0 0
    %3942 = vmatpush1.bf16.msra.mxu0 0
    %3943 = vmatprep.subr.bf16.mxu0 0
    %3944 = vmatpush1.bf16.msra.mxu0 0
    %3945 = vmatprep.subr.bf16.mxu0 0
    %3946 = vmatpush1.bf16.msra.mxu0 0
    %3947 = vmatprep.subr.bf16.mxu0 0
    %3948 = vmatpush1.bf16.msra.mxu0 0
    %3949 = vmatprep.subr.bf16.mxu0 0
    %3950 = vmatpush1.bf16.msra.mxu0 0
    %3951 = vmatprep.subr.bf16.mxu0 0
    %3952 = vmatpush1.bf16.msra.mxu0 0
    %3953 = vmatprep.subr.bf16.mxu0 0
    %3954 = vmatpush1.bf16.msra.mxu0 0
    %3955 = vmatprep.subr.bf16.mxu0 0
    %3956 = vmatpush1.bf16.msra.mxu0 0
    %3957 = vmatprep.subr.bf16.mxu0 0
    %3958 = vmatpush1.bf16.msra.mxu0 0
    %3959 = vmatprep.subr.bf16.mxu0 0
    %3960 = vmatpush1.bf16.msra.mxu0 0
    %3961 = vmatprep.subr.bf16.mxu0 0
    %3962 = vmatpush1.bf16.msra.mxu0 0
    %3963 = vmatprep.subr.bf16.mxu0 0
    %3964 = vmatpush1.bf16.msra.mxu0 0
    %3965 = vmatprep.subr.bf16.mxu0 0
    %3966 = vmatpush1.bf16.msra.mxu0 0
    %3967 = vmatprep.subr.bf16.mxu0 0
    %3968 = vmatpush1.bf16.msra.mxu0 0
    %3969 = vmatprep.subr.bf16.mxu0 0
    %3970 = vmatpush1.bf16.msra.mxu0 0
    %3971 = vmatprep.mubr.bf16.mxu0 0
    %3972 = vmatmul.mubr.bf16.gmra.mrb[0].mxu0 %v3934
    %v3973 = vpop.f32.mrb[0].mxu0
    %v3974 = vadd.f32 0.0, %v3973
    %v3975 = vpop.f32.mrb[0].mxu0
    %v3976 = vpop.f32.mrb[0].mxu0
    %v3977 = vpop.f32.mrb[0].mxu0
    %3978 = vdwg.mxu0
    %v3980 = vsel %vm2075, %v3926, 0
    %v3983 = vsel %vm2175, %v3462, 0
    %3985 = vmatprep.subr.bf16.mxu0 0
    %3986 = vmatpush1.bf16.msra.mxu0 %v3983
    %3987 = vmatprep.subr.bf16.mxu0 0
    %3988 = vmatpush1.bf16.msra.mxu0 0
    %3989 = vmatprep.subr.bf16.mxu0 0
    %3990 = vmatpush1.bf16.msra.mxu0 0
    %3991 = vmatprep.subr.bf16.mxu0 0
    %3992 = vmatpush1.bf16.msra.mxu0 0
    %3993 = vmatprep.subr.bf16.mxu0 0
    %3994 = vmatpush1.bf16.msra.mxu0 0
    %3995 = vmatprep.subr.bf16.mxu0 0
    %3996 = vmatpush1.bf16.msra.mxu0 0
    %3997 = vmatprep.subr.bf16.mxu0 0
    %3998 = vmatpush1.bf16.msra.mxu0 0
    %3999 = vmatprep.subr.bf16.mxu0 0
    %4000 = vmatpush1.bf16.msra.mxu0 0
    %4001 = vmatprep.subr.bf16.mxu0 0
    %4002 = vmatpush1.bf16.msra.mxu0 0
    %4003 = vmatprep.subr.bf16.mxu0 0
    %4004 = vmatpush1.bf16.msra.mxu0 0
    %4005 = vmatprep.subr.bf16.mxu0 0
    %4006 = vmatpush1.bf16.msra.mxu0 0
    %4007 = vmatprep.subr.bf16.mxu0 0
    %4008 = vmatpush1.bf16.msra.mxu0 0
    %4009 = vmatprep.subr.bf16.mxu0 0
    %4010 = vmatpush1.bf16.msra.mxu0 0
    %4011 = vmatprep.subr.bf16.mxu0 0
    %4012 = vmatpush1.bf16.msra.mxu0 0
    %4013 = vmatprep.subr.bf16.mxu0 0
    %4014 = vmatpush1.bf16.msra.mxu0 0
    %4015 = vmatprep.subr.bf16.mxu0 0
    %4016 = vmatpush1.bf16.msra.mxu0 0
    %4017 = vmatprep.mubr.bf16.mxu0 0
    %4018 = vmatmul.mubr.bf16.gmra.mrb[0].mxu0 %v3980
    %v4019 = vpop.f32.mrb[0].mxu0
    %v4020 = vadd.f32 0.0, %v4019
    %v4021 = vpop.f32.mrb[0].mxu0
    %v4022 = vpop.f32.mrb[0].mxu0
    %v4023 = vpop.f32.mrb[0].mxu0
    %4024 = vdwg.mxu0
    %v4026 = vsel %vm2075, %v3927, 0
    %v4029 = vsel %vm2175, %v3463, 0
    %4031 = vmatprep.subr.bf16.mxu0 0
    %4032 = vmatpush1.bf16.msra.mxu0 %v4029
    %4033 = vmatprep.subr.bf16.mxu0 0
    %4034 = vmatpush1.bf16.msra.mxu0 0
    %4035 = vmatprep.subr.bf16.mxu0 0
    %4036 = vmatpush1.bf16.msra.mxu0 0
    %4037 = vmatprep.subr.bf16.mxu0 0
    %4038 = vmatpush1.bf16.msra.mxu0 0
    %4039 = vmatprep.subr.bf16.mxu0 0
    %4040 = vmatpush1.bf16.msra.mxu0 0
    %4041 = vmatprep.subr.bf16.mxu0 0
    %4042 = vmatpush1.bf16.msra.mxu0 0
    %4043 = vmatprep.subr.bf16.mxu0 0
    %4044 = vmatpush1.bf16.msra.mxu0 0
    %4045 = vmatprep.subr.bf16.mxu0 0
    %4046 = vmatpush1.bf16.msra.mxu0 0
    %4047 = vmatprep.subr.bf16.mxu0 0
    %4048 = vmatpush1.bf16.msra.mxu0 0
    %4049 = vmatprep.subr.bf16.mxu0 0
    %4050 = vmatpush1.bf16.msra.mxu0 0
    %4051 = vmatprep.subr.bf16.mxu0 0
    %4052 = vmatpush1.bf16.msra.mxu0 0
    %4053 = vmatprep.subr.bf16.mxu0 0
    %4054 = vmatpush1.bf16.msra.mxu0 0
    %4055 = vmatprep.subr.bf16.mxu0 0
    %4056 = vmatpush1.bf16.msra.mxu0 0
    %4057 = vmatprep.subr.bf16.mxu0 0
    %4058 = vmatpush1.bf16.msra.mxu0 0
    %4059 = vmatprep.subr.bf16.mxu0 0
    %4060 = vmatpush1.bf16.msra.mxu0 0
    %4061 = vmatprep.subr.bf16.mxu0 0
    %4062 = vmatpush1.bf16.msra.mxu0 0
    %4063 = vmatprep.mubr.bf16.mxu0 0
    %4064 = vmatmul.mubr.bf16.gmra.mrb[0].mxu0 %v4026
    %v4065 = vpop.f32.mrb[0].mxu0
    %v4066 = vadd.f32 0.0, %v4065
    %v4067 = vpop.f32.mrb[0].mxu0
    %v4068 = vpop.f32.mrb[0].mxu0
    %v4069 = vpop.f32.mrb[0].mxu0
    %4070 = vdwg.mxu0
    %v4072 = vsel %vm2075, %v3928, 0
    %v4075 = vsel %vm2175, %v3464, 0
    %4077 = vmatprep.subr.bf16.mxu0 0
    %4078 = vmatpush1.bf16.msra.mxu0 %v4075
    %4079 = vmatprep.subr.bf16.mxu0 0
    %4080 = vmatpush1.bf16.msra.mxu0 0
    %4081 = vmatprep.subr.bf16.mxu0 0
    %4082 = vmatpush1.bf16.msra.mxu0 0
    %4083 = vmatprep.subr.bf16.mxu0 0
    %4084 = vmatpush1.bf16.msra.mxu0 0
    %4085 = vmatprep.subr.bf16.mxu0 0
    %4086 = vmatpush1.bf16.msra.mxu0 0
    %4087 = vmatprep.subr.bf16.mxu0 0
    %4088 = vmatpush1.bf16.msra.mxu0 0
    %4089 = vmatprep.subr.bf16.mxu0 0
    %4090 = vmatpush1.bf16.msra.mxu0 0
    %4091 = vmatprep.subr.bf16.mxu0 0
    %4092 = vmatpush1.bf16.msra.mxu0 0
    %4093 = vmatprep.subr.bf16.mxu0 0
    %4094 = vmatpush1.bf16.msra.mxu0 0
    %4095 = vmatprep.subr.bf16.mxu0 0
    %4096 = vmatpush1.bf16.msra.mxu0 0
    %4097 = vmatprep.subr.bf16.mxu0 0
    %4098 = vmatpush1.bf16.msra.mxu0 0
    %4099 = vmatprep.subr.bf16.mxu0 0
    %4100 = vmatpush1.bf16.msra.mxu0 0
    %4101 = vmatprep.subr.bf16.mxu0 0
    %4102 = vmatpush1.bf16.msra.mxu0 0
    %4103 = vmatprep.subr.bf16.mxu0 0
    %4104 = vmatpush1.bf16.msra.mxu0 0
    %4105 = vmatprep.subr.bf16.mxu0 0
    %4106 = vmatpush1.bf16.msra.mxu0 0
    %4107 = vmatprep.subr.bf16.mxu0 0
    %4108 = vmatpush1.bf16.msra.mxu0 0
    %4109 = vmatprep.mubr.bf16.mxu0 0
    %4110 = vmatmul.mubr.bf16.gmra.mrb[0].mxu0 %v4072
    %v4111 = vpop.f32.mrb[0].mxu0
    %v4112 = vadd.f32 0.0, %v4111
    %v4113 = vpop.f32.mrb[0].mxu0
    %v4114 = vpop.f32.mrb[0].mxu0
    %v4115 = vpop.f32.mrb[0].mxu0
    %4116 = vdwg.mxu0
    %v4118 = vsel %vm2075, %v3929, 0
    %v4121 = vsel %vm2175, %v3465, 0
    %4123 = vmatprep.subr.bf16.mxu0 0
    %4124 = vmatpush1.bf16.msra.mxu0 %v4121
    %4125 = vmatprep.subr.bf16.mxu0 0
    %4126 = vmatpush1.bf16.msra.mxu0 0
    %4127 = vmatprep.subr.bf16.mxu0 0
    %4128 = vmatpush1.bf16.msra.mxu0 0
    %4129 = vmatprep.subr.bf16.mxu0 0
    %4130 = vmatpush1.bf16.msra.mxu0 0
    %4131 = vmatprep.subr.bf16.mxu0 0
    %4132 = vmatpush1.bf16.msra.mxu0 0
    %4133 = vmatprep.subr.bf16.mxu0 0
    %4134 = vmatpush1.bf16.msra.mxu0 0
    %4135 = vmatprep.subr.bf16.mxu0 0
    %4136 = vmatpush1.bf16.msra.mxu0 0
    %4137 = vmatprep.subr.bf16.mxu0 0
    %4138 = vmatpush1.bf16.msra.mxu0 0
    %4139 = vmatprep.subr.bf16.mxu0 0
    %4140 = vmatpush1.bf16.msra.mxu0 0
    %4141 = vmatprep.subr.bf16.mxu0 0
    %4142 = vmatpush1.bf16.msra.mxu0 0
    %4143 = vmatprep.subr.bf16.mxu0 0
    %4144 = vmatpush1.bf16.msra.mxu0 0
    %4145 = vmatprep.subr.bf16.mxu0 0
    %4146 = vmatpush1.bf16.msra.mxu0 0
    %4147 = vmatprep.subr.bf16.mxu0 0
    %4148 = vmatpush1.bf16.msra.mxu0 0
    %4149 = vmatprep.subr.bf16.mxu0 0
    %4150 = vmatpush1.bf16.msra.mxu0 0
    %4151 = vmatprep.subr.bf16.mxu0 0
    %4152 = vmatpush1.bf16.msra.mxu0 0
    %4153 = vmatprep.subr.bf16.mxu0 0
    %4154 = vmatpush1.bf16.msra.mxu0 0
    %4155 = vmatprep.mubr.bf16.mxu0 0
    %4156 = vmatmul.mubr.bf16.gmra.mrb[0].mxu0 %v4118
    %v4157 = vpop.f32.mrb[0].mxu0
    %v4158 = vadd.f32 0.0, %v4157
    %v4159 = vpop.f32.mrb[0].mxu0
    %v4160 = vpop.f32.mrb[0].mxu0
    %v4161 = vpop.f32.mrb[0].mxu0
    %4162 = vdwg.mxu0
    %v4164 = vsel %vm2075, %v3930, 0
    %v4167 = vsel %vm2175, %v3466, 0
    %4169 = vmatprep.subr.bf16.mxu0 0
    %4170 = vmatpush1.bf16.msra.mxu0 %v4167
    %4171 = vmatprep.subr.bf16.mxu0 0
    %4172 = vmatpush1.bf16.msra.mxu0 0
    %4173 = vmatprep.subr.bf16.mxu0 0
    %4174 = vmatpush1.bf16.msra.mxu0 0
    %4175 = vmatprep.subr.bf16.mxu0 0
    %4176 = vmatpush1.bf16.msra.mxu0 0
    %4177 = vmatprep.subr.bf16.mxu0 0
    %4178 = vmatpush1.bf16.msra.mxu0 0
    %4179 = vmatprep.subr.bf16.mxu0 0
    %4180 = vmatpush1.bf16.msra.mxu0 0
    %4181 = vmatprep.subr.bf16.mxu0 0
    %4182 = vmatpush1.bf16.msra.mxu0 0
    %4183 = vmatprep.subr.bf16.mxu0 0
    %4184 = vmatpush1.bf16.msra.mxu0 0
    %4185 = vmatprep.subr.bf16.mxu0 0
    %4186 = vmatpush1.bf16.msra.mxu0 0
    %4187 = vmatprep.subr.bf16.mxu0 0
    %4188 = vmatpush1.bf16.msra.mxu0 0
    %4189 = vmatprep.subr.bf16.mxu0 0
    %4190 = vmatpush1.bf16.msra.mxu0 0
    %4191 = vmatprep.subr.bf16.mxu0 0
    %4192 = vmatpush1.bf16.msra.mxu0 0
    %4193 = vmatprep.subr.bf16.mxu0 0
    %4194 = vmatpush1.bf16.msra.mxu0 0
    %4195 = vmatprep.subr.bf16.mxu0 0
    %4196 = vmatpush1.bf16.msra.mxu0 0
    %4197 = vmatprep.subr.bf16.mxu0 0
    %4198 = vmatpush1.bf16.msra.mxu0 0
    %4199 = vmatprep.subr.bf16.mxu0 0
    %4200 = vmatpush1.bf16.msra.mxu0 0
    %4201 = vmatprep.mubr.bf16.mxu0 0
    %4202 = vmatmul.mubr.bf16.gmra.mrb[0].mxu0 %v4164
    %v4203 = vpop.f32.mrb[0].mxu0
    %v4204 = vadd.f32 0.0, %v4203
    %v4205 = vpop.f32.mrb[0].mxu0
    %v4206 = vpop.f32.mrb[0].mxu0
    %v4207 = vpop.f32.mrb[0].mxu0
    %4208 = vdwg.mxu0
    %v4210 = vsel %vm2075, %v3931, 0
    %v4213 = vsel %vm2175, %v3467, 0
    %4215 = vmatprep.subr.bf16.mxu0 0
    %4216 = vmatpush1.bf16.msra.mxu0 %v4213
    %4217 = vmatprep.subr.bf16.mxu0 0
    %4218 = vmatpush1.bf16.msra.mxu0 0
    %4219 = vmatprep.subr.bf16.mxu0 0
    %4220 = vmatpush1.bf16.msra.mxu0 0
    %4221 = vmatprep.subr.bf16.mxu0 0
    %4222 = vmatpush1.bf16.msra.mxu0 0
    %4223 = vmatprep.subr.bf16.mxu0 0
    %4224 = vmatpush1.bf16.msra.mxu0 0
    %4225 = vmatprep.subr.bf16.mxu0 0
    %4226 = vmatpush1.bf16.msra.mxu0 0
    %4227 = vmatprep.subr.bf16.mxu0 0
    %4228 = vmatpush1.bf16.msra.mxu0 0
    %4229 = vmatprep.subr.bf16.mxu0 0
    %4230 = vmatpush1.bf16.msra.mxu0 0
    %4231 = vmatprep.subr.bf16.mxu0 0
    %4232 = vmatpush1.bf16.msra.mxu0 0
    %4233 = vmatprep.subr.bf16.mxu0 0
    %4234 = vmatpush1.bf16.msra.mxu0 0
    %4235 = vmatprep.subr.bf16.mxu0 0
    %4236 = vmatpush1.bf16.msra.mxu0 0
    %4237 = vmatprep.subr.bf16.mxu0 0
    %4238 = vmatpush1.bf16.msra.mxu0 0
    %4239 = vmatprep.subr.bf16.mxu0 0
    %4240 = vmatpush1.bf16.msra.mxu0 0
    %4241 = vmatprep.subr.bf16.mxu0 0
    %4242 = vmatpush1.bf16.msra.mxu0 0
    %4243 = vmatprep.subr.bf16.mxu0 0
    %4244 = vmatpush1.bf16.msra.mxu0 0
    %4245 = vmatprep.subr.bf16.mxu0 0
    %4246 = vmatpush1.bf16.msra.mxu0 0
    %4247 = vmatprep.mubr.bf16.mxu0 0
    %4248 = vmatmul.mubr.bf16.gmra.mrb[0].mxu0 %v4210
    %v4249 = vpop.f32.mrb[0].mxu0
    %v4250 = vadd.f32 0.0, %v4249
    %v4251 = vpop.f32.mrb[0].mxu0
    %v4252 = vpop.f32.mrb[0].mxu0
    %v4253 = vpop.f32.mrb[0].mxu0
    %4254 = vdwg.mxu0
    %v4256 = vsel %vm2075, %v3932, 0
    %v4259 = vsel %vm2175, %v3468, 0
    %4261 = vmatprep.subr.bf16.mxu0 0
    %4262 = vmatpush1.bf16.msra.mxu0 %v4259
    %4263 = vmatprep.subr.bf16.mxu0 0
    %4264 = vmatpush1.bf16.msra.mxu0 0
    %4265 = vmatprep.subr.bf16.mxu0 0
    %4266 = vmatpush1.bf16.msra.mxu0 0
    %4267 = vmatprep.subr.bf16.mxu0 0
    %4268 = vmatpush1.bf16.msra.mxu0 0
    %4269 = vmatprep.subr.bf16.mxu0 0
    %4270 = vmatpush1.bf16.msra.mxu0 0
    %4271 = vmatprep.subr.bf16.mxu0 0
    %4272 = vmatpush1.bf16.msra.mxu0 0
    %4273 = vmatprep.subr.bf16.mxu0 0
    %4274 = vmatpush1.bf16.msra.mxu0 0
    %4275 = vmatprep.subr.bf16.mxu0 0
    %4276 = vmatpush1.bf16.msra.mxu0 0
    %4277 = vmatprep.subr.bf16.mxu0 0
    %4278 = vmatpush1.bf16.msra.mxu0 0
    %4279 = vmatprep.subr.bf16.mxu0 0
    %4280 = vmatpush1.bf16.msra.mxu0 0
    %4281 = vmatprep.subr.bf16.mxu0 0
    %4282 = vmatpush1.bf16.msra.mxu0 0
    %4283 = vmatprep.subr.bf16.mxu0 0
    %4284 = vmatpush1.bf16.msra.mxu0 0
    %4285 = vmatprep.subr.bf16.mxu0 0
    %4286 = vmatpush1.bf16.msra.mxu0 0
    %4287 = vmatprep.subr.bf16.mxu0 0
    %4288 = vmatpush1.bf16.msra.mxu0 0
    %4289 = vmatprep.subr.bf16.mxu0 0
    %4290 = vmatpush1.bf16.msra.mxu0 0
    %4291 = vmatprep.subr.bf16.mxu0 0
    %4292 = vmatpush1.bf16.msra.mxu0 0
    %4293 = vmatprep.mubr.bf16.mxu0 0
    %4294 = vmatmul.mubr.bf16.gmra.mrb[0].mxu0 %v4256
    %v4295 = vpop.f32.mrb[0].mxu0
    %v4296 = vadd.f32 0.0, %v4295
    %v4297 = vpop.f32.mrb[0].mxu0
    %v4298 = vpop.f32.mrb[0].mxu0
    %v4299 = vpop.f32.mrb[0].mxu0
    %4300 = vdwg.mxu0
    %4302 = vrot.lane.b32.xlu0 %v3445, 64
    %v4303 = vpop.permute.xlu0 %4302
    %4305 = vrot.lane.b32.xlu0 %v3453, 64
    %v4306 = vpop.permute.xlu0 %4305
    %v4308 = vsel %vm1706, %v4303, 0
    %v4311 = vsel %vm1706, %v4306, 0
    %4313 = vmatprep.subr.bf16.mxu0 0
    %4314 = vmatpush1.bf16.xpose.msra.mxu0 %v4311
    %4315 = vmatprep.subr.bf16.mxu0 0
    %4316 = vmatpush1.bf16.xpose.msra.mxu0 0
    %4317 = vmatprep.subr.bf16.mxu0 0
    %4318 = vmatpush1.bf16.xpose.msra.mxu0 0
    %4319 = vmatprep.subr.bf16.mxu0 0
    %4320 = vmatpush1.bf16.xpose.msra.mxu0 0
    %4321 = vmatprep.subr.bf16.mxu0 0
    %4322 = vmatpush1.bf16.xpose.msra.mxu0 0
    %4323 = vmatprep.subr.bf16.mxu0 0
    %4324 = vmatpush1.bf16.xpose.msra.mxu0 0
    %4325 = vmatprep.subr.bf16.mxu0 0
    %4326 = vmatpush1.bf16.xpose.msra.mxu0 0
    %4327 = vmatprep.subr.bf16.mxu0 0
    %4328 = vmatpush1.bf16.xpose.msra.mxu0 0
    %4329 = vmatprep.subr.bf16.mxu0 0
    %4330 = vmatpush1.bf16.xpose.msra.mxu0 0
    %4331 = vmatprep.subr.bf16.mxu0 0
    %4332 = vmatpush1.bf16.xpose.msra.mxu0 0
    %4333 = vmatprep.subr.bf16.mxu0 0
    %4334 = vmatpush1.bf16.xpose.msra.mxu0 0
    %4335 = vmatprep.subr.bf16.mxu0 0
    %4336 = vmatpush1.bf16.xpose.msra.mxu0 0
    %4337 = vmatprep.subr.bf16.mxu0 0
    %4338 = vmatpush1.bf16.xpose.msra.mxu0 0
    %4339 = vmatprep.subr.bf16.mxu0 0
    %4340 = vmatpush1.bf16.xpose.msra.mxu0 0
    %4341 = vmatprep.subr.bf16.mxu0 0
    %4342 = vmatpush1.bf16.xpose.msra.mxu0 0
    %4343 = vmatprep.subr.bf16.mxu0 0
    %4344 = vmatpush1.bf16.xpose.msra.mxu0 0
    %4345 = vmatprep.mubr.bf16.mxu0 0
    %4346 = vmatmul.mubr.bf16.gmra.mrb[0].mxu0 %v4308
    %v4347 = vpop.f32.mrb[0].mxu0
    %v4348 = vadd.f32 0.0, %v4347
    %v4349 = vpop.f32.mrb[0].mxu0
    %v4350 = vpop.f32.mrb[0].mxu0
    %v4351 = vpop.f32.mrb[0].mxu0
    %4352 = vdwg.mxu0
    %4354 = vrot.lane.b32.xlu0 %v3446, 64
    %v4355 = vpop.permute.xlu0 %4354
    %4357 = vrot.lane.b32.xlu0 %v3454, 64
    %v4358 = vpop.permute.xlu0 %4357
    %v4360 = vsel %vm1706, %v4355, 0
    %v4363 = vsel %vm1706, %v4358, 0
    %4365 = vmatprep.subr.bf16.mxu0 0
    %4366 = vmatpush1.bf16.xpose.msra.mxu0 %v4363
    %4367 = vmatprep.subr.bf16.mxu0 0
    %4368 = vmatpush1.bf16.xpose.msra.mxu0 0
    %4369 = vmatprep.subr.bf16.mxu0 0
    %4370 = vmatpush1.bf16.xpose.msra.mxu0 0
    %4371 = vmatprep.subr.bf16.mxu0 0
    %4372 = vmatpush1.bf16.xpose.msra.mxu0 0
    %4373 = vmatprep.subr.bf16.mxu0 0
    %4374 = vmatpush1.bf16.xpose.msra.mxu0 0
    %4375 = vmatprep.subr.bf16.mxu0 0
    %4376 = vmatpush1.bf16.xpose.msra.mxu0 0
    %4377 = vmatprep.subr.bf16.mxu0 0
    %4378 = vmatpush1.bf16.xpose.msra.mxu0 0
    %4379 = vmatprep.subr.bf16.mxu0 0
    %4380 = vmatpush1.bf16.xpose.msra.mxu0 0
    %4381 = vmatprep.subr.bf16.mxu0 0
    %4382 = vmatpush1.bf16.xpose.msra.mxu0 0
    %4383 = vmatprep.subr.bf16.mxu0 0
    %4384 = vmatpush1.bf16.xpose.msra.mxu0 0
    %4385 = vmatprep.subr.bf16.mxu0 0
    %4386 = vmatpush1.bf16.xpose.msra.mxu0 0
    %4387 = vmatprep.subr.bf16.mxu0 0
    %4388 = vmatpush1.bf16.xpose.msra.mxu0 0
    %4389 = vmatprep.subr.bf16.mxu0 0
    %4390 = vmatpush1.bf16.xpose.msra.mxu0 0
    %4391 = vmatprep.subr.bf16.mxu0 0
    %4392 = vmatpush1.bf16.xpose.msra.mxu0 0
    %4393 = vmatprep.subr.bf16.mxu0 0
    %4394 = vmatpush1.bf16.xpose.msra.mxu0 0
    %4395 = vmatprep.subr.bf16.mxu0 0
    %4396 = vmatpush1.bf16.xpose.msra.mxu0 0
    %4397 = vmatprep.mubr.bf16.mxu0 0
    %4398 = vmatmul.mubr.bf16.gmra.mrb[0].mxu0 %v4360
    %v4399 = vpop.f32.mrb[0].mxu0
    %v4400 = vadd.f32 0.0, %v4399
    %v4401 = vpop.f32.mrb[0].mxu0
    %v4402 = vpop.f32.mrb[0].mxu0
    %v4403 = vpop.f32.mrb[0].mxu0
    %4404 = vdwg.mxu0
    %4406 = vrot.lane.b32.xlu0 %v3447, 64
    %v4407 = vpop.permute.xlu0 %4406
    %4409 = vrot.lane.b32.xlu0 %v3455, 64
    %v4410 = vpop.permute.xlu0 %4409
    %v4412 = vsel %vm1706, %v4407, 0
    %v4415 = vsel %vm1706, %v4410, 0
    %4417 = vmatprep.subr.bf16.mxu0 0
    %4418 = vmatpush1.bf16.xpose.msra.mxu0 %v4415
    %4419 = vmatprep.subr.bf16.mxu0 0
    %4420 = vmatpush1.bf16.xpose.msra.mxu0 0
    %4421 = vmatprep.subr.bf16.mxu0 0
    %4422 = vmatpush1.bf16.xpose.msra.mxu0 0
    %4423 = vmatprep.subr.bf16.mxu0 0
    %4424 = vmatpush1.bf16.xpose.msra.mxu0 0
    %4425 = vmatprep.subr.bf16.mxu0 0
    %4426 = vmatpush1.bf16.xpose.msra.mxu0 0
    %4427 = vmatprep.subr.bf16.mxu0 0
    %4428 = vmatpush1.bf16.xpose.msra.mxu0 0
    %4429 = vmatprep.subr.bf16.mxu0 0
    %4430 = vmatpush1.bf16.xpose.msra.mxu0 0
    %4431 = vmatprep.subr.bf16.mxu0 0
    %4432 = vmatpush1.bf16.xpose.msra.mxu0 0
    %4433 = vmatprep.subr.bf16.mxu0 0
    %4434 = vmatpush1.bf16.xpose.msra.mxu0 0
    %4435 = vmatprep.subr.bf16.mxu0 0
    %4436 = vmatpush1.bf16.xpose.msra.mxu0 0
    %4437 = vmatprep.subr.bf16.mxu0 0
    %4438 = vmatpush1.bf16.xpose.msra.mxu0 0
    %4439 = vmatprep.subr.bf16.mxu0 0
    %4440 = vmatpush1.bf16.xpose.msra.mxu0 0
    %4441 = vmatprep.subr.bf16.mxu0 0
    %4442 = vmatpush1.bf16.xpose.msra.mxu0 0
    %4443 = vmatprep.subr.bf16.mxu0 0
    %4444 = vmatpush1.bf16.xpose.msra.mxu0 0
    %4445 = vmatprep.subr.bf16.mxu0 0
    %4446 = vmatpush1.bf16.xpose.msra.mxu0 0
    %4447 = vmatprep.subr.bf16.mxu0 0
    %4448 = vmatpush1.bf16.xpose.msra.mxu0 0
    %4449 = vmatprep.mubr.bf16.mxu0 0
    %4450 = vmatmul.mubr.bf16.gmra.mrb[0].mxu0 %v4412
    %v4451 = vpop.f32.mrb[0].mxu0
    %v4452 = vadd.f32 0.0, %v4451
    %v4453 = vpop.f32.mrb[0].mxu0
    %v4454 = vpop.f32.mrb[0].mxu0
    %v4455 = vpop.f32.mrb[0].mxu0
    %4456 = vdwg.mxu0
    %4458 = vrot.lane.b32.xlu0 %v3448, 64
    %v4459 = vpop.permute.xlu0 %4458
    %4461 = vrot.lane.b32.xlu0 %v3456, 64
    %v4462 = vpop.permute.xlu0 %4461
    %v4464 = vsel %vm1706, %v4459, 0
    %v4467 = vsel %vm1706, %v4462, 0
    %4469 = vmatprep.subr.bf16.mxu0 0
    %4470 = vmatpush1.bf16.xpose.msra.mxu0 %v4467
    %4471 = vmatprep.subr.bf16.mxu0 0
    %4472 = vmatpush1.bf16.xpose.msra.mxu0 0
    %4473 = vmatprep.subr.bf16.mxu0 0
    %4474 = vmatpush1.bf16.xpose.msra.mxu0 0
    %4475 = vmatprep.subr.bf16.mxu0 0
    %4476 = vmatpush1.bf16.xpose.msra.mxu0 0
    %4477 = vmatprep.subr.bf16.mxu0 0
    %4478 = vmatpush1.bf16.xpose.msra.mxu0 0
    %4479 = vmatprep.subr.bf16.mxu0 0
    %4480 = vmatpush1.bf16.xpose.msra.mxu0 0
    %4481 = vmatprep.subr.bf16.mxu0 0
    %4482 = vmatpush1.bf16.xpose.msra.mxu0 0
    %4483 = vmatprep.subr.bf16.mxu0 0
    %4484 = vmatpush1.bf16.xpose.msra.mxu0 0
    %4485 = vmatprep.subr.bf16.mxu0 0
    %4486 = vmatpush1.bf16.xpose.msra.mxu0 0
    %4487 = vmatprep.subr.bf16.mxu0 0
    %4488 = vmatpush1.bf16.xpose.msra.mxu0 0
    %4489 = vmatprep.subr.bf16.mxu0 0
    %4490 = vmatpush1.bf16.xpose.msra.mxu0 0
    %4491 = vmatprep.subr.bf16.mxu0 0
    %4492 = vmatpush1.bf16.xpose.msra.mxu0 0
    %4493 = vmatprep.subr.bf16.mxu0 0
    %4494 = vmatpush1.bf16.xpose.msra.mxu0 0
    %4495 = vmatprep.subr.bf16.mxu0 0
    %4496 = vmatpush1.bf16.xpose.msra.mxu0 0
    %4497 = vmatprep.subr.bf16.mxu0 0
    %4498 = vmatpush1.bf16.xpose.msra.mxu0 0
    %4499 = vmatprep.subr.bf16.mxu0 0
    %4500 = vmatpush1.bf16.xpose.msra.mxu0 0
    %4501 = vmatprep.mubr.bf16.mxu0 0
    %4502 = vmatmul.mubr.bf16.gmra.mrb[0].mxu0 %v4464
    %v4503 = vpop.f32.mrb[0].mxu0
    %v4504 = vadd.f32 0.0, %v4503
    %v4505 = vpop.f32.mrb[0].mxu0
    %v4506 = vpop.f32.mrb[0].mxu0
    %v4507 = vpop.f32.mrb[0].mxu0
    %4508 = vdwg.mxu0
    %4510 = vrot.lane.b32.xlu0 %v3449, 64
    %v4511 = vpop.permute.xlu0 %4510
    %4513 = vrot.lane.b32.xlu0 %v3457, 64
    %v4514 = vpop.permute.xlu0 %4513
    %v4516 = vsel %vm1706, %v4511, 0
    %v4519 = vsel %vm1706, %v4514, 0
    %4521 = vmatprep.subr.bf16.mxu0 0
    %4522 = vmatpush1.bf16.xpose.msra.mxu0 %v4519
    %4523 = vmatprep.subr.bf16.mxu0 0
    %4524 = vmatpush1.bf16.xpose.msra.mxu0 0
    %4525 = vmatprep.subr.bf16.mxu0 0
    %4526 = vmatpush1.bf16.xpose.msra.mxu0 0
    %4527 = vmatprep.subr.bf16.mxu0 0
    %4528 = vmatpush1.bf16.xpose.msra.mxu0 0
    %4529 = vmatprep.subr.bf16.mxu0 0
    %4530 = vmatpush1.bf16.xpose.msra.mxu0 0
    %4531 = vmatprep.subr.bf16.mxu0 0
    %4532 = vmatpush1.bf16.xpose.msra.mxu0 0
    %4533 = vmatprep.subr.bf16.mxu0 0
    %4534 = vmatpush1.bf16.xpose.msra.mxu0 0
    %4535 = vmatprep.subr.bf16.mxu0 0
    %4536 = vmatpush1.bf16.xpose.msra.mxu0 0
    %4537 = vmatprep.subr.bf16.mxu0 0
    %4538 = vmatpush1.bf16.xpose.msra.mxu0 0
    %4539 = vmatprep.subr.bf16.mxu0 0
    %4540 = vmatpush1.bf16.xpose.msra.mxu0 0
    %4541 = vmatprep.subr.bf16.mxu0 0
    %4542 = vmatpush1.bf16.xpose.msra.mxu0 0
    %4543 = vmatprep.subr.bf16.mxu0 0
    %4544 = vmatpush1.bf16.xpose.msra.mxu0 0
    %4545 = vmatprep.subr.bf16.mxu0 0
    %4546 = vmatpush1.bf16.xpose.msra.mxu0 0
    %4547 = vmatprep.subr.bf16.mxu0 0
    %4548 = vmatpush1.bf16.xpose.msra.mxu0 0
    %4549 = vmatprep.subr.bf16.mxu0 0
    %4550 = vmatpush1.bf16.xpose.msra.mxu0 0
    %4551 = vmatprep.subr.bf16.mxu0 0
    %4552 = vmatpush1.bf16.xpose.msra.mxu0 0
    %4553 = vmatprep.mubr.bf16.mxu0 0
    %4554 = vmatmul.mubr.bf16.gmra.mrb[0].mxu0 %v4516
    %v4555 = vpop.f32.mrb[0].mxu0
    %v4556 = vadd.f32 0.0, %v4555
    %v4557 = vpop.f32.mrb[0].mxu0
    %v4558 = vpop.f32.mrb[0].mxu0
    %v4559 = vpop.f32.mrb[0].mxu0
    %4560 = vdwg.mxu0
    %4562 = vrot.lane.b32.xlu0 %v3450, 64
    %v4563 = vpop.permute.xlu0 %4562
    %4565 = vrot.lane.b32.xlu0 %v3458, 64
    %v4566 = vpop.permute.xlu0 %4565
    %v4568 = vsel %vm1706, %v4563, 0
    %v4571 = vsel %vm1706, %v4566, 0
    %4573 = vmatprep.subr.bf16.mxu0 0
    %4574 = vmatpush1.bf16.xpose.msra.mxu0 %v4571
    %4575 = vmatprep.subr.bf16.mxu0 0
    %4576 = vmatpush1.bf16.xpose.msra.mxu0 0
    %4577 = vmatprep.subr.bf16.mxu0 0
    %4578 = vmatpush1.bf16.xpose.msra.mxu0 0
    %4579 = vmatprep.subr.bf16.mxu0 0
    %4580 = vmatpush1.bf16.xpose.msra.mxu0 0
    %4581 = vmatprep.subr.bf16.mxu0 0
    %4582 = vmatpush1.bf16.xpose.msra.mxu0 0
    %4583 = vmatprep.subr.bf16.mxu0 0
    %4584 = vmatpush1.bf16.xpose.msra.mxu0 0
    %4585 = vmatprep.subr.bf16.mxu0 0
    %4586 = vmatpush1.bf16.xpose.msra.mxu0 0
    %4587 = vmatprep.subr.bf16.mxu0 0
    %4588 = vmatpush1.bf16.xpose.msra.mxu0 0
    %4589 = vmatprep.subr.bf16.mxu0 0
    %4590 = vmatpush1.bf16.xpose.msra.mxu0 0
    %4591 = vmatprep.subr.bf16.mxu0 0
    %4592 = vmatpush1.bf16.xpose.msra.mxu0 0
    %4593 = vmatprep.subr.bf16.mxu0 0
    %4594 = vmatpush1.bf16.xpose.msra.mxu0 0
    %4595 = vmatprep.subr.bf16.mxu0 0
    %4596 = vmatpush1.bf16.xpose.msra.mxu0 0
    %4597 = vmatprep.subr.bf16.mxu0 0
    %4598 = vmatpush1.bf16.xpose.msra.mxu0 0
    %4599 = vmatprep.subr.bf16.mxu0 0
    %4600 = vmatpush1.bf16.xpose.msra.mxu0 0
    %4601 = vmatprep.subr.bf16.mxu0 0
    %4602 = vmatpush1.bf16.xpose.msra.mxu0 0
    %4603 = vmatprep.subr.bf16.mxu0 0
    %4604 = vmatpush1.bf16.xpose.msra.mxu0 0
    %4605 = vmatprep.mubr.bf16.mxu0 0
    %4606 = vmatmul.mubr.bf16.gmra.mrb[0].mxu0 %v4568
    %v4607 = vpop.f32.mrb[0].mxu0
    %v4608 = vadd.f32 0.0, %v4607
    %v4609 = vpop.f32.mrb[0].mxu0
    %v4610 = vpop.f32.mrb[0].mxu0
    %v4611 = vpop.f32.mrb[0].mxu0
    %4612 = vdwg.mxu0
    %4614 = vrot.lane.b32.xlu0 %v3451, 64
    %v4615 = vpop.permute.xlu0 %4614
    %4617 = vrot.lane.b32.xlu0 %v3459, 64
    %v4618 = vpop.permute.xlu0 %4617
    %v4620 = vsel %vm1706, %v4615, 0
    %v4623 = vsel %vm1706, %v4618, 0
    %4625 = vmatprep.subr.bf16.mxu0 0
    %4626 = vmatpush1.bf16.xpose.msra.mxu0 %v4623
    %4627 = vmatprep.subr.bf16.mxu0 0
    %4628 = vmatpush1.bf16.xpose.msra.mxu0 0
    %4629 = vmatprep.subr.bf16.mxu0 0
    %4630 = vmatpush1.bf16.xpose.msra.mxu0 0
    %4631 = vmatprep.subr.bf16.mxu0 0
    %4632 = vmatpush1.bf16.xpose.msra.mxu0 0
    %4633 = vmatprep.subr.bf16.mxu0 0
    %4634 = vmatpush1.bf16.xpose.msra.mxu0 0
    %4635 = vmatprep.subr.bf16.mxu0 0
    %4636 = vmatpush1.bf16.xpose.msra.mxu0 0
    %4637 = vmatprep.subr.bf16.mxu0 0
    %4638 = vmatpush1.bf16.xpose.msra.mxu0 0
    %4639 = vmatprep.subr.bf16.mxu0 0
    %4640 = vmatpush1.bf16.xpose.msra.mxu0 0
    %4641 = vmatprep.subr.bf16.mxu0 0
    %4642 = vmatpush1.bf16.xpose.msra.mxu0 0
    %4643 = vmatprep.subr.bf16.mxu0 0
    %4644 = vmatpush1.bf16.xpose.msra.mxu0 0
    %4645 = vmatprep.subr.bf16.mxu0 0
    %4646 = vmatpush1.bf16.xpose.msra.mxu0 0
    %4647 = vmatprep.subr.bf16.mxu0 0
    %4648 = vmatpush1.bf16.xpose.msra.mxu0 0
    %4649 = vmatprep.subr.bf16.mxu0 0
    %4650 = vmatpush1.bf16.xpose.msra.mxu0 0
    %4651 = vmatprep.subr.bf16.mxu0 0
    %4652 = vmatpush1.bf16.xpose.msra.mxu0 0
    %4653 = vmatprep.subr.bf16.mxu0 0
    %4654 = vmatpush1.bf16.xpose.msra.mxu0 0
    %4655 = vmatprep.subr.bf16.mxu0 0
    %4656 = vmatpush1.bf16.xpose.msra.mxu0 0
    %4657 = vmatprep.mubr.bf16.mxu0 0
    %4658 = vmatmul.mubr.bf16.gmra.mrb[0].mxu0 %v4620
    %v4659 = vpop.f32.mrb[0].mxu0
    %v4660 = vadd.f32 0.0, %v4659
    %v4661 = vpop.f32.mrb[0].mxu0
    %v4662 = vpop.f32.mrb[0].mxu0
    %v4663 = vpop.f32.mrb[0].mxu0
    %4664 = vdwg.mxu0
    %4666 = vrot.lane.b32.xlu0 %v3452, 64
    %v4667 = vpop.permute.xlu0 %4666
    %4669 = vrot.lane.b32.xlu0 %v3460, 64
    %v4670 = vpop.permute.xlu0 %4669
    %v4672 = vsel %vm1706, %v4667, 0
    %v4675 = vsel %vm1706, %v4670, 0
    %4677 = vmatprep.subr.bf16.mxu0 0
    %4678 = vmatpush1.bf16.xpose.msra.mxu0 %v4675
    %4679 = vmatprep.subr.bf16.mxu0 0
    %4680 = vmatpush1.bf16.xpose.msra.mxu0 0
    %4681 = vmatprep.subr.bf16.mxu0 0
    %4682 = vmatpush1.bf16.xpose.msra.mxu0 0
    %4683 = vmatprep.subr.bf16.mxu0 0
    %4684 = vmatpush1.bf16.xpose.msra.mxu0 0
    %4685 = vmatprep.subr.bf16.mxu0 0
    %4686 = vmatpush1.bf16.xpose.msra.mxu0 0
    %4687 = vmatprep.subr.bf16.mxu0 0
    %4688 = vmatpush1.bf16.xpose.msra.mxu0 0
    %4689 = vmatprep.subr.bf16.mxu0 0
    %4690 = vmatpush1.bf16.xpose.msra.mxu0 0
    %4691 = vmatprep.subr.bf16.mxu0 0
    %4692 = vmatpush1.bf16.xpose.msra.mxu0 0
    %4693 = vmatprep.subr.bf16.mxu0 0
    %4694 = vmatpush1.bf16.xpose.msra.mxu0 0
    %4695 = vmatprep.subr.bf16.mxu0 0
    %4696 = vmatpush1.bf16.xpose.msra.mxu0 0
    %4697 = vmatprep.subr.bf16.mxu0 0
    %4698 = vmatpush1.bf16.xpose.msra.mxu0 0
    %4699 = vmatprep.subr.bf16.mxu0 0
    %4700 = vmatpush1.bf16.xpose.msra.mxu0 0
    %4701 = vmatprep.subr.bf16.mxu0 0
    %4702 = vmatpush1.bf16.xpose.msra.mxu0 0
    %4703 = vmatprep.subr.bf16.mxu0 0
    %4704 = vmatpush1.bf16.xpose.msra.mxu0 0
    %4705 = vmatprep.subr.bf16.mxu0 0
    %4706 = vmatpush1.bf16.xpose.msra.mxu0 0
    %4707 = vmatprep.subr.bf16.mxu0 0
    %4708 = vmatpush1.bf16.xpose.msra.mxu0 0
    %4709 = vmatprep.mubr.bf16.mxu0 0
    %4710 = vmatmul.mubr.bf16.gmra.mrb[0].mxu0 %v4672
    %v4711 = vpop.f32.mrb[0].mxu0
    %v4712 = vadd.f32 0.0, %v4711
    %v4713 = vpop.f32.mrb[0].mxu0
    %v4714 = vpop.f32.mrb[0].mxu0
    %v4715 = vpop.f32.mrb[0].mxu0
    %4716 = vdwg.mxu0
    %v4717 = vsel %vm2075, %v4348, -inf
    %4718 = vmax.xlane.f32.xlu0 %v4717
    %v4719 = vpop.xlane.xlu0 %4718
    %v4720 = vsel %vm2075, %v4400, -inf
    %4721 = vmax.xlane.f32.xlu0 %v4720
    %v4722 = vpop.xlane.xlu0 %4721
    %v4723 = vsel %vm2075, %v4452, -inf
    %4724 = vmax.xlane.f32.xlu0 %v4723
    %v4725 = vpop.xlane.xlu0 %4724
    %v4726 = vsel %vm2075, %v4504, -inf
    %4727 = vmax.xlane.f32.xlu0 %v4726
    %v4728 = vpop.xlane.xlu0 %4727
    %v4729 = vsel %vm2075, %v4556, -inf
    %4730 = vmax.xlane.f32.xlu0 %v4729
    %v4731 = vpop.xlane.xlu0 %4730
    %v4732 = vsel %vm2075, %v4608, -inf
    %4733 = vmax.xlane.f32.xlu0 %v4732
    %v4734 = vpop.xlane.xlu0 %4733
    %v4735 = vsel %vm2075, %v4660, -inf
    %4736 = vmax.xlane.f32.xlu0 %v4735
    %v4737 = vpop.xlane.xlu0 %4736
    %v4738 = vsel %vm2075, %v4712, -inf
    %4739 = vmax.xlane.f32.xlu0 %v4738
    %v4740 = vpop.xlane.xlu0 %4739
    %v4741 = vsub.f32 %v4348, %v4719
    %v4742 = vsub.f32 %v4400, %v4722
    %v4743 = vsub.f32 %v4452, %v4725
    %v4744 = vsub.f32 %v4504, %v4728
    %v4745 = vsub.f32 %v4556, %v4731
    %v4746 = vsub.f32 %v4608, %v4734
    %v4747 = vsub.f32 %v4660, %v4737
    %v4748 = vsub.f32 %v4712, %v4740
    %v4749 = vmul.f32 %v4741, 1.442695
    %v4750 = vpow.pop %v4749
    %v4751 = vmul.f32 %v4742, 1.442695
    %v4752 = vpow.pop %v4751
    %v4753 = vmul.f32 %v4743, 1.442695
    %v4754 = vpow.pop %v4753
    %v4755 = vmul.f32 %v4744, 1.442695
    %v4756 = vpow.pop %v4755
    %v4757 = vmul.f32 %v4745, 1.442695
    %v4758 = vpow.pop %v4757
    %v4759 = vmul.f32 %v4746, 1.442695
    %v4760 = vpow.pop %v4759
    %v4761 = vmul.f32 %v4747, 1.442695
    %v4762 = vpow.pop %v4761
    %v4763 = vmul.f32 %v4748, 1.442695
    %v4764 = vpow.pop %v4763
    %v4765 = vsel %vm2075, %v4750, 0.0
    %4766 = vadd.xlane.f32.xlu0 %v4765
    %v4767 = vpop.xlane.xlu0 %4766
    %v4768 = vsel %vm2075, %v4752, 0.0
    %4769 = vadd.xlane.f32.xlu0 %v4768
    %v4770 = vpop.xlane.xlu0 %4769
    %v4771 = vsel %vm2075, %v4754, 0.0
    %4772 = vadd.xlane.f32.xlu0 %v4771
    %v4773 = vpop.xlane.xlu0 %4772
    %v4774 = vsel %vm2075, %v4756, 0.0
    %4775 = vadd.xlane.f32.xlu0 %v4774
    %v4776 = vpop.xlane.xlu0 %4775
    %v4777 = vsel %vm2075, %v4758, 0.0
    %4778 = vadd.xlane.f32.xlu0 %v4777
    %v4779 = vpop.xlane.xlu0 %4778
    %v4780 = vsel %vm2075, %v4760, 0.0
    %4781 = vadd.xlane.f32.xlu0 %v4780
    %v4782 = vpop.xlane.xlu0 %4781
    %v4783 = vsel %vm2075, %v4762, 0.0
    %4784 = vadd.xlane.f32.xlu0 %v4783
    %v4785 = vpop.xlane.xlu0 %4784
    %v4786 = vsel %vm2075, %v4764, 0.0
    %4787 = vadd.xlane.f32.xlu0 %v4786
    %v4788 = vpop.xlane.xlu0 %4787
    %v4789 = vrcp.pop %v4767
    %v4790 = vrcp.pop %v4770
    %v4791 = vrcp.pop %v4773
    %v4792 = vrcp.pop %v4776
    %v4793 = vrcp.pop %v4779
    %v4794 = vrcp.pop %v4782
    %v4795 = vrcp.pop %v4785
    %v4796 = vrcp.pop %v4788
    %v4797 = vmul.f32 %v4750, %v4789
    %v4798 = vmul.f32 %v4752, %v4790
    %v4799 = vmul.f32 %v4754, %v4791
    %v4800 = vmul.f32 %v4756, %v4792
    %v4801 = vmul.f32 %v4758, %v4793
    %v4802 = vmul.f32 %v4760, %v4794
    %v4803 = vmul.f32 %v4762, %v4795
    %v4804 = vmul.f32 %v4764, %v4796
    %v4805 = vpack.c.bf16 %v4797, %v4797
    %v4806 = vpack.c.bf16 %v4798, %v4798
    %v4807 = vpack.c.bf16 %v4799, %v4799
    %v4808 = vpack.c.bf16 %v4800, %v4800
    %v4809 = vpack.c.bf16 %v4801, %v4801
    %v4810 = vpack.c.bf16 %v4802, %v4802
    %v4811 = vpack.c.bf16 %v4803, %v4803
    %v4812 = vpack.c.bf16 %v4804, %v4804
    %4814 = vrot.lane.b32.xlu0 %v3461, 64
    %v4815 = vpop.permute.xlu0 %4814
    %v4817 = vsel %vm2075, %v4805, 0
    %v4820 = vsel %vm2175, %v4815, 0
    %4822 = vmatprep.subr.bf16.mxu0 0
    %4823 = vmatpush1.bf16.msra.mxu0 %v4820
    %4824 = vmatprep.subr.bf16.mxu0 0
    %4825 = vmatpush1.bf16.msra.mxu0 0
    %4826 = vmatprep.subr.bf16.mxu0 0
    %4827 = vmatpush1.bf16.msra.mxu0 0
    %4828 = vmatprep.subr.bf16.mxu0 0
    %4829 = vmatpush1.bf16.msra.mxu0 0
    %4830 = vmatprep.subr.bf16.mxu0 0
    %4831 = vmatpush1.bf16.msra.mxu0 0
    %4832 = vmatprep.subr.bf16.mxu0 0
    %4833 = vmatpush1.bf16.msra.mxu0 0
    %4834 = vmatprep.subr.bf16.mxu0 0
    %4835 = vmatpush1.bf16.msra.mxu0 0
    %4836 = vmatprep.subr.bf16.mxu0 0
    %4837 = vmatpush1.bf16.msra.mxu0 0
    %4838 = vmatprep.subr.bf16.mxu0 0
    %4839 = vmatpush1.bf16.msra.mxu0 0
    %4840 = vmatprep.subr.bf16.mxu0 0
    %4841 = vmatpush1.bf16.msra.mxu0 0
    %4842 = vmatprep.subr.bf16.mxu0 0
    %4843 = vmatpush1.bf16.msra.mxu0 0
    %4844 = vmatprep.subr.bf16.mxu0 0
    %4845 = vmatpush1.bf16.msra.mxu0 0
    %4846 = vmatprep.subr.bf16.mxu0 0
    %4847 = vmatpush1.bf16.msra.mxu0 0
    %4848 = vmatprep.subr.bf16.mxu0 0
    %4849 = vmatpush1.bf16.msra.mxu0 0
    %4850 = vmatprep.subr.bf16.mxu0 0
    %4851 = vmatpush1.bf16.msra.mxu0 0
    %4852 = vmatprep.subr.bf16.mxu0 0
    %4853 = vmatpush1.bf16.msra.mxu0 0
    %4854 = vmatprep.mubr.bf16.mxu0 0
    %4855 = vmatmul.mubr.bf16.gmra.mrb[0].mxu0 %v4817
    %v4856 = vpop.f32.mrb[0].mxu0
    %v4857 = vadd.f32 0.0, %v4856
    %v4858 = vpop.f32.mrb[0].mxu0
    %v4859 = vpop.f32.mrb[0].mxu0
    %v4860 = vpop.f32.mrb[0].mxu0
    %4861 = vdwg.mxu0
    %4863 = vrot.lane.b32.xlu0 %v3462, 64
    %v4864 = vpop.permute.xlu0 %4863
    %v4866 = vsel %vm2075, %v4806, 0
    %v4869 = vsel %vm2175, %v4864, 0
    %4871 = vmatprep.subr.bf16.mxu0 0
    %4872 = vmatpush1.bf16.msra.mxu0 %v4869
    %4873 = vmatprep.subr.bf16.mxu0 0
    %4874 = vmatpush1.bf16.msra.mxu0 0
    %4875 = vmatprep.subr.bf16.mxu0 0
    %4876 = vmatpush1.bf16.msra.mxu0 0
    %4877 = vmatprep.subr.bf16.mxu0 0
    %4878 = vmatpush1.bf16.msra.mxu0 0
    %4879 = vmatprep.subr.bf16.mxu0 0
    %4880 = vmatpush1.bf16.msra.mxu0 0
    %4881 = vmatprep.subr.bf16.mxu0 0
    %4882 = vmatpush1.bf16.msra.mxu0 0
    %4883 = vmatprep.subr.bf16.mxu0 0
    %4884 = vmatpush1.bf16.msra.mxu0 0
    %4885 = vmatprep.subr.bf16.mxu0 0
    %4886 = vmatpush1.bf16.msra.mxu0 0
    %4887 = vmatprep.subr.bf16.mxu0 0
    %4888 = vmatpush1.bf16.msra.mxu0 0
    %4889 = vmatprep.subr.bf16.mxu0 0
    %4890 = vmatpush1.bf16.msra.mxu0 0
    %4891 = vmatprep.subr.bf16.mxu0 0
    %4892 = vmatpush1.bf16.msra.mxu0 0
    %4893 = vmatprep.subr.bf16.mxu0 0
    %4894 = vmatpush1.bf16.msra.mxu0 0
    %4895 = vmatprep.subr.bf16.mxu0 0
    %4896 = vmatpush1.bf16.msra.mxu0 0
    %4897 = vmatprep.subr.bf16.mxu0 0
    %4898 = vmatpush1.bf16.msra.mxu0 0
    %4899 = vmatprep.subr.bf16.mxu0 0
    %4900 = vmatpush1.bf16.msra.mxu0 0
    %4901 = vmatprep.subr.bf16.mxu0 0
    %4902 = vmatpush1.bf16.msra.mxu0 0
    %4903 = vmatprep.mubr.bf16.mxu0 0
    %4904 = vmatmul.mubr.bf16.gmra.mrb[0].mxu0 %v4866
    %v4905 = vpop.f32.mrb[0].mxu0
    %v4906 = vadd.f32 0.0, %v4905
    %v4907 = vpop.f32.mrb[0].mxu0
    %v4908 = vpop.f32.mrb[0].mxu0
    %v4909 = vpop.f32.mrb[0].mxu0
    %4910 = vdwg.mxu0
    %4912 = vrot.lane.b32.xlu0 %v3463, 64
    %v4913 = vpop.permute.xlu0 %4912
    %v4915 = vsel %vm2075, %v4807, 0
    %v4918 = vsel %vm2175, %v4913, 0
    %4920 = vmatprep.subr.bf16.mxu0 0
    %4921 = vmatpush1.bf16.msra.mxu0 %v4918
    %4922 = vmatprep.subr.bf16.mxu0 0
    %4923 = vmatpush1.bf16.msra.mxu0 0
    %4924 = vmatprep.subr.bf16.mxu0 0
    %4925 = vmatpush1.bf16.msra.mxu0 0
    %4926 = vmatprep.subr.bf16.mxu0 0
    %4927 = vmatpush1.bf16.msra.mxu0 0
    %4928 = vmatprep.subr.bf16.mxu0 0
    %4929 = vmatpush1.bf16.msra.mxu0 0
    %4930 = vmatprep.subr.bf16.mxu0 0
    %4931 = vmatpush1.bf16.msra.mxu0 0
    %4932 = vmatprep.subr.bf16.mxu0 0
    %4933 = vmatpush1.bf16.msra.mxu0 0
    %4934 = vmatprep.subr.bf16.mxu0 0
    %4935 = vmatpush1.bf16.msra.mxu0 0
    %4936 = vmatprep.subr.bf16.mxu0 0
    %4937 = vmatpush1.bf16.msra.mxu0 0
    %4938 = vmatprep.subr.bf16.mxu0 0
    %4939 = vmatpush1.bf16.msra.mxu0 0
    %4940 = vmatprep.subr.bf16.mxu0 0
    %4941 = vmatpush1.bf16.msra.mxu0 0
    %4942 = vmatprep.subr.bf16.mxu0 0
    %4943 = vmatpush1.bf16.msra.mxu0 0
    %4944 = vmatprep.subr.bf16.mxu0 0
    %4945 = vmatpush1.bf16.msra.mxu0 0
    %4946 = vmatprep.subr.bf16.mxu0 0
    %4947 = vmatpush1.bf16.msra.mxu0 0
    %4948 = vmatprep.subr.bf16.mxu0 0
    %4949 = vmatpush1.bf16.msra.mxu0 0
    %4950 = vmatprep.subr.bf16.mxu0 0
    %4951 = vmatpush1.bf16.msra.mxu0 0
    %4952 = vmatprep.mubr.bf16.mxu0 0
    %4953 = vmatmul.mubr.bf16.gmra.mrb[0].mxu0 %v4915
    %v4954 = vpop.f32.mrb[0].mxu0
    %v4955 = vadd.f32 0.0, %v4954
    %v4956 = vpop.f32.mrb[0].mxu0
    %v4957 = vpop.f32.mrb[0].mxu0
    %v4958 = vpop.f32.mrb[0].mxu0
    %4959 = vdwg.mxu0
    %4961 = vrot.lane.b32.xlu0 %v3464, 64
    %v4962 = vpop.permute.xlu0 %4961
    %v4964 = vsel %vm2075, %v4808, 0
    %v4967 = vsel %vm2175, %v4962, 0
    %4969 = vmatprep.subr.bf16.mxu0 0
    %4970 = vmatpush1.bf16.msra.mxu0 %v4967
    %4971 = vmatprep.subr.bf16.mxu0 0
    %4972 = vmatpush1.bf16.msra.mxu0 0
    %4973 = vmatprep.subr.bf16.mxu0 0
    %4974 = vmatpush1.bf16.msra.mxu0 0
    %4975 = vmatprep.subr.bf16.mxu0 0
    %4976 = vmatpush1.bf16.msra.mxu0 0
    %4977 = vmatprep.subr.bf16.mxu0 0
    %4978 = vmatpush1.bf16.msra.mxu0 0
    %4979 = vmatprep.subr.bf16.mxu0 0
    %4980 = vmatpush1.bf16.msra.mxu0 0
    %4981 = vmatprep.subr.bf16.mxu0 0
    %4982 = vmatpush1.bf16.msra.mxu0 0
    %4983 = vmatprep.subr.bf16.mxu0 0
    %4984 = vmatpush1.bf16.msra.mxu0 0
    %4985 = vmatprep.subr.bf16.mxu0 0
    %4986 = vmatpush1.bf16.msra.mxu0 0
    %4987 = vmatprep.subr.bf16.mxu0 0
    %4988 = vmatpush1.bf16.msra.mxu0 0
    %4989 = vmatprep.subr.bf16.mxu0 0
    %4990 = vmatpush1.bf16.msra.mxu0 0
    %4991 = vmatprep.subr.bf16.mxu0 0
    %4992 = vmatpush1.bf16.msra.mxu0 0
    %4993 = vmatprep.subr.bf16.mxu0 0
    %4994 = vmatpush1.bf16.msra.mxu0 0
    %4995 = vmatprep.subr.bf16.mxu0 0
    %4996 = vmatpush1.bf16.msra.mxu0 0
    %4997 = vmatprep.subr.bf16.mxu0 0
    %4998 = vmatpush1.bf16.msra.mxu0 0
    %4999 = vmatprep.subr.bf16.mxu0 0
    %5000 = vmatpush1.bf16.msra.mxu0 0
    %5001 = vmatprep.mubr.bf16.mxu0 0
    %5002 = vmatmul.mubr.bf16.gmra.mrb[0].mxu0 %v4964
    %v5003 = vpop.f32.mrb[0].mxu0
    %v5004 = vadd.f32 0.0, %v5003
    %v5005 = vpop.f32.mrb[0].mxu0
    %v5006 = vpop.f32.mrb[0].mxu0
    %v5007 = vpop.f32.mrb[0].mxu0
    %5008 = vdwg.mxu0
    %5010 = vrot.lane.b32.xlu0 %v3465, 64
    %v5011 = vpop.permute.xlu0 %5010
    %v5013 = vsel %vm2075, %v4809, 0
    %v5016 = vsel %vm2175, %v5011, 0
    %5018 = vmatprep.subr.bf16.mxu0 0
    %5019 = vmatpush1.bf16.msra.mxu0 %v5016
    %5020 = vmatprep.subr.bf16.mxu0 0
    %5021 = vmatpush1.bf16.msra.mxu0 0
    %5022 = vmatprep.subr.bf16.mxu0 0
    %5023 = vmatpush1.bf16.msra.mxu0 0
    %5024 = vmatprep.subr.bf16.mxu0 0
    %5025 = vmatpush1.bf16.msra.mxu0 0
    %5026 = vmatprep.subr.bf16.mxu0 0
    %5027 = vmatpush1.bf16.msra.mxu0 0
    %5028 = vmatprep.subr.bf16.mxu0 0
    %5029 = vmatpush1.bf16.msra.mxu0 0
    %5030 = vmatprep.subr.bf16.mxu0 0
    %5031 = vmatpush1.bf16.msra.mxu0 0
    %5032 = vmatprep.subr.bf16.mxu0 0
    %5033 = vmatpush1.bf16.msra.mxu0 0
    %5034 = vmatprep.subr.bf16.mxu0 0
    %5035 = vmatpush1.bf16.msra.mxu0 0
    %5036 = vmatprep.subr.bf16.mxu0 0
    %5037 = vmatpush1.bf16.msra.mxu0 0
    %5038 = vmatprep.subr.bf16.mxu0 0
    %5039 = vmatpush1.bf16.msra.mxu0 0
    %5040 = vmatprep.subr.bf16.mxu0 0
    %5041 = vmatpush1.bf16.msra.mxu0 0
    %5042 = vmatprep.subr.bf16.mxu0 0
    %5043 = vmatpush1.bf16.msra.mxu0 0
    %5044 = vmatprep.subr.bf16.mxu0 0
    %5045 = vmatpush1.bf16.msra.mxu0 0
    %5046 = vmatprep.subr.bf16.mxu0 0
    %5047 = vmatpush1.bf16.msra.mxu0 0
    %5048 = vmatprep.subr.bf16.mxu0 0
    %5049 = vmatpush1.bf16.msra.mxu0 0
    %5050 = vmatprep.mubr.bf16.mxu0 0
    %5051 = vmatmul.mubr.bf16.gmra.mrb[0].mxu0 %v5013
    %v5052 = vpop.f32.mrb[0].mxu0
    %v5053 = vadd.f32 0.0, %v5052
    %v5054 = vpop.f32.mrb[0].mxu0
    %v5055 = vpop.f32.mrb[0].mxu0
    %v5056 = vpop.f32.mrb[0].mxu0
    %5057 = vdwg.mxu0
    %5059 = vrot.lane.b32.xlu0 %v3466, 64
    %v5060 = vpop.permute.xlu0 %5059
    %v5062 = vsel %vm2075, %v4810, 0
    %v5065 = vsel %vm2175, %v5060, 0
    %5067 = vmatprep.subr.bf16.mxu0 0
    %5068 = vmatpush1.bf16.msra.mxu0 %v5065
    %5069 = vmatprep.subr.bf16.mxu0 0
    %5070 = vmatpush1.bf16.msra.mxu0 0
    %5071 = vmatprep.subr.bf16.mxu0 0
    %5072 = vmatpush1.bf16.msra.mxu0 0
    %5073 = vmatprep.subr.bf16.mxu0 0
    %5074 = vmatpush1.bf16.msra.mxu0 0
    %5075 = vmatprep.subr.bf16.mxu0 0
    %5076 = vmatpush1.bf16.msra.mxu0 0
    %5077 = vmatprep.subr.bf16.mxu0 0
    %5078 = vmatpush1.bf16.msra.mxu0 0
    %5079 = vmatprep.subr.bf16.mxu0 0
    %5080 = vmatpush1.bf16.msra.mxu0 0
    %5081 = vmatprep.subr.bf16.mxu0 0
    %5082 = vmatpush1.bf16.msra.mxu0 0
    %5083 = vmatprep.subr.bf16.mxu0 0
    %5084 = vmatpush1.bf16.msra.mxu0 0
    %5085 = vmatprep.subr.bf16.mxu0 0
    %5086 = vmatpush1.bf16.msra.mxu0 0
    %5087 = vmatprep.subr.bf16.mxu0 0
    %5088 = vmatpush1.bf16.msra.mxu0 0
    %5089 = vmatprep.subr.bf16.mxu0 0
    %5090 = vmatpush1.bf16.msra.mxu0 0
    %5091 = vmatprep.subr.bf16.mxu0 0
    %5092 = vmatpush1.bf16.msra.mxu0 0
    %5093 = vmatprep.subr.bf16.mxu0 0
    %5094 = vmatpush1.bf16.msra.mxu0 0
    %5095 = vmatprep.subr.bf16.mxu0 0
    %5096 = vmatpush1.bf16.msra.mxu0 0
    %5097 = vmatprep.subr.bf16.mxu0 0
    %5098 = vmatpush1.bf16.msra.mxu0 0
    %5099 = vmatprep.mubr.bf16.mxu0 0
    %5100 = vmatmul.mubr.bf16.gmra.mrb[0].mxu0 %v5062
    %v5101 = vpop.f32.mrb[0].mxu0
    %v5102 = vadd.f32 0.0, %v5101
    %v5103 = vpop.f32.mrb[0].mxu0
    %v5104 = vpop.f32.mrb[0].mxu0
    %v5105 = vpop.f32.mrb[0].mxu0
    %5106 = vdwg.mxu0
    %5108 = vrot.lane.b32.xlu0 %v3467, 64
    %v5109 = vpop.permute.xlu0 %5108
    %v5111 = vsel %vm2075, %v4811, 0
    %v5114 = vsel %vm2175, %v5109, 0
    %5116 = vmatprep.subr.bf16.mxu0 0
    %5117 = vmatpush1.bf16.msra.mxu0 %v5114
    %5118 = vmatprep.subr.bf16.mxu0 0
    %5119 = vmatpush1.bf16.msra.mxu0 0
    %5120 = vmatprep.subr.bf16.mxu0 0
    %5121 = vmatpush1.bf16.msra.mxu0 0
    %5122 = vmatprep.subr.bf16.mxu0 0
    %5123 = vmatpush1.bf16.msra.mxu0 0
    %5124 = vmatprep.subr.bf16.mxu0 0
    %5125 = vmatpush1.bf16.msra.mxu0 0
    %5126 = vmatprep.subr.bf16.mxu0 0
    %5127 = vmatpush1.bf16.msra.mxu0 0
    %5128 = vmatprep.subr.bf16.mxu0 0
    %5129 = vmatpush1.bf16.msra.mxu0 0
    %5130 = vmatprep.subr.bf16.mxu0 0
    %5131 = vmatpush1.bf16.msra.mxu0 0
    %5132 = vmatprep.subr.bf16.mxu0 0
    %5133 = vmatpush1.bf16.msra.mxu0 0
    %5134 = vmatprep.subr.bf16.mxu0 0
    %5135 = vmatpush1.bf16.msra.mxu0 0
    %5136 = vmatprep.subr.bf16.mxu0 0
    %5137 = vmatpush1.bf16.msra.mxu0 0
    %5138 = vmatprep.subr.bf16.mxu0 0
    %5139 = vmatpush1.bf16.msra.mxu0 0
    %5140 = vmatprep.subr.bf16.mxu0 0
    %5141 = vmatpush1.bf16.msra.mxu0 0
    %5142 = vmatprep.subr.bf16.mxu0 0
    %5143 = vmatpush1.bf16.msra.mxu0 0
    %5144 = vmatprep.subr.bf16.mxu0 0
    %5145 = vmatpush1.bf16.msra.mxu0 0
    %5146 = vmatprep.subr.bf16.mxu0 0
    %5147 = vmatpush1.bf16.msra.mxu0 0
    %5148 = vmatprep.mubr.bf16.mxu0 0
    %5149 = vmatmul.mubr.bf16.gmra.mrb[0].mxu0 %v5111
    %v5150 = vpop.f32.mrb[0].mxu0
    %v5151 = vadd.f32 0.0, %v5150
    %v5152 = vpop.f32.mrb[0].mxu0
    %v5153 = vpop.f32.mrb[0].mxu0
    %v5154 = vpop.f32.mrb[0].mxu0
    %5155 = vdwg.mxu0
    %5157 = vrot.lane.b32.xlu0 %v3468, 64
    %v5158 = vpop.permute.xlu0 %5157
    %v5160 = vsel %vm2075, %v4812, 0
    %v5163 = vsel %vm2175, %v5158, 0
    %5165 = vmatprep.subr.bf16.mxu0 0
    %5166 = vmatpush1.bf16.msra.mxu0 %v5163
    %5167 = vmatprep.subr.bf16.mxu0 0
    %5168 = vmatpush1.bf16.msra.mxu0 0
    %5169 = vmatprep.subr.bf16.mxu0 0
    %5170 = vmatpush1.bf16.msra.mxu0 0
    %5171 = vmatprep.subr.bf16.mxu0 0
    %5172 = vmatpush1.bf16.msra.mxu0 0
    %5173 = vmatprep.subr.bf16.mxu0 0
    %5174 = vmatpush1.bf16.msra.mxu0 0
    %5175 = vmatprep.subr.bf16.mxu0 0
    %5176 = vmatpush1.bf16.msra.mxu0 0
    %5177 = vmatprep.subr.bf16.mxu0 0
    %5178 = vmatpush1.bf16.msra.mxu0 0
    %5179 = vmatprep.subr.bf16.mxu0 0
    %5180 = vmatpush1.bf16.msra.mxu0 0
    %5181 = vmatprep.subr.bf16.mxu0 0
    %5182 = vmatpush1.bf16.msra.mxu0 0
    %5183 = vmatprep.subr.bf16.mxu0 0
    %5184 = vmatpush1.bf16.msra.mxu0 0
    %5185 = vmatprep.subr.bf16.mxu0 0
    %5186 = vmatpush1.bf16.msra.mxu0 0
    %5187 = vmatprep.subr.bf16.mxu0 0
    %5188 = vmatpush1.bf16.msra.mxu0 0
    %5189 = vmatprep.subr.bf16.mxu0 0
    %5190 = vmatpush1.bf16.msra.mxu0 0
    %5191 = vmatprep.subr.bf16.mxu0 0
    %5192 = vmatpush1.bf16.msra.mxu0 0
    %5193 = vmatprep.subr.bf16.mxu0 0
    %5194 = vmatpush1.bf16.msra.mxu0 0
    %5195 = vmatprep.subr.bf16.mxu0 0
    %5196 = vmatpush1.bf16.msra.mxu0 0
    %5197 = vmatprep.mubr.bf16.mxu0 0
    %5198 = vmatmul.mubr.bf16.gmra.mrb[0].mxu0 %v5160
    %v5199 = vpop.f32.mrb[0].mxu0
    %v5200 = vadd.f32 0.0, %v5199
    %v5201 = vpop.f32.mrb[0].mxu0
    %v5202 = vpop.f32.mrb[0].mxu0
    %v5203 = vpop.f32.mrb[0].mxu0
    %5204 = vdwg.mxu0
    %5213 = vrot.lane.b32.xlu0 %v3097, 64
    %v5214 = vpop.permute.xlu0 %5213
    %5215 = vrot.lane.b32.xlu0 %v3146, 64
    %v5216 = vpop.permute.xlu0 %5215
    %5217 = vrot.lane.b32.xlu0 %v3195, 64
    %v5218 = vpop.permute.xlu0 %5217
    %5219 = vrot.lane.b32.xlu0 %v3244, 64
    %v5220 = vpop.permute.xlu0 %5219
    %5221 = vrot.lane.b32.xlu0 %v3293, 64
    %v5222 = vpop.permute.xlu0 %5221
    %5223 = vrot.lane.b32.xlu0 %v3342, 64
    %v5224 = vpop.permute.xlu0 %5223
    %5225 = vrot.lane.b32.xlu0 %v3391, 64
    %v5226 = vpop.permute.xlu0 %5225
    %5227 = vrot.lane.b32.xlu0 %v3440, 64
    %v5228 = vpop.permute.xlu0 %5227
    %5245 = vrot.lane.b32.xlu0 %v4857, 64
    %v5246 = vpop.permute.xlu0 %5245
    %5247 = vrot.lane.b32.xlu0 %v4906, 64
    %v5248 = vpop.permute.xlu0 %5247
    %5249 = vrot.lane.b32.xlu0 %v4955, 64
    %v5250 = vpop.permute.xlu0 %5249
    %5251 = vrot.lane.b32.xlu0 %v5004, 64
    %v5252 = vpop.permute.xlu0 %5251
    %5253 = vrot.lane.b32.xlu0 %v5053, 64
    %v5254 = vpop.permute.xlu0 %5253
    %5255 = vrot.lane.b32.xlu0 %v5102, 64
    %v5256 = vpop.permute.xlu0 %5255
    %5257 = vrot.lane.b32.xlu0 %v5151, 64
    %v5258 = vpop.permute.xlu0 %5257
    %5259 = vrot.lane.b32.xlu0 %v5200, 64
    %v5260 = vpop.permute.xlu0 %5259
    %v5269 = vsel %vm1706, %v2214, %v5214
    %v5270 = vsel %vm1706, %v2260, %v5216
    %v5271 = vsel %vm1706, %v2306, %v5218
    %v5272 = vsel %vm1706, %v2352, %v5220
    %v5273 = vsel %vm1706, %v2398, %v5222
    %v5274 = vsel %vm1706, %v2444, %v5224
    %v5275 = vsel %vm1706, %v2490, %v5226
    %v5276 = vsel %vm1706, %v2536, %v5228
    %v5277 = vsel %vm1706, %v3974, %v5246
    %v5278 = vsel %vm1706, %v4020, %v5248
    %v5279 = vsel %vm1706, %v4066, %v5250
    %v5280 = vsel %vm1706, %v4112, %v5252
    %v5281 = vsel %vm1706, %v4158, %v5254
    %v5282 = vsel %vm1706, %v4204, %v5256
    %v5283 = vsel %vm1706, %v4250, %v5258
    %v5284 = vsel %vm1706, %v4296, %v5260
    %v5285 = vpack.c.bf16 %v5270, %v5269
    %v5286 = vpack.c.bf16 %v5278, %v5277
    %v5287 = vpack.c.bf16 %v5272, %v5271
    %v5288 = vpack.c.bf16 %v5280, %v5279
    %v5289 = vpack.c.bf16 %v5274, %v5273
    %v5290 = vpack.c.bf16 %v5282, %v5281
    %v5291 = vpack.c.bf16 %v5276, %v5275
    %v5292 = vpack.c.bf16 %v5284, %v5283
    %v5293 = vld [vmem:[#allocation11] sm:$0xff]
    %v5294 = vld [vmem:[#allocation11 + $0x8] sm:$0xff]
    %v5295 = vld [vmem:[#allocation11 + $0x10] sm:$0xff]
    %v5296 = vld [vmem:[#allocation11 + $0x18] sm:$0xff]
    %v5297 = vld [vmem:[#allocation11 + $0x20] sm:$0xff]
    %v5298 = vld [vmem:[#allocation11 + $0x28] sm:$0xff]
    %v5299 = vld [vmem:[#allocation11 + $0x30] sm:$0xff]
    %v5300 = vld [vmem:[#allocation11 + $0x38] sm:$0xff]
    %v5301 = vld [vmem:[#allocation11 + $0x40] sm:$0xff]
    %v5302 = vld [vmem:[#allocation11 + $0x48] sm:$0xff]
    %v5303 = vld [vmem:[#allocation11 + $0x50] sm:$0xff]
    %v5304 = vld [vmem:[#allocation11 + $0x58] sm:$0xff]
    %v5305 = vld [vmem:[#allocation11 + $0x60] sm:$0xff]
    %v5306 = vld [vmem:[#allocation11 + $0x68] sm:$0xff]
    %v5307 = vld [vmem:[#allocation11 + $0x70] sm:$0xff]
    %v5308 = vld [vmem:[#allocation11 + $0x78] sm:$0xff]
    %v5309 = vld [vmem:[#allocation11 + $0x80] sm:$0xff]
    %v5310 = vld [vmem:[#allocation11 + $0x88] sm:$0xff]
    %v5311 = vld [vmem:[#allocation11 + $0x90] sm:$0xff]
    %v5312 = vld [vmem:[#allocation11 + $0x98] sm:$0xff]
    %v5313 = vld [vmem:[#allocation11 + $0xa0] sm:$0xff]
    %v5314 = vld [vmem:[#allocation11 + $0xa8] sm:$0xff]
    %v5315 = vld [vmem:[#allocation11 + $0xb0] sm:$0xff]
    %v5316 = vld [vmem:[#allocation11 + $0xb8] sm:$0xff]
    %v5317 = vld [vmem:[#allocation11 + $0xc0] sm:$0xff]
    %v5318 = vld [vmem:[#allocation11 + $0xc8] sm:$0xff]
    %v5319 = vld [vmem:[#allocation11 + $0xd0] sm:$0xff]
    %v5320 = vld [vmem:[#allocation11 + $0xd8] sm:$0xff]
    %v5321 = vld [vmem:[#allocation11 + $0xe0] sm:$0xff]
    %v5322 = vld [vmem:[#allocation11 + $0xe8] sm:$0xff]
    %v5323 = vld [vmem:[#allocation11 + $0xf0] sm:$0xff]
    %v5324 = vld [vmem:[#allocation11 + $0xf8] sm:$0xff]
    %v5325 = vlaneseq
    %v5326 = vshrl.u32 %v5325, 7
    %v5327 = vsub.s32 3, %v5326
    %v5328 = vrot.slane %v217, %v5327
    %v5329 = vlaneseq
    %v5330 = vshrl.u32 %v5329, 7
    %v5331 = vsub.s32 3, %v5330
    %v5332 = vrot.slane %v218, %v5331
    %v5365 = vunpack.c.l.b16 %v5293
    %v5366 = vunpack.c.h.b16 %v5293
    %v5367 = vunpack.c.l.b16 %v5294
    %v5368 = vunpack.c.h.b16 %v5294
    %v5369 = vunpack.c.l.b16 %v5295
    %v5370 = vunpack.c.h.b16 %v5295
    %v5371 = vunpack.c.l.b16 %v5296
    %v5372 = vunpack.c.h.b16 %v5296
    %v5373 = vunpack.c.l.b16 %v5297
    %v5374 = vunpack.c.h.b16 %v5297
    %v5375 = vunpack.c.l.b16 %v5298
    %v5376 = vunpack.c.h.b16 %v5298
    %v5377 = vunpack.c.l.b16 %v5299
    %v5378 = vunpack.c.h.b16 %v5299
    %v5379 = vunpack.c.l.b16 %v5300
    %v5380 = vunpack.c.h.b16 %v5300
    %v5381 = vunpack.c.l.b16 %v5301
    %v5382 = vunpack.c.h.b16 %v5301
    %v5383 = vunpack.c.l.b16 %v5302
    %v5384 = vunpack.c.h.b16 %v5302
    %v5385 = vunpack.c.l.b16 %v5303
    %v5386 = vunpack.c.h.b16 %v5303
    %v5387 = vunpack.c.l.b16 %v5304
    %v5388 = vunpack.c.h.b16 %v5304
    %v5389 = vunpack.c.l.b16 %v5305
    %v5390 = vunpack.c.h.b16 %v5305
    %v5391 = vunpack.c.l.b16 %v5306
    %v5392 = vunpack.c.h.b16 %v5306
    %v5393 = vunpack.c.l.b16 %v5307
    %v5394 = vunpack.c.h.b16 %v5307
    %v5395 = vunpack.c.l.b16 %v5308
    %v5396 = vunpack.c.h.b16 %v5308
    %v5397 = vunpack.c.l.b16 %v5309
    %v5398 = vunpack.c.h.b16 %v5309
    %v5399 = vunpack.c.l.b16 %v5310
    %v5400 = vunpack.c.h.b16 %v5310
    %v5401 = vunpack.c.l.b16 %v5311
    %v5402 = vunpack.c.h.b16 %v5311
    %v5403 = vunpack.c.l.b16 %v5312
    %v5404 = vunpack.c.h.b16 %v5312
    %v5405 = vunpack.c.l.b16 %v5313
    %v5406 = vunpack.c.h.b16 %v5313
    %v5407 = vunpack.c.l.b16 %v5314
    %v5408 = vunpack.c.h.b16 %v5314
    %v5409 = vunpack.c.l.b16 %v5315
    %v5410 = vunpack.c.h.b16 %v5315
    %v5411 = vunpack.c.l.b16 %v5316
    %v5412 = vunpack.c.h.b16 %v5316
    %v5413 = vunpack.c.l.b16 %v5317
    %v5414 = vunpack.c.h.b16 %v5317
    %v5415 = vunpack.c.l.b16 %v5318
    %v5416 = vunpack.c.h.b16 %v5318
    %v5417 = vunpack.c.l.b16 %v5319
    %v5418 = vunpack.c.h.b16 %v5319
    %v5419 = vunpack.c.l.b16 %v5320
    %v5420 = vunpack.c.h.b16 %v5320
    %v5421 = vunpack.c.l.b16 %v5321
    %v5422 = vunpack.c.h.b16 %v5321
    %v5423 = vunpack.c.l.b16 %v5322
    %v5424 = vunpack.c.h.b16 %v5322
    %v5425 = vunpack.c.l.b16 %v5323
    %v5426 = vunpack.c.h.b16 %v5323
    %v5427 = vunpack.c.l.b16 %v5324
    %v5428 = vunpack.c.h.b16 %v5324
    %v5429 = vpack.c.b16 %v5367, %v5365
    %v5430 = vpack.c.b16 %v5368, %v5366
    %v5431 = vpack.c.b16 %v5371, %v5369
    %v5432 = vpack.c.b16 %v5372, %v5370
    %v5433 = vpack.c.b16 %v5375, %v5373
    %v5434 = vpack.c.b16 %v5376, %v5374
    %v5435 = vpack.c.b16 %v5379, %v5377
    %v5436 = vpack.c.b16 %v5380, %v5378
    %v5437 = vpack.c.b16 %v5383, %v5381
    %v5438 = vpack.c.b16 %v5384, %v5382
    %v5439 = vpack.c.b16 %v5387, %v5385
    %v5440 = vpack.c.b16 %v5388, %v5386
    %v5441 = vpack.c.b16 %v5391, %v5389
    %v5442 = vpack.c.b16 %v5392, %v5390
    %v5443 = vpack.c.b16 %v5395, %v5393
    %v5444 = vpack.c.b16 %v5396, %v5394
    %v5445 = vpack.c.b16 %v5399, %v5397
    %v5446 = vpack.c.b16 %v5400, %v5398
    %v5447 = vpack.c.b16 %v5403, %v5401
    %v5448 = vpack.c.b16 %v5404, %v5402
    %v5449 = vpack.c.b16 %v5407, %v5405
    %v5450 = vpack.c.b16 %v5408, %v5406
    %v5451 = vpack.c.b16 %v5411, %v5409
    %v5452 = vpack.c.b16 %v5412, %v5410
    %v5453 = vpack.c.b16 %v5415, %v5413
    %v5454 = vpack.c.b16 %v5416, %v5414
    %v5455 = vpack.c.b16 %v5419, %v5417
    %v5456 = vpack.c.b16 %v5420, %v5418
    %v5457 = vpack.c.b16 %v5423, %v5421
    %v5458 = vpack.c.b16 %v5424, %v5422
    %v5459 = vpack.c.b16 %v5427, %v5425
    %v5460 = vpack.c.b16 %v5428, %v5426
    %5493 = vmatprep.subr.bf16.mxu0 %v5430
    %5494 = vmatpush1.bf16.msra.mxu0 %v5429
    %5495 = vmatprep.subr.bf16.mxu0 %v5432
    %5496 = vmatpush1.bf16.msra.mxu0 %v5431
    %5497 = vmatprep.subr.bf16.mxu0 %v5434
    %5498 = vmatpush1.bf16.msra.mxu0 %v5433
    %5499 = vmatprep.subr.bf16.mxu0 %v5436
    %5500 = vmatpush1.bf16.msra.mxu0 %v5435
    %5501 = vmatprep.subr.bf16.mxu0 %v5438
    %5502 = vmatpush1.bf16.msra.mxu0 %v5437
    %5503 = vmatprep.subr.bf16.mxu0 %v5440
    %5504 = vmatpush1.bf16.msra.mxu0 %v5439
    %5505 = vmatprep.subr.bf16.mxu0 %v5442
    %5506 = vmatpush1.bf16.msra.mxu0 %v5441
    %5507 = vmatprep.subr.bf16.mxu0 %v5444
    %5508 = vmatpush1.bf16.msra.mxu0 %v5443
    %5509 = vmatprep.subr.bf16.mxu0 %v5446
    %5510 = vmatpush1.bf16.msra.mxu0 %v5445
    %5511 = vmatprep.subr.bf16.mxu0 %v5448
    %5512 = vmatpush1.bf16.msra.mxu0 %v5447
    %5513 = vmatprep.subr.bf16.mxu0 %v5450
    %5514 = vmatpush1.bf16.msra.mxu0 %v5449
    %5515 = vmatprep.subr.bf16.mxu0 %v5452
    %5516 = vmatpush1.bf16.msra.mxu0 %v5451
    %5517 = vmatprep.subr.bf16.mxu0 %v5454
    %5518 = vmatpush1.bf16.msra.mxu0 %v5453
    %5519 = vmatprep.subr.bf16.mxu0 %v5456
    %5520 = vmatpush1.bf16.msra.mxu0 %v5455
    %5521 = vmatprep.subr.bf16.mxu0 %v5458
    %5522 = vmatpush1.bf16.msra.mxu0 %v5457
    %5523 = vmatprep.subr.bf16.mxu0 %v5460
    %5524 = vmatpush1.bf16.msra.mxu0 %v5459
    %5525 = vmatprep.mubr.bf16.mxu0 %v5286
    %5526 = vmatmul.mubr.bf16.gmra.mrb[0].mxu0 %v5285
    %v5527 = vpop.f32.mrb[0].mxu0
    %v5528 = vadd.f32 %v5328, %v5527
    %v5529 = vpop.f32.mrb[0].mxu0
    %v5530 = vadd.f32 %v5332, %v5529
    %v5531 = vpop.f32.mrb[0].mxu0
    %v5532 = vadd.f32 %v5328, %v5531
    %v5533 = vpop.f32.mrb[0].mxu0
    %v5534 = vadd.f32 %v5332, %v5533
    %5535 = vmatprep.mubr.bf16.mxu0 %v5288
    %5536 = vmatmul.mubr.bf16.gmra.mrb[0].mxu0 %v5287
    %v5537 = vpop.f32.mrb[0].mxu0
    %v5538 = vadd.f32 %v5328, %v5537
    %v5539 = vpop.f32.mrb[0].mxu0
    %v5540 = vadd.f32 %v5332, %v5539
    %v5541 = vpop.f32.mrb[0].mxu0
    %v5542 = vadd.f32 %v5328, %v5541
    %v5543 = vpop.f32.mrb[0].mxu0
    %v5544 = vadd.f32 %v5332, %v5543
    %5545 = vmatprep.mubr.bf16.mxu0 %v5290
    %5546 = vmatmul.mubr.bf16.gmra.mrb[0].mxu0 %v5289
    %v5547 = vpop.f32.mrb[0].mxu0
    %v5548 = vadd.f32 %v5328, %v5547
    %v5549 = vpop.f32.mrb[0].mxu0
    %v5550 = vadd.f32 %v5332, %v5549
    %v5551 = vpop.f32.mrb[0].mxu0
    %v5552 = vadd.f32 %v5328, %v5551
    %v5553 = vpop.f32.mrb[0].mxu0
    %v5554 = vadd.f32 %v5332, %v5553
    %5555 = vmatprep.mubr.bf16.mxu0 %v5292
    %5556 = vmatmul.mubr.bf16.gmra.mrb[0].mxu0 %v5291
    %v5557 = vpop.f32.mrb[0].mxu0
    %v5558 = vadd.f32 %v5328, %v5557
    %v5559 = vpop.f32.mrb[0].mxu0
    %v5560 = vadd.f32 %v5332, %v5559
    %v5561 = vpop.f32.mrb[0].mxu0
    %v5562 = vadd.f32 %v5328, %v5561
    %v5563 = vpop.f32.mrb[0].mxu0
    %v5564 = vadd.f32 %v5332, %v5563
    %5565 = vdwg.mxu0
    %v5566 = vadd.f32 %v405, %v5528
    %v5567 = vadd.f32 %v406, %v5530
    %v5568 = vadd.f32 %v407, %v5532
    %v5569 = vadd.f32 %v408, %v5534
    %v5570 = vadd.f32 %v409, %v5538
    %v5571 = vadd.f32 %v410, %v5540
    %v5572 = vadd.f32 %v411, %v5542
    %v5573 = vadd.f32 %v412, %v5544
    %v5574 = vadd.f32 %v413, %v5548
    %v5575 = vadd.f32 %v414, %v5550
    %v5576 = vadd.f32 %v415, %v5552
    %v5577 = vadd.f32 %v416, %v5554
    %v5578 = vadd.f32 %v417, %v5558
    %v5579 = vadd.f32 %v418, %v5560
    %v5580 = vadd.f32 %v419, %v5562
    %v5581 = vadd.f32 %v420, %v5564
    %v5582 = vadd.f32 %v5566, %v5567
    %5583 = vadd.xlane.f32.xlu0 %v5582
    %v5584 = vpop.xlane.xlu0 %5583
    %v5585 = vadd.f32 %v5568, %v5569
    %5586 = vadd.xlane.f32.xlu0 %v5585
    %v5587 = vpop.xlane.xlu0 %5586
    %v5588 = vadd.f32 %v5570, %v5571
    %5589 = vadd.xlane.f32.xlu0 %v5588
    %v5590 = vpop.xlane.xlu0 %5589
    %v5591 = vadd.f32 %v5572, %v5573
    %5592 = vadd.xlane.f32.xlu0 %v5591
    %v5593 = vpop.xlane.xlu0 %5592
    %v5594 = vadd.f32 %v5574, %v5575
    %5595 = vadd.xlane.f32.xlu0 %v5594
    %v5596 = vpop.xlane.xlu0 %5595
    %v5597 = vadd.f32 %v5576, %v5577
    %5598 = vadd.xlane.f32.xlu0 %v5597
    %v5599 = vpop.xlane.xlu0 %5598
    %v5600 = vadd.f32 %v5578, %v5579
    %5601 = vadd.xlane.f32.xlu0 %v5600
    %v5602 = vpop.xlane.xlu0 %5601
    %v5603 = vadd.f32 %v5580, %v5581
    %5604 = vadd.xlane.f32.xlu0 %v5603
    %v5605 = vpop.xlane.xlu0 %5604
    %v5606 = vmul.f32 %v5584, %v244
    %v5607 = vmul.f32 %v5587, %v244
    %v5608 = vmul.f32 %v5590, %v244
    %v5609 = vmul.f32 %v5593, %v244
    %v5610 = vmul.f32 %v5596, %v244
    %v5611 = vmul.f32 %v5599, %v244
    %v5612 = vmul.f32 %v5602, %v244
    %v5613 = vmul.f32 %v5605, %v244
    %v5614 = vmul.f32 %v5566, %v5566
    %v5615 = vmul.f32 %v5567, %v5567
    %v5616 = vmul.f32 %v5568, %v5568
    %v5617 = vmul.f32 %v5569, %v5569
    %v5618 = vmul.f32 %v5570, %v5570
    %v5619 = vmul.f32 %v5571, %v5571
    %v5620 = vmul.f32 %v5572, %v5572
    %v5621 = vmul.f32 %v5573, %v5573
    %v5622 = vmul.f32 %v5574, %v5574
    %v5623 = vmul.f32 %v5575, %v5575
    %v5624 = vmul.f32 %v5576, %v5576
    %v5625 = vmul.f32 %v5577, %v5577
    %v5626 = vmul.f32 %v5578, %v5578
    %v5627 = vmul.f32 %v5579, %v5579
    %v5628 = vmul.f32 %v5580, %v5580
    %v5629 = vmul.f32 %v5581, %v5581
    %v5630 = vadd.f32 %v5614, %v5615
    %5631 = vadd.xlane.f32.xlu0 %v5630
    %v5632 = vpop.xlane.xlu0 %5631
    %v5633 = vadd.f32 %v5616, %v5617
    %5634 = vadd.xlane.f32.xlu0 %v5633
    %v5635 = vpop.xlane.xlu0 %5634
    %v5636 = vadd.f32 %v5618, %v5619
    %5637 = vadd.xlane.f32.xlu0 %v5636
    %v5638 = vpop.xlane.xlu0 %5637
    %v5639 = vadd.f32 %v5620, %v5621
    %5640 = vadd.xlane.f32.xlu0 %v5639
    %v5641 = vpop.xlane.xlu0 %5640
    %v5642 = vadd.f32 %v5622, %v5623
    %5643 = vadd.xlane.f32.xlu0 %v5642
    %v5644 = vpop.xlane.xlu0 %5643
    %v5645 = vadd.f32 %v5624, %v5625
    %5646 = vadd.xlane.f32.xlu0 %v5645
    %v5647 = vpop.xlane.xlu0 %5646
    %v5648 = vadd.f32 %v5626, %v5627
    %5649 = vadd.xlane.f32.xlu0 %v5648
    %v5650 = vpop.xlane.xlu0 %5649
    %v5651 = vadd.f32 %v5628, %v5629
    %5652 = vadd.xlane.f32.xlu0 %v5651
    %v5653 = vpop.xlane.xlu0 %5652
    %v5654 = vmul.f32 %v5632, %v244
    %v5655 = vmul.f32 %v5635, %v244
    %v5656 = vmul.f32 %v5638, %v244
    %v5657 = vmul.f32 %v5641, %v244
    %v5658 = vmul.f32 %v5644, %v244
    %v5659 = vmul.f32 %v5647, %v244
    %v5660 = vmul.f32 %v5650, %v244
    %v5661 = vmul.f32 %v5653, %v244
    %v5662 = vmul.f32 %v5606, %v5606
    %v5663 = vmul.f32 %v5607, %v5607
    %v5664 = vmul.f32 %v5608, %v5608
    %v5665 = vmul.f32 %v5609, %v5609
    %v5666 = vmul.f32 %v5610, %v5610
    %v5667 = vmul.f32 %v5611, %v5611
    %v5668 = vmul.f32 %v5612, %v5612
    %v5669 = vmul.f32 %v5613, %v5613
    %v5670 = vsub.f32 %v5654, %v5662
    %v5671 = vsub.f32 %v5655, %v5663
    %v5672 = vsub.f32 %v5656, %v5664
    %v5673 = vsub.f32 %v5657, %v5665
    %v5674 = vsub.f32 %v5658, %v5666
    %v5675 = vsub.f32 %v5659, %v5667
    %v5676 = vsub.f32 %v5660, %v5668
    %v5677 = vsub.f32 %v5661, %v5669
    %v5678 = vmax.f32 %v5670, 0.0
    %v5679 = vmax.f32 %v5671, 0.0
    %v5680 = vmax.f32 %v5672, 0.0
    %v5681 = vmax.f32 %v5673, 0.0
    %v5682 = vmax.f32 %v5674, 0.0
    %v5683 = vmax.f32 %v5675, 0.0
    %v5684 = vmax.f32 %v5676, 0.0
    %v5685 = vmax.f32 %v5677, 0.0
    %v5686 = vsub.f32 %v5566, %v5606
    %v5687 = vsub.f32 %v5567, %v5606
    %v5688 = vsub.f32 %v5568, %v5607
    %v5689 = vsub.f32 %v5569, %v5607
    %v5690 = vsub.f32 %v5570, %v5608
    %v5691 = vsub.f32 %v5571, %v5608
    %v5692 = vsub.f32 %v5572, %v5609
    %v5693 = vsub.f32 %v5573, %v5609
    %v5694 = vsub.f32 %v5574, %v5610
    %v5695 = vsub.f32 %v5575, %v5610
    %v5696 = vsub.f32 %v5576, %v5611
    %v5697 = vsub.f32 %v5577, %v5611
    %v5698 = vsub.f32 %v5578, %v5612
    %v5699 = vsub.f32 %v5579, %v5612
    %v5700 = vsub.f32 %v5580, %v5613
    %v5701 = vsub.f32 %v5581, %v5613
    %v5702 = vadd.f32 %v5678, 1e-05
    %v5703 = vadd.f32 %v5679, 1e-05
    %v5704 = vadd.f32 %v5680, 1e-05
    %v5705 = vadd.f32 %v5681, 1e-05
    %v5706 = vadd.f32 %v5682, 1e-05
    %v5707 = vadd.f32 %v5683, 1e-05
    %v5708 = vadd.f32 %v5684, 1e-05
    %v5709 = vadd.f32 %v5685, 1e-05
    %v5710 = vrsqrt.pop %v5702
    %v5711 = vrsqrt.pop %v5703
    %v5712 = vrsqrt.pop %v5704
    %v5713 = vrsqrt.pop %v5705
    %v5714 = vrsqrt.pop %v5706
    %v5715 = vrsqrt.pop %v5707
    %v5716 = vrsqrt.pop %v5708
    %v5717 = vrsqrt.pop %v5709
    %v5718 = vmul.f32 %v5686, %v5710
    %v5719 = vmul.f32 %v5687, %v5710
    %v5720 = vmul.f32 %v5688, %v5711
    %v5721 = vmul.f32 %v5689, %v5711
    %v5722 = vmul.f32 %v5690, %v5712
    %v5723 = vmul.f32 %v5691, %v5712
    %v5724 = vmul.f32 %v5692, %v5713
    %v5725 = vmul.f32 %v5693, %v5713
    %v5726 = vmul.f32 %v5694, %v5714
    %v5727 = vmul.f32 %v5695, %v5714
    %v5728 = vmul.f32 %v5696, %v5715
    %v5729 = vmul.f32 %v5697, %v5715
    %v5730 = vmul.f32 %v5698, %v5716
    %v5731 = vmul.f32 %v5699, %v5716
    %v5732 = vmul.f32 %v5700, %v5717
    %v5733 = vmul.f32 %v5701, %v5717
    %v5734 = vlaneseq
    %v5735 = vshrl.u32 %v5734, 7
    %v5736 = vsub.s32 6, %v5735
    %v5737 = vrot.slane %v215, %v5736
    %v5738 = vlaneseq
    %v5739 = vshrl.u32 %v5738, 7
    %v5740 = vsub.s32 6, %v5739
    %v5741 = vrot.slane %v216, %v5740
    %v5742 = vmul.f32 %v5718, %v5737
    %v5743 = vmul.f32 %v5719, %v5741
    %v5744 = vmul.f32 %v5720, %v5737
    %v5745 = vmul.f32 %v5721, %v5741
    %v5746 = vmul.f32 %v5722, %v5737
    %v5747 = vmul.f32 %v5723, %v5741
    %v5748 = vmul.f32 %v5724, %v5737
    %v5749 = vmul.f32 %v5725, %v5741
    %v5750 = vmul.f32 %v5726, %v5737
    %v5751 = vmul.f32 %v5727, %v5741
    %v5752 = vmul.f32 %v5728, %v5737
    %v5753 = vmul.f32 %v5729, %v5741
    %v5754 = vmul.f32 %v5730, %v5737
    %v5755 = vmul.f32 %v5731, %v5741
    %v5756 = vmul.f32 %v5732, %v5737
    %v5757 = vmul.f32 %v5733, %v5741
    %v5758 = vlaneseq
    %v5759 = vshrl.u32 %v5758, 7
    %v5760 = vsub.s32 7, %v5759
    %v5761 = vrot.slane %v215, %v5760
    %v5762 = vlaneseq
    %v5763 = vshrl.u32 %v5762, 7
    %v5764 = vsub.s32 7, %v5763
    %v5765 = vrot.slane %v216, %v5764
    %v5766 = vadd.f32 %v5742, %v5761
    %v5767 = vadd.f32 %v5743, %v5765
    %v5768 = vadd.f32 %v5744, %v5761
    %v5769 = vadd.f32 %v5745, %v5765
    %v5770 = vadd.f32 %v5746, %v5761
    %v5771 = vadd.f32 %v5747, %v5765
    %v5772 = vadd.f32 %v5748, %v5761
    %v5773 = vadd.f32 %v5749, %v5765
    %v5774 = vadd.f32 %v5750, %v5761
    %v5775 = vadd.f32 %v5751, %v5765
    %v5776 = vadd.f32 %v5752, %v5761
    %v5777 = vadd.f32 %v5753, %v5765
    %v5778 = vadd.f32 %v5754, %v5761
    %v5779 = vadd.f32 %v5755, %v5765
    %v5780 = vadd.f32 %v5756, %v5761
    %v5781 = vadd.f32 %v5757, %v5765
    %v5782 = vpack.c.bf16 %v5768, %v5766
    %v5783 = vpack.c.bf16 %v5769, %v5767
    %v5784 = vpack.c.bf16 %v5772, %v5770
    %v5785 = vpack.c.bf16 %v5773, %v5771
    %v5786 = vpack.c.bf16 %v5776, %v5774
    %v5787 = vpack.c.bf16 %v5777, %v5775
    %v5788 = vpack.c.bf16 %v5780, %v5778
    %v5789 = vpack.c.bf16 %v5781, %v5779
    %v5790 = vld [vmem:[#allocation13] sm:$0xf]
    %v5791 = vld [vmem:[#allocation13 + $0x4] sm:$0xf]
    %v5792 = vld [vmem:[#allocation13 + $0x8] sm:$0xf]
    %v5793 = vld [vmem:[#allocation13 + $0xc] sm:$0xf]
    %v5794 = vld [vmem:[#allocation13 + $0x10] sm:$0xf]
    %v5795 = vld [vmem:[#allocation13 + $0x14] sm:$0xf]
    %v5796 = vld [vmem:[#allocation13 + $0x18] sm:$0xf]
    %v5797 = vld [vmem:[#allocation13 + $0x1c] sm:$0xf]
    %v5798 = vld [vmem:[#allocation13 + $0x20] sm:$0xf]
    %v5799 = vld [vmem:[#allocation13 + $0x24] sm:$0xf]
    %v5800 = vld [vmem:[#allocation13 + $0x28] sm:$0xf]
    %v5801 = vld [vmem:[#allocation13 + $0x2c] sm:$0xf]
    %v5802 = vld [vmem:[#allocation13 + $0x30] sm:$0xf]
    %v5803 = vld [vmem:[#allocation13 + $0x34] sm:$0xf]
    %v5804 = vld [vmem:[#allocation13 + $0x38] sm:$0xf]
    %v5805 = vld [vmem:[#allocation13 + $0x3c] sm:$0xf]
    %v5806 = vld [vmem:[#allocation13 + $0x40] sm:$0xf]
    %v5807 = vld [vmem:[#allocation13 + $0x44] sm:$0xf]
    %v5808 = vld [vmem:[#allocation13 + $0x48] sm:$0xf]
    %v5809 = vld [vmem:[#allocation13 + $0x4c] sm:$0xf]
    %v5810 = vld [vmem:[#allocation13 + $0x50] sm:$0xf]
    %v5811 = vld [vmem:[#allocation13 + $0x54] sm:$0xf]
    %v5812 = vld [vmem:[#allocation13 + $0x58] sm:$0xf]
    %v5813 = vld [vmem:[#allocation13 + $0x5c] sm:$0xf]
    %v5814 = vld [vmem:[#allocation13 + $0x60] sm:$0xf]
    %v5815 = vld [vmem:[#allocation13 + $0x64] sm:$0xf]
    %v5816 = vld [vmem:[#allocation13 + $0x68] sm:$0xf]
    %v5817 = vld [vmem:[#allocation13 + $0x6c] sm:$0xf]
    %v5818 = vld [vmem:[#allocation13 + $0x70] sm:$0xf]
    %v5819 = vld [vmem:[#allocation13 + $0x74] sm:$0xf]
    %v5820 = vld [vmem:[#allocation13 + $0x78] sm:$0xf]
    %v5821 = vld [vmem:[#allocation13 + $0x7c] sm:$0xf]
    %v5822 = vlaneseq
    %v5823 = vshrl.u32 %v5822, 7
    %v5824 = vsub.s32 2, %v5823
    %v5825 = vrot.slane %v219, %v5824
    %v5858 = vunpack.c.l.b16 %v5790
    %v5859 = vunpack.c.l.b16 %v5791
    %v5860 = vunpack.c.l.b16 %v5792
    %v5861 = vunpack.c.l.b16 %v5793
    %v5862 = vunpack.c.l.b16 %v5794
    %v5863 = vunpack.c.l.b16 %v5795
    %v5864 = vunpack.c.l.b16 %v5796
    %v5865 = vunpack.c.l.b16 %v5797
    %v5866 = vunpack.c.l.b16 %v5798
    %v5867 = vunpack.c.l.b16 %v5799
    %v5868 = vunpack.c.l.b16 %v5800
    %v5869 = vunpack.c.l.b16 %v5801
    %v5870 = vunpack.c.l.b16 %v5802
    %v5871 = vunpack.c.l.b16 %v5803
    %v5872 = vunpack.c.l.b16 %v5804
    %v5873 = vunpack.c.l.b16 %v5805
    %v5874 = vunpack.c.l.b16 %v5806
    %v5875 = vunpack.c.l.b16 %v5807
    %v5876 = vunpack.c.l.b16 %v5808
    %v5877 = vunpack.c.l.b16 %v5809
    %v5878 = vunpack.c.l.b16 %v5810
    %v5879 = vunpack.c.l.b16 %v5811
    %v5880 = vunpack.c.l.b16 %v5812
    %v5881 = vunpack.c.l.b16 %v5813
    %v5882 = vunpack.c.l.b16 %v5814
    %v5883 = vunpack.c.l.b16 %v5815
    %v5884 = vunpack.c.l.b16 %v5816
    %v5885 = vunpack.c.l.b16 %v5817
    %v5886 = vunpack.c.l.b16 %v5818
    %v5887 = vunpack.c.l.b16 %v5819
    %v5888 = vunpack.c.l.b16 %v5820
    %v5889 = vunpack.c.l.b16 %v5821
    %v5890 = vpack.c.b16 %v5859, %v5858
    %v5891 = vpack.c.b16 %v5861, %v5860
    %v5892 = vpack.c.b16 %v5863, %v5862
    %v5893 = vpack.c.b16 %v5865, %v5864
    %v5894 = vpack.c.b16 %v5867, %v5866
    %v5895 = vpack.c.b16 %v5869, %v5868
    %v5896 = vpack.c.b16 %v5871, %v5870
    %v5897 = vpack.c.b16 %v5873, %v5872
    %v5898 = vpack.c.b16 %v5875, %v5874
    %v5899 = vpack.c.b16 %v5877, %v5876
    %v5900 = vpack.c.b16 %v5879, %v5878
    %v5901 = vpack.c.b16 %v5881, %v5880
    %v5902 = vpack.c.b16 %v5883, %v5882
    %v5903 = vpack.c.b16 %v5885, %v5884
    %v5904 = vpack.c.b16 %v5887, %v5886
    %v5905 = vpack.c.b16 %v5889, %v5888
    %5922 = vmatprep.subr.bf16.mxu0 0
    %5923 = vmatpush1.bf16.msra.mxu0 %v5890
    %5924 = vmatprep.subr.bf16.mxu0 0
    %5925 = vmatpush1.bf16.msra.mxu0 %v5891
    %5926 = vmatprep.subr.bf16.mxu0 0
    %5927 = vmatpush1.bf16.msra.mxu0 %v5892
    %5928 = vmatprep.subr.bf16.mxu0 0
    %5929 = vmatpush1.bf16.msra.mxu0 %v5893
    %5930 = vmatprep.subr.bf16.mxu0 0
    %5931 = vmatpush1.bf16.msra.mxu0 %v5894
    %5932 = vmatprep.subr.bf16.mxu0 0
    %5933 = vmatpush1.bf16.msra.mxu0 %v5895
    %5934 = vmatprep.subr.bf16.mxu0 0
    %5935 = vmatpush1.bf16.msra.mxu0 %v5896
    %5936 = vmatprep.subr.bf16.mxu0 0
    %5937 = vmatpush1.bf16.msra.mxu0 %v5897
    %5938 = vmatprep.subr.bf16.mxu0 0
    %5939 = vmatpush1.bf16.msra.mxu0 %v5898
    %5940 = vmatprep.subr.bf16.mxu0 0
    %5941 = vmatpush1.bf16.msra.mxu0 %v5899
    %5942 = vmatprep.subr.bf16.mxu0 0
    %5943 = vmatpush1.bf16.msra.mxu0 %v5900
    %5944 = vmatprep.subr.bf16.mxu0 0
    %5945 = vmatpush1.bf16.msra.mxu0 %v5901
    %5946 = vmatprep.subr.bf16.mxu0 0
    %5947 = vmatpush1.bf16.msra.mxu0 %v5902
    %5948 = vmatprep.subr.bf16.mxu0 0
    %5949 = vmatpush1.bf16.msra.mxu0 %v5903
    %5950 = vmatprep.subr.bf16.mxu0 0
    %5951 = vmatpush1.bf16.msra.mxu0 %v5904
    %5952 = vmatprep.subr.bf16.mxu0 0
    %5953 = vmatpush1.bf16.msra.mxu0 %v5905
    %5954 = vmatprep.mubr.bf16.mxu0 %v5783
    %5955 = vmatmul.mubr.bf16.gmra.mrb[0].mxu0 %v5782
    %v5956 = vpop.f32.mrb[0].mxu0
    %v5957 = vadd.f32 %v5825, %v5956
    %v5958 = vpop.f32.mrb[0].mxu0
    %v5959 = vpop.f32.mrb[0].mxu0
    %v5960 = vadd.f32 %v5825, %v5959
    %v5961 = vpop.f32.mrb[0].mxu0
    %5962 = vmatprep.mubr.bf16.mxu0 %v5785
    %5963 = vmatmul.mubr.bf16.gmra.mrb[0].mxu0 %v5784
    %v5964 = vpop.f32.mrb[0].mxu0
    %v5965 = vadd.f32 %v5825, %v5964
    %v5966 = vpop.f32.mrb[0].mxu0
    %v5967 = vpop.f32.mrb[0].mxu0
    %v5968 = vadd.f32 %v5825, %v5967
    %v5969 = vpop.f32.mrb[0].mxu0
    %5970 = vmatprep.mubr.bf16.mxu0 %v5787
    %5971 = vmatmul.mubr.bf16.gmra.mrb[0].mxu0 %v5786
    %v5972 = vpop.f32.mrb[0].mxu0
    %v5973 = vadd.f32 %v5825, %v5972
    %v5974 = vpop.f32.mrb[0].mxu0
    %v5975 = vpop.f32.mrb[0].mxu0
    %v5976 = vadd.f32 %v5825, %v5975
    %v5977 = vpop.f32.mrb[0].mxu0
    %5978 = vmatprep.mubr.bf16.mxu0 %v5789
    %5979 = vmatmul.mubr.bf16.gmra.mrb[0].mxu0 %v5788
    %v5980 = vpop.f32.mrb[0].mxu0
    %v5981 = vadd.f32 %v5825, %v5980
    %v5982 = vpop.f32.mrb[0].mxu0
    %v5983 = vpop.f32.mrb[0].mxu0
    %v5984 = vadd.f32 %v5825, %v5983
    %v5985 = vpop.f32.mrb[0].mxu0
    %5986 = vdwg.mxu0
    %v5987 = vmul.f32 %v5957, %v5957
    %v5988 = vmul.f32 %v5960, %v5960
    %v5989 = vmul.f32 %v5965, %v5965
    %v5990 = vmul.f32 %v5968, %v5968
    %v5991 = vmul.f32 %v5973, %v5973
    %v5992 = vmul.f32 %v5976, %v5976
    %v5993 = vmul.f32 %v5981, %v5981
    %v5994 = vmul.f32 %v5984, %v5984
    %v5995 = vmul.f32 %v5957, %v5987
    %v5996 = vmul.f32 %v5960, %v5988
    %v5997 = vmul.f32 %v5965, %v5989
    %v5998 = vmul.f32 %v5968, %v5990
    %v5999 = vmul.f32 %v5973, %v5991
    %v6000 = vmul.f32 %v5976, %v5992
    %v6001 = vmul.f32 %v5981, %v5993
    %v6002 = vmul.f32 %v5984, %v5994
    %v6003 = vmul.f32 %v5995, 0.044715
    %v6004 = vmul.f32 %v5996, 0.044715
    %v6005 = vmul.f32 %v5997, 0.044715
    %v6006 = vmul.f32 %v5998, 0.044715
    %v6007 = vmul.f32 %v5999, 0.044715
    %v6008 = vmul.f32 %v6000, 0.044715
    %v6009 = vmul.f32 %v6001, 0.044715
    %v6010 = vmul.f32 %v6002, 0.044715
    %v6011 = vadd.f32 %v5957, %v6003
    %v6012 = vadd.f32 %v5960, %v6004
    %v6013 = vadd.f32 %v5965, %v6005
    %v6014 = vadd.f32 %v5968, %v6006
    %v6015 = vadd.f32 %v5973, %v6007
    %v6016 = vadd.f32 %v5976, %v6008
    %v6017 = vadd.f32 %v5981, %v6009
    %v6018 = vadd.f32 %v5984, %v6010
    %v6019 = vmul.f32 %v6011, 0.7978846
    %v6020 = vmul.f32 %v6012, 0.7978846
    %v6021 = vmul.f32 %v6013, 0.7978846
    %v6022 = vmul.f32 %v6014, 0.7978846
    %v6023 = vmul.f32 %v6015, 0.7978846
    %v6024 = vmul.f32 %v6016, 0.7978846
    %v6025 = vmul.f32 %v6017, 0.7978846
    %v6026 = vmul.f32 %v6018, 0.7978846
    %v6027 = vtanh.pop %v6019
    %v6028 = vtanh.pop %v6020
    %v6029 = vtanh.pop %v6021
    %v6030 = vtanh.pop %v6022
    %v6031 = vtanh.pop %v6023
    %v6032 = vtanh.pop %v6024
    %v6033 = vtanh.pop %v6025
    %v6034 = vtanh.pop %v6026
    %v6035 = vadd.f32 %v6027, 1.0
    %v6036 = vadd.f32 %v6028, 1.0
    %v6037 = vadd.f32 %v6029, 1.0
    %v6038 = vadd.f32 %v6030, 1.0
    %v6039 = vadd.f32 %v6031, 1.0
    %v6040 = vadd.f32 %v6032, 1.0
    %v6041 = vadd.f32 %v6033, 1.0
    %v6042 = vadd.f32 %v6034, 1.0
    %v6043 = vmul.f32 %v6035, 0.5
    %v6044 = vmul.f32 %v6036, 0.5
    %v6045 = vmul.f32 %v6037, 0.5
    %v6046 = vmul.f32 %v6038, 0.5
    %v6047 = vmul.f32 %v6039, 0.5
    %v6048 = vmul.f32 %v6040, 0.5
    %v6049 = vmul.f32 %v6041, 0.5
    %v6050 = vmul.f32 %v6042, 0.5
    %v6051 = vmul.f32 %v5957, %v6043
    %v6052 = vmul.f32 %v5960, %v6044
    %v6053 = vmul.f32 %v5965, %v6045
    %v6054 = vmul.f32 %v5968, %v6046
    %v6055 = vmul.f32 %v5973, %v6047
    %v6056 = vmul.f32 %v5976, %v6048
    %v6057 = vmul.f32 %v5981, %v6049
    %v6058 = vmul.f32 %v5984, %v6050
    %6059 = vadd.xlane.f32.xlu0 %v6051
    %v6060 = vpop.xlane.xlu0 %6059
    %6061 = vadd.xlane.f32.xlu0 %v6052
    %v6062 = vpop.xlane.xlu0 %6061
    %6063 = vadd.xlane.f32.xlu0 %v6053
    %v6064 = vpop.xlane.xlu0 %6063
    %6065 = vadd.xlane.f32.xlu0 %v6054
    %v6066 = vpop.xlane.xlu0 %6065
    %6067 = vadd.xlane.f32.xlu0 %v6055
    %v6068 = vpop.xlane.xlu0 %6067
    %6069 = vadd.xlane.f32.xlu0 %v6056
    %v6070 = vpop.xlane.xlu0 %6069
    %6071 = vadd.xlane.f32.xlu0 %v6057
    %v6072 = vpop.xlane.xlu0 %6071
    %6073 = vadd.xlane.f32.xlu0 %v6058
    %v6074 = vpop.xlane.xlu0 %6073
    %v6075 = vrcp.pop 128.0
    %v6076 = vmul.f32 %v6060, %v6075
    %v6077 = vmul.f32 %v6062, %v6075
    %v6078 = vmul.f32 %v6064, %v6075
    %v6079 = vmul.f32 %v6066, %v6075
    %v6080 = vmul.f32 %v6068, %v6075
    %v6081 = vmul.f32 %v6070, %v6075
    %v6082 = vmul.f32 %v6072, %v6075
    %v6083 = vmul.f32 %v6074, %v6075
    %v6084 = vmul.f32 %v6051, %v6051
    %v6085 = vmul.f32 %v6052, %v6052
    %v6086 = vmul.f32 %v6053, %v6053
    %v6087 = vmul.f32 %v6054, %v6054
    %v6088 = vmul.f32 %v6055, %v6055
    %v6089 = vmul.f32 %v6056, %v6056
    %v6090 = vmul.f32 %v6057, %v6057
    %v6091 = vmul.f32 %v6058, %v6058
    %6092 = vadd.xlane.f32.xlu0 %v6084
    %v6093 = vpop.xlane.xlu0 %6092
    %6094 = vadd.xlane.f32.xlu0 %v6085
    %v6095 = vpop.xlane.xlu0 %6094
    %6096 = vadd.xlane.f32.xlu0 %v6086
    %v6097 = vpop.xlane.xlu0 %6096
    %6098 = vadd.xlane.f32.xlu0 %v6087
    %v6099 = vpop.xlane.xlu0 %6098
    %6100 = vadd.xlane.f32.xlu0 %v6088
    %v6101 = vpop.xlane.xlu0 %6100
    %6102 = vadd.xlane.f32.xlu0 %v6089
    %v6103 = vpop.xlane.xlu0 %6102
    %6104 = vadd.xlane.f32.xlu0 %v6090
    %v6105 = vpop.xlane.xlu0 %6104
    %6106 = vadd.xlane.f32.xlu0 %v6091
    %v6107 = vpop.xlane.xlu0 %6106
    %v6108 = vmul.f32 %v6093, %v6075
    %v6109 = vmul.f32 %v6095, %v6075
    %v6110 = vmul.f32 %v6097, %v6075
    %v6111 = vmul.f32 %v6099, %v6075
    %v6112 = vmul.f32 %v6101, %v6075
    %v6113 = vmul.f32 %v6103, %v6075
    %v6114 = vmul.f32 %v6105, %v6075
    %v6115 = vmul.f32 %v6107, %v6075
    %v6116 = vmul.f32 %v6076, %v6076
    %v6117 = vmul.f32 %v6077, %v6077
    %v6118 = vmul.f32 %v6078, %v6078
    %v6119 = vmul.f32 %v6079, %v6079
    %v6120 = vmul.f32 %v6080, %v6080
    %v6121 = vmul.f32 %v6081, %v6081
    %v6122 = vmul.f32 %v6082, %v6082
    %v6123 = vmul.f32 %v6083, %v6083
    %v6124 = vsub.f32 %v6108, %v6116
    %v6125 = vsub.f32 %v6109, %v6117
    %v6126 = vsub.f32 %v6110, %v6118
    %v6127 = vsub.f32 %v6111, %v6119
    %v6128 = vsub.f32 %v6112, %v6120
    %v6129 = vsub.f32 %v6113, %v6121
    %v6130 = vsub.f32 %v6114, %v6122
    %v6131 = vsub.f32 %v6115, %v6123
    %v6132 = vmax.f32 %v6124, 0.0
    %v6133 = vmax.f32 %v6125, 0.0
    %v6134 = vmax.f32 %v6126, 0.0
    %v6135 = vmax.f32 %v6127, 0.0
    %v6136 = vmax.f32 %v6128, 0.0
    %v6137 = vmax.f32 %v6129, 0.0
    %v6138 = vmax.f32 %v6130, 0.0
    %v6139 = vmax.f32 %v6131, 0.0
    %v6140 = vsub.f32 %v6051, %v6076
    %v6141 = vsub.f32 %v6052, %v6077
    %v6142 = vsub.f32 %v6053, %v6078
    %v6143 = vsub.f32 %v6054, %v6079
    %v6144 = vsub.f32 %v6055, %v6080
    %v6145 = vsub.f32 %v6056, %v6081
    %v6146 = vsub.f32 %v6057, %v6082
    %v6147 = vsub.f32 %v6058, %v6083
    %v6148 = vadd.f32 %v6132, 1e-05
    %v6149 = vadd.f32 %v6133, 1e-05
    %v6150 = vadd.f32 %v6134, 1e-05
    %v6151 = vadd.f32 %v6135, 1e-05
    %v6152 = vadd.f32 %v6136, 1e-05
    %v6153 = vadd.f32 %v6137, 1e-05
    %v6154 = vadd.f32 %v6138, 1e-05
    %v6155 = vadd.f32 %v6139, 1e-05
    %v6156 = vrsqrt.pop %v6148
    %v6157 = vrsqrt.pop %v6149
    %v6158 = vrsqrt.pop %v6150
    %v6159 = vrsqrt.pop %v6151
    %v6160 = vrsqrt.pop %v6152
    %v6161 = vrsqrt.pop %v6153
    %v6162 = vrsqrt.pop %v6154
    %v6163 = vrsqrt.pop %v6155
    %v6164 = vmul.f32 %v6140, %v6156
    %v6165 = vmul.f32 %v6141, %v6157
    %v6166 = vmul.f32 %v6142, %v6158
    %v6167 = vmul.f32 %v6143, %v6159
    %v6168 = vmul.f32 %v6144, %v6160
    %v6169 = vmul.f32 %v6145, %v6161
    %v6170 = vmul.f32 %v6146, %v6162
    %v6171 = vmul.f32 %v6147, %v6163
    %v6172 = vlaneseq
    %v6173 = vshrl.u32 %v6172, 7
    %v6174 = vsub.s32 0, %v6173
    %v6175 = vrot.slane %v219, %v6174
    %v6176 = vmul.f32 %v6164, %v6175
    %v6177 = vmul.f32 %v6165, %v6175
    %v6178 = vmul.f32 %v6166, %v6175
    %v6179 = vmul.f32 %v6167, %v6175
    %v6180 = vmul.f32 %v6168, %v6175
    %v6181 = vmul.f32 %v6169, %v6175
    %v6182 = vmul.f32 %v6170, %v6175
    %v6183 = vmul.f32 %v6171, %v6175
    %v6184 = vlaneseq
    %v6185 = vshrl.u32 %v6184, 7
    %v6186 = vsub.s32 1, %v6185
    %v6187 = vrot.slane %v219, %v6186
    %v6188 = vadd.f32 %v6176, %v6187
    %v6189 = vadd.f32 %v6177, %v6187
    %v6190 = vadd.f32 %v6178, %v6187
    %v6191 = vadd.f32 %v6179, %v6187
    %v6192 = vadd.f32 %v6180, %v6187
    %v6193 = vadd.f32 %v6181, %v6187
    %v6194 = vadd.f32 %v6182, %v6187
    %v6195 = vadd.f32 %v6183, %v6187
    %v6196 = vpack.c.bf16 %v6189, %v6188
    %v6197 = vpack.c.bf16 %v6191, %v6190
    %v6198 = vpack.c.bf16 %v6193, %v6192
    %v6199 = vpack.c.bf16 %v6195, %v6194
    %v6200 = vld [vmem:[#allocation14] sm:$0xff]
    %v6201 = vld [vmem:[#allocation14 + $0x8] sm:$0xff]
    %v6202 = vld [vmem:[#allocation14 + $0x10] sm:$0xff]
    %v6203 = vld [vmem:[#allocation14 + $0x18] sm:$0xff]
    %v6204 = vld [vmem:[#allocation14 + $0x20] sm:$0xff]
    %v6205 = vld [vmem:[#allocation14 + $0x28] sm:$0xff]
    %v6206 = vld [vmem:[#allocation14 + $0x30] sm:$0xff]
    %v6207 = vld [vmem:[#allocation14 + $0x38] sm:$0xff]
    %v6208 = vld [vmem:[#allocation14 + $0x40] sm:$0xff]
    %v6209 = vld [vmem:[#allocation14 + $0x48] sm:$0xff]
    %v6210 = vld [vmem:[#allocation14 + $0x50] sm:$0xff]
    %v6211 = vld [vmem:[#allocation14 + $0x58] sm:$0xff]
    %v6212 = vld [vmem:[#allocation14 + $0x60] sm:$0xff]
    %v6213 = vld [vmem:[#allocation14 + $0x68] sm:$0xff]
    %v6214 = vld [vmem:[#allocation14 + $0x70] sm:$0xff]
    %v6215 = vld [vmem:[#allocation14 + $0x78] sm:$0xff]
    %v6216 = vlaneseq
    %v6217 = vshrl.u32 %v6216, 7
    %v6218 = vsub.s32 4, %v6217
    %v6219 = vrot.slane %v217, %v6218
    %v6220 = vlaneseq
    %v6221 = vshrl.u32 %v6220, 7
    %v6222 = vsub.s32 4, %v6221
    %v6223 = vrot.slane %v218, %v6222
    %v6240 = vunpack.c.l.b16 %v6200
    %v6241 = vunpack.c.h.b16 %v6200
    %v6242 = vunpack.c.l.b16 %v6201
    %v6243 = vunpack.c.h.b16 %v6201
    %v6244 = vunpack.c.l.b16 %v6202
    %v6245 = vunpack.c.h.b16 %v6202
    %v6246 = vunpack.c.l.b16 %v6203
    %v6247 = vunpack.c.h.b16 %v6203
    %v6248 = vunpack.c.l.b16 %v6204
    %v6249 = vunpack.c.h.b16 %v6204
    %v6250 = vunpack.c.l.b16 %v6205
    %v6251 = vunpack.c.h.b16 %v6205
    %v6252 = vunpack.c.l.b16 %v6206
    %v6253 = vunpack.c.h.b16 %v6206
    %v6254 = vunpack.c.l.b16 %v6207
    %v6255 = vunpack.c.h.b16 %v6207
    %v6256 = vunpack.c.l.b16 %v6208
    %v6257 = vunpack.c.h.b16 %v6208
    %v6258 = vunpack.c.l.b16 %v6209
    %v6259 = vunpack.c.h.b16 %v6209
    %v6260 = vunpack.c.l.b16 %v6210
    %v6261 = vunpack.c.h.b16 %v6210
    %v6262 = vunpack.c.l.b16 %v6211
    %v6263 = vunpack.c.h.b16 %v6211
    %v6264 = vunpack.c.l.b16 %v6212
    %v6265 = vunpack.c.h.b16 %v6212
    %v6266 = vunpack.c.l.b16 %v6213
    %v6267 = vunpack.c.h.b16 %v6213
    %v6268 = vunpack.c.l.b16 %v6214
    %v6269 = vunpack.c.h.b16 %v6214
    %v6270 = vunpack.c.l.b16 %v6215
    %v6271 = vunpack.c.h.b16 %v6215
    %v6272 = vpack.c.b16 %v6242, %v6240
    %v6273 = vpack.c.b16 %v6243, %v6241
    %v6274 = vpack.c.b16 %v6246, %v6244
    %v6275 = vpack.c.b16 %v6247, %v6245
    %v6276 = vpack.c.b16 %v6250, %v6248
    %v6277 = vpack.c.b16 %v6251, %v6249
    %v6278 = vpack.c.b16 %v6254, %v6252
    %v6279 = vpack.c.b16 %v6255, %v6253
    %v6280 = vpack.c.b16 %v6258, %v6256
    %v6281 = vpack.c.b16 %v6259, %v6257
    %v6282 = vpack.c.b16 %v6262, %v6260
    %v6283 = vpack.c.b16 %v6263, %v6261
    %v6284 = vpack.c.b16 %v6266, %v6264
    %v6285 = vpack.c.b16 %v6267, %v6265
    %v6286 = vpack.c.b16 %v6270, %v6268
    %v6287 = vpack.c.b16 %v6271, %v6269
    %6304 = vmatprep.subr.bf16.mxu0 %v6273
    %6305 = vmatpush1.bf16.msra.mxu0 %v6272
    %6306 = vmatprep.subr.bf16.mxu0 %v6275
    %6307 = vmatpush1.bf16.msra.mxu0 %v6274
    %6308 = vmatprep.subr.bf16.mxu0 %v6277
    %6309 = vmatpush1.bf16.msra.mxu0 %v6276
    %6310 = vmatprep.subr.bf16.mxu0 %v6279
    %6311 = vmatpush1.bf16.msra.mxu0 %v6278
    %6312 = vmatprep.subr.bf16.mxu0 %v6281
    %6313 = vmatpush1.bf16.msra.mxu0 %v6280
    %6314 = vmatprep.subr.bf16.mxu0 %v6283
    %6315 = vmatpush1.bf16.msra.mxu0 %v6282
    %6316 = vmatprep.subr.bf16.mxu0 %v6285
    %6317 = vmatpush1.bf16.msra.mxu0 %v6284
    %6318 = vmatprep.subr.bf16.mxu0 %v6287
    %6319 = vmatpush1.bf16.msra.mxu0 %v6286
    %6320 = vmatprep.subr.bf16.mxu0 0
    %6321 = vmatpush1.bf16.msra.mxu0 0
    %6322 = vmatprep.subr.bf16.mxu0 0
    %6323 = vmatpush1.bf16.msra.mxu0 0
    %6324 = vmatprep.subr.bf16.mxu0 0
    %6325 = vmatpush1.bf16.msra.mxu0 0
    %6326 = vmatprep.subr.bf16.mxu0 0
    %6327 = vmatpush1.bf16.msra.mxu0 0
    %6328 = vmatprep.subr.bf16.mxu0 0
    %6329 = vmatpush1.bf16.msra.mxu0 0
    %6330 = vmatprep.subr.bf16.mxu0 0
    %6331 = vmatpush1.bf16.msra.mxu0 0
    %6332 = vmatprep.subr.bf16.mxu0 0
    %6333 = vmatpush1.bf16.msra.mxu0 0
    %6334 = vmatprep.subr.bf16.mxu0 0
    %6335 = vmatpush1.bf16.msra.mxu0 0
    %6336 = vmatprep.mubr.bf16.mxu0 0
    %6337 = vmatmul.mubr.bf16.gmra.mrb[0].mxu0 %v6196
    %v6338 = vpop.f32.mrb[0].mxu0
    %v6339 = vadd.f32 %v6219, %v6338
    %v6340 = vpop.f32.mrb[0].mxu0
    %v6341 = vadd.f32 %v6223, %v6340
    %v6342 = vpop.f32.mrb[0].mxu0
    %v6343 = vadd.f32 %v6219, %v6342
    %v6344 = vpop.f32.mrb[0].mxu0
    %v6345 = vadd.f32 %v6223, %v6344
    %6346 = vmatprep.mubr.bf16.mxu0 0
    %6347 = vmatmul.mubr.bf16.gmra.mrb[0].mxu0 %v6197
    %v6348 = vpop.f32.mrb[0].mxu0
    %v6349 = vadd.f32 %v6219, %v6348
    %v6350 = vpop.f32.mrb[0].mxu0
    %v6351 = vadd.f32 %v6223, %v6350
    %v6352 = vpop.f32.mrb[0].mxu0
    %v6353 = vadd.f32 %v6219, %v6352
    %v6354 = vpop.f32.mrb[0].mxu0
    %v6355 = vadd.f32 %v6223, %v6354
    %6356 = vmatprep.mubr.bf16.mxu0 0
    %6357 = vmatmul.mubr.bf16.gmra.mrb[0].mxu0 %v6198
    %v6358 = vpop.f32.mrb[0].mxu0
    %v6359 = vadd.f32 %v6219, %v6358
    %v6360 = vpop.f32.mrb[0].mxu0
    %v6361 = vadd.f32 %v6223, %v6360
    %v6362 = vpop.f32.mrb[0].mxu0
    %v6363 = vadd.f32 %v6219, %v6362
    %v6364 = vpop.f32.mrb[0].mxu0
    %v6365 = vadd.f32 %v6223, %v6364
    %6366 = vmatprep.mubr.bf16.mxu0 0
    %6367 = vmatmul.mubr.bf16.gmra.mrb[0].mxu0 %v6199
    %v6368 = vpop.f32.mrb[0].mxu0
    %v6369 = vadd.f32 %v6219, %v6368
    %v6370 = vpop.f32.mrb[0].mxu0
    %v6371 = vadd.f32 %v6223, %v6370
    %v6372 = vpop.f32.mrb[0].mxu0
    %v6373 = vadd.f32 %v6219, %v6372
    %v6374 = vpop.f32.mrb[0].mxu0
    %v6375 = vadd.f32 %v6223, %v6374
    %6376 = vdwg.mxu0
    %v6377 = vmul.f32 %v6339, %v6339
    %v6378 = vmul.f32 %v6341, %v6341
    %v6379 = vmul.f32 %v6343, %v6343
    %v6380 = vmul.f32 %v6345, %v6345
    %v6381 = vmul.f32 %v6349, %v6349
    %v6382 = vmul.f32 %v6351, %v6351
    %v6383 = vmul.f32 %v6353, %v6353
    %v6384 = vmul.f32 %v6355, %v6355
    %v6385 = vmul.f32 %v6359, %v6359
    %v6386 = vmul.f32 %v6361, %v6361
    %v6387 = vmul.f32 %v6363, %v6363
    %v6388 = vmul.f32 %v6365, %v6365
    %v6389 = vmul.f32 %v6369, %v6369
    %v6390 = vmul.f32 %v6371, %v6371
    %v6391 = vmul.f32 %v6373, %v6373
    %v6392 = vmul.f32 %v6375, %v6375
    %v6393 = vmul.f32 %v6339, %v6377
    %v6394 = vmul.f32 %v6341, %v6378
    %v6395 = vmul.f32 %v6343, %v6379
    %v6396 = vmul.f32 %v6345, %v6380
    %v6397 = vmul.f32 %v6349, %v6381
    %v6398 = vmul.f32 %v6351, %v6382
    %v6399 = vmul.f32 %v6353, %v6383
    %v6400 = vmul.f32 %v6355, %v6384
    %v6401 = vmul.f32 %v6359, %v6385
    %v6402 = vmul.f32 %v6361, %v6386
    %v6403 = vmul.f32 %v6363, %v6387
    %v6404 = vmul.f32 %v6365, %v6388
    %v6405 = vmul.f32 %v6369, %v6389
    %v6406 = vmul.f32 %v6371, %v6390
    %v6407 = vmul.f32 %v6373, %v6391
    %v6408 = vmul.f32 %v6375, %v6392
    %v6409 = vmul.f32 %v6393, 0.044715
    %v6410 = vmul.f32 %v6394, 0.044715
    %v6411 = vmul.f32 %v6395, 0.044715
    %v6412 = vmul.f32 %v6396, 0.044715
    %v6413 = vmul.f32 %v6397, 0.044715
    %v6414 = vmul.f32 %v6398, 0.044715
    %v6415 = vmul.f32 %v6399, 0.044715
    %v6416 = vmul.f32 %v6400, 0.044715
    %v6417 = vmul.f32 %v6401, 0.044715
    %v6418 = vmul.f32 %v6402, 0.044715
    %v6419 = vmul.f32 %v6403, 0.044715
    %v6420 = vmul.f32 %v6404, 0.044715
    %v6421 = vmul.f32 %v6405, 0.044715
    %v6422 = vmul.f32 %v6406, 0.044715
    %v6423 = vmul.f32 %v6407, 0.044715
    %v6424 = vmul.f32 %v6408, 0.044715
    %v6425 = vadd.f32 %v6339, %v6409
    %v6426 = vadd.f32 %v6341, %v6410
    %v6427 = vadd.f32 %v6343, %v6411
    %v6428 = vadd.f32 %v6345, %v6412
    %v6429 = vadd.f32 %v6349, %v6413
    %v6430 = vadd.f32 %v6351, %v6414
    %v6431 = vadd.f32 %v6353, %v6415
    %v6432 = vadd.f32 %v6355, %v6416
    %v6433 = vadd.f32 %v6359, %v6417
    %v6434 = vadd.f32 %v6361, %v6418
    %v6435 = vadd.f32 %v6363, %v6419
    %v6436 = vadd.f32 %v6365, %v6420
    %v6437 = vadd.f32 %v6369, %v6421
    %v6438 = vadd.f32 %v6371, %v6422
    %v6439 = vadd.f32 %v6373, %v6423
    %v6440 = vadd.f32 %v6375, %v6424
    %v6441 = vmul.f32 %v6425, 0.7978846
    %v6442 = vmul.f32 %v6426, 0.7978846
    %v6443 = vmul.f32 %v6427, 0.7978846
    %v6444 = vmul.f32 %v6428, 0.7978846
    %v6445 = vmul.f32 %v6429, 0.7978846
    %v6446 = vmul.f32 %v6430, 0.7978846
    %v6447 = vmul.f32 %v6431, 0.7978846
    %v6448 = vmul.f32 %v6432, 0.7978846
    %v6449 = vmul.f32 %v6433, 0.7978846
    %v6450 = vmul.f32 %v6434, 0.7978846
    %v6451 = vmul.f32 %v6435, 0.7978846
    %v6452 = vmul.f32 %v6436, 0.7978846
    %v6453 = vmul.f32 %v6437, 0.7978846
    %v6454 = vmul.f32 %v6438, 0.7978846
    %v6455 = vmul.f32 %v6439, 0.7978846
    %v6456 = vmul.f32 %v6440, 0.7978846
    %v6457 = vtanh.pop %v6441
    %v6458 = vtanh.pop %v6442
    %v6459 = vtanh.pop %v6443
    %v6460 = vtanh.pop %v6444
    %v6461 = vtanh.pop %v6445
    %v6462 = vtanh.pop %v6446
    %v6463 = vtanh.pop %v6447
    %v6464 = vtanh.pop %v6448
    %v6465 = vtanh.pop %v6449
    %v6466 = vtanh.pop %v6450
    %v6467 = vtanh.pop %v6451
    %v6468 = vtanh.pop %v6452
    %v6469 = vtanh.pop %v6453
    %v6470 = vtanh.pop %v6454
    %v6471 = vtanh.pop %v6455
    %v6472 = vtanh.pop %v6456
    %v6473 = vadd.f32 %v6457, 1.0
    %v6474 = vadd.f32 %v6458, 1.0
    %v6475 = vadd.f32 %v6459, 1.0
    %v6476 = vadd.f32 %v6460, 1.0
    %v6477 = vadd.f32 %v6461, 1.0
    %v6478 = vadd.f32 %v6462, 1.0
    %v6479 = vadd.f32 %v6463, 1.0
    %v6480 = vadd.f32 %v6464, 1.0
    %v6481 = vadd.f32 %v6465, 1.0
    %v6482 = vadd.f32 %v6466, 1.0
    %v6483 = vadd.f32 %v6467, 1.0
    %v6484 = vadd.f32 %v6468, 1.0
    %v6485 = vadd.f32 %v6469, 1.0
    %v6486 = vadd.f32 %v6470, 1.0
    %v6487 = vadd.f32 %v6471, 1.0
    %v6488 = vadd.f32 %v6472, 1.0
    %v6489 = vmul.f32 %v6473, 0.5
    %v6490 = vmul.f32 %v6474, 0.5
    %v6491 = vmul.f32 %v6475, 0.5
    %v6492 = vmul.f32 %v6476, 0.5
    %v6493 = vmul.f32 %v6477, 0.5
    %v6494 = vmul.f32 %v6478, 0.5
    %v6495 = vmul.f32 %v6479, 0.5
    %v6496 = vmul.f32 %v6480, 0.5
    %v6497 = vmul.f32 %v6481, 0.5
    %v6498 = vmul.f32 %v6482, 0.5
    %v6499 = vmul.f32 %v6483, 0.5
    %v6500 = vmul.f32 %v6484, 0.5
    %v6501 = vmul.f32 %v6485, 0.5
    %v6502 = vmul.f32 %v6486, 0.5
    %v6503 = vmul.f32 %v6487, 0.5
    %v6504 = vmul.f32 %v6488, 0.5
    %v6505 = vmul.f32 %v6339, %v6489
    %v6506 = vmul.f32 %v6341, %v6490
    %v6507 = vmul.f32 %v6343, %v6491
    %v6508 = vmul.f32 %v6345, %v6492
    %v6509 = vmul.f32 %v6349, %v6493
    %v6510 = vmul.f32 %v6351, %v6494
    %v6511 = vmul.f32 %v6353, %v6495
    %v6512 = vmul.f32 %v6355, %v6496
    %v6513 = vmul.f32 %v6359, %v6497
    %v6514 = vmul.f32 %v6361, %v6498
    %v6515 = vmul.f32 %v6363, %v6499
    %v6516 = vmul.f32 %v6365, %v6500
    %v6517 = vmul.f32 %v6369, %v6501
    %v6518 = vmul.f32 %v6371, %v6502
    %v6519 = vmul.f32 %v6373, %v6503
    %v6520 = vmul.f32 %v6375, %v6504
    %v6521 = vadd.f32 %v5766, %v6505
    %v6522 = vadd.f32 %v5767, %v6506
    %v6523 = vadd.f32 %v5768, %v6507
    %v6524 = vadd.f32 %v5769, %v6508
    %v6525 = vadd.f32 %v5770, %v6509
    %v6526 = vadd.f32 %v5771, %v6510
    %v6527 = vadd.f32 %v5772, %v6511
    %v6528 = vadd.f32 %v5773, %v6512
    %v6529 = vadd.f32 %v5774, %v6513
    %v6530 = vadd.f32 %v5775, %v6514
    %v6531 = vadd.f32 %v5776, %v6515
    %v6532 = vadd.f32 %v5777, %v6516
    %v6533 = vadd.f32 %v5778, %v6517
    %v6534 = vadd.f32 %v5779, %v6518
    %v6535 = vadd.f32 %v5780, %v6519
    %v6536 = vadd.f32 %v5781, %v6520
    %6537 = vst [vmem:[#allocation16] sm:$0xff] %v6521
    %6538 = vst [vmem:[#allocation16 + $0x8] sm:$0xff] %v6522
    %6539 = vst [vmem:[#allocation16 + $0x10] sm:$0xff] %v6523
    %6540 = vst [vmem:[#allocation16 + $0x18] sm:$0xff] %v6524
    %6541 = vst [vmem:[#allocation16 + $0x20] sm:$0xff] %v6525
    %6542 = vst [vmem:[#allocation16 + $0x28] sm:$0xff] %v6526
    %6543 = vst [vmem:[#allocation16 + $0x30] sm:$0xff] %v6527
    %6544 = vst [vmem:[#allocation16 + $0x38] sm:$0xff] %v6528
    %6545 = vst [vmem:[#allocation16 + $0x40] sm:$0xff] %v6529
    %6546 = vst [vmem:[#allocation16 + $0x48] sm:$0xff] %v6530
    %6547 = vst [vmem:[#allocation16 + $0x50] sm:$0xff] %v6531
    %6548 = vst [vmem:[#allocation16 + $0x58] sm:$0xff] %v6532
    %6549 = vst [vmem:[#allocation16 + $0x60] sm:$0xff] %v6533
    %6550 = vst [vmem:[#allocation16 + $0x68] sm:$0xff] %v6534
    %6551 = vst [vmem:[#allocation16 + $0x70] sm:$0xff] %v6535
    %6552 = vst [vmem:[#allocation16 + $0x78] sm:$0xff] %v6536
    // Predicated region
    $region70: #{tpu_custom_call.1} parent=1 // pred_check
      _
    $region71: #{tpu_custom_call.1} parent=1 // pred_check_branch
      %6554 = sbr.rel (0) target = $region73
    $region72: #{tpu_custom_call.1} parent=1 // pred_region
      %s6556 = ssub.s32 2048, 2048
      %6557 = vsyncadd [#allocation4], %s6556
      %s6558 = sshll.u32 [#allocation16], 4
      %s6559 = int_to_ptr.vmem [resolvable:$true] %s6558
      %6564 = dma.vmem_to_hbm [thread:$0]  %s6559, 2048, %s9, [#allocation4], 256, 256, 16
    $region73: #{tpu_custom_call.1} parent=1 // pred_fallthru
      _
    // Predicated region
    $region74: #{tpu_custom_call.1} parent=1 // pred_check
      _
    $region75: #{tpu_custom_call.1} parent=1 // pred_check_branch
      %6566 = sbr.rel (0) target = $region77
    $region76: #{tpu_custom_call.1} parent=1 // pred_region
      %6567 = dma.done [#allocation4], 2048
    $region77: #{tpu_custom_call.1} parent=1 // pred_fallthru
      _
    %6568 = vsyncpa [#allocation3], 1
    %6569 = vsyncpa [#allocation6], 1
    %6570 = vsyncpa [#allocation9], 1
    %6571 = vsyncpa [#allocation12], 1
    %6572 = vsyncpa [#allocation15], 1
    %6573 = vsyncpa [#allocation4], 1

</llo_original>
